<compile_context>
chip_gen: v6e
topology: v6e:2x2x1
jax: 0.10.0
libtpu: 0.0.40
codegen_flags: <defaults>
</compile_context>

<pallas_src>
import jax
import jax.numpy as jnp
from jax.experimental import pallas as pl
from jax.experimental.pallas import tpu as pltpu

EMB = 128                    # embedding_size in the torch module
LIN1_OUT = 4 * EMB           # 512
OUT_DIM = 19110 * 2          # 38220  (module's `out` Linear)
NT = 6400                    # output-tile width for the final big linear (50 * 128)
OUT_PAD = 6 * NT             # 38400, zero-padded columns
K0_PAD = 8                   # node-feature dim padded 4 -> 8
G_PAD = 8                    # graph (row) dim padded to 8 sublanes


# ----------------------------- Pallas kernels ------------------------------

def _gnn_prologue_kernel(a_ref, x_ref,
                         w0_ref, b0_ref, w1_ref, b1_ref,
                         w2_ref, b2_ref, w3_ref, b3_ref,
                         mgn_ref, mng_ref, invc_ref, valid_ref,
                         wl_ref, bl_ref, o_ref):
    """Fused: 4x ( A_hat @ (h @ W) + b -> tanh ), max/mean pool, lin1."""
    a = a_ref[...]                                        # (N, N)

    def gcn(h, w_ref, b_ref):
        xw = jnp.dot(h, w_ref[...], preferred_element_type=jnp.float32)
        return jnp.tanh(jnp.dot(a, xw, preferred_element_type=jnp.float32)
                        + b_ref[...])

    # TODO(synk): F.dropout(p=0.2) is stochastic (training mode in torch);
    # implemented as identity (eval semantics) for determinism.
    h = gcn(x_ref[...], w0_ref, b0_ref)
    h = gcn(h, w1_ref, b1_ref)
    h = gcn(h, w2_ref, b2_ref)
    h = gcn(h, w3_ref, b3_ref)                            # (N, EMB)

    # global mean pool: per-graph sum via matmul, scaled by guarded 1/count
    gap = (jnp.dot(mgn_ref[...], h, preferred_element_type=jnp.float32)
           * invc_ref[...])                               # (G_PAD, EMB)

    # global max pool: accumulate rows in registers, single unmasked store
    neg = jnp.full_like(h, -1e30)
    rows = []
    for g in range(G_PAD):                                # static, unrolled
        masked = jnp.where(mng_ref[:, g:g + 1] > 0.5, h, neg)
        rows.append(jnp.max(masked, axis=0, keepdims=True))
    gmp = jnp.concatenate(rows, axis=0)                   # (G_PAD, EMB)
    gmp = jnp.where(valid_ref[...] > 0.5, gmp, 0.0)       # empty graphs -> 0

    pooled = jnp.concatenate([gmp, gap], axis=1)          # (G_PAD, 2*EMB)
    o_ref[...] = (jnp.dot(pooled, wl_ref[...], preferred_element_type=jnp.float32)
                  + bl_ref[...])                          # (G_PAD, 4*EMB)


def gnn_prologue(a_hat, x_pad, params, mask_gn, mask_ng, inv_count, valid):
    return pl.pallas_call(
        _gnn_prologue_kernel,
        out_shape=jax.ShapeDtypeStruct((G_PAD, LIN1_OUT), jnp.float32),
    )(a_hat, x_pad,
      params["w0"], params["b0"].reshape(1, EMB),
      params["w1"], params["b1"].reshape(1, EMB),
      params["w2"], params["b2"].reshape(1, EMB),
      params["w3"], params["b3"].reshape(1, EMB),
      mask_gn, mask_ng, inv_count, valid,
      params["w_lin1"], params["b_lin1"].reshape(1, LIN1_OUT))


def _big_linear_kernel(x_ref, w_ref, b_ref, o_ref):
    # bf16 x bf16 -> f32 accumulate on the MXU; weights streamed in bf16.
    o_ref[...] = (jnp.dot(x_ref[...].astype(jnp.bfloat16), w_ref[...],
                          preferred_element_type=jnp.float32)
                  + b_ref[...])


def big_linear(x, w_bf16, b):
    """Final Linear(512 -> 38220): bf16 weights, output dim tiled across the grid."""
    g, k = x.shape
    npad = w_bf16.shape[1]
    n_tiles = npad // NT
    cost = pl.CostEstimate(
        flops=2 * g * k * npad,
        transcendentals=0,
        bytes_accessed=(k * npad * 2        # bf16 weights (dominant)
                        + npad * 4          # f32 bias
                        + g * k * 4         # activations
                        + g * npad * 4))    # f32 output
    return pl.pallas_call(
        _big_linear_kernel,
        out_shape=jax.ShapeDtypeStruct((g, npad), jnp.float32),
        grid_spec=pltpu.PrefetchScalarGridSpec(
            num_scalar_prefetch=0,
            grid=(n_tiles,),
            in_specs=[pl.BlockSpec((g, k), lambda j: (0, 0)),
                      pl.BlockSpec((k, NT), lambda j: (0, j)),
                      pl.BlockSpec((1, NT), lambda j: (0, j))],
            out_specs=pl.BlockSpec((g, NT), lambda j: (0, j)),
        ),
        compiler_params=pltpu.CompilerParams(
            dimension_semantics=("parallel",),
            vmem_limit_bytes=32 * 1024 * 1024,
        ),
        cost_estimate=cost,
    )(x, w_bf16, b.reshape(1, npad))


# ------------------------------- glue (JAX) --------------------------------

def build_norm_adj(edge_index, n):
    """Dense GCN-normalized adjacency: D^-1/2 (A + I) D^-1/2 (PyG GCNConv default)."""
    src, dst = edge_index[0], edge_index[1]
    a = jnp.zeros((n, n), jnp.float32).at[dst, src].add(1.0)
    a = a + jnp.eye(n, dtype=jnp.float32)                 # add_self_loops=True
    deg = a.sum(axis=1)
    dinv = jax.lax.rsqrt(deg)
    return dinv[:, None] * a * dinv[None, :]


def init_params(key):
    ks = jax.random.split(key, 6)

    def dense(k, fan_in, fan_out):
        return (jax.random.normal(k, (fan_in, fan_out), jnp.float32)
                * (1.0 / jnp.sqrt(jnp.float32(fan_in))))

    p = {}
    w0 = dense(ks[0], 4, EMB)
    p["w0"] = jnp.pad(w0, ((0, K0_PAD - 4), (0, 0)))      # zero-padded contraction rows
    p["b0"] = jnp.zeros((EMB,), jnp.float32)
    p["w1"], p["b1"] = dense(ks[1], EMB, EMB), jnp.zeros((EMB,), jnp.float32)
    p["w2"], p["b2"] = dense(ks[2], EMB, EMB), jnp.zeros((EMB,), jnp.float32)
    p["w3"], p["b3"] = dense(ks[3], EMB, EMB), jnp.zeros((EMB,), jnp.float32)
    p["w_lin1"] = dense(ks[4], 2 * EMB, LIN1_OUT)
    p["b_lin1"] = jnp.zeros((LIN1_OUT,), jnp.float32)
    w_out = dense(ks[5], LIN1_OUT, OUT_DIM)
    p["w_out"] = jnp.pad(w_out, ((0, 0), (0, OUT_PAD - OUT_DIM))).astype(jnp.bfloat16)
    p["b_out"] = jnp.zeros((OUT_PAD,), jnp.float32)
    return p


def gnn_forward(params, x, edge_index, batch_index, num_graphs):
    n = x.shape[0]
    a_hat = build_norm_adj(edge_index, n)
    x_pad = jnp.pad(x.astype(jnp.float32), ((0, 0), (0, K0_PAD - x.shape[1])))

    # pooling masks, padded to G_PAD graphs (empty graphs guarded -> 0 output rows)
    gid = jnp.arange(G_PAD, dtype=batch_index.dtype)
    mask_gn = (batch_index[None, :] == gid[:, None]).astype(jnp.float32)   # (G_PAD, N)
    mask_ng = mask_gn.T                                                    # (N, G_PAD)
    count = mask_gn.sum(axis=1, keepdims=True)
    inv_count = 1.0 / jnp.maximum(count, 1.0)
    valid = (count > 0.0).astype(jnp.float32)

    hid = gnn_prologue(a_hat, x_pad, params, mask_gn, mask_ng, inv_count, valid)
    out_pad = big_linear(hid, params["w_out"], params["b_out"])   # (G_PAD, OUT_PAD)
    return out_pad[:num_graphs, :OUT_DIM]                         # (G, 38220)


# --------------------------------- driver -----------------------------------

if __name__ == "__main__":
    key = jax.random.PRNGKey(0)
    k_x, k_p = jax.random.split(key)

    N_NODES, F_IN, N_GRAPHS = 16, 4, 2
    x = jax.random.normal(k_x, (N_NODES, F_IN), jnp.float32)

    # two graphs of 8 nodes each, ring-connected, bidirectional edges
    src, dst = [], []
    for base in (0, 8):
        for i in range(8):
            a, b = base + i, base + (i + 1) % 8
            src += [a, b]
            dst += [b, a]
    edge_index = jnp.array([src, dst], dtype=jnp.int32)          # (2, 32)
    batch_index = jnp.array([0] * 8 + [1] * 8, dtype=jnp.int32)  # (16,)

    params = init_params(k_p)

    fwd = jax.jit(gnn_forward, static_argnums=(4,))
    out = fwd(params, x, edge_index, batch_index, N_GRAPHS)
    jax.block_until_ready(out)
    assert out.shape == (N_GRAPHS, OUT_DIM) and out.dtype == jnp.float32
    assert bool(jnp.all(jnp.isfinite(out)))
    print("KERNEL_OK")
</pallas_src>

<mosaic_0001>
module attributes {stable_mosaic.version = 11 : i64} {
  func.func private @main(%arg0: i32) attributes {dimension_semantics = [#tpu.dimension_semantics<core_parallel>], iteration_bounds = array<i64: 2>, tpu.core_type = #tpu.core_type<sc_scalar_subcore>, window_params = []} {
    return
  }
}

module attributes {stable_mosaic.version = 11 : i64} {
  func.func private @main(%arg0: i32) attributes {dimension_semantics = [#tpu.dimension_semantics<core_parallel>], iteration_bounds = array<i64: 2>, tpu.core_type = #tpu.core_type<sc_scalar_subcore>, window_params = []} {
    return
  }
}

module attributes {stable_mosaic.version = 11 : i64} {
  func.func @_big_linear_kernel(%arg0: i32, %arg1: memref<8x512xf32, #tpu.memory_space<vmem>>, %arg2: memref<512x6400xbf16, #tpu.memory_space<vmem>>, %arg3: memref<1x6400xf32, #tpu.memory_space<vmem>>, %arg4: memref<8x6400xf32, #tpu.memory_space<vmem>>) attributes {dimension_semantics = [#tpu.dimension_semantics<parallel>], iteration_bounds = array<i64: 6>, scalar_prefetch = 0 : i64, scratch_operands = 0 : i64, tpu.core_type = #tpu.core_type<tc>, window_params = [{pipeline_mode = #tpu.pipeline_mode<synchronous>, transform_indices = @transform_0, window_bounds = array<i64: 8, 512>}, {transform_indices = @transform_1, window_bounds = array<i64: 512, 6400>}, {transform_indices = @transform_2, window_bounds = array<i64: 1, 6400>}, {transform_indices = @transform_3, window_bounds = array<i64: 8, 6400>}]} {
    %c0 = arith.constant 0 : index
    %c0_0 = arith.constant 0 : index
    %0 = vector.load %arg1[%c0, %c0_0] : memref<8x512xf32, #tpu.memory_space<vmem>>, vector<8x512xf32>
    %1 = arith.truncf %0 : vector<8x512xf32> to vector<8x512xbf16>
    %c0_1 = arith.constant 0 : index
    %c0_2 = arith.constant 0 : index
    %2 = vector.load %arg2[%c0_1, %c0_2] : memref<512x6400xbf16, #tpu.memory_space<vmem>>, vector<512x6400xbf16>
    %cst = arith.constant dense<0.000000e+00> : vector<8x6400xf32>
    %3 = tpu.matmul %1, %2, %cst {dimension_numbers = #tpu.dot_dimension_numbers<[1], [0], [0], [1], [0, 0, 1, 1], [], []>} : vector<8x512xbf16>, vector<512x6400xbf16>, vector<8x6400xf32> -> vector<8x6400xf32>
    %c0_3 = arith.constant 0 : index
    %c0_4 = arith.constant 0 : index
    %4 = vector.load %arg3[%c0_3, %c0_4] : memref<1x6400xf32, #tpu.memory_space<vmem>>, vector<1x6400xf32>
    %5 = vector.broadcast %4 : vector<1x6400xf32> to vector<8x6400xf32>
    %6 = arith.addf %3, %5 : vector<8x6400xf32>
    %c0_5 = arith.constant 0 : index
    %c0_6 = arith.constant 0 : index
    %7 = vector.load %arg4[%c0_5, %c0_6] : memref<8x6400xf32, #tpu.memory_space<vmem>>, vector<8x6400xf32>
    tpu.vector_store %arg4[%c0_5, %c0_6], %6 {strides = array<i32>} : memref<8x6400xf32, #tpu.memory_space<vmem>>, vector<8x6400xf32>,
    return
  }
  func.func @transform_0(%arg0: i32) -> (i32, i32) {
    %c0_i32 = arith.constant 0 : i32
    %c0_i32_0 = arith.constant 0 : i32
    %c0_i32_1 = arith.constant 0 : i32
    return %c0_i32, %c0_i32_0 : i32, i32
  }
  func.func @transform_1(%arg0: i32) -> (i32, i32) {
    %c0_i32 = arith.constant 0 : i32
    %c0_i32_0 = arith.constant 0 : i32
    return %c0_i32, %arg0 : i32, i32
  }
  func.func @transform_2(%arg0: i32) -> (i32, i32) {
    %c0_i32 = arith.constant 0 : i32
    %c0_i32_0 = arith.constant 0 : i32
    return %c0_i32, %arg0 : i32, i32
  }
  func.func @transform_3(%arg0: i32) -> (i32, i32) {
    %c0_i32 = arith.constant 0 : i32
    %c0_i32_0 = arith.constant 0 : i32
    return %c0_i32, %arg0 : i32, i32
  }
}

module attributes {stable_mosaic.version = 11 : i64} {
  func.func @_gnn_prologue_kernel(%arg0: memref<16x16xf32, #tpu.memory_space<vmem>>, %arg1: memref<16x8xf32, #tpu.memory_space<vmem>>, %arg2: memref<8x128xf32, #tpu.memory_space<vmem>>, %arg3: memref<1x128xf32, #tpu.memory_space<vmem>>, %arg4: memref<128x128xf32, #tpu.memory_space<vmem>>, %arg5: memref<1x128xf32, #tpu.memory_space<vmem>>, %arg6: memref<128x128xf32, #tpu.memory_space<vmem>>, %arg7: memref<1x128xf32, #tpu.memory_space<vmem>>, %arg8: memref<128x128xf32, #tpu.memory_space<vmem>>, %arg9: memref<1x128xf32, #tpu.memory_space<vmem>>, %arg10: memref<8x16xf32, #tpu.memory_space<vmem>>, %arg11: memref<16x8xf32, #tpu.memory_space<vmem>>, %arg12: memref<8x1xf32, #tpu.memory_space<vmem>>, %arg13: memref<8x1xf32, #tpu.memory_space<vmem>>, %arg14: memref<256x512xf32, #tpu.memory_space<vmem>>, %arg15: memref<1x512xf32, #tpu.memory_space<vmem>>, %arg16: memref<8x512xf32, #tpu.memory_space<vmem>>) attributes {dimension_semantics = [], scalar_prefetch = 0 : i64, scratch_operands = 0 : i64, tpu.core_type = #tpu.core_type<tc>} {
    %c0 = arith.constant 0 : index
    %c0_0 = arith.constant 0 : index
    %0 = vector.load %arg0[%c0, %c0_0] : memref<16x16xf32, #tpu.memory_space<vmem>>, vector<16x16xf32>
    %c0_1 = arith.constant 0 : index
    %c0_2 = arith.constant 0 : index
    %1 = vector.load %arg1[%c0_1, %c0_2] : memref<16x8xf32, #tpu.memory_space<vmem>>, vector<16x8xf32>
    %c0_3 = arith.constant 0 : index
    %c0_4 = arith.constant 0 : index
    %2 = vector.load %arg2[%c0_3, %c0_4] : memref<8x128xf32, #tpu.memory_space<vmem>>, vector<8x128xf32>
    %cst = arith.constant dense<0.000000e+00> : vector<16x128xf32>
    %3 = tpu.matmul %1, %2, %cst {dimension_numbers = #tpu.dot_dimension_numbers<[1], [0], [0], [1], [0, 0, 1, 1], [], []>} : vector<16x8xf32>, vector<8x128xf32>, vector<16x128xf32> -> vector<16x128xf32>
    %cst_5 = arith.constant dense<0.000000e+00> : vector<16x128xf32>
    %4 = tpu.matmul %0, %3, %cst_5 {dimension_numbers = #tpu.dot_dimension_numbers<[1], [0], [0], [1], [0, 0, 1, 1], [], []>} : vector<16x16xf32>, vector<16x128xf32>, vector<16x128xf32> -> vector<16x128xf32>
    %c0_6 = arith.constant 0 : index
    %c0_7 = arith.constant 0 : index
    %5 = vector.load %arg3[%c0_6, %c0_7] : memref<1x128xf32, #tpu.memory_space<vmem>>, vector<1x128xf32>
    %6 = vector.broadcast %5 : vector<1x128xf32> to vector<16x128xf32>
    %7 = arith.addf %4, %6 : vector<16x128xf32>
    %8 = math.tanh %7 : vector<16x128xf32>
    %c0_8 = arith.constant 0 : index
    %c0_9 = arith.constant 0 : index
    %9 = vector.load %arg4[%c0_8, %c0_9] : memref<128x128xf32, #tpu.memory_space<vmem>>, vector<128x128xf32>
    %cst_10 = arith.constant dense<0.000000e+00> : vector<16x128xf32>
    %10 = tpu.matmul %8, %9, %cst_10 {dimension_numbers = #tpu.dot_dimension_numbers<[1], [0], [0], [1], [0, 0, 1, 1], [], []>} : vector<16x128xf32>, vector<128x128xf32>, vector<16x128xf32> -> vector<16x128xf32>
    %cst_11 = arith.constant dense<0.000000e+00> : vector<16x128xf32>
    %11 = tpu.matmul %0, %10, %cst_11 {dimension_numbers = #tpu.dot_dimension_numbers<[1], [0], [0], [1], [0, 0, 1, 1], [], []>} : vector<16x16xf32>, vector<16x128xf32>, vector<16x128xf32> -> vector<16x128xf32>
    %c0_12 = arith.constant 0 : index
    %c0_13 = arith.constant 0 : index
    %12 = vector.load %arg5[%c0_12, %c0_13] : memref<1x128xf32, #tpu.memory_space<vmem>>, vector<1x128xf32>
    %13 = vector.broadcast %12 : vector<1x128xf32> to vector<16x128xf32>
    %14 = arith.addf %11, %13 : vector<16x128xf32>
    %15 = math.tanh %14 : vector<16x128xf32>
    %c0_14 = arith.constant 0 : index
    %c0_15 = arith.constant 0 : index
    %16 = vector.load %arg6[%c0_14, %c0_15] : memref<128x128xf32, #tpu.memory_space<vmem>>, vector<128x128xf32>
    %cst_16 = arith.constant dense<0.000000e+00> : vector<16x128xf32>
    %17 = tpu.matmul %15, %16, %cst_16 {dimension_numbers = #tpu.dot_dimension_numbers<[1], [0], [0], [1], [0, 0, 1, 1], [], []>} : vector<16x128xf32>, vector<128x128xf32>, vector<16x128xf32> -> vector<16x128xf32>
    %cst_17 = arith.constant dense<0.000000e+00> : vector<16x128xf32>
    %18 = tpu.matmul %0, %17, %cst_17 {dimension_numbers = #tpu.dot_dimension_numbers<[1], [0], [0], [1], [0, 0, 1, 1], [], []>} : vector<16x16xf32>, vector<16x128xf32>, vector<16x128xf32> -> vector<16x128xf32>
    %c0_18 = arith.constant 0 : index
    %c0_19 = arith.constant 0 : index
    %19 = vector.load %arg7[%c0_18, %c0_19] : memref<1x128xf32, #tpu.memory_space<vmem>>, vector<1x128xf32>
    %20 = vector.broadcast %19 : vector<1x128xf32> to vector<16x128xf32>
    %21 = arith.addf %18, %20 : vector<16x128xf32>
    %22 = math.tanh %21 : vector<16x128xf32>
    %c0_20 = arith.constant 0 : index
    %c0_21 = arith.constant 0 : index
    %23 = vector.load %arg8[%c0_20, %c0_21] : memref<128x128xf32, #tpu.memory_space<vmem>>, vector<128x128xf32>
    %cst_22 = arith.constant dense<0.000000e+00> : vector<16x128xf32>
    %24 = tpu.matmul %22, %23, %cst_22 {dimension_numbers = #tpu.dot_dimension_numbers<[1], [0], [0], [1], [0, 0, 1, 1], [], []>} : vector<16x128xf32>, vector<128x128xf32>, vector<16x128xf32> -> vector<16x128xf32>
    %cst_23 = arith.constant dense<0.000000e+00> : vector<16x128xf32>
    %25 = tpu.matmul %0, %24, %cst_23 {dimension_numbers = #tpu.dot_dimension_numbers<[1], [0], [0], [1], [0, 0, 1, 1], [], []>} : vector<16x16xf32>, vector<16x128xf32>, vector<16x128xf32> -> vector<16x128xf32>
    %c0_24 = arith.constant 0 : index
    %c0_25 = arith.constant 0 : index
    %26 = vector.load %arg9[%c0_24, %c0_25] : memref<1x128xf32, #tpu.memory_space<vmem>>, vector<1x128xf32>
    %27 = vector.broadcast %26 : vector<1x128xf32> to vector<16x128xf32>
    %28 = arith.addf %25, %27 : vector<16x128xf32>
    %29 = math.tanh %28 : vector<16x128xf32>
    %c0_26 = arith.constant 0 : index
    %c0_27 = arith.constant 0 : index
    %30 = vector.load %arg10[%c0_26, %c0_27] : memref<8x16xf32, #tpu.memory_space<vmem>>, vector<8x16xf32>
    %cst_28 = arith.constant dense<0.000000e+00> : vector<8x128xf32>
    %31 = tpu.matmul %30, %29, %cst_28 {dimension_numbers = #tpu.dot_dimension_numbers<[1], [0], [0], [1], [0, 0, 1, 1], [], []>} : vector<8x16xf32>, vector<16x128xf32>, vector<8x128xf32> -> vector<8x128xf32>
    %c0_29 = arith.constant 0 : index
    %c0_30 = arith.constant 0 : index
    %32 = vector.load %arg12[%c0_29, %c0_30] : memref<8x1xf32, #tpu.memory_space<vmem>>, vector<8x1xf32>
    %33 = vector.broadcast %32 : vector<8x1xf32> to vector<8x128xf32>
    %34 = arith.mulf %31, %33 : vector<8x128xf32>
    %cst_31 = arith.constant -1.000000e+30 : f32
    %35 = vector.broadcast %cst_31 : f32 to vector<16x128xf32>
    %c0_32 = arith.constant 0 : index
    %c0_33 = arith.constant 0 : index
    %36 = vector.load %arg11[%c0_32, %c0_33] : memref<16x8xf32, #tpu.memory_space<vmem>>, vector<16x1xf32>
    %cst_34 = arith.constant 5.000000e-01 : f32
    %37 = vector.broadcast %cst_34 : f32 to vector<16x1xf32>
    %38 = arith.cmpf ogt, %36, %37 : vector<16x1xf32>
    %39 = vector.shape_cast %38 : vector<16x1xi1> to vector<16x1xi1>
    %40 = vector.broadcast %39 : vector<16x1xi1> to vector<16x128xi1>
    %41 = arith.select %40, %29, %35 : vector<16x128xi1>, vector<16x128xf32>
    %cst_35 = arith.constant dense<0xFF800000> : vector<128xf32>
    %42 = vector.multi_reduction <maximumf>, %41, %cst_35 [0] : vector<16x128xf32> to vector<128xf32>
    %43 = vector.shape_cast %42 : vector<128xf32> to vector<1x128xf32>
    %c0_36 = arith.constant 0 : index
    %c1 = arith.constant 1 : index
    %44 = vector.load %arg11[%c0_36, %c1] : memref<16x8xf32, #tpu.memory_space<vmem>>, vector<16x1xf32>
    %cst_37 = arith.constant 5.000000e-01 : f32
    %45 = vector.broadcast %cst_37 : f32 to vector<16x1xf32>
    %46 = arith.cmpf ogt, %44, %45 : vector<16x1xf32>
    %47 = vector.shape_cast %46 : vector<16x1xi1> to vector<16x1xi1>
    %48 = vector.broadcast %47 : vector<16x1xi1> to vector<16x128xi1>
    %49 = arith.select %48, %29, %35 : vector<16x128xi1>, vector<16x128xf32>
    %cst_38 = arith.constant dense<0xFF800000> : vector<128xf32>
    %50 = vector.multi_reduction <maximumf>, %49, %cst_38 [0] : vector<16x128xf32> to vector<128xf32>
    %51 = vector.shape_cast %50 : vector<128xf32> to vector<1x128xf32>
    %c0_39 = arith.constant 0 : index
    %c2 = arith.constant 2 : index
    %52 = vector.load %arg11[%c0_39, %c2] : memref<16x8xf32, #tpu.memory_space<vmem>>, vector<16x1xf32>
    %cst_40 = arith.constant 5.000000e-01 : f32
    %53 = vector.broadcast %cst_40 : f32 to vector<16x1xf32>
    %54 = arith.cmpf ogt, %52, %53 : vector<16x1xf32>
    %55 = vector.shape_cast %54 : vector<16x1xi1> to vector<16x1xi1>
    %56 = vector.broadcast %55 : vector<16x1xi1> to vector<16x128xi1>
    %57 = arith.select %56, %29, %35 : vector<16x128xi1>, vector<16x128xf32>
    %cst_41 = arith.constant dense<0xFF800000> : vector<128xf32>
    %58 = vector.multi_reduction <maximumf>, %57, %cst_41 [0] : vector<16x128xf32> to vector<128xf32>
    %59 = vector.shape_cast %58 : vector<128xf32> to vector<1x128xf32>
    %c0_42 = arith.constant 0 : index
    %c3 = arith.constant 3 : index
    %60 = vector.load %arg11[%c0_42, %c3] : memref<16x8xf32, #tpu.memory_space<vmem>>, vector<16x1xf32>
    %cst_43 = arith.constant 5.000000e-01 : f32
    %61 = vector.broadcast %cst_43 : f32 to vector<16x1xf32>
    %62 = arith.cmpf ogt, %60, %61 : vector<16x1xf32>
    %63 = vector.shape_cast %62 : vector<16x1xi1> to vector<16x1xi1>
    %64 = vector.broadcast %63 : vector<16x1xi1> to vector<16x128xi1>
    %65 = arith.select %64, %29, %35 : vector<16x128xi1>, vector<16x128xf32>
    %cst_44 = arith.constant dense<0xFF800000> : vector<128xf32>
    %66 = vector.multi_reduction <maximumf>, %65, %cst_44 [0] : vector<16x128xf32> to vector<128xf32>
    %67 = vector.shape_cast %66 : vector<128xf32> to vector<1x128xf32>
    %c0_45 = arith.constant 0 : index
    %c4 = arith.constant 4 : index
    %68 = vector.load %arg11[%c0_45, %c4] : memref<16x8xf32, #tpu.memory_space<vmem>>, vector<16x1xf32>
    %cst_46 = arith.constant 5.000000e-01 : f32
    %69 = vector.broadcast %cst_46 : f32 to vector<16x1xf32>
    %70 = arith.cmpf ogt, %68, %69 : vector<16x1xf32>
    %71 = vector.shape_cast %70 : vector<16x1xi1> to vector<16x1xi1>
    %72 = vector.broadcast %71 : vector<16x1xi1> to vector<16x128xi1>
    %73 = arith.select %72, %29, %35 : vector<16x128xi1>, vector<16x128xf32>
    %cst_47 = arith.constant dense<0xFF800000> : vector<128xf32>
    %74 = vector.multi_reduction <maximumf>, %73, %cst_47 [0] : vector<16x128xf32> to vector<128xf32>
    %75 = vector.shape_cast %74 : vector<128xf32> to vector<1x128xf32>
    %c0_48 = arith.constant 0 : index
    %c5 = arith.constant 5 : index
    %76 = vector.load %arg11[%c0_48, %c5] : memref<16x8xf32, #tpu.memory_space<vmem>>, vector<16x1xf32>
    %cst_49 = arith.constant 5.000000e-01 : f32
    %77 = vector.broadcast %cst_49 : f32 to vector<16x1xf32>
    %78 = arith.cmpf ogt, %76, %77 : vector<16x1xf32>
    %79 = vector.shape_cast %78 : vector<16x1xi1> to vector<16x1xi1>
    %80 = vector.broadcast %79 : vector<16x1xi1> to vector<16x128xi1>
    %81 = arith.select %80, %29, %35 : vector<16x128xi1>, vector<16x128xf32>
    %cst_50 = arith.constant dense<0xFF800000> : vector<128xf32>
    %82 = vector.multi_reduction <maximumf>, %81, %cst_50 [0] : vector<16x128xf32> to vector<128xf32>
    %83 = vector.shape_cast %82 : vector<128xf32> to vector<1x128xf32>
    %c0_51 = arith.constant 0 : index
    %c6 = arith.constant 6 : index
    %84 = vector.load %arg11[%c0_51, %c6] : memref<16x8xf32, #tpu.memory_space<vmem>>, vector<16x1xf32>
    %cst_52 = arith.constant 5.000000e-01 : f32
    %85 = vector.broadcast %cst_52 : f32 to vector<16x1xf32>
    %86 = arith.cmpf ogt, %84, %85 : vector<16x1xf32>
    %87 = vector.shape_cast %86 : vector<16x1xi1> to vector<16x1xi1>
    %88 = vector.broadcast %87 : vector<16x1xi1> to vector<16x128xi1>
    %89 = arith.select %88, %29, %35 : vector<16x128xi1>, vector<16x128xf32>
    %cst_53 = arith.constant dense<0xFF800000> : vector<128xf32>
    %90 = vector.multi_reduction <maximumf>, %89, %cst_53 [0] : vector<16x128xf32> to vector<128xf32>
    %91 = vector.shape_cast %90 : vector<128xf32> to vector<1x128xf32>
    %c0_54 = arith.constant 0 : index
    %c7 = arith.constant 7 : index
    %92 = vector.load %arg11[%c0_54, %c7] : memref<16x8xf32, #tpu.memory_space<vmem>>, vector<16x1xf32>
    %cst_55 = arith.constant 5.000000e-01 : f32
    %93 = vector.broadcast %cst_55 : f32 to vector<16x1xf32>
    %94 = arith.cmpf ogt, %92, %93 : vector<16x1xf32>
    %95 = vector.shape_cast %94 : vector<16x1xi1> to vector<16x1xi1>
    %96 = vector.broadcast %95 : vector<16x1xi1> to vector<16x128xi1>
    %97 = arith.select %96, %29, %35 : vector<16x128xi1>, vector<16x128xf32>
    %cst_56 = arith.constant dense<0xFF800000> : vector<128xf32>
    %98 = vector.multi_reduction <maximumf>, %97, %cst_56 [0] : vector<16x128xf32> to vector<128xf32>
    %99 = vector.shape_cast %98 : vector<128xf32> to vector<1x128xf32>
    %100 = tpu.concatenate %43, %51, %59, %67, %75, %83, %91, %99 in 0 : vector<1x128xf32>, vector<1x128xf32>, vector<1x128xf32>, vector<1x128xf32>, vector<1x128xf32>, vector<1x128xf32>, vector<1x128xf32>, vector<1x128xf32> -> vector<8x128xf32>
    %c0_57 = arith.constant 0 : index
    %c0_58 = arith.constant 0 : index
    %101 = vector.load %arg13[%c0_57, %c0_58] : memref<8x1xf32, #tpu.memory_space<vmem>>, vector<8x1xf32>
    %cst_59 = arith.constant 5.000000e-01 : f32
    %102 = vector.broadcast %cst_59 : f32 to vector<8x1xf32>
    %103 = arith.cmpf ogt, %101, %102 : vector<8x1xf32>
    %cst_60 = arith.constant 0.000000e+00 : f32
    %104 = vector.shape_cast %103 : vector<8x1xi1> to vector<8x1xi1>
    %105 = vector.broadcast %104 : vector<8x1xi1> to vector<8x128xi1>
    %106 = vector.broadcast %cst_60 : f32 to vector<8x128xf32>
    %107 = arith.select %105, %100, %106 : vector<8x128xi1>, vector<8x128xf32>
    %108 = tpu.concatenate %107, %34 in 1 : vector<8x128xf32>, vector<8x128xf32> -> vector<8x256xf32>
    %c0_61 = arith.constant 0 : index
    %c0_62 = arith.constant 0 : index
    %109 = vector.load %arg14[%c0_61, %c0_62] : memref<256x512xf32, #tpu.memory_space<vmem>>, vector<256x512xf32>
    %cst_63 = arith.constant dense<0.000000e+00> : vector<8x512xf32>
    %110 = tpu.matmul %108, %109, %cst_63 {dimension_numbers = #tpu.dot_dimension_numbers<[1], [0], [0], [1], [0, 0, 1, 1], [], []>} : vector<8x256xf32>, vector<256x512xf32>, vector<8x512xf32> -> vector<8x512xf32>
    %c0_64 = arith.constant 0 : index
    %c0_65 = arith.constant 0 : index
    %111 = vector.load %arg15[%c0_64, %c0_65] : memref<1x512xf32, #tpu.memory_space<vmem>>, vector<1x512xf32>
    %112 = vector.broadcast %111 : vector<1x512xf32> to vector<8x512xf32>
    %113 = arith.addf %110, %112 : vector<8x512xf32>
    %c0_66 = arith.constant 0 : index
    %c0_67 = arith.constant 0 : index
    %114 = vector.load %arg16[%c0_66, %c0_67] : memref<8x512xf32, #tpu.memory_space<vmem>>, vector<8x512xf32>
    tpu.vector_store %arg16[%c0_66, %c0_67], %113 {strides = array<i32>} : memref<8x512xf32, #tpu.memory_space<vmem>>, vector<8x512xf32>,
    return
  }
}

</mosaic_0001>

<llo_original>
// kernel: gnn_forward.2
$region0: #{gnn_forward.2}
  #allocation0 [shape = 'u32[]', space=smem, size = 0x4, offset = 0x4, fixed_abs, tag = 'smem constant byte address 0x4 - core index']
  #allocation1 [shape = 'u32[144,128]{1,0:T(1,128)}', space=vmem, size = 0x12000, scoped, tag = 'internal scratch']
  %s0 = inlined_call_operand.vmem [shape: f32[16,16], index: 0, kind: input, shape index: {}]
  %s1 = inlined_call_operand.vmem [shape: f32[16,8], index: 1, kind: input, shape index: {}]
  %s2 = inlined_call_operand.hbm [shape: f32[8,128], index: 2, kind: input, shape index: {}]
  %s3 = inlined_call_operand.hbm [shape: f32[1,128], index: 3, kind: input, shape index: {}]
  %s4 = inlined_call_operand.hbm [shape: f32[128,128], index: 4, kind: input, shape index: {}]
  %s5 = inlined_call_operand.hbm [shape: f32[1,128], index: 5, kind: input, shape index: {}]
  %s6 = inlined_call_operand.hbm [shape: f32[128,128], index: 6, kind: input, shape index: {}]
  %s7 = inlined_call_operand.hbm [shape: f32[1,128], index: 7, kind: input, shape index: {}]
  %s8 = inlined_call_operand.hbm [shape: f32[128,128], index: 8, kind: input, shape index: {}]
  %s9 = inlined_call_operand.hbm [shape: f32[1,128], index: 9, kind: input, shape index: {}]
  %s10 = inlined_call_operand.vmem [shape: f32[8,16], index: 10, kind: input, shape index: {}]
  %s11 = inlined_call_operand.vmem [shape: f32[16,8], index: 11, kind: input, shape index: {}]
  %s12 = inlined_call_operand.vmem [shape: f32[8,1], index: 12, kind: input, shape index: {}]
  %s13 = inlined_call_operand.vmem [shape: f32[8,1], index: 13, kind: input, shape index: {}]
  %s14 = inlined_call_operand.hbm [shape: f32[256,512], index: 14, kind: input, shape index: {}]
  %s15 = inlined_call_operand.hbm [shape: f32[1,512], index: 15, kind: input, shape index: {}]
  %s16 = inlined_call_operand.vmem [shape: f32[8,512], index: 16, kind: output, shape index: {}]
  %s17 = sld [smem:[#allocation0]]
  $region114: #{gnn_forward.2} parent=0
    _
  %s19 = ssub.s32 1, %s17
  %s20 = scalar_select 0, %s19, %s17
  $region1: #{gnn_forward.2} parent=0
    #allocation2 [shape = 'u8[4096]{0}', space=vmem, size = 0x1000, scoped, tag = 'input window, operand 2, single buffered']
    #allocation3 [shape = 's32[1]{0}', space=sflag, size = 0x4, scoped, tag = 'scoped memory for gnn_forward.2']
    #allocation4 [shape = 'u8[512]{0}', space=vmem, size = 0x400, scoped, tag = 'input window, operand 3, single buffered']
    #allocation5 [shape = 's32[1]{0}', space=sflag, size = 0x4, scoped, tag = 'scoped memory for gnn_forward.2']
    #allocation6 [shape = 'u8[65536]{0}', space=vmem, size = 0x10000, scoped, tag = 'input window, operand 4, single buffered']
    #allocation7 [shape = 'u8[512]{0}', space=vmem, size = 0x400, scoped, tag = 'input window, operand 5, single buffered']
    #allocation8 [shape = 's32[1]{0}', space=sflag, size = 0x4, scoped, tag = 'scoped memory for gnn_forward.2']
    #allocation9 [shape = 'u8[65536]{0}', space=vmem, size = 0x10000, scoped, tag = 'input window, operand 6, single buffered']
    #allocation10 [shape = 'u8[512]{0}', space=vmem, size = 0x400, scoped, tag = 'input window, operand 7, single buffered']
    #allocation11 [shape = 's32[1]{0}', space=sflag, size = 0x4, scoped, tag = 'scoped memory for gnn_forward.2']
    #allocation12 [shape = 'u8[65536]{0}', space=vmem, size = 0x10000, scoped, tag = 'input window, operand 8, single buffered']
    #allocation13 [shape = 'u8[512]{0}', space=vmem, size = 0x400, scoped, tag = 'input window, operand 9, single buffered']
    #allocation14 [shape = 's32[1]{0}', space=sflag, size = 0x4, scoped, tag = 'scoped memory for gnn_forward.2']
    #allocation15 [shape = 'u8[524288]{0}', space=vmem, size = 0x80000, scoped, tag = 'input window, operand 14, single buffered']
    #allocation16 [shape = 'u8[2048]{0}', space=vmem, size = 0x800, scoped, tag = 'input window, operand 15, single buffered']
    #allocation17 [shape = 's32[1]{0}', space=sflag, size = 0x4, scoped, tag = 'scoped memory for gnn_forward.2']
    %21 = vsyncpa [#allocation3], 0
    %22 = vsyncpa [#allocation5], 0
    %23 = vsyncpa [#allocation8], 0
    %24 = vsyncpa [#allocation11], 0
    %25 = vsyncpa [#allocation14], 0
    %26 = vsyncpa [#allocation17], 0
    // Predicated region
    $region2: #{gnn_forward.2} parent=1 // pred_check
      _
    $region3: #{gnn_forward.2} parent=1 // pred_check_branch
      %28 = sbr.rel (0) target = $region5
    $region4: #{gnn_forward.2} parent=1 // pred_region
      _
    $region5: #{gnn_forward.2} parent=1 // pred_fallthru
      _
    // Predicated region
    $region6: #{gnn_forward.2} parent=1 // pred_check
      _
    $region7: #{gnn_forward.2} parent=1 // pred_check_branch
      %30 = sbr.rel (0) target = $region9
    $region8: #{gnn_forward.2} parent=1 // pred_region
      _
    $region9: #{gnn_forward.2} parent=1 // pred_fallthru
      _
    // Predicated region
    $region10: #{gnn_forward.2} parent=1 // pred_check
      _
    $region11: #{gnn_forward.2} parent=1 // pred_check_branch
      %32 = sbr.rel (0) target = $region13
    $region12: #{gnn_forward.2} parent=1 // pred_region
      %s34 = ssub.s32 128, 128
      %35 = vsyncadd [#allocation3], %s34
      %s37 = sshll.u32 [#allocation2], 4
      %s38 = int_to_ptr.vmem [resolvable:$true] %s37
      %40 = dma.hbm_to_vmem [thread:$0]  %s2, 128, %s38, [#allocation3]
    $region13: #{gnn_forward.2} parent=1 // pred_fallthru
      _
    // Predicated region
    $region14: #{gnn_forward.2} parent=1 // pred_check
      _
    $region15: #{gnn_forward.2} parent=1 // pred_check_branch
      %42 = sbr.rel (0) target = $region17
    $region16: #{gnn_forward.2} parent=1 // pred_region
      %s44 = ssub.s32 16, 16
      %45 = vsyncadd [#allocation5], %s44
      %s47 = sshll.u32 [#allocation4], 4
      %s48 = int_to_ptr.vmem [resolvable:$true] %s47
      %50 = dma.hbm_to_vmem [thread:$0]  %s3, 16, %s48, [#allocation5]
    $region17: #{gnn_forward.2} parent=1 // pred_fallthru
      _
    // Predicated region
    $region18: #{gnn_forward.2} parent=1 // pred_check
      _
    $region19: #{gnn_forward.2} parent=1 // pred_check_branch
      %52 = sbr.rel (0) target = $region21
    $region20: #{gnn_forward.2} parent=1 // pred_region
      %s54 = ssub.s32 2048, 2048
      %55 = vsyncadd [#allocation5], %s54
      %s56 = sshll.u32 [#allocation6], 4
      %s57 = int_to_ptr.vmem [resolvable:$true] %s56
      %62 = dma.hbm_to_vmem [thread:$0]  %s4, 2048, %s57, [#allocation5], 128, 128, 8
    $region21: #{gnn_forward.2} parent=1 // pred_fallthru
      _
    // Predicated region
    $region22: #{gnn_forward.2} parent=1 // pred_check
      _
    $region23: #{gnn_forward.2} parent=1 // pred_check_branch
      %64 = sbr.rel (0) target = $region25
    $region24: #{gnn_forward.2} parent=1 // pred_region
      %s66 = ssub.s32 16, 16
      %67 = vsyncadd [#allocation8], %s66
      %s69 = sshll.u32 [#allocation7], 4
      %s70 = int_to_ptr.vmem [resolvable:$true] %s69
      %72 = dma.hbm_to_vmem [thread:$0]  %s5, 16, %s70, [#allocation8]
    $region25: #{gnn_forward.2} parent=1 // pred_fallthru
      _
    // Predicated region
    $region26: #{gnn_forward.2} parent=1 // pred_check
      _
    $region27: #{gnn_forward.2} parent=1 // pred_check_branch
      %74 = sbr.rel (0) target = $region29
    $region28: #{gnn_forward.2} parent=1 // pred_region
      %s76 = ssub.s32 2048, 2048
      %77 = vsyncadd [#allocation8], %s76
      %s78 = sshll.u32 [#allocation9], 4
      %s79 = int_to_ptr.vmem [resolvable:$true] %s78
      %84 = dma.hbm_to_vmem [thread:$0]  %s6, 2048, %s79, [#allocation8], 128, 128, 8
    $region29: #{gnn_forward.2} parent=1 // pred_fallthru
      _
    // Predicated region
    $region30: #{gnn_forward.2} parent=1 // pred_check
      _
    $region31: #{gnn_forward.2} parent=1 // pred_check_branch
      %86 = sbr.rel (0) target = $region33
    $region32: #{gnn_forward.2} parent=1 // pred_region
      %s88 = ssub.s32 16, 16
      %89 = vsyncadd [#allocation11], %s88
      %s91 = sshll.u32 [#allocation10], 4
      %s92 = int_to_ptr.vmem [resolvable:$true] %s91
      %94 = dma.hbm_to_vmem [thread:$0]  %s7, 16, %s92, [#allocation11]
    $region33: #{gnn_forward.2} parent=1 // pred_fallthru
      _
    // Predicated region
    $region34: #{gnn_forward.2} parent=1 // pred_check
      _
    $region35: #{gnn_forward.2} parent=1 // pred_check_branch
      %96 = sbr.rel (0) target = $region37
    $region36: #{gnn_forward.2} parent=1 // pred_region
      %s98 = ssub.s32 2048, 2048
      %99 = vsyncadd [#allocation11], %s98
      %s100 = sshll.u32 [#allocation12], 4
      %s101 = int_to_ptr.vmem [resolvable:$true] %s100
      %106 = dma.hbm_to_vmem [thread:$0]  %s8, 2048, %s101, [#allocation11], 128, 128, 8
    $region37: #{gnn_forward.2} parent=1 // pred_fallthru
      _
    // Predicated region
    $region38: #{gnn_forward.2} parent=1 // pred_check
      _
    $region39: #{gnn_forward.2} parent=1 // pred_check_branch
      %108 = sbr.rel (0) target = $region41
    $region40: #{gnn_forward.2} parent=1 // pred_region
      %s110 = ssub.s32 16, 16
      %111 = vsyncadd [#allocation14], %s110
      %s113 = sshll.u32 [#allocation13], 4
      %s114 = int_to_ptr.vmem [resolvable:$true] %s113
      %116 = dma.hbm_to_vmem [thread:$0]  %s9, 16, %s114, [#allocation14]
    $region41: #{gnn_forward.2} parent=1 // pred_fallthru
      _
    // Predicated region
    $region42: #{gnn_forward.2} parent=1 // pred_check
      _
    $region43: #{gnn_forward.2} parent=1 // pred_check_branch
      %118 = sbr.rel (0) target = $region45
    $region44: #{gnn_forward.2} parent=1 // pred_region
      _
    $region45: #{gnn_forward.2} parent=1 // pred_fallthru
      _
    // Predicated region
    $region46: #{gnn_forward.2} parent=1 // pred_check
      _
    $region47: #{gnn_forward.2} parent=1 // pred_check_branch
      %120 = sbr.rel (0) target = $region49
    $region48: #{gnn_forward.2} parent=1 // pred_region
      _
    $region49: #{gnn_forward.2} parent=1 // pred_fallthru
      _
    // Predicated region
    $region50: #{gnn_forward.2} parent=1 // pred_check
      _
    $region51: #{gnn_forward.2} parent=1 // pred_check_branch
      %122 = sbr.rel (0) target = $region53
    $region52: #{gnn_forward.2} parent=1 // pred_region
      _
    $region53: #{gnn_forward.2} parent=1 // pred_fallthru
      _
    // Predicated region
    $region54: #{gnn_forward.2} parent=1 // pred_check
      _
    $region55: #{gnn_forward.2} parent=1 // pred_check_branch
      %124 = sbr.rel (0) target = $region57
    $region56: #{gnn_forward.2} parent=1 // pred_region
      _
    $region57: #{gnn_forward.2} parent=1 // pred_fallthru
      _
    // Predicated region
    $region58: #{gnn_forward.2} parent=1 // pred_check
      _
    $region59: #{gnn_forward.2} parent=1 // pred_check_branch
      %126 = sbr.rel (0) target = $region61
    $region60: #{gnn_forward.2} parent=1 // pred_region
      %s128 = ssub.s32 16384, 16384
      %129 = vsyncadd [#allocation14], %s128
      %s130 = sshll.u32 [#allocation15], 4
      %s131 = int_to_ptr.vmem [resolvable:$true] %s130
      %136 = dma.hbm_to_vmem [thread:$0]  %s14, 16384, %s131, [#allocation14], 512, 512, 32
    $region61: #{gnn_forward.2} parent=1 // pred_fallthru
      _
    // Predicated region
    $region62: #{gnn_forward.2} parent=1 // pred_check
      _
    $region63: #{gnn_forward.2} parent=1 // pred_check_branch
      %138 = sbr.rel (0) target = $region65
    $region64: #{gnn_forward.2} parent=1 // pred_region
      %s140 = ssub.s32 64, 64
      %141 = vsyncadd [#allocation17], %s140
      %s143 = sshll.u32 [#allocation16], 4
      %s144 = int_to_ptr.vmem [resolvable:$true] %s143
      %146 = dma.hbm_to_vmem [thread:$0]  %s15, 64, %s144, [#allocation17]
    $region65: #{gnn_forward.2} parent=1 // pred_fallthru
      _
    // Predicated region
    $region66: #{gnn_forward.2} parent=1 // pred_check
      _
    $region67: #{gnn_forward.2} parent=1 // pred_check_branch
      %148 = sbr.rel (0) target = $region69
    $region68: #{gnn_forward.2} parent=1 // pred_region
      %149 = dma.done [#allocation3], 128
    $region69: #{gnn_forward.2} parent=1 // pred_fallthru
      _
    // Predicated region
    $region70: #{gnn_forward.2} parent=1 // pred_check
      _
    $region71: #{gnn_forward.2} parent=1 // pred_check_branch
      %151 = sbr.rel (0) target = $region73
    $region72: #{gnn_forward.2} parent=1 // pred_region
      %152 = dma.done [#allocation5], 16
    $region73: #{gnn_forward.2} parent=1 // pred_fallthru
      _
    // Predicated region
    $region74: #{gnn_forward.2} parent=1 // pred_check
      _
    $region75: #{gnn_forward.2} parent=1 // pred_check_branch
      %154 = sbr.rel (0) target = $region77
    $region76: #{gnn_forward.2} parent=1 // pred_region
      %155 = dma.done [#allocation5], 2048
    $region77: #{gnn_forward.2} parent=1 // pred_fallthru
      _
    // Predicated region
    $region78: #{gnn_forward.2} parent=1 // pred_check
      _
    $region79: #{gnn_forward.2} parent=1 // pred_check_branch
      %157 = sbr.rel (0) target = $region81
    $region80: #{gnn_forward.2} parent=1 // pred_region
      %158 = dma.done [#allocation8], 16
    $region81: #{gnn_forward.2} parent=1 // pred_fallthru
      _
    // Predicated region
    $region82: #{gnn_forward.2} parent=1 // pred_check
      _
    $region83: #{gnn_forward.2} parent=1 // pred_check_branch
      %160 = sbr.rel (0) target = $region85
    $region84: #{gnn_forward.2} parent=1 // pred_region
      %161 = dma.done [#allocation8], 2048
    $region85: #{gnn_forward.2} parent=1 // pred_fallthru
      _
    // Predicated region
    $region86: #{gnn_forward.2} parent=1 // pred_check
      _
    $region87: #{gnn_forward.2} parent=1 // pred_check_branch
      %163 = sbr.rel (0) target = $region89
    $region88: #{gnn_forward.2} parent=1 // pred_region
      %164 = dma.done [#allocation11], 16
    $region89: #{gnn_forward.2} parent=1 // pred_fallthru
      _
    // Predicated region
    $region90: #{gnn_forward.2} parent=1 // pred_check
      _
    $region91: #{gnn_forward.2} parent=1 // pred_check_branch
      %166 = sbr.rel (0) target = $region93
    $region92: #{gnn_forward.2} parent=1 // pred_region
      %167 = dma.done [#allocation11], 2048
    $region93: #{gnn_forward.2} parent=1 // pred_fallthru
      _
    // Predicated region
    $region94: #{gnn_forward.2} parent=1 // pred_check
      _
    $region95: #{gnn_forward.2} parent=1 // pred_check_branch
      %169 = sbr.rel (0) target = $region97
    $region96: #{gnn_forward.2} parent=1 // pred_region
      %170 = dma.done [#allocation14], 16
    $region97: #{gnn_forward.2} parent=1 // pred_fallthru
      _
    // Predicated region
    $region98: #{gnn_forward.2} parent=1 // pred_check
      _
    $region99: #{gnn_forward.2} parent=1 // pred_check_branch
      %172 = sbr.rel (0) target = $region101
    $region100: #{gnn_forward.2} parent=1 // pred_region
      %173 = dma.done [#allocation14], 16384
    $region101: #{gnn_forward.2} parent=1 // pred_fallthru
      _
    // Predicated region
    $region102: #{gnn_forward.2} parent=1 // pred_check
      _
    $region103: #{gnn_forward.2} parent=1 // pred_check_branch
      %175 = sbr.rel (0) target = $region105
    $region104: #{gnn_forward.2} parent=1 // pred_region
      %176 = dma.done [#allocation17], 64
    $region105: #{gnn_forward.2} parent=1 // pred_fallthru
      _
    %v177 = vld [vmem:[%s0] sm:$0xff]
    %v178 = vld [vmem:[%s0 + $0x8] sm:$0xff]
    %v179 = vld [vmem:[%s1] sm:$0xff]
    %v180 = vld [vmem:[%s1 + $0x8] sm:$0xff]
    %v181 = vld [vmem:[#allocation2] sm:$0xff]
    %vm182 = vcmask 64512
    %v184 = vsel %vm182, %v179, 0
    %v187 = vsel %vm182, %v180, 0
    %189 = vmatprep.subr.mxu0 0.0
    %190 = vmatpush1.msra.mxu0 0.0
    %191 = vmatprep.subr.mxu0 0.0
    %192 = vmatpush1.msra.mxu0 0.0
    %193 = vmatprep.subr.mxu0 0.0
    %194 = vmatpush1.msra.mxu0 0.0
    %195 = vmatprep.subr.mxu0 0.0
    %196 = vmatpush1.msra.mxu0 0.0
    %197 = vmatprep.subr.mxu0 0.0
    %198 = vmatpush1.msra.mxu0 0.0
    %199 = vmatprep.subr.mxu0 0.0
    %200 = vmatpush1.msra.mxu0 0.0
    %201 = vmatprep.subr.mxu0 0.0
    %202 = vmatpush1.msra.mxu0 0.0
    %203 = vmatprep.subr.mxu0 0.0
    %204 = vmatpush1.msra.mxu0 0.0
    %205 = vmatprep.subr.mxu0 0.0
    %206 = vmatpush1.msra.mxu0 0.0
    %207 = vmatprep.subr.mxu0 0.0
    %208 = vmatpush1.msra.mxu0 0.0
    %209 = vmatprep.subr.mxu0 0.0
    %210 = vmatpush1.msra.mxu0 0.0
    %211 = vmatprep.subr.mxu0 0.0
    %212 = vmatpush1.msra.mxu0 0.0
    %213 = vmatprep.subr.mxu0 0.0
    %214 = vmatpush1.msra.mxu0 0.0
    %215 = vmatprep.subr.mxu0 0.0
    %216 = vmatpush1.msra.mxu0 0.0
    %217 = vmatprep.subr.mxu0 0.0
    %218 = vmatpush1.msra.mxu0 0.0
    %219 = vmatprep.subr.mxu0 0.0
    %220 = vmatpush1.msra.mxu0 %v181
    %221 = vmatprep.subr.mxu0 0.0
    %222 = vmatpush2.msra.mxu0 0.0
    %223 = vmatprep.subr.mxu0 0.0
    %224 = vmatpush2.msra.mxu0 0.0
    %225 = vmatprep.subr.mxu0 0.0
    %226 = vmatpush2.msra.mxu0 0.0
    %227 = vmatprep.subr.mxu0 0.0
    %228 = vmatpush2.msra.mxu0 0.0
    %229 = vmatprep.subr.mxu0 0.0
    %230 = vmatpush2.msra.mxu0 0.0
    %231 = vmatprep.subr.mxu0 0.0
    %232 = vmatpush2.msra.mxu0 0.0
    %233 = vmatprep.subr.mxu0 0.0
    %234 = vmatpush2.msra.mxu0 0.0
    %235 = vmatprep.subr.mxu0 0.0
    %236 = vmatpush2.msra.mxu0 0.0
    %237 = vmatprep.subr.mxu0 0.0
    %238 = vmatpush2.msra.mxu0 0.0
    %239 = vmatprep.subr.mxu0 0.0
    %240 = vmatpush2.msra.mxu0 0.0
    %241 = vmatprep.subr.mxu0 0.0
    %242 = vmatpush2.msra.mxu0 0.0
    %243 = vmatprep.subr.mxu0 0.0
    %244 = vmatpush2.msra.mxu0 0.0
    %245 = vmatprep.subr.mxu0 0.0
    %246 = vmatpush2.msra.mxu0 0.0
    %247 = vmatprep.subr.mxu0 0.0
    %248 = vmatpush2.msra.mxu0 0.0
    %249 = vmatprep.subr.mxu0 0.0
    %250 = vmatpush2.msra.mxu0 0.0
    %251 = vmatprep.subr.mxu0 0.0
    %252 = vmatpush2.msra.mxu0 0.0
    %253 = vmatprep.mubr.f32.mxu0 0.0
    %254 = vmatmul.mubr.f32.gmra.mxu0 %v184
    %v255 = vpop.f32.mrf.mxu0
    %v256 = vadd.f32 0.0, %v255
    %v257 = vpop.f32.mrf.mxu0
    %258 = vmatprep.mubr.f32.mxu0 0.0
    %259 = vmatmul.mubr.f32.gmra.mxu0 %v187
    %v260 = vpop.f32.mrf.mxu0
    %v261 = vadd.f32 0.0, %v260
    %v262 = vpop.f32.mrf.mxu0
    %263 = vdwg.mxu0
    %v264 = vld [vmem:[#allocation4] sm:$0x1]
    %v266 = vlaneseq
    %v267 = vshrl.u32 %v266, 7
    %v268 = vsub.s32 0, %v267
    %v269 = vrot.slane %v264, %v268
    %vm271 = vcmask 130048
    %v273 = vsel %vm271, %v177, 0
    %v276 = vsel %vm271, %v178, 0
    %278 = vmatprep.subr.mxu0 0.0
    %279 = vmatpush1.msra.mxu0 0.0
    %280 = vmatprep.subr.mxu0 0.0
    %281 = vmatpush1.msra.mxu0 0.0
    %282 = vmatprep.subr.mxu0 0.0
    %283 = vmatpush1.msra.mxu0 0.0
    %284 = vmatprep.subr.mxu0 0.0
    %285 = vmatpush1.msra.mxu0 0.0
    %286 = vmatprep.subr.mxu0 0.0
    %287 = vmatpush1.msra.mxu0 0.0
    %288 = vmatprep.subr.mxu0 0.0
    %289 = vmatpush1.msra.mxu0 0.0
    %290 = vmatprep.subr.mxu0 0.0
    %291 = vmatpush1.msra.mxu0 0.0
    %292 = vmatprep.subr.mxu0 0.0
    %293 = vmatpush1.msra.mxu0 0.0
    %294 = vmatprep.subr.mxu0 0.0
    %295 = vmatpush1.msra.mxu0 0.0
    %296 = vmatprep.subr.mxu0 0.0
    %297 = vmatpush1.msra.mxu0 0.0
    %298 = vmatprep.subr.mxu0 0.0
    %299 = vmatpush1.msra.mxu0 0.0
    %300 = vmatprep.subr.mxu0 0.0
    %301 = vmatpush1.msra.mxu0 0.0
    %302 = vmatprep.subr.mxu0 0.0
    %303 = vmatpush1.msra.mxu0 0.0
    %304 = vmatprep.subr.mxu0 0.0
    %305 = vmatpush1.msra.mxu0 0.0
    %306 = vmatprep.subr.mxu0 0.0
    %307 = vmatpush1.msra.mxu0 %v261
    %308 = vmatprep.subr.mxu0 0.0
    %309 = vmatpush1.msra.mxu0 %v256
    %310 = vmatprep.subr.mxu0 0.0
    %311 = vmatpush2.msra.mxu0 0.0
    %312 = vmatprep.subr.mxu0 0.0
    %313 = vmatpush2.msra.mxu0 0.0
    %314 = vmatprep.subr.mxu0 0.0
    %315 = vmatpush2.msra.mxu0 0.0
    %316 = vmatprep.subr.mxu0 0.0
    %317 = vmatpush2.msra.mxu0 0.0
    %318 = vmatprep.subr.mxu0 0.0
    %319 = vmatpush2.msra.mxu0 0.0
    %320 = vmatprep.subr.mxu0 0.0
    %321 = vmatpush2.msra.mxu0 0.0
    %322 = vmatprep.subr.mxu0 0.0
    %323 = vmatpush2.msra.mxu0 0.0
    %324 = vmatprep.subr.mxu0 0.0
    %325 = vmatpush2.msra.mxu0 0.0
    %326 = vmatprep.subr.mxu0 0.0
    %327 = vmatpush2.msra.mxu0 0.0
    %328 = vmatprep.subr.mxu0 0.0
    %329 = vmatpush2.msra.mxu0 0.0
    %330 = vmatprep.subr.mxu0 0.0
    %331 = vmatpush2.msra.mxu0 0.0
    %332 = vmatprep.subr.mxu0 0.0
    %333 = vmatpush2.msra.mxu0 0.0
    %334 = vmatprep.subr.mxu0 0.0
    %335 = vmatpush2.msra.mxu0 0.0
    %336 = vmatprep.subr.mxu0 0.0
    %337 = vmatpush2.msra.mxu0 0.0
    %338 = vmatprep.subr.mxu0 0.0
    %339 = vmatpush2.msra.mxu0 0.0
    %340 = vmatprep.subr.mxu0 0.0
    %341 = vmatpush2.msra.mxu0 0.0
    %342 = vmatprep.mubr.f32.mxu0 0.0
    %343 = vmatmul.mubr.f32.gmra.mxu0 %v273
    %v344 = vpop.f32.mrf.mxu0
    %v345 = vadd.f32 %v269, %v344
    %v346 = vpop.f32.mrf.mxu0
    %347 = vmatprep.mubr.f32.mxu0 0.0
    %348 = vmatmul.mubr.f32.gmra.mxu0 %v276
    %v349 = vpop.f32.mrf.mxu0
    %v350 = vadd.f32 %v269, %v349
    %v351 = vpop.f32.mrf.mxu0
    %352 = vdwg.mxu0
    %v353 = vtanh.pop %v345
    %v354 = vtanh.pop %v350
    %v355 = vld [vmem:[#allocation6] sm:$0xff]
    %v356 = vld [vmem:[#allocation6 + $0x8] sm:$0xff]
    %v357 = vld [vmem:[#allocation6 + $0x10] sm:$0xff]
    %v358 = vld [vmem:[#allocation6 + $0x18] sm:$0xff]
    %v359 = vld [vmem:[#allocation6 + $0x20] sm:$0xff]
    %v360 = vld [vmem:[#allocation6 + $0x28] sm:$0xff]
    %v361 = vld [vmem:[#allocation6 + $0x30] sm:$0xff]
    %v362 = vld [vmem:[#allocation6 + $0x38] sm:$0xff]
    %v363 = vld [vmem:[#allocation6 + $0x40] sm:$0xff]
    %v364 = vld [vmem:[#allocation6 + $0x48] sm:$0xff]
    %v365 = vld [vmem:[#allocation6 + $0x50] sm:$0xff]
    %v366 = vld [vmem:[#allocation6 + $0x58] sm:$0xff]
    %v367 = vld [vmem:[#allocation6 + $0x60] sm:$0xff]
    %v368 = vld [vmem:[#allocation6 + $0x68] sm:$0xff]
    %v369 = vld [vmem:[#allocation6 + $0x70] sm:$0xff]
    %v370 = vld [vmem:[#allocation6 + $0x78] sm:$0xff]
    %371 = vmatprep.subr.mxu0 0.0
    %372 = vmatpush1.msra.mxu0 %v370
    %373 = vmatprep.subr.mxu0 0.0
    %374 = vmatpush1.msra.mxu0 %v369
    %375 = vmatprep.subr.mxu0 0.0
    %376 = vmatpush1.msra.mxu0 %v368
    %377 = vmatprep.subr.mxu0 0.0
    %378 = vmatpush1.msra.mxu0 %v367
    %379 = vmatprep.subr.mxu0 0.0
    %380 = vmatpush1.msra.mxu0 %v366
    %381 = vmatprep.subr.mxu0 0.0
    %382 = vmatpush1.msra.mxu0 %v365
    %383 = vmatprep.subr.mxu0 0.0
    %384 = vmatpush1.msra.mxu0 %v364
    %385 = vmatprep.subr.mxu0 0.0
    %386 = vmatpush1.msra.mxu0 %v363
    %387 = vmatprep.subr.mxu0 0.0
    %388 = vmatpush1.msra.mxu0 %v362
    %389 = vmatprep.subr.mxu0 0.0
    %390 = vmatpush1.msra.mxu0 %v361
    %391 = vmatprep.subr.mxu0 0.0
    %392 = vmatpush1.msra.mxu0 %v360
    %393 = vmatprep.subr.mxu0 0.0
    %394 = vmatpush1.msra.mxu0 %v359
    %395 = vmatprep.subr.mxu0 0.0
    %396 = vmatpush1.msra.mxu0 %v358
    %397 = vmatprep.subr.mxu0 0.0
    %398 = vmatpush1.msra.mxu0 %v357
    %399 = vmatprep.subr.mxu0 0.0
    %400 = vmatpush1.msra.mxu0 %v356
    %401 = vmatprep.subr.mxu0 0.0
    %402 = vmatpush1.msra.mxu0 %v355
    %403 = vmatprep.subr.mxu0 0.0
    %404 = vmatpush2.msra.mxu0 0.0
    %405 = vmatprep.subr.mxu0 0.0
    %406 = vmatpush2.msra.mxu0 0.0
    %407 = vmatprep.subr.mxu0 0.0
    %408 = vmatpush2.msra.mxu0 0.0
    %409 = vmatprep.subr.mxu0 0.0
    %410 = vmatpush2.msra.mxu0 0.0
    %411 = vmatprep.subr.mxu0 0.0
    %412 = vmatpush2.msra.mxu0 0.0
    %413 = vmatprep.subr.mxu0 0.0
    %414 = vmatpush2.msra.mxu0 0.0
    %415 = vmatprep.subr.mxu0 0.0
    %416 = vmatpush2.msra.mxu0 0.0
    %417 = vmatprep.subr.mxu0 0.0
    %418 = vmatpush2.msra.mxu0 0.0
    %419 = vmatprep.subr.mxu0 0.0
    %420 = vmatpush2.msra.mxu0 0.0
    %421 = vmatprep.subr.mxu0 0.0
    %422 = vmatpush2.msra.mxu0 0.0
    %423 = vmatprep.subr.mxu0 0.0
    %424 = vmatpush2.msra.mxu0 0.0
    %425 = vmatprep.subr.mxu0 0.0
    %426 = vmatpush2.msra.mxu0 0.0
    %427 = vmatprep.subr.mxu0 0.0
    %428 = vmatpush2.msra.mxu0 0.0
    %429 = vmatprep.subr.mxu0 0.0
    %430 = vmatpush2.msra.mxu0 0.0
    %431 = vmatprep.subr.mxu0 0.0
    %432 = vmatpush2.msra.mxu0 0.0
    %433 = vmatprep.subr.mxu0 0.0
    %434 = vmatpush2.msra.mxu0 0.0
    %435 = vmatprep.mubr.f32.mxu0 0.0
    %436 = vmatmul.mubr.f32.gmra.mxu0 %v353
    %v437 = vpop.f32.mrf.mxu0
    %v438 = vadd.f32 0.0, %v437
    %v439 = vpop.f32.mrf.mxu0
    %440 = vmatprep.mubr.f32.mxu0 0.0
    %441 = vmatmul.mubr.f32.gmra.mxu0 %v354
    %v442 = vpop.f32.mrf.mxu0
    %v443 = vadd.f32 0.0, %v442
    %v444 = vpop.f32.mrf.mxu0
    %445 = vdwg.mxu0
    %v446 = vld [vmem:[#allocation7] sm:$0x1]
    %v448 = vlaneseq
    %v449 = vshrl.u32 %v448, 7
    %v450 = vsub.s32 0, %v449
    %v451 = vrot.slane %v446, %v450
    %453 = vmatprep.subr.mxu0 0.0
    %454 = vmatpush1.msra.mxu0 0.0
    %455 = vmatprep.subr.mxu0 0.0
    %456 = vmatpush1.msra.mxu0 0.0
    %457 = vmatprep.subr.mxu0 0.0
    %458 = vmatpush1.msra.mxu0 0.0
    %459 = vmatprep.subr.mxu0 0.0
    %460 = vmatpush1.msra.mxu0 0.0
    %461 = vmatprep.subr.mxu0 0.0
    %462 = vmatpush1.msra.mxu0 0.0
    %463 = vmatprep.subr.mxu0 0.0
    %464 = vmatpush1.msra.mxu0 0.0
    %465 = vmatprep.subr.mxu0 0.0
    %466 = vmatpush1.msra.mxu0 0.0
    %467 = vmatprep.subr.mxu0 0.0
    %468 = vmatpush1.msra.mxu0 0.0
    %469 = vmatprep.subr.mxu0 0.0
    %470 = vmatpush1.msra.mxu0 0.0
    %471 = vmatprep.subr.mxu0 0.0
    %472 = vmatpush1.msra.mxu0 0.0
    %473 = vmatprep.subr.mxu0 0.0
    %474 = vmatpush1.msra.mxu0 0.0
    %475 = vmatprep.subr.mxu0 0.0
    %476 = vmatpush1.msra.mxu0 0.0
    %477 = vmatprep.subr.mxu0 0.0
    %478 = vmatpush1.msra.mxu0 0.0
    %479 = vmatprep.subr.mxu0 0.0
    %480 = vmatpush1.msra.mxu0 0.0
    %481 = vmatprep.subr.mxu0 0.0
    %482 = vmatpush1.msra.mxu0 %v443
    %483 = vmatprep.subr.mxu0 0.0
    %484 = vmatpush1.msra.mxu0 %v438
    %485 = vmatprep.subr.mxu0 0.0
    %486 = vmatpush2.msra.mxu0 0.0
    %487 = vmatprep.subr.mxu0 0.0
    %488 = vmatpush2.msra.mxu0 0.0
    %489 = vmatprep.subr.mxu0 0.0
    %490 = vmatpush2.msra.mxu0 0.0
    %491 = vmatprep.subr.mxu0 0.0
    %492 = vmatpush2.msra.mxu0 0.0
    %493 = vmatprep.subr.mxu0 0.0
    %494 = vmatpush2.msra.mxu0 0.0
    %495 = vmatprep.subr.mxu0 0.0
    %496 = vmatpush2.msra.mxu0 0.0
    %497 = vmatprep.subr.mxu0 0.0
    %498 = vmatpush2.msra.mxu0 0.0
    %499 = vmatprep.subr.mxu0 0.0
    %500 = vmatpush2.msra.mxu0 0.0
    %501 = vmatprep.subr.mxu0 0.0
    %502 = vmatpush2.msra.mxu0 0.0
    %503 = vmatprep.subr.mxu0 0.0
    %504 = vmatpush2.msra.mxu0 0.0
    %505 = vmatprep.subr.mxu0 0.0
    %506 = vmatpush2.msra.mxu0 0.0
    %507 = vmatprep.subr.mxu0 0.0
    %508 = vmatpush2.msra.mxu0 0.0
    %509 = vmatprep.subr.mxu0 0.0
    %510 = vmatpush2.msra.mxu0 0.0
    %511 = vmatprep.subr.mxu0 0.0
    %512 = vmatpush2.msra.mxu0 0.0
    %513 = vmatprep.subr.mxu0 0.0
    %514 = vmatpush2.msra.mxu0 0.0
    %515 = vmatprep.subr.mxu0 0.0
    %516 = vmatpush2.msra.mxu0 0.0
    %517 = vmatprep.mubr.f32.mxu0 0.0
    %518 = vmatmul.mubr.f32.gmra.mxu0 %v273
    %v519 = vpop.f32.mrf.mxu0
    %v520 = vadd.f32 %v451, %v519
    %v521 = vpop.f32.mrf.mxu0
    %522 = vmatprep.mubr.f32.mxu0 0.0
    %523 = vmatmul.mubr.f32.gmra.mxu0 %v276
    %v524 = vpop.f32.mrf.mxu0
    %v525 = vadd.f32 %v451, %v524
    %v526 = vpop.f32.mrf.mxu0
    %527 = vdwg.mxu0
    %v528 = vtanh.pop %v520
    %v529 = vtanh.pop %v525
    %v530 = vld [vmem:[#allocation9] sm:$0xff]
    %v531 = vld [vmem:[#allocation9 + $0x8] sm:$0xff]
    %v532 = vld [vmem:[#allocation9 + $0x10] sm:$0xff]
    %v533 = vld [vmem:[#allocation9 + $0x18] sm:$0xff]
    %v534 = vld [vmem:[#allocation9 + $0x20] sm:$0xff]
    %v535 = vld [vmem:[#allocation9 + $0x28] sm:$0xff]
    %v536 = vld [vmem:[#allocation9 + $0x30] sm:$0xff]
    %v537 = vld [vmem:[#allocation9 + $0x38] sm:$0xff]
    %v538 = vld [vmem:[#allocation9 + $0x40] sm:$0xff]
    %v539 = vld [vmem:[#allocation9 + $0x48] sm:$0xff]
    %v540 = vld [vmem:[#allocation9 + $0x50] sm:$0xff]
    %v541 = vld [vmem:[#allocation9 + $0x58] sm:$0xff]
    %v542 = vld [vmem:[#allocation9 + $0x60] sm:$0xff]
    %v543 = vld [vmem:[#allocation9 + $0x68] sm:$0xff]
    %v544 = vld [vmem:[#allocation9 + $0x70] sm:$0xff]
    %v545 = vld [vmem:[#allocation9 + $0x78] sm:$0xff]
    %546 = vmatprep.subr.mxu0 0.0
    %547 = vmatpush1.msra.mxu0 %v545
    %548 = vmatprep.subr.mxu0 0.0
    %549 = vmatpush1.msra.mxu0 %v544
    %550 = vmatprep.subr.mxu0 0.0
    %551 = vmatpush1.msra.mxu0 %v543
    %552 = vmatprep.subr.mxu0 0.0
    %553 = vmatpush1.msra.mxu0 %v542
    %554 = vmatprep.subr.mxu0 0.0
    %555 = vmatpush1.msra.mxu0 %v541
    %556 = vmatprep.subr.mxu0 0.0
    %557 = vmatpush1.msra.mxu0 %v540
    %558 = vmatprep.subr.mxu0 0.0
    %559 = vmatpush1.msra.mxu0 %v539
    %560 = vmatprep.subr.mxu0 0.0
    %561 = vmatpush1.msra.mxu0 %v538
    %562 = vmatprep.subr.mxu0 0.0
    %563 = vmatpush1.msra.mxu0 %v537
    %564 = vmatprep.subr.mxu0 0.0
    %565 = vmatpush1.msra.mxu0 %v536
    %566 = vmatprep.subr.mxu0 0.0
    %567 = vmatpush1.msra.mxu0 %v535
    %568 = vmatprep.subr.mxu0 0.0
    %569 = vmatpush1.msra.mxu0 %v534
    %570 = vmatprep.subr.mxu0 0.0
    %571 = vmatpush1.msra.mxu0 %v533
    %572 = vmatprep.subr.mxu0 0.0
    %573 = vmatpush1.msra.mxu0 %v532
    %574 = vmatprep.subr.mxu0 0.0
    %575 = vmatpush1.msra.mxu0 %v531
    %576 = vmatprep.subr.mxu0 0.0
    %577 = vmatpush1.msra.mxu0 %v530
    %578 = vmatprep.subr.mxu0 0.0
    %579 = vmatpush2.msra.mxu0 0.0
    %580 = vmatprep.subr.mxu0 0.0
    %581 = vmatpush2.msra.mxu0 0.0
    %582 = vmatprep.subr.mxu0 0.0
    %583 = vmatpush2.msra.mxu0 0.0
    %584 = vmatprep.subr.mxu0 0.0
    %585 = vmatpush2.msra.mxu0 0.0
    %586 = vmatprep.subr.mxu0 0.0
    %587 = vmatpush2.msra.mxu0 0.0
    %588 = vmatprep.subr.mxu0 0.0
    %589 = vmatpush2.msra.mxu0 0.0
    %590 = vmatprep.subr.mxu0 0.0
    %591 = vmatpush2.msra.mxu0 0.0
    %592 = vmatprep.subr.mxu0 0.0
    %593 = vmatpush2.msra.mxu0 0.0
    %594 = vmatprep.subr.mxu0 0.0
    %595 = vmatpush2.msra.mxu0 0.0
    %596 = vmatprep.subr.mxu0 0.0
    %597 = vmatpush2.msra.mxu0 0.0
    %598 = vmatprep.subr.mxu0 0.0
    %599 = vmatpush2.msra.mxu0 0.0
    %600 = vmatprep.subr.mxu0 0.0
    %601 = vmatpush2.msra.mxu0 0.0
    %602 = vmatprep.subr.mxu0 0.0
    %603 = vmatpush2.msra.mxu0 0.0
    %604 = vmatprep.subr.mxu0 0.0
    %605 = vmatpush2.msra.mxu0 0.0
    %606 = vmatprep.subr.mxu0 0.0
    %607 = vmatpush2.msra.mxu0 0.0
    %608 = vmatprep.subr.mxu0 0.0
    %609 = vmatpush2.msra.mxu0 0.0
    %610 = vmatprep.mubr.f32.mxu0 0.0
    %611 = vmatmul.mubr.f32.gmra.mxu0 %v528
    %v612 = vpop.f32.mrf.mxu0
    %v613 = vadd.f32 0.0, %v612
    %v614 = vpop.f32.mrf.mxu0
    %615 = vmatprep.mubr.f32.mxu0 0.0
    %616 = vmatmul.mubr.f32.gmra.mxu0 %v529
    %v617 = vpop.f32.mrf.mxu0
    %v618 = vadd.f32 0.0, %v617
    %v619 = vpop.f32.mrf.mxu0
    %620 = vdwg.mxu0
    %v621 = vld [vmem:[#allocation10] sm:$0x1]
    %v623 = vlaneseq
    %v624 = vshrl.u32 %v623, 7
    %v625 = vsub.s32 0, %v624
    %v626 = vrot.slane %v621, %v625
    %628 = vmatprep.subr.mxu0 0.0
    %629 = vmatpush1.msra.mxu0 0.0
    %630 = vmatprep.subr.mxu0 0.0
    %631 = vmatpush1.msra.mxu0 0.0
    %632 = vmatprep.subr.mxu0 0.0
    %633 = vmatpush1.msra.mxu0 0.0
    %634 = vmatprep.subr.mxu0 0.0
    %635 = vmatpush1.msra.mxu0 0.0
    %636 = vmatprep.subr.mxu0 0.0
    %637 = vmatpush1.msra.mxu0 0.0
    %638 = vmatprep.subr.mxu0 0.0
    %639 = vmatpush1.msra.mxu0 0.0
    %640 = vmatprep.subr.mxu0 0.0
    %641 = vmatpush1.msra.mxu0 0.0
    %642 = vmatprep.subr.mxu0 0.0
    %643 = vmatpush1.msra.mxu0 0.0
    %644 = vmatprep.subr.mxu0 0.0
    %645 = vmatpush1.msra.mxu0 0.0
    %646 = vmatprep.subr.mxu0 0.0
    %647 = vmatpush1.msra.mxu0 0.0
    %648 = vmatprep.subr.mxu0 0.0
    %649 = vmatpush1.msra.mxu0 0.0
    %650 = vmatprep.subr.mxu0 0.0
    %651 = vmatpush1.msra.mxu0 0.0
    %652 = vmatprep.subr.mxu0 0.0
    %653 = vmatpush1.msra.mxu0 0.0
    %654 = vmatprep.subr.mxu0 0.0
    %655 = vmatpush1.msra.mxu0 0.0
    %656 = vmatprep.subr.mxu0 0.0
    %657 = vmatpush1.msra.mxu0 %v618
    %658 = vmatprep.subr.mxu0 0.0
    %659 = vmatpush1.msra.mxu0 %v613
    %660 = vmatprep.subr.mxu0 0.0
    %661 = vmatpush2.msra.mxu0 0.0
    %662 = vmatprep.subr.mxu0 0.0
    %663 = vmatpush2.msra.mxu0 0.0
    %664 = vmatprep.subr.mxu0 0.0
    %665 = vmatpush2.msra.mxu0 0.0
    %666 = vmatprep.subr.mxu0 0.0
    %667 = vmatpush2.msra.mxu0 0.0
    %668 = vmatprep.subr.mxu0 0.0
    %669 = vmatpush2.msra.mxu0 0.0
    %670 = vmatprep.subr.mxu0 0.0
    %671 = vmatpush2.msra.mxu0 0.0
    %672 = vmatprep.subr.mxu0 0.0
    %673 = vmatpush2.msra.mxu0 0.0
    %674 = vmatprep.subr.mxu0 0.0
    %675 = vmatpush2.msra.mxu0 0.0
    %676 = vmatprep.subr.mxu0 0.0
    %677 = vmatpush2.msra.mxu0 0.0
    %678 = vmatprep.subr.mxu0 0.0
    %679 = vmatpush2.msra.mxu0 0.0
    %680 = vmatprep.subr.mxu0 0.0
    %681 = vmatpush2.msra.mxu0 0.0
    %682 = vmatprep.subr.mxu0 0.0
    %683 = vmatpush2.msra.mxu0 0.0
    %684 = vmatprep.subr.mxu0 0.0
    %685 = vmatpush2.msra.mxu0 0.0
    %686 = vmatprep.subr.mxu0 0.0
    %687 = vmatpush2.msra.mxu0 0.0
    %688 = vmatprep.subr.mxu0 0.0
    %689 = vmatpush2.msra.mxu0 0.0
    %690 = vmatprep.subr.mxu0 0.0
    %691 = vmatpush2.msra.mxu0 0.0
    %692 = vmatprep.mubr.f32.mxu0 0.0
    %693 = vmatmul.mubr.f32.gmra.mxu0 %v273
    %v694 = vpop.f32.mrf.mxu0
    %v695 = vadd.f32 %v626, %v694
    %v696 = vpop.f32.mrf.mxu0
    %697 = vmatprep.mubr.f32.mxu0 0.0
    %698 = vmatmul.mubr.f32.gmra.mxu0 %v276
    %v699 = vpop.f32.mrf.mxu0
    %v700 = vadd.f32 %v626, %v699
    %v701 = vpop.f32.mrf.mxu0
    %702 = vdwg.mxu0
    %v703 = vtanh.pop %v695
    %v704 = vtanh.pop %v700
    %v705 = vld [vmem:[#allocation12] sm:$0xff]
    %v706 = vld [vmem:[#allocation12 + $0x8] sm:$0xff]
    %v707 = vld [vmem:[#allocation12 + $0x10] sm:$0xff]
    %v708 = vld [vmem:[#allocation12 + $0x18] sm:$0xff]
    %v709 = vld [vmem:[#allocation12 + $0x20] sm:$0xff]
    %v710 = vld [vmem:[#allocation12 + $0x28] sm:$0xff]
    %v711 = vld [vmem:[#allocation12 + $0x30] sm:$0xff]
    %v712 = vld [vmem:[#allocation12 + $0x38] sm:$0xff]
    %v713 = vld [vmem:[#allocation12 + $0x40] sm:$0xff]
    %v714 = vld [vmem:[#allocation12 + $0x48] sm:$0xff]
    %v715 = vld [vmem:[#allocation12 + $0x50] sm:$0xff]
    %v716 = vld [vmem:[#allocation12 + $0x58] sm:$0xff]
    %v717 = vld [vmem:[#allocation12 + $0x60] sm:$0xff]
    %v718 = vld [vmem:[#allocation12 + $0x68] sm:$0xff]
    %v719 = vld [vmem:[#allocation12 + $0x70] sm:$0xff]
    %v720 = vld [vmem:[#allocation12 + $0x78] sm:$0xff]
    %721 = vmatprep.subr.mxu0 0.0
    %722 = vmatpush1.msra.mxu0 %v720
    %723 = vmatprep.subr.mxu0 0.0
    %724 = vmatpush1.msra.mxu0 %v719
    %725 = vmatprep.subr.mxu0 0.0
    %726 = vmatpush1.msra.mxu0 %v718
    %727 = vmatprep.subr.mxu0 0.0
    %728 = vmatpush1.msra.mxu0 %v717
    %729 = vmatprep.subr.mxu0 0.0
    %730 = vmatpush1.msra.mxu0 %v716
    %731 = vmatprep.subr.mxu0 0.0
    %732 = vmatpush1.msra.mxu0 %v715
    %733 = vmatprep.subr.mxu0 0.0
    %734 = vmatpush1.msra.mxu0 %v714
    %735 = vmatprep.subr.mxu0 0.0
    %736 = vmatpush1.msra.mxu0 %v713
    %737 = vmatprep.subr.mxu0 0.0
    %738 = vmatpush1.msra.mxu0 %v712
    %739 = vmatprep.subr.mxu0 0.0
    %740 = vmatpush1.msra.mxu0 %v711
    %741 = vmatprep.subr.mxu0 0.0
    %742 = vmatpush1.msra.mxu0 %v710
    %743 = vmatprep.subr.mxu0 0.0
    %744 = vmatpush1.msra.mxu0 %v709
    %745 = vmatprep.subr.mxu0 0.0
    %746 = vmatpush1.msra.mxu0 %v708
    %747 = vmatprep.subr.mxu0 0.0
    %748 = vmatpush1.msra.mxu0 %v707
    %749 = vmatprep.subr.mxu0 0.0
    %750 = vmatpush1.msra.mxu0 %v706
    %751 = vmatprep.subr.mxu0 0.0
    %752 = vmatpush1.msra.mxu0 %v705
    %753 = vmatprep.subr.mxu0 0.0
    %754 = vmatpush2.msra.mxu0 0.0
    %755 = vmatprep.subr.mxu0 0.0
    %756 = vmatpush2.msra.mxu0 0.0
    %757 = vmatprep.subr.mxu0 0.0
    %758 = vmatpush2.msra.mxu0 0.0
    %759 = vmatprep.subr.mxu0 0.0
    %760 = vmatpush2.msra.mxu0 0.0
    %761 = vmatprep.subr.mxu0 0.0
    %762 = vmatpush2.msra.mxu0 0.0
    %763 = vmatprep.subr.mxu0 0.0
    %764 = vmatpush2.msra.mxu0 0.0
    %765 = vmatprep.subr.mxu0 0.0
    %766 = vmatpush2.msra.mxu0 0.0
    %767 = vmatprep.subr.mxu0 0.0
    %768 = vmatpush2.msra.mxu0 0.0
    %769 = vmatprep.subr.mxu0 0.0
    %770 = vmatpush2.msra.mxu0 0.0
    %771 = vmatprep.subr.mxu0 0.0
    %772 = vmatpush2.msra.mxu0 0.0
    %773 = vmatprep.subr.mxu0 0.0
    %774 = vmatpush2.msra.mxu0 0.0
    %775 = vmatprep.subr.mxu0 0.0
    %776 = vmatpush2.msra.mxu0 0.0
    %777 = vmatprep.subr.mxu0 0.0
    %778 = vmatpush2.msra.mxu0 0.0
    %779 = vmatprep.subr.mxu0 0.0
    %780 = vmatpush2.msra.mxu0 0.0
    %781 = vmatprep.subr.mxu0 0.0
    %782 = vmatpush2.msra.mxu0 0.0
    %783 = vmatprep.subr.mxu0 0.0
    %784 = vmatpush2.msra.mxu0 0.0
    %785 = vmatprep.mubr.f32.mxu0 0.0
    %786 = vmatmul.mubr.f32.gmra.mxu0 %v703
    %v787 = vpop.f32.mrf.mxu0
    %v788 = vadd.f32 0.0, %v787
    %v789 = vpop.f32.mrf.mxu0
    %790 = vmatprep.mubr.f32.mxu0 0.0
    %791 = vmatmul.mubr.f32.gmra.mxu0 %v704
    %v792 = vpop.f32.mrf.mxu0
    %v793 = vadd.f32 0.0, %v792
    %v794 = vpop.f32.mrf.mxu0
    %795 = vdwg.mxu0
    %v796 = vld [vmem:[#allocation13] sm:$0x1]
    %v798 = vlaneseq
    %v799 = vshrl.u32 %v798, 7
    %v800 = vsub.s32 0, %v799
    %v801 = vrot.slane %v796, %v800
    %803 = vmatprep.subr.mxu0 0.0
    %804 = vmatpush1.msra.mxu0 0.0
    %805 = vmatprep.subr.mxu0 0.0
    %806 = vmatpush1.msra.mxu0 0.0
    %807 = vmatprep.subr.mxu0 0.0
    %808 = vmatpush1.msra.mxu0 0.0
    %809 = vmatprep.subr.mxu0 0.0
    %810 = vmatpush1.msra.mxu0 0.0
    %811 = vmatprep.subr.mxu0 0.0
    %812 = vmatpush1.msra.mxu0 0.0
    %813 = vmatprep.subr.mxu0 0.0
    %814 = vmatpush1.msra.mxu0 0.0
    %815 = vmatprep.subr.mxu0 0.0
    %816 = vmatpush1.msra.mxu0 0.0
    %817 = vmatprep.subr.mxu0 0.0
    %818 = vmatpush1.msra.mxu0 0.0
    %819 = vmatprep.subr.mxu0 0.0
    %820 = vmatpush1.msra.mxu0 0.0
    %821 = vmatprep.subr.mxu0 0.0
    %822 = vmatpush1.msra.mxu0 0.0
    %823 = vmatprep.subr.mxu0 0.0
    %824 = vmatpush1.msra.mxu0 0.0
    %825 = vmatprep.subr.mxu0 0.0
    %826 = vmatpush1.msra.mxu0 0.0
    %827 = vmatprep.subr.mxu0 0.0
    %828 = vmatpush1.msra.mxu0 0.0
    %829 = vmatprep.subr.mxu0 0.0
    %830 = vmatpush1.msra.mxu0 0.0
    %831 = vmatprep.subr.mxu0 0.0
    %832 = vmatpush1.msra.mxu0 %v793
    %833 = vmatprep.subr.mxu0 0.0
    %834 = vmatpush1.msra.mxu0 %v788
    %835 = vmatprep.subr.mxu0 0.0
    %836 = vmatpush2.msra.mxu0 0.0
    %837 = vmatprep.subr.mxu0 0.0
    %838 = vmatpush2.msra.mxu0 0.0
    %839 = vmatprep.subr.mxu0 0.0
    %840 = vmatpush2.msra.mxu0 0.0
    %841 = vmatprep.subr.mxu0 0.0
    %842 = vmatpush2.msra.mxu0 0.0
    %843 = vmatprep.subr.mxu0 0.0
    %844 = vmatpush2.msra.mxu0 0.0
    %845 = vmatprep.subr.mxu0 0.0
    %846 = vmatpush2.msra.mxu0 0.0
    %847 = vmatprep.subr.mxu0 0.0
    %848 = vmatpush2.msra.mxu0 0.0
    %849 = vmatprep.subr.mxu0 0.0
    %850 = vmatpush2.msra.mxu0 0.0
    %851 = vmatprep.subr.mxu0 0.0
    %852 = vmatpush2.msra.mxu0 0.0
    %853 = vmatprep.subr.mxu0 0.0
    %854 = vmatpush2.msra.mxu0 0.0
    %855 = vmatprep.subr.mxu0 0.0
    %856 = vmatpush2.msra.mxu0 0.0
    %857 = vmatprep.subr.mxu0 0.0
    %858 = vmatpush2.msra.mxu0 0.0
    %859 = vmatprep.subr.mxu0 0.0
    %860 = vmatpush2.msra.mxu0 0.0
    %861 = vmatprep.subr.mxu0 0.0
    %862 = vmatpush2.msra.mxu0 0.0
    %863 = vmatprep.subr.mxu0 0.0
    %864 = vmatpush2.msra.mxu0 0.0
    %865 = vmatprep.subr.mxu0 0.0
    %866 = vmatpush2.msra.mxu0 0.0
    %867 = vmatprep.mubr.f32.mxu0 0.0
    %868 = vmatmul.mubr.f32.gmra.mxu0 %v273
    %v869 = vpop.f32.mrf.mxu0
    %v870 = vadd.f32 %v801, %v869
    %v871 = vpop.f32.mrf.mxu0
    %872 = vmatprep.mubr.f32.mxu0 0.0
    %873 = vmatmul.mubr.f32.gmra.mxu0 %v276
    %v874 = vpop.f32.mrf.mxu0
    %v875 = vadd.f32 %v801, %v874
    %v876 = vpop.f32.mrf.mxu0
    %877 = vdwg.mxu0
    %v878 = vtanh.pop %v870
    %v879 = vtanh.pop %v875
    %v880 = vld [vmem:[%s10] sm:$0xff]
    %v882 = vsel %vm271, %v880, 0
    %884 = vmatprep.subr.mxu0 0.0
    %885 = vmatpush1.msra.mxu0 0.0
    %886 = vmatprep.subr.mxu0 0.0
    %887 = vmatpush1.msra.mxu0 0.0
    %888 = vmatprep.subr.mxu0 0.0
    %889 = vmatpush1.msra.mxu0 0.0
    %890 = vmatprep.subr.mxu0 0.0
    %891 = vmatpush1.msra.mxu0 0.0
    %892 = vmatprep.subr.mxu0 0.0
    %893 = vmatpush1.msra.mxu0 0.0
    %894 = vmatprep.subr.mxu0 0.0
    %895 = vmatpush1.msra.mxu0 0.0
    %896 = vmatprep.subr.mxu0 0.0
    %897 = vmatpush1.msra.mxu0 0.0
    %898 = vmatprep.subr.mxu0 0.0
    %899 = vmatpush1.msra.mxu0 0.0
    %900 = vmatprep.subr.mxu0 0.0
    %901 = vmatpush1.msra.mxu0 0.0
    %902 = vmatprep.subr.mxu0 0.0
    %903 = vmatpush1.msra.mxu0 0.0
    %904 = vmatprep.subr.mxu0 0.0
    %905 = vmatpush1.msra.mxu0 0.0
    %906 = vmatprep.subr.mxu0 0.0
    %907 = vmatpush1.msra.mxu0 0.0
    %908 = vmatprep.subr.mxu0 0.0
    %909 = vmatpush1.msra.mxu0 0.0
    %910 = vmatprep.subr.mxu0 0.0
    %911 = vmatpush1.msra.mxu0 0.0
    %912 = vmatprep.subr.mxu0 0.0
    %913 = vmatpush1.msra.mxu0 %v879
    %914 = vmatprep.subr.mxu0 0.0
    %915 = vmatpush1.msra.mxu0 %v878
    %916 = vmatprep.subr.mxu0 0.0
    %917 = vmatpush2.msra.mxu0 0.0
    %918 = vmatprep.subr.mxu0 0.0
    %919 = vmatpush2.msra.mxu0 0.0
    %920 = vmatprep.subr.mxu0 0.0
    %921 = vmatpush2.msra.mxu0 0.0
    %922 = vmatprep.subr.mxu0 0.0
    %923 = vmatpush2.msra.mxu0 0.0
    %924 = vmatprep.subr.mxu0 0.0
    %925 = vmatpush2.msra.mxu0 0.0
    %926 = vmatprep.subr.mxu0 0.0
    %927 = vmatpush2.msra.mxu0 0.0
    %928 = vmatprep.subr.mxu0 0.0
    %929 = vmatpush2.msra.mxu0 0.0
    %930 = vmatprep.subr.mxu0 0.0
    %931 = vmatpush2.msra.mxu0 0.0
    %932 = vmatprep.subr.mxu0 0.0
    %933 = vmatpush2.msra.mxu0 0.0
    %934 = vmatprep.subr.mxu0 0.0
    %935 = vmatpush2.msra.mxu0 0.0
    %936 = vmatprep.subr.mxu0 0.0
    %937 = vmatpush2.msra.mxu0 0.0
    %938 = vmatprep.subr.mxu0 0.0
    %939 = vmatpush2.msra.mxu0 0.0
    %940 = vmatprep.subr.mxu0 0.0
    %941 = vmatpush2.msra.mxu0 0.0
    %942 = vmatprep.subr.mxu0 0.0
    %943 = vmatpush2.msra.mxu0 0.0
    %944 = vmatprep.subr.mxu0 0.0
    %945 = vmatpush2.msra.mxu0 0.0
    %946 = vmatprep.subr.mxu0 0.0
    %947 = vmatpush2.msra.mxu0 0.0
    %948 = vmatprep.mubr.f32.mxu0 0.0
    %949 = vmatmul.mubr.f32.gmra.mxu0 %v882
    %v950 = vpop.f32.mrf.mxu0
    %v951 = vadd.f32 0.0, %v950
    %v952 = vpop.f32.mrf.mxu0
    %953 = vdwg.mxu0
    %v954 = vld [vmem:[%s12] sm:$0xff]
    %956 = vset.pattern.permute.xlu0 0
    %957 = vperm.xlu0 %956, %v954
    %v958 = vpop.permute.xlu0 %957
    %v960 = vmul.f32 %v951, %v958
    %v961 = vld [vmem:[%s11] sm:$0xff]
    %v962 = vld [vmem:[%s11 + $0x8] sm:$0xff]
    %vm963 = vcmp.gt.f32.partialorder %v961, 0.5
    %vm964 = vcmp.gt.f32.partialorder %v962, 0.5
    %v965 = vsel %vm963, 1, 0
    %v966 = vsel %vm964, 1, 0
    %967 = vset.pattern.permute.xlu0 0
    %968 = vperm.xlu0 %967, %v965
    %v969 = vpop.permute.xlu0 %968
    %970 = vset.pattern.permute.xlu0 0
    %971 = vperm.xlu0 %970, %v966
    %v972 = vpop.permute.xlu0 %971
    %vm973 = vcmp.eq.s32.totalorder %v969, 1
    %vm974 = vcmp.eq.s32.totalorder %v972, 1
    %v975 = vsel %vm973, %v878, -1e+30
    %v976 = vsel %vm974, %v879, -1e+30
    %v977 = vmax.f32 %v975, %v976
    %v978 = vrot.slane %v977, 4
    %v979 = vmax.f32 %v977, %v978
    %v980 = vrot.slane %v979, 2
    %v981 = vmax.f32 %v979, %v980
    %v982 = vrot.slane %v981, 1
    %v983 = vmax.f32 %v981, %v982
    %984 = vset.pattern.permute.xlu0 1
    %985 = vperm.xlu0 %984, %v965
    %v986 = vpop.permute.xlu0 %985
    %987 = vset.pattern.permute.xlu0 1
    %988 = vperm.xlu0 %987, %v966
    %v989 = vpop.permute.xlu0 %988
    %vm990 = vcmp.eq.s32.totalorder %v986, 1
    %vm991 = vcmp.eq.s32.totalorder %v989, 1
    %v992 = vsel %vm990, %v878, -1e+30
    %v993 = vsel %vm991, %v879, -1e+30
    %v994 = vmax.f32 %v992, %v993
    %v995 = vrot.slane %v994, 4
    %v996 = vmax.f32 %v994, %v995
    %v997 = vrot.slane %v996, 2
    %v998 = vmax.f32 %v996, %v997
    %v999 = vrot.slane %v998, 1
    %v1000 = vmax.f32 %v998, %v999
    %1001 = vset.pattern.permute.xlu0 2
    %1002 = vperm.xlu0 %1001, %v965
    %v1003 = vpop.permute.xlu0 %1002
    %1004 = vset.pattern.permute.xlu0 2
    %1005 = vperm.xlu0 %1004, %v966
    %v1006 = vpop.permute.xlu0 %1005
    %vm1007 = vcmp.eq.s32.totalorder %v1003, 1
    %vm1008 = vcmp.eq.s32.totalorder %v1006, 1
    %v1009 = vsel %vm1007, %v878, -1e+30
    %v1010 = vsel %vm1008, %v879, -1e+30
    %v1011 = vmax.f32 %v1009, %v1010
    %v1012 = vrot.slane %v1011, 4
    %v1013 = vmax.f32 %v1011, %v1012
    %v1014 = vrot.slane %v1013, 2
    %v1015 = vmax.f32 %v1013, %v1014
    %v1016 = vrot.slane %v1015, 1
    %v1017 = vmax.f32 %v1015, %v1016
    %1018 = vset.pattern.permute.xlu0 3
    %1019 = vperm.xlu0 %1018, %v965
    %v1020 = vpop.permute.xlu0 %1019
    %1021 = vset.pattern.permute.xlu0 3
    %1022 = vperm.xlu0 %1021, %v966
    %v1023 = vpop.permute.xlu0 %1022
    %vm1024 = vcmp.eq.s32.totalorder %v1020, 1
    %vm1025 = vcmp.eq.s32.totalorder %v1023, 1
    %v1026 = vsel %vm1024, %v878, -1e+30
    %v1027 = vsel %vm1025, %v879, -1e+30
    %v1028 = vmax.f32 %v1026, %v1027
    %v1029 = vrot.slane %v1028, 4
    %v1030 = vmax.f32 %v1028, %v1029
    %v1031 = vrot.slane %v1030, 2
    %v1032 = vmax.f32 %v1030, %v1031
    %v1033 = vrot.slane %v1032, 1
    %v1034 = vmax.f32 %v1032, %v1033
    %1035 = vset.pattern.permute.xlu0 4
    %1036 = vperm.xlu0 %1035, %v965
    %v1037 = vpop.permute.xlu0 %1036
    %1038 = vset.pattern.permute.xlu0 4
    %1039 = vperm.xlu0 %1038, %v966
    %v1040 = vpop.permute.xlu0 %1039
    %vm1041 = vcmp.eq.s32.totalorder %v1037, 1
    %vm1042 = vcmp.eq.s32.totalorder %v1040, 1
    %v1043 = vsel %vm1041, %v878, -1e+30
    %v1044 = vsel %vm1042, %v879, -1e+30
    %v1045 = vmax.f32 %v1043, %v1044
    %v1046 = vrot.slane %v1045, 4
    %v1047 = vmax.f32 %v1045, %v1046
    %v1048 = vrot.slane %v1047, 2
    %v1049 = vmax.f32 %v1047, %v1048
    %v1050 = vrot.slane %v1049, 1
    %v1051 = vmax.f32 %v1049, %v1050
    %1052 = vset.pattern.permute.xlu0 5
    %1053 = vperm.xlu0 %1052, %v965
    %v1054 = vpop.permute.xlu0 %1053
    %1055 = vset.pattern.permute.xlu0 5
    %1056 = vperm.xlu0 %1055, %v966
    %v1057 = vpop.permute.xlu0 %1056
    %vm1058 = vcmp.eq.s32.totalorder %v1054, 1
    %vm1059 = vcmp.eq.s32.totalorder %v1057, 1
    %v1060 = vsel %vm1058, %v878, -1e+30
    %v1061 = vsel %vm1059, %v879, -1e+30
    %v1062 = vmax.f32 %v1060, %v1061
    %v1063 = vrot.slane %v1062, 4
    %v1064 = vmax.f32 %v1062, %v1063
    %v1065 = vrot.slane %v1064, 2
    %v1066 = vmax.f32 %v1064, %v1065
    %v1067 = vrot.slane %v1066, 1
    %v1068 = vmax.f32 %v1066, %v1067
    %1069 = vset.pattern.permute.xlu0 6
    %1070 = vperm.xlu0 %1069, %v965
    %v1071 = vpop.permute.xlu0 %1070
    %1072 = vset.pattern.permute.xlu0 6
    %1073 = vperm.xlu0 %1072, %v966
    %v1074 = vpop.permute.xlu0 %1073
    %vm1075 = vcmp.eq.s32.totalorder %v1071, 1
    %vm1076 = vcmp.eq.s32.totalorder %v1074, 1
    %v1077 = vsel %vm1075, %v878, -1e+30
    %v1078 = vsel %vm1076, %v879, -1e+30
    %v1079 = vmax.f32 %v1077, %v1078
    %v1080 = vrot.slane %v1079, 4
    %v1081 = vmax.f32 %v1079, %v1080
    %v1082 = vrot.slane %v1081, 2
    %v1083 = vmax.f32 %v1081, %v1082
    %v1084 = vrot.slane %v1083, 1
    %v1085 = vmax.f32 %v1083, %v1084
    %1086 = vset.pattern.permute.xlu0 7
    %1087 = vperm.xlu0 %1086, %v965
    %v1088 = vpop.permute.xlu0 %1087
    %1089 = vset.pattern.permute.xlu0 7
    %1090 = vperm.xlu0 %1089, %v966
    %v1091 = vpop.permute.xlu0 %1090
    %vm1092 = vcmp.eq.s32.totalorder %v1088, 1
    %vm1093 = vcmp.eq.s32.totalorder %v1091, 1
    %v1094 = vsel %vm1092, %v878, -1e+30
    %v1095 = vsel %vm1093, %v879, -1e+30
    %v1096 = vmax.f32 %v1094, %v1095
    %v1097 = vrot.slane %v1096, 4
    %v1098 = vmax.f32 %v1096, %v1097
    %v1099 = vrot.slane %v1098, 2
    %v1100 = vmax.f32 %v1098, %v1099
    %v1101 = vrot.slane %v1100, 1
    %v1102 = vmax.f32 %v1100, %v1101
    %vm1103 = vcmask 1040384
    %v1104 = vsel %vm1103, %v983, %v1000
    %vm1105 = vcmask 1041408
    %v1106 = vsel %vm1105, %v1104, %v1017
    %vm1107 = vcmask 1042432
    %v1108 = vsel %vm1107, %v1106, %v1034
    %vm1109 = vcmask 1043456
    %v1110 = vsel %vm1109, %v1108, %v1051
    %vm1111 = vcmask 1044480
    %v1112 = vsel %vm1111, %v1110, %v1068
    %vm1113 = vcmask 1045504
    %v1114 = vsel %vm1113, %v1112, %v1085
    %vm1115 = vcmask 1046528
    %v1116 = vsel %vm1115, %v1114, %v1102
    %v1117 = vld [vmem:[%s13] sm:$0xff]
    %vm1118 = vcmp.gt.f32.partialorder %v1117, 0.5
    %v1119 = vsel %vm1118, 1, 0
    %1120 = vset.pattern.permute.xlu0 0
    %1121 = vperm.xlu0 %1120, %v1119
    %v1122 = vpop.permute.xlu0 %1121
    %vm1123 = vcmp.eq.s32.totalorder %v1122, 1
    %v1124 = vsel %vm1123, %v1116, 0.0
    %v1125 = vld [vmem:[#allocation15] sm:$0xff]
    %v1126 = vld [vmem:[#allocation15 + $0x8] sm:$0xff]
    %v1127 = vld [vmem:[#allocation15 + $0x10] sm:$0xff]
    %v1128 = vld [vmem:[#allocation15 + $0x18] sm:$0xff]
    %v1129 = vld [vmem:[#allocation15 + $0x20] sm:$0xff]
    %v1130 = vld [vmem:[#allocation15 + $0x28] sm:$0xff]
    %v1131 = vld [vmem:[#allocation15 + $0x30] sm:$0xff]
    %v1132 = vld [vmem:[#allocation15 + $0x38] sm:$0xff]
    %v1133 = vld [vmem:[#allocation15 + $0x40] sm:$0xff]
    %v1134 = vld [vmem:[#allocation15 + $0x48] sm:$0xff]
    %v1135 = vld [vmem:[#allocation15 + $0x50] sm:$0xff]
    %v1136 = vld [vmem:[#allocation15 + $0x58] sm:$0xff]
    %v1137 = vld [vmem:[#allocation15 + $0x60] sm:$0xff]
    %v1138 = vld [vmem:[#allocation15 + $0x68] sm:$0xff]
    %v1139 = vld [vmem:[#allocation15 + $0x70] sm:$0xff]
    %v1140 = vld [vmem:[#allocation15 + $0x78] sm:$0xff]
    %v1141 = vld [vmem:[#allocation15 + $0x80] sm:$0xff]
    %v1142 = vld [vmem:[#allocation15 + $0x88] sm:$0xff]
    %v1143 = vld [vmem:[#allocation15 + $0x90] sm:$0xff]
    %v1144 = vld [vmem:[#allocation15 + $0x98] sm:$0xff]
    %v1145 = vld [vmem:[#allocation15 + $0xa0] sm:$0xff]
    %v1146 = vld [vmem:[#allocation15 + $0xa8] sm:$0xff]
    %v1147 = vld [vmem:[#allocation15 + $0xb0] sm:$0xff]
    %v1148 = vld [vmem:[#allocation15 + $0xb8] sm:$0xff]
    %v1149 = vld [vmem:[#allocation15 + $0xc0] sm:$0xff]
    %v1150 = vld [vmem:[#allocation15 + $0xc8] sm:$0xff]
    %v1151 = vld [vmem:[#allocation15 + $0xd0] sm:$0xff]
    %v1152 = vld [vmem:[#allocation15 + $0xd8] sm:$0xff]
    %v1153 = vld [vmem:[#allocation15 + $0xe0] sm:$0xff]
    %v1154 = vld [vmem:[#allocation15 + $0xe8] sm:$0xff]
    %v1155 = vld [vmem:[#allocation15 + $0xf0] sm:$0xff]
    %v1156 = vld [vmem:[#allocation15 + $0xf8] sm:$0xff]
    %v1157 = vld [vmem:[#allocation15 + $0x100] sm:$0xff]
    %v1158 = vld [vmem:[#allocation15 + $0x108] sm:$0xff]
    %v1159 = vld [vmem:[#allocation15 + $0x110] sm:$0xff]
    %v1160 = vld [vmem:[#allocation15 + $0x118] sm:$0xff]
    %v1161 = vld [vmem:[#allocation15 + $0x120] sm:$0xff]
    %v1162 = vld [vmem:[#allocation15 + $0x128] sm:$0xff]
    %v1163 = vld [vmem:[#allocation15 + $0x130] sm:$0xff]
    %v1164 = vld [vmem:[#allocation15 + $0x138] sm:$0xff]
    %v1165 = vld [vmem:[#allocation15 + $0x140] sm:$0xff]
    %v1166 = vld [vmem:[#allocation15 + $0x148] sm:$0xff]
    %v1167 = vld [vmem:[#allocation15 + $0x150] sm:$0xff]
    %v1168 = vld [vmem:[#allocation15 + $0x158] sm:$0xff]
    %v1169 = vld [vmem:[#allocation15 + $0x160] sm:$0xff]
    %v1170 = vld [vmem:[#allocation15 + $0x168] sm:$0xff]
    %v1171 = vld [vmem:[#allocation15 + $0x170] sm:$0xff]
    %v1172 = vld [vmem:[#allocation15 + $0x178] sm:$0xff]
    %v1173 = vld [vmem:[#allocation15 + $0x180] sm:$0xff]
    %v1174 = vld [vmem:[#allocation15 + $0x188] sm:$0xff]
    %v1175 = vld [vmem:[#allocation15 + $0x190] sm:$0xff]
    %v1176 = vld [vmem:[#allocation15 + $0x198] sm:$0xff]
    %v1177 = vld [vmem:[#allocation15 + $0x1a0] sm:$0xff]
    %v1178 = vld [vmem:[#allocation15 + $0x1a8] sm:$0xff]
    %v1179 = vld [vmem:[#allocation15 + $0x1b0] sm:$0xff]
    %v1180 = vld [vmem:[#allocation15 + $0x1b8] sm:$0xff]
    %v1181 = vld [vmem:[#allocation15 + $0x1c0] sm:$0xff]
    %v1182 = vld [vmem:[#allocation15 + $0x1c8] sm:$0xff]
    %v1183 = vld [vmem:[#allocation15 + $0x1d0] sm:$0xff]
    %v1184 = vld [vmem:[#allocation15 + $0x1d8] sm:$0xff]
    %v1185 = vld [vmem:[#allocation15 + $0x1e0] sm:$0xff]
    %v1186 = vld [vmem:[#allocation15 + $0x1e8] sm:$0xff]
    %v1187 = vld [vmem:[#allocation15 + $0x1f0] sm:$0xff]
    %v1188 = vld [vmem:[#allocation15 + $0x1f8] sm:$0xff]
    %v1189 = vld [vmem:[#allocation15 + $0x200] sm:$0xff]
    %v1190 = vld [vmem:[#allocation15 + $0x208] sm:$0xff]
    %v1191 = vld [vmem:[#allocation15 + $0x210] sm:$0xff]
    %v1192 = vld [vmem:[#allocation15 + $0x218] sm:$0xff]
    %v1193 = vld [vmem:[#allocation15 + $0x220] sm:$0xff]
    %v1194 = vld [vmem:[#allocation15 + $0x228] sm:$0xff]
    %v1195 = vld [vmem:[#allocation15 + $0x230] sm:$0xff]
    %v1196 = vld [vmem:[#allocation15 + $0x238] sm:$0xff]
    %v1197 = vld [vmem:[#allocation15 + $0x240] sm:$0xff]
    %v1198 = vld [vmem:[#allocation15 + $0x248] sm:$0xff]
    %v1199 = vld [vmem:[#allocation15 + $0x250] sm:$0xff]
    %v1200 = vld [vmem:[#allocation15 + $0x258] sm:$0xff]
    %v1201 = vld [vmem:[#allocation15 + $0x260] sm:$0xff]
    %v1202 = vld [vmem:[#allocation15 + $0x268] sm:$0xff]
    %v1203 = vld [vmem:[#allocation15 + $0x270] sm:$0xff]
    %v1204 = vld [vmem:[#allocation15 + $0x278] sm:$0xff]
    %v1205 = vld [vmem:[#allocation15 + $0x280] sm:$0xff]
    %v1206 = vld [vmem:[#allocation15 + $0x288] sm:$0xff]
    %v1207 = vld [vmem:[#allocation15 + $0x290] sm:$0xff]
    %v1208 = vld [vmem:[#allocation15 + $0x298] sm:$0xff]
    %v1209 = vld [vmem:[#allocation15 + $0x2a0] sm:$0xff]
    %v1210 = vld [vmem:[#allocation15 + $0x2a8] sm:$0xff]
    %v1211 = vld [vmem:[#allocation15 + $0x2b0] sm:$0xff]
    %v1212 = vld [vmem:[#allocation15 + $0x2b8] sm:$0xff]
    %v1213 = vld [vmem:[#allocation15 + $0x2c0] sm:$0xff]
    %v1214 = vld [vmem:[#allocation15 + $0x2c8] sm:$0xff]
    %v1215 = vld [vmem:[#allocation15 + $0x2d0] sm:$0xff]
    %v1216 = vld [vmem:[#allocation15 + $0x2d8] sm:$0xff]
    %v1217 = vld [vmem:[#allocation15 + $0x2e0] sm:$0xff]
    %v1218 = vld [vmem:[#allocation15 + $0x2e8] sm:$0xff]
    %v1219 = vld [vmem:[#allocation15 + $0x2f0] sm:$0xff]
    %v1220 = vld [vmem:[#allocation15 + $0x2f8] sm:$0xff]
    %v1221 = vld [vmem:[#allocation15 + $0x300] sm:$0xff]
    %v1222 = vld [vmem:[#allocation15 + $0x308] sm:$0xff]
    %v1223 = vld [vmem:[#allocation15 + $0x310] sm:$0xff]
    %v1224 = vld [vmem:[#allocation15 + $0x318] sm:$0xff]
    %v1225 = vld [vmem:[#allocation15 + $0x320] sm:$0xff]
    %v1226 = vld [vmem:[#allocation15 + $0x328] sm:$0xff]
    %v1227 = vld [vmem:[#allocation15 + $0x330] sm:$0xff]
    %v1228 = vld [vmem:[#allocation15 + $0x338] sm:$0xff]
    %v1229 = vld [vmem:[#allocation15 + $0x340] sm:$0xff]
    %v1230 = vld [vmem:[#allocation15 + $0x348] sm:$0xff]
    %v1231 = vld [vmem:[#allocation15 + $0x350] sm:$0xff]
    %v1232 = vld [vmem:[#allocation15 + $0x358] sm:$0xff]
    %v1233 = vld [vmem:[#allocation15 + $0x360] sm:$0xff]
    %v1234 = vld [vmem:[#allocation15 + $0x368] sm:$0xff]
    %v1235 = vld [vmem:[#allocation15 + $0x370] sm:$0xff]
    %v1236 = vld [vmem:[#allocation15 + $0x378] sm:$0xff]
    %v1237 = vld [vmem:[#allocation15 + $0x380] sm:$0xff]
    %v1238 = vld [vmem:[#allocation15 + $0x388] sm:$0xff]
    %v1239 = vld [vmem:[#allocation15 + $0x390] sm:$0xff]
    %v1240 = vld [vmem:[#allocation15 + $0x398] sm:$0xff]
    %v1241 = vld [vmem:[#allocation15 + $0x3a0] sm:$0xff]
    %v1242 = vld [vmem:[#allocation15 + $0x3a8] sm:$0xff]
    %v1243 = vld [vmem:[#allocation15 + $0x3b0] sm:$0xff]
    %v1244 = vld [vmem:[#allocation15 + $0x3b8] sm:$0xff]
    %v1245 = vld [vmem:[#allocation15 + $0x3c0] sm:$0xff]
    %v1246 = vld [vmem:[#allocation15 + $0x3c8] sm:$0xff]
    %v1247 = vld [vmem:[#allocation15 + $0x3d0] sm:$0xff]
    %v1248 = vld [vmem:[#allocation15 + $0x3d8] sm:$0xff]
    %v1249 = vld [vmem:[#allocation15 + $0x3e0] sm:$0xff]
    %v1250 = vld [vmem:[#allocation15 + $0x3e8] sm:$0xff]
    %v1251 = vld [vmem:[#allocation15 + $0x3f0] sm:$0xff]
    %v1252 = vld [vmem:[#allocation15 + $0x3f8] sm:$0xff]
    %v1253 = vld [vmem:[#allocation16] sm:$0xf]
    %v1255 = vlaneseq
    %v1256 = vshrl.u32 %v1255, 7
    %v1257 = vsub.s32 0, %v1256
    %v1258 = vrot.slane %v1253, %v1257
    %v1259 = vlaneseq
    %v1260 = vshrl.u32 %v1259, 7
    %v1261 = vsub.s32 1, %v1260
    %v1262 = vrot.slane %v1253, %v1261
    %v1263 = vlaneseq
    %v1264 = vshrl.u32 %v1263, 7
    %v1265 = vsub.s32 2, %v1264
    %v1266 = vrot.slane %v1253, %v1265
    %v1267 = vlaneseq
    %v1268 = vshrl.u32 %v1267, 7
    %v1269 = vsub.s32 3, %v1268
    %v1270 = vrot.slane %v1253, %v1269
    %1275 = vmatprep.subr.mxu0 %v1186
    %1276 = vmatpush1.msra.mxu0 %v1185
    %1277 = vmatprep.subr.mxu0 %v1182
    %1278 = vmatpush1.msra.mxu0 %v1181
    %1279 = vmatprep.subr.mxu0 %v1178
    %1280 = vmatpush1.msra.mxu0 %v1177
    %1281 = vmatprep.subr.mxu0 %v1174
    %1282 = vmatpush1.msra.mxu0 %v1173
    %1283 = vmatprep.subr.mxu0 %v1170
    %1284 = vmatpush1.msra.mxu0 %v1169
    %1285 = vmatprep.subr.mxu0 %v1166
    %1286 = vmatpush1.msra.mxu0 %v1165
    %1287 = vmatprep.subr.mxu0 %v1162
    %1288 = vmatpush1.msra.mxu0 %v1161
    %1289 = vmatprep.subr.mxu0 %v1158
    %1290 = vmatpush1.msra.mxu0 %v1157
    %1291 = vmatprep.subr.mxu0 %v1154
    %1292 = vmatpush1.msra.mxu0 %v1153
    %1293 = vmatprep.subr.mxu0 %v1150
    %1294 = vmatpush1.msra.mxu0 %v1149
    %1295 = vmatprep.subr.mxu0 %v1146
    %1296 = vmatpush1.msra.mxu0 %v1145
    %1297 = vmatprep.subr.mxu0 %v1142
    %1298 = vmatpush1.msra.mxu0 %v1141
    %1299 = vmatprep.subr.mxu0 %v1138
    %1300 = vmatpush1.msra.mxu0 %v1137
    %1301 = vmatprep.subr.mxu0 %v1134
    %1302 = vmatpush1.msra.mxu0 %v1133
    %1303 = vmatprep.subr.mxu0 %v1130
    %1304 = vmatpush1.msra.mxu0 %v1129
    %1305 = vmatprep.subr.mxu0 %v1126
    %1306 = vmatpush1.msra.mxu0 %v1125
    %1307 = vmatprep.subr.mxu0 %v1250
    %1308 = vmatpush2.msra.mxu0 %v1249
    %1309 = vmatprep.subr.mxu0 %v1246
    %1310 = vmatpush2.msra.mxu0 %v1245
    %1311 = vmatprep.subr.mxu0 %v1242
    %1312 = vmatpush2.msra.mxu0 %v1241
    %1313 = vmatprep.subr.mxu0 %v1238
    %1314 = vmatpush2.msra.mxu0 %v1237
    %1315 = vmatprep.subr.mxu0 %v1234
    %1316 = vmatpush2.msra.mxu0 %v1233
    %1317 = vmatprep.subr.mxu0 %v1230
    %1318 = vmatpush2.msra.mxu0 %v1229
    %1319 = vmatprep.subr.mxu0 %v1226
    %1320 = vmatpush2.msra.mxu0 %v1225
    %1321 = vmatprep.subr.mxu0 %v1222
    %1322 = vmatpush2.msra.mxu0 %v1221
    %1323 = vmatprep.subr.mxu0 %v1218
    %1324 = vmatpush2.msra.mxu0 %v1217
    %1325 = vmatprep.subr.mxu0 %v1214
    %1326 = vmatpush2.msra.mxu0 %v1213
    %1327 = vmatprep.subr.mxu0 %v1210
    %1328 = vmatpush2.msra.mxu0 %v1209
    %1329 = vmatprep.subr.mxu0 %v1206
    %1330 = vmatpush2.msra.mxu0 %v1205
    %1331 = vmatprep.subr.mxu0 %v1202
    %1332 = vmatpush2.msra.mxu0 %v1201
    %1333 = vmatprep.subr.mxu0 %v1198
    %1334 = vmatpush2.msra.mxu0 %v1197
    %1335 = vmatprep.subr.mxu0 %v1194
    %1336 = vmatpush2.msra.mxu0 %v1193
    %1337 = vmatprep.subr.mxu0 %v1190
    %1338 = vmatpush2.msra.mxu0 %v1189
    %1339 = vmatprep.mubr.f32.mxu0 %v960
    %1340 = vmatmul.mubr.f32.gmra.mxu0 %v1124
    %v1341 = vpop.f32.mrf.mxu0
    %v1342 = vadd.f32 %v1258, %v1341
    %v1343 = vpop.f32.mrf.mxu0
    %v1344 = vadd.f32 %v1262, %v1343
    %1345 = vdwg.mxu0
    %1346 = vmatprep.subr.mxu0 %v1188
    %1347 = vmatpush1.msra.mxu0 %v1187
    %1348 = vmatprep.subr.mxu0 %v1184
    %1349 = vmatpush1.msra.mxu0 %v1183
    %1350 = vmatprep.subr.mxu0 %v1180
    %1351 = vmatpush1.msra.mxu0 %v1179
    %1352 = vmatprep.subr.mxu0 %v1176
    %1353 = vmatpush1.msra.mxu0 %v1175
    %1354 = vmatprep.subr.mxu0 %v1172
    %1355 = vmatpush1.msra.mxu0 %v1171
    %1356 = vmatprep.subr.mxu0 %v1168
    %1357 = vmatpush1.msra.mxu0 %v1167
    %1358 = vmatprep.subr.mxu0 %v1164
    %1359 = vmatpush1.msra.mxu0 %v1163
    %1360 = vmatprep.subr.mxu0 %v1160
    %1361 = vmatpush1.msra.mxu0 %v1159
    %1362 = vmatprep.subr.mxu0 %v1156
    %1363 = vmatpush1.msra.mxu0 %v1155
    %1364 = vmatprep.subr.mxu0 %v1152
    %1365 = vmatpush1.msra.mxu0 %v1151
    %1366 = vmatprep.subr.mxu0 %v1148
    %1367 = vmatpush1.msra.mxu0 %v1147
    %1368 = vmatprep.subr.mxu0 %v1144
    %1369 = vmatpush1.msra.mxu0 %v1143
    %1370 = vmatprep.subr.mxu0 %v1140
    %1371 = vmatpush1.msra.mxu0 %v1139
    %1372 = vmatprep.subr.mxu0 %v1136
    %1373 = vmatpush1.msra.mxu0 %v1135
    %1374 = vmatprep.subr.mxu0 %v1132
    %1375 = vmatpush1.msra.mxu0 %v1131
    %1376 = vmatprep.subr.mxu0 %v1128
    %1377 = vmatpush1.msra.mxu0 %v1127
    %1378 = vmatprep.subr.mxu0 %v1252
    %1379 = vmatpush2.msra.mxu0 %v1251
    %1380 = vmatprep.subr.mxu0 %v1248
    %1381 = vmatpush2.msra.mxu0 %v1247
    %1382 = vmatprep.subr.mxu0 %v1244
    %1383 = vmatpush2.msra.mxu0 %v1243
    %1384 = vmatprep.subr.mxu0 %v1240
    %1385 = vmatpush2.msra.mxu0 %v1239
    %1386 = vmatprep.subr.mxu0 %v1236
    %1387 = vmatpush2.msra.mxu0 %v1235
    %1388 = vmatprep.subr.mxu0 %v1232
    %1389 = vmatpush2.msra.mxu0 %v1231
    %1390 = vmatprep.subr.mxu0 %v1228
    %1391 = vmatpush2.msra.mxu0 %v1227
    %1392 = vmatprep.subr.mxu0 %v1224
    %1393 = vmatpush2.msra.mxu0 %v1223
    %1394 = vmatprep.subr.mxu0 %v1220
    %1395 = vmatpush2.msra.mxu0 %v1219
    %1396 = vmatprep.subr.mxu0 %v1216
    %1397 = vmatpush2.msra.mxu0 %v1215
    %1398 = vmatprep.subr.mxu0 %v1212
    %1399 = vmatpush2.msra.mxu0 %v1211
    %1400 = vmatprep.subr.mxu0 %v1208
    %1401 = vmatpush2.msra.mxu0 %v1207
    %1402 = vmatprep.subr.mxu0 %v1204
    %1403 = vmatpush2.msra.mxu0 %v1203
    %1404 = vmatprep.subr.mxu0 %v1200
    %1405 = vmatpush2.msra.mxu0 %v1199
    %1406 = vmatprep.subr.mxu0 %v1196
    %1407 = vmatpush2.msra.mxu0 %v1195
    %1408 = vmatprep.subr.mxu0 %v1192
    %1409 = vmatpush2.msra.mxu0 %v1191
    %1410 = vmatprep.mubr.f32.mxu0 %v960
    %1411 = vmatmul.mubr.f32.gmra.mxu0 %v1124
    %v1412 = vpop.f32.mrf.mxu0
    %v1413 = vadd.f32 %v1266, %v1412
    %v1414 = vpop.f32.mrf.mxu0
    %v1415 = vadd.f32 %v1270, %v1414
    %1416 = vdwg.mxu0
    %1417 = vst [vmem:[%s16] sm:$0xff] %v1342
    %1418 = vst [vmem:[%s16 + $0x8] sm:$0xff] %v1344
    %1419 = vst [vmem:[%s16 + $0x10] sm:$0xff] %v1413
    %1420 = vst [vmem:[%s16 + $0x18] sm:$0xff] %v1415
    // Predicated region
    $region106: #{gnn_forward.2} parent=1 // pred_check
      _
    $region107: #{gnn_forward.2} parent=1 // pred_check_branch
      %1422 = sbr.rel (0) target = $region109
    $region108: #{gnn_forward.2} parent=1 // pred_region
      _
    $region109: #{gnn_forward.2} parent=1 // pred_fallthru
      _
    // Predicated region
    $region110: #{gnn_forward.2} parent=1 // pred_check
      _
    $region111: #{gnn_forward.2} parent=1 // pred_check_branch
      %1424 = sbr.rel (0) target = $region113
    $region112: #{gnn_forward.2} parent=1 // pred_region
      _
    $region113: #{gnn_forward.2} parent=1 // pred_fallthru
      _
    %1425 = vsyncpa [#allocation3], 1
    %1426 = vsyncpa [#allocation5], 1
    %1427 = vsyncpa [#allocation8], 1
    %1428 = vsyncpa [#allocation11], 1
    %1429 = vsyncpa [#allocation14], 1
    %1430 = vsyncpa [#allocation17], 1

// kernel: gnn_forward.3
$region0: #{gnn_forward.3}
  #allocation0 [shape = 'u32[]', space=smem, size = 0x4, offset = 0x4, fixed_abs, tag = 'smem constant byte address 0x4 - core index']
  #allocation1 [shape = 'u32[144,128]{1,0:T(1,128)}', space=vmem, size = 0x12000, scoped, tag = 'internal scratch']
  %s0 = inlined_call_operand.vmem [shape: f32[8,512], index: 0, kind: input, shape index: {}]
  %s1 = inlined_call_operand.hbm [shape: bf16[512,38400], index: 1, kind: input, shape index: {}]
  %s2 = inlined_call_operand.vmem [shape: f32[1,38400], index: 2, kind: input, shape index: {}]
  %s3 = inlined_call_operand.vmem [shape: f32[8,38400], index: 3, kind: output, shape index: {}]
  %s4 = sld [smem:[#allocation0]]
  $region49: #{gnn_forward.3} parent=0
    _
  %s6 = ssub.s32 1, %s4
  %s7 = scalar_select 0, %s6, %s4
  $region1: #{gnn_forward.3} parent=0
    #allocation2 [shape = 'u8[13107200]{0}', space=vmem, size = 0xc80000, scoped, tag = 'input window, operand 1']
    #allocation3 [shape = 's32[2]{0}', space=sflag, size = 0x8, scoped, tag = 'scoped memory for gnn_forward.3']
    %8 = vsyncpa [#allocation3], 0
    %s9 = scalar_lea.sflag [#allocation3], 1
    %10 = vsyncpa %s9, 0
    loop: start=0, step=1, limit=8
    $region2: #{gnn_forward.3} parent=1 // loop_pre_header
      _
    $region3: #{gnn_forward.3} parent=1 // loop_header
      %s12 = sphi 0, %s16
      %p13 = scmp.ge.s32.totalorder %s12, 8
      %s20 = sphi 0, %s20
      %s22 = sphi 0, %s20
      %s23 = sphi 0, %s22
      %s37 = sphi 0, %s23
      %s43 = sphi 0, %s45
      %s46 = sphi 0, %s43
      %s47 = sphi 0, %s46
      %s63 = sphi 0, %s47
      %s69 = sphi 0, %s71
      %s72 = sphi 0, %s69
      %s73 = sphi 0, %s72
      %s89 = sphi 0, %s73
      %s95 = sphi 0, %s97
      %s98 = sphi 0, %s95
      %s99 = sphi 0, %s98
      %s115 = sphi 0, %s99
    $region4: #{gnn_forward.3} parent=1 // loop_header_branch
      %15 = sbr.rel (%p13) target = $region8
    $region5: #{gnn_forward.3} parent=1 // loop_body
      %s17 = ssub.s32 %s12, 1
      %s18 = ssub.s32 %s12, 2
      %s19 = sadd.s32 %s12, 1
      %s21 = sadd.s32 %s20, 1
      %p24 = scmp.eq.s32.totalorder %s12, 5
      %p25 = scmp.ne.s32.totalorder %s20, %s22
      %p26 = scmp.eq.s32.totalorder %s12, 0
      %p27 = por %p25, %p26
      %p28 = scmp.ne.s32.totalorder %s20, %s22
      %p29 = scmp.eq.s32.totalorder %s17, 5
      %p30 = por %p28, %p29
      %p31 = scmp.ne.s32.totalorder %s22, %s23
      %p32 = scmp.eq.s32.totalorder %s17, 0
      %p33 = por %p31, %p32
      %p34 = scmp.ne.s32.totalorder %s22, %s23
      %p35 = scmp.eq.s32.totalorder %s18, 5
      %p36 = por %p34, %p35
      %p38 = scmp.ne.s32.totalorder %s23, %s37
      %p39 = scmp.eq.s32.totalorder %s18, 0
      %p40 = por %p38, %p39
      %s41 = ssub.s32 %s12, %s19
      %p42 = scmp.eq.s32.totalorder %s41, 0
      %s44 = sadd.s32 %s43, 1
      %s45 = scalar_select %p42, %s43, %s44
      %p48 = pneg %p42
      %p49 = scmp.eq.s32.totalorder %s12, 5
      %p50 = por %p48, %p49
      %p51 = scmp.ne.s32.totalorder %s43, %s46
      %p52 = scmp.eq.s32.totalorder %s12, 0
      %p53 = por %p51, %p52
      %p54 = scmp.ne.s32.totalorder %s43, %s46
      %p55 = scmp.eq.s32.totalorder %s17, 5
      %p56 = por %p54, %p55
      %p57 = scmp.ne.s32.totalorder %s46, %s47
      %p58 = scmp.eq.s32.totalorder %s17, 0
      %p59 = por %p57, %p58
      %p60 = scmp.ne.s32.totalorder %s46, %s47
      %p61 = scmp.eq.s32.totalorder %s18, 5
      %p62 = por %p60, %p61
      %p64 = scmp.ne.s32.totalorder %s47, %s63
      %p65 = scmp.eq.s32.totalorder %s18, 0
      %p66 = por %p64, %p65
      %s67 = ssub.s32 %s12, %s19
      %p68 = scmp.eq.s32.totalorder %s67, 0
      %s70 = sadd.s32 %s69, 1
      %s71 = scalar_select %p68, %s69, %s70
      %p74 = pneg %p68
      %p75 = scmp.eq.s32.totalorder %s12, 5
      %p76 = por %p74, %p75
      %p77 = scmp.ne.s32.totalorder %s69, %s72
      %p78 = scmp.eq.s32.totalorder %s12, 0
      %p79 = por %p77, %p78
      %p80 = scmp.ne.s32.totalorder %s69, %s72
      %p81 = scmp.eq.s32.totalorder %s17, 5
      %p82 = por %p80, %p81
      %p83 = scmp.ne.s32.totalorder %s72, %s73
      %p84 = scmp.eq.s32.totalorder %s17, 0
      %p85 = por %p83, %p84
      %p86 = scmp.ne.s32.totalorder %s72, %s73
      %p87 = scmp.eq.s32.totalorder %s18, 5
      %p88 = por %p86, %p87
      %p90 = scmp.ne.s32.totalorder %s73, %s89
      %p91 = scmp.eq.s32.totalorder %s18, 0
      %p92 = por %p90, %p91
      %s93 = ssub.s32 %s12, %s19
      %p94 = scmp.eq.s32.totalorder %s93, 0
      %s96 = sadd.s32 %s95, 1
      %s97 = scalar_select %p94, %s95, %s96
      %p100 = pneg %p94
      %p101 = scmp.eq.s32.totalorder %s12, 5
      %p102 = por %p100, %p101
      %p103 = scmp.ne.s32.totalorder %s95, %s98
      %p104 = scmp.eq.s32.totalorder %s12, 0
      %p105 = por %p103, %p104
      %p106 = scmp.ne.s32.totalorder %s95, %s98
      %p107 = scmp.eq.s32.totalorder %s17, 5
      %p108 = por %p106, %p107
      %p109 = scmp.ne.s32.totalorder %s98, %s99
      %p110 = scmp.eq.s32.totalorder %s17, 0
      %p111 = por %p109, %p110
      %p112 = scmp.ne.s32.totalorder %s98, %s99
      %p113 = scmp.eq.s32.totalorder %s18, 5
      %p114 = por %p112, %p113
      %p116 = scmp.ne.s32.totalorder %s99, %s115
      %p117 = scmp.eq.s32.totalorder %s18, 0
      %p118 = por %p116, %p117
      %p119 = scmp.le.s32.totalorder 1, %s12
      %p120 = scmp.lt.s32.totalorder %s12, 7
      %p121 = pnand %p119, %p120
      %p122 = pneg %p121
      // Predicated region
      $region9: #{gnn_forward.3} parent=5 // pred_check
        _
      $region10: #{gnn_forward.3} parent=5 // pred_check_branch
        %124 = sbr.rel (%p121) target = $region12
      $region11: #{gnn_forward.3} parent=5 // pred_region
        %s125 = ssub.s32 %s12, 1
        // Predicated region
        $region13: #{gnn_forward.3} parent=11 // pred_check
          %p126 = pneg %p33
        $region14: #{gnn_forward.3} parent=11 // pred_check_branch
          %128 = sbr.rel (%p126) target = $region16
        $region15: #{gnn_forward.3} parent=11 // pred_region
          _
        $region16: #{gnn_forward.3} parent=11 // pred_fallthru
          _
      $region12: #{gnn_forward.3} parent=5 // pred_fallthru
        _
      %p129 = scmp.lt.s32.totalorder %s12, 6
      // Predicated region
      $region17: #{gnn_forward.3} parent=5 // pred_check
        %p130 = pneg %p129
      $region18: #{gnn_forward.3} parent=5 // pred_check_branch
        %132 = sbr.rel (%p130) target = $region20
      $region19: #{gnn_forward.3} parent=5 // pred_region
        // Predicated region
        $region21: #{gnn_forward.3} parent=19 // pred_check
          %p133 = pneg %p53
        $region22: #{gnn_forward.3} parent=19 // pred_check_branch
          %135 = sbr.rel (%p133) target = $region24
        $region23: #{gnn_forward.3} parent=19 // pred_region
          %s136 = sand.u32 %s43, 1
          %s137 = scalar_lea.sflag [#allocation3], %s136
          %s138 = sand.u32 %s43, 1
          %s139 = smul.addr %s138, 12800
          %s140 = scalar_lea.vmem [#allocation2], %s139
          %s141 = smul.u32 50, %s12
          %s143 = ssub.s32 204800, 204800
          %144 = vsyncadd %s137, %s143
          %s145 = smul.addr %s141, 64
          %s146 = scalar_lea.hbm %s1, %s145
          %s147 = sshll.u32 %s140, 4
          %s148 = int_to_ptr.vmem [resolvable:$true] %s147
          %153 = dma.hbm_to_vmem [thread:$0]  %s146, 204800, %s148, %s137, 19200, 3200, 200
        $region24: #{gnn_forward.3} parent=19 // pred_fallthru
          _
        // Predicated region
        $region25: #{gnn_forward.3} parent=19 // pred_check
          %p154 = pneg %p79
        $region26: #{gnn_forward.3} parent=19 // pred_check_branch
          %156 = sbr.rel (%p154) target = $region28
        $region27: #{gnn_forward.3} parent=19 // pred_region
          %s157 = smul.u32 50, %s12
          %p158 = scmp.lt.s32.totalorder %s157, 299
          %s159 = scalar_select %p158, %s157, 299
          %s160 = scalar_lea.vmem %s2, %s159
          %s161 = smul.u32 50, %s12
        $region28: #{gnn_forward.3} parent=19 // pred_fallthru
          _
      $region20: #{gnn_forward.3} parent=5 // pred_fallthru
        _
      %p162 = scmp.le.s32.totalorder 1, %s12
      %p163 = scmp.lt.s32.totalorder %s12, 7
      %p164 = pnand %p162, %p163
      %p165 = pneg %p164
      // Predicated region
      $region29: #{gnn_forward.3} parent=5 // pred_check
        _
      $region30: #{gnn_forward.3} parent=5 // pred_check_branch
        %167 = sbr.rel (%p164) target = $region32
      $region31: #{gnn_forward.3} parent=5 // pred_region
        %s168 = ssub.s32 %s12, 1
        %s169 = sand.u32 %s46, 1
        %s170 = scalar_lea.sflag [#allocation3], %s169
        %s171 = sand.u32 %s46, 1
        %s172 = smul.addr %s171, 12800
        %s173 = scalar_lea.vmem [#allocation2], %s172
        // Predicated region
        $region33: #{gnn_forward.3} parent=31 // pred_check
          %p174 = pneg %p59
        $region34: #{gnn_forward.3} parent=31 // pred_check_branch
          %176 = sbr.rel (%p174) target = $region36
        $region35: #{gnn_forward.3} parent=31 // pred_region
          %177 = dma.done %s170, 204800
        $region36: #{gnn_forward.3} parent=31 // pred_fallthru
          _
        %p178 = pneg %p33
        %p179 = pneg %p30
        %s180 = sand.u32 %s46, 1
        %s181 = scalar_lea.sflag [#allocation3], %s180
        %s182 = sand.u32 %s46, 1
        %s183 = smul.addr %s182, 12800
        %s184 = scalar_lea.vmem [#allocation2], %s183
        %p185 = pneg %p59
        %p186 = pneg %p56
        %s187 = smul.u32 50, %s17
        %p188 = scmp.lt.s32.totalorder %s187, 299
        %s189 = scalar_select %p188, %s187, 299
        %s190 = scalar_lea.vmem %s2, %s189
        %p191 = pneg %p85
        %p192 = pneg %p82
        %p193 = pneg %p111
        %p194 = pneg %p108
        %s195 = smul.u32 50, %s17
        %p196 = scmp.lt.s32.totalorder %s195, 299
        %s197 = scalar_select %p196, %s195, 299
        %s198 = smul.addr %s197, 8
        %s199 = scalar_lea.vmem %s3, %s198
        %s200 = smul.u32 50, %s17
        %s201 = smul.u32 50, %s17
        %p202 = scmp.lt.s32.totalorder %s201, 299
        %s203 = scalar_select %p202, %s201, 299
        %s204 = scalar_lea.vmem %s2, %s203
        %s205 = smul.u32 50, %s17
        %s206 = smul.u32 50, %s17
        %p207 = scmp.lt.s32.totalorder %s206, 299
        %s208 = scalar_select %p207, %s206, 299
        %s209 = smul.addr %s208, 8
        %s210 = scalar_lea.vmem %s3, %s209
        %s211 = smul.u32 50, %s17
        %v212 = vld [vmem:[%s0] sm:$0xff]
        %v213 = vld [vmem:[%s0 + $0x8] sm:$0xff]
        %v214 = vld [vmem:[%s0 + $0x10] sm:$0xff]
        %v215 = vld [vmem:[%s0 + $0x18] sm:$0xff]
        %v216 = vpack.c.bf16 %v212, %v212
        %v217 = vpack.c.bf16 %v213, %v213
        %v218 = vpack.c.bf16 %v214, %v214
        %v219 = vpack.c.bf16 %v215, %v215
        %v220 = vld [vmem:[%s173] sm:$0xff]
        %v221 = vld [vmem:[%s173 + $0x8] sm:$0xff]
        %v222 = vld [vmem:[%s173 + $0x10] sm:$0xff]
        %v223 = vld [vmem:[%s173 + $0x18] sm:$0xff]
        %v224 = vld [vmem:[%s173 + $0x20] sm:$0xff]
        %v225 = vld [vmem:[%s173 + $0x28] sm:$0xff]
        %v226 = vld [vmem:[%s173 + $0x30] sm:$0xff]
        %v227 = vld [vmem:[%s173 + $0x38] sm:$0xff]
        %v228 = vld [vmem:[%s173 + $0x40] sm:$0xff]
        %v229 = vld [vmem:[%s173 + $0x48] sm:$0xff]
        %v230 = vld [vmem:[%s173 + $0x50] sm:$0xff]
        %v231 = vld [vmem:[%s173 + $0x58] sm:$0xff]
        %v232 = vld [vmem:[%s173 + $0x60] sm:$0xff]
        %v233 = vld [vmem:[%s173 + $0x68] sm:$0xff]
        %v234 = vld [vmem:[%s173 + $0x70] sm:$0xff]
        %v235 = vld [vmem:[%s173 + $0x78] sm:$0xff]
        %v236 = vld [vmem:[%s173 + $0x80] sm:$0xff]
        %v237 = vld [vmem:[%s173 + $0x88] sm:$0xff]
        %v238 = vld [vmem:[%s173 + $0x90] sm:$0xff]
        %v239 = vld [vmem:[%s173 + $0x98] sm:$0xff]
        %v240 = vld [vmem:[%s173 + $0xa0] sm:$0xff]
        %v241 = vld [vmem:[%s173 + $0xa8] sm:$0xff]
        %v242 = vld [vmem:[%s173 + $0xb0] sm:$0xff]
        %v243 = vld [vmem:[%s173 + $0xb8] sm:$0xff]
        %v244 = vld [vmem:[%s173 + $0xc0] sm:$0xff]
        %v245 = vld [vmem:[%s173 + $0xc8] sm:$0xff]
        %v246 = vld [vmem:[%s173 + $0xd0] sm:$0xff]
        %v247 = vld [vmem:[%s173 + $0xd8] sm:$0xff]
        %v248 = vld [vmem:[%s173 + $0xe0] sm:$0xff]
        %v249 = vld [vmem:[%s173 + $0xe8] sm:$0xff]
        %v250 = vld [vmem:[%s173 + $0xf0] sm:$0xff]
        %v251 = vld [vmem:[%s173 + $0xf8] sm:$0xff]
        %v252 = vld [vmem:[%s173 + $0x100] sm:$0xff]
        %v253 = vld [vmem:[%s173 + $0x108] sm:$0xff]
        %v254 = vld [vmem:[%s173 + $0x110] sm:$0xff]
        %v255 = vld [vmem:[%s173 + $0x118] sm:$0xff]
        %v256 = vld [vmem:[%s173 + $0x120] sm:$0xff]
        %v257 = vld [vmem:[%s173 + $0x128] sm:$0xff]
        %v258 = vld [vmem:[%s173 + $0x130] sm:$0xff]
        %v259 = vld [vmem:[%s173 + $0x138] sm:$0xff]
        %v260 = vld [vmem:[%s173 + $0x140] sm:$0xff]
        %v261 = vld [vmem:[%s173 + $0x148] sm:$0xff]
        %v262 = vld [vmem:[%s173 + $0x150] sm:$0xff]
        %v263 = vld [vmem:[%s173 + $0x158] sm:$0xff]
        %v264 = vld [vmem:[%s173 + $0x160] sm:$0xff]
        %v265 = vld [vmem:[%s173 + $0x168] sm:$0xff]
        %v266 = vld [vmem:[%s173 + $0x170] sm:$0xff]
        %v267 = vld [vmem:[%s173 + $0x178] sm:$0xff]
        %v268 = vld [vmem:[%s173 + $0x180] sm:$0xff]
        %v269 = vld [vmem:[%s173 + $0x188] sm:$0xff]
        %v270 = vld [vmem:[%s173 + $0x190] sm:$0xff]
        %v271 = vld [vmem:[%s173 + $0x198] sm:$0xff]
        %v272 = vld [vmem:[%s173 + $0x1a0] sm:$0xff]
        %v273 = vld [vmem:[%s173 + $0x1a8] sm:$0xff]
        %v274 = vld [vmem:[%s173 + $0x1b0] sm:$0xff]
        %v275 = vld [vmem:[%s173 + $0x1b8] sm:$0xff]
        %v276 = vld [vmem:[%s173 + $0x1c0] sm:$0xff]
        %v277 = vld [vmem:[%s173 + $0x1c8] sm:$0xff]
        %v278 = vld [vmem:[%s173 + $0x1d0] sm:$0xff]
        %v279 = vld [vmem:[%s173 + $0x1d8] sm:$0xff]
        %v280 = vld [vmem:[%s173 + $0x1e0] sm:$0xff]
        %v281 = vld [vmem:[%s173 + $0x1e8] sm:$0xff]
        %v282 = vld [vmem:[%s173 + $0x1f0] sm:$0xff]
        %v283 = vld [vmem:[%s173 + $0x1f8] sm:$0xff]
        %v284 = vld [vmem:[%s173 + $0x200] sm:$0xff]
        %v285 = vld [vmem:[%s173 + $0x208] sm:$0xff]
        %v286 = vld [vmem:[%s173 + $0x210] sm:$0xff]
        %v287 = vld [vmem:[%s173 + $0x218] sm:$0xff]
        %v288 = vld [vmem:[%s173 + $0x220] sm:$0xff]
        %v289 = vld [vmem:[%s173 + $0x228] sm:$0xff]
        %v290 = vld [vmem:[%s173 + $0x230] sm:$0xff]
        %v291 = vld [vmem:[%s173 + $0x238] sm:$0xff]
        %v292 = vld [vmem:[%s173 + $0x240] sm:$0xff]
        %v293 = vld [vmem:[%s173 + $0x248] sm:$0xff]
        %v294 = vld [vmem:[%s173 + $0x250] sm:$0xff]
        %v295 = vld [vmem:[%s173 + $0x258] sm:$0xff]
        %v296 = vld [vmem:[%s173 + $0x260] sm:$0xff]
        %v297 = vld [vmem:[%s173 + $0x268] sm:$0xff]
        %v298 = vld [vmem:[%s173 + $0x270] sm:$0xff]
        %v299 = vld [vmem:[%s173 + $0x278] sm:$0xff]
        %v300 = vld [vmem:[%s173 + $0x280] sm:$0xff]
        %v301 = vld [vmem:[%s173 + $0x288] sm:$0xff]
        %v302 = vld [vmem:[%s173 + $0x290] sm:$0xff]
        %v303 = vld [vmem:[%s173 + $0x298] sm:$0xff]
        %v304 = vld [vmem:[%s173 + $0x2a0] sm:$0xff]
        %v305 = vld [vmem:[%s173 + $0x2a8] sm:$0xff]
        %v306 = vld [vmem:[%s173 + $0x2b0] sm:$0xff]
        %v307 = vld [vmem:[%s173 + $0x2b8] sm:$0xff]
        %v308 = vld [vmem:[%s173 + $0x2c0] sm:$0xff]
        %v309 = vld [vmem:[%s173 + $0x2c8] sm:$0xff]
        %v310 = vld [vmem:[%s173 + $0x2d0] sm:$0xff]
        %v311 = vld [vmem:[%s173 + $0x2d8] sm:$0xff]
        %v312 = vld [vmem:[%s173 + $0x2e0] sm:$0xff]
        %v313 = vld [vmem:[%s173 + $0x2e8] sm:$0xff]
        %v314 = vld [vmem:[%s173 + $0x2f0] sm:$0xff]
        %v315 = vld [vmem:[%s173 + $0x2f8] sm:$0xff]
        %v316 = vld [vmem:[%s173 + $0x300] sm:$0xff]
        %v317 = vld [vmem:[%s173 + $0x308] sm:$0xff]
        %v318 = vld [vmem:[%s173 + $0x310] sm:$0xff]
        %v319 = vld [vmem:[%s173 + $0x318] sm:$0xff]
        %v320 = vld [vmem:[%s173 + $0x320] sm:$0xff]
        %v321 = vld [vmem:[%s173 + $0x328] sm:$0xff]
        %v322 = vld [vmem:[%s173 + $0x330] sm:$0xff]
        %v323 = vld [vmem:[%s173 + $0x338] sm:$0xff]
        %v324 = vld [vmem:[%s173 + $0x340] sm:$0xff]
        %v325 = vld [vmem:[%s173 + $0x348] sm:$0xff]
        %v326 = vld [vmem:[%s173 + $0x350] sm:$0xff]
        %v327 = vld [vmem:[%s173 + $0x358] sm:$0xff]
        %v328 = vld [vmem:[%s173 + $0x360] sm:$0xff]
        %v329 = vld [vmem:[%s173 + $0x368] sm:$0xff]
        %v330 = vld [vmem:[%s173 + $0x370] sm:$0xff]
        %v331 = vld [vmem:[%s173 + $0x378] sm:$0xff]
        %v332 = vld [vmem:[%s173 + $0x380] sm:$0xff]
        %v333 = vld [vmem:[%s173 + $0x388] sm:$0xff]
        %v334 = vld [vmem:[%s173 + $0x390] sm:$0xff]
        %v335 = vld [vmem:[%s173 + $0x398] sm:$0xff]
        %v336 = vld [vmem:[%s173 + $0x3a0] sm:$0xff]
        %v337 = vld [vmem:[%s173 + $0x3a8] sm:$0xff]
        %v338 = vld [vmem:[%s173 + $0x3b0] sm:$0xff]
        %v339 = vld [vmem:[%s173 + $0x3b8] sm:$0xff]
        %v340 = vld [vmem:[%s173 + $0x3c0] sm:$0xff]
        %v341 = vld [vmem:[%s173 + $0x3c8] sm:$0xff]
        %v342 = vld [vmem:[%s173 + $0x3d0] sm:$0xff]
        %v343 = vld [vmem:[%s173 + $0x3d8] sm:$0xff]
        %v344 = vld [vmem:[%s173 + $0x3e0] sm:$0xff]
        %v345 = vld [vmem:[%s173 + $0x3e8] sm:$0xff]
        %v346 = vld [vmem:[%s173 + $0x3f0] sm:$0xff]
        %v347 = vld [vmem:[%s173 + $0x3f8] sm:$0xff]
        %v348 = vld [vmem:[%s173 + $0x400] sm:$0xff]
        %v349 = vld [vmem:[%s173 + $0x408] sm:$0xff]
        %v350 = vld [vmem:[%s173 + $0x410] sm:$0xff]
        %v351 = vld [vmem:[%s173 + $0x418] sm:$0xff]
        %v352 = vld [vmem:[%s173 + $0x420] sm:$0xff]
        %v353 = vld [vmem:[%s173 + $0x428] sm:$0xff]
        %v354 = vld [vmem:[%s173 + $0x430] sm:$0xff]
        %v355 = vld [vmem:[%s173 + $0x438] sm:$0xff]
        %v356 = vld [vmem:[%s173 + $0x440] sm:$0xff]
        %v357 = vld [vmem:[%s173 + $0x448] sm:$0xff]
        %v358 = vld [vmem:[%s173 + $0x450] sm:$0xff]
        %v359 = vld [vmem:[%s173 + $0x458] sm:$0xff]
        %v360 = vld [vmem:[%s173 + $0x460] sm:$0xff]
        %v361 = vld [vmem:[%s173 + $0x468] sm:$0xff]
        %v362 = vld [vmem:[%s173 + $0x470] sm:$0xff]
        %v363 = vld [vmem:[%s173 + $0x478] sm:$0xff]
        %v364 = vld [vmem:[%s173 + $0x480] sm:$0xff]
        %v365 = vld [vmem:[%s173 + $0x488] sm:$0xff]
        %v366 = vld [vmem:[%s173 + $0x490] sm:$0xff]
        %v367 = vld [vmem:[%s173 + $0x498] sm:$0xff]
        %v368 = vld [vmem:[%s173 + $0x4a0] sm:$0xff]
        %v369 = vld [vmem:[%s173 + $0x4a8] sm:$0xff]
        %v370 = vld [vmem:[%s173 + $0x4b0] sm:$0xff]
        %v371 = vld [vmem:[%s173 + $0x4b8] sm:$0xff]
        %v372 = vld [vmem:[%s173 + $0x4c0] sm:$0xff]
        %v373 = vld [vmem:[%s173 + $0x4c8] sm:$0xff]
        %v374 = vld [vmem:[%s173 + $0x4d0] sm:$0xff]
        %v375 = vld [vmem:[%s173 + $0x4d8] sm:$0xff]
        %v376 = vld [vmem:[%s173 + $0x4e0] sm:$0xff]
        %v377 = vld [vmem:[%s173 + $0x4e8] sm:$0xff]
        %v378 = vld [vmem:[%s173 + $0x4f0] sm:$0xff]
        %v379 = vld [vmem:[%s173 + $0x4f8] sm:$0xff]
        %v380 = vld [vmem:[%s173 + $0x500] sm:$0xff]
        %v381 = vld [vmem:[%s173 + $0x508] sm:$0xff]
        %v382 = vld [vmem:[%s173 + $0x510] sm:$0xff]
        %v383 = vld [vmem:[%s173 + $0x518] sm:$0xff]
        %v384 = vld [vmem:[%s173 + $0x520] sm:$0xff]
        %v385 = vld [vmem:[%s173 + $0x528] sm:$0xff]
        %v386 = vld [vmem:[%s173 + $0x530] sm:$0xff]
        %v387 = vld [vmem:[%s173 + $0x538] sm:$0xff]
        %v388 = vld [vmem:[%s173 + $0x540] sm:$0xff]
        %v389 = vld [vmem:[%s173 + $0x548] sm:$0xff]
        %v390 = vld [vmem:[%s173 + $0x550] sm:$0xff]
        %v391 = vld [vmem:[%s173 + $0x558] sm:$0xff]
        %v392 = vld [vmem:[%s173 + $0x560] sm:$0xff]
        %v393 = vld [vmem:[%s173 + $0x568] sm:$0xff]
        %v394 = vld [vmem:[%s173 + $0x570] sm:$0xff]
        %v395 = vld [vmem:[%s173 + $0x578] sm:$0xff]
        %v396 = vld [vmem:[%s173 + $0x580] sm:$0xff]
        %v397 = vld [vmem:[%s173 + $0x588] sm:$0xff]
        %v398 = vld [vmem:[%s173 + $0x590] sm:$0xff]
        %v399 = vld [vmem:[%s173 + $0x598] sm:$0xff]
        %v400 = vld [vmem:[%s173 + $0x5a0] sm:$0xff]
        %v401 = vld [vmem:[%s173 + $0x5a8] sm:$0xff]
        %v402 = vld [vmem:[%s173 + $0x5b0] sm:$0xff]
        %v403 = vld [vmem:[%s173 + $0x5b8] sm:$0xff]
        %v404 = vld [vmem:[%s173 + $0x5c0] sm:$0xff]
        %v405 = vld [vmem:[%s173 + $0x5c8] sm:$0xff]
        %v406 = vld [vmem:[%s173 + $0x5d0] sm:$0xff]
        %v407 = vld [vmem:[%s173 + $0x5d8] sm:$0xff]
        %v408 = vld [vmem:[%s173 + $0x5e0] sm:$0xff]
        %v409 = vld [vmem:[%s173 + $0x5e8] sm:$0xff]
        %v410 = vld [vmem:[%s173 + $0x5f0] sm:$0xff]
        %v411 = vld [vmem:[%s173 + $0x5f8] sm:$0xff]
        %v412 = vld [vmem:[%s173 + $0x600] sm:$0xff]
        %v413 = vld [vmem:[%s173 + $0x608] sm:$0xff]
        %v414 = vld [vmem:[%s173 + $0x610] sm:$0xff]
        %v415 = vld [vmem:[%s173 + $0x618] sm:$0xff]
        %v416 = vld [vmem:[%s173 + $0x620] sm:$0xff]
        %v417 = vld [vmem:[%s173 + $0x628] sm:$0xff]
        %v418 = vld [vmem:[%s173 + $0x630] sm:$0xff]
        %v419 = vld [vmem:[%s173 + $0x638] sm:$0xff]
        %v420 = vld [vmem:[%s173 + $0x640] sm:$0xff]
        %v421 = vld [vmem:[%s173 + $0x648] sm:$0xff]
        %v422 = vld [vmem:[%s173 + $0x650] sm:$0xff]
        %v423 = vld [vmem:[%s173 + $0x658] sm:$0xff]
        %v424 = vld [vmem:[%s173 + $0x660] sm:$0xff]
        %v425 = vld [vmem:[%s173 + $0x668] sm:$0xff]
        %v426 = vld [vmem:[%s173 + $0x670] sm:$0xff]
        %v427 = vld [vmem:[%s173 + $0x678] sm:$0xff]
        %v428 = vld [vmem:[%s173 + $0x680] sm:$0xff]
        %v429 = vld [vmem:[%s173 + $0x688] sm:$0xff]
        %v430 = vld [vmem:[%s173 + $0x690] sm:$0xff]
        %v431 = vld [vmem:[%s173 + $0x698] sm:$0xff]
        %v432 = vld [vmem:[%s173 + $0x6a0] sm:$0xff]
        %v433 = vld [vmem:[%s173 + $0x6a8] sm:$0xff]
        %v434 = vld [vmem:[%s173 + $0x6b0] sm:$0xff]
        %v435 = vld [vmem:[%s173 + $0x6b8] sm:$0xff]
        %v436 = vld [vmem:[%s173 + $0x6c0] sm:$0xff]
        %v437 = vld [vmem:[%s173 + $0x6c8] sm:$0xff]
        %v438 = vld [vmem:[%s173 + $0x6d0] sm:$0xff]
        %v439 = vld [vmem:[%s173 + $0x6d8] sm:$0xff]
        %v440 = vld [vmem:[%s173 + $0x6e0] sm:$0xff]
        %v441 = vld [vmem:[%s173 + $0x6e8] sm:$0xff]
        %v442 = vld [vmem:[%s173 + $0x6f0] sm:$0xff]
        %v443 = vld [vmem:[%s173 + $0x6f8] sm:$0xff]
        %v444 = vld [vmem:[%s173 + $0x700] sm:$0xff]
        %v445 = vld [vmem:[%s173 + $0x708] sm:$0xff]
        %v446 = vld [vmem:[%s173 + $0x710] sm:$0xff]
        %v447 = vld [vmem:[%s173 + $0x718] sm:$0xff]
        %v448 = vld [vmem:[%s173 + $0x720] sm:$0xff]
        %v449 = vld [vmem:[%s173 + $0x728] sm:$0xff]
        %v450 = vld [vmem:[%s173 + $0x730] sm:$0xff]
        %v451 = vld [vmem:[%s173 + $0x738] sm:$0xff]
        %v452 = vld [vmem:[%s173 + $0x740] sm:$0xff]
        %v453 = vld [vmem:[%s173 + $0x748] sm:$0xff]
        %v454 = vld [vmem:[%s173 + $0x750] sm:$0xff]
        %v455 = vld [vmem:[%s173 + $0x758] sm:$0xff]
        %v456 = vld [vmem:[%s173 + $0x760] sm:$0xff]
        %v457 = vld [vmem:[%s173 + $0x768] sm:$0xff]
        %v458 = vld [vmem:[%s173 + $0x770] sm:$0xff]
        %v459 = vld [vmem:[%s173 + $0x778] sm:$0xff]
        %v460 = vld [vmem:[%s173 + $0x780] sm:$0xff]
        %v461 = vld [vmem:[%s173 + $0x788] sm:$0xff]
        %v462 = vld [vmem:[%s173 + $0x790] sm:$0xff]
        %v463 = vld [vmem:[%s173 + $0x798] sm:$0xff]
        %v464 = vld [vmem:[%s173 + $0x7a0] sm:$0xff]
        %v465 = vld [vmem:[%s173 + $0x7a8] sm:$0xff]
        %v466 = vld [vmem:[%s173 + $0x7b0] sm:$0xff]
        %v467 = vld [vmem:[%s173 + $0x7b8] sm:$0xff]
        %v468 = vld [vmem:[%s173 + $0x7c0] sm:$0xff]
        %v469 = vld [vmem:[%s173 + $0x7c8] sm:$0xff]
        %v470 = vld [vmem:[%s173 + $0x7d0] sm:$0xff]
        %v471 = vld [vmem:[%s173 + $0x7d8] sm:$0xff]
        %v472 = vld [vmem:[%s173 + $0x7e0] sm:$0xff]
        %v473 = vld [vmem:[%s173 + $0x7e8] sm:$0xff]
        %v474 = vld [vmem:[%s173 + $0x7f0] sm:$0xff]
        %v475 = vld [vmem:[%s173 + $0x7f8] sm:$0xff]
        %v476 = vld [vmem:[%s173 + $0x800] sm:$0xff]
        %v477 = vld [vmem:[%s173 + $0x808] sm:$0xff]
        %v478 = vld [vmem:[%s173 + $0x810] sm:$0xff]
        %v479 = vld [vmem:[%s173 + $0x818] sm:$0xff]
        %v480 = vld [vmem:[%s173 + $0x820] sm:$0xff]
        %v481 = vld [vmem:[%s173 + $0x828] sm:$0xff]
        %v482 = vld [vmem:[%s173 + $0x830] sm:$0xff]
        %v483 = vld [vmem:[%s173 + $0x838] sm:$0xff]
        %v484 = vld [vmem:[%s173 + $0x840] sm:$0xff]
        %v485 = vld [vmem:[%s173 + $0x848] sm:$0xff]
        %v486 = vld [vmem:[%s173 + $0x850] sm:$0xff]
        %v487 = vld [vmem:[%s173 + $0x858] sm:$0xff]
        %v488 = vld [vmem:[%s173 + $0x860] sm:$0xff]
        %v489 = vld [vmem:[%s173 + $0x868] sm:$0xff]
        %v490 = vld [vmem:[%s173 + $0x870] sm:$0xff]
        %v491 = vld [vmem:[%s173 + $0x878] sm:$0xff]
        %v492 = vld [vmem:[%s173 + $0x880] sm:$0xff]
        %v493 = vld [vmem:[%s173 + $0x888] sm:$0xff]
        %v494 = vld [vmem:[%s173 + $0x890] sm:$0xff]
        %v495 = vld [vmem:[%s173 + $0x898] sm:$0xff]
        %v496 = vld [vmem:[%s173 + $0x8a0] sm:$0xff]
        %v497 = vld [vmem:[%s173 + $0x8a8] sm:$0xff]
        %v498 = vld [vmem:[%s173 + $0x8b0] sm:$0xff]
        %v499 = vld [vmem:[%s173 + $0x8b8] sm:$0xff]
        %v500 = vld [vmem:[%s173 + $0x8c0] sm:$0xff]
        %v501 = vld [vmem:[%s173 + $0x8c8] sm:$0xff]
        %v502 = vld [vmem:[%s173 + $0x8d0] sm:$0xff]
        %v503 = vld [vmem:[%s173 + $0x8d8] sm:$0xff]
        %v504 = vld [vmem:[%s173 + $0x8e0] sm:$0xff]
        %v505 = vld [vmem:[%s173 + $0x8e8] sm:$0xff]
        %v506 = vld [vmem:[%s173 + $0x8f0] sm:$0xff]
        %v507 = vld [vmem:[%s173 + $0x8f8] sm:$0xff]
        %v508 = vld [vmem:[%s173 + $0x900] sm:$0xff]
        %v509 = vld [vmem:[%s173 + $0x908] sm:$0xff]
        %v510 = vld [vmem:[%s173 + $0x910] sm:$0xff]
        %v511 = vld [vmem:[%s173 + $0x918] sm:$0xff]
        %v512 = vld [vmem:[%s173 + $0x920] sm:$0xff]
        %v513 = vld [vmem:[%s173 + $0x928] sm:$0xff]
        %v514 = vld [vmem:[%s173 + $0x930] sm:$0xff]
        %v515 = vld [vmem:[%s173 + $0x938] sm:$0xff]
        %v516 = vld [vmem:[%s173 + $0x940] sm:$0xff]
        %v517 = vld [vmem:[%s173 + $0x948] sm:$0xff]
        %v518 = vld [vmem:[%s173 + $0x950] sm:$0xff]
        %v519 = vld [vmem:[%s173 + $0x958] sm:$0xff]
        %v520 = vld [vmem:[%s173 + $0x960] sm:$0xff]
        %v521 = vld [vmem:[%s173 + $0x968] sm:$0xff]
        %v522 = vld [vmem:[%s173 + $0x970] sm:$0xff]
        %v523 = vld [vmem:[%s173 + $0x978] sm:$0xff]
        %v524 = vld [vmem:[%s173 + $0x980] sm:$0xff]
        %v525 = vld [vmem:[%s173 + $0x988] sm:$0xff]
        %v526 = vld [vmem:[%s173 + $0x990] sm:$0xff]
        %v527 = vld [vmem:[%s173 + $0x998] sm:$0xff]
        %v528 = vld [vmem:[%s173 + $0x9a0] sm:$0xff]
        %v529 = vld [vmem:[%s173 + $0x9a8] sm:$0xff]
        %v530 = vld [vmem:[%s173 + $0x9b0] sm:$0xff]
        %v531 = vld [vmem:[%s173 + $0x9b8] sm:$0xff]
        %v532 = vld [vmem:[%s173 + $0x9c0] sm:$0xff]
        %v533 = vld [vmem:[%s173 + $0x9c8] sm:$0xff]
        %v534 = vld [vmem:[%s173 + $0x9d0] sm:$0xff]
        %v535 = vld [vmem:[%s173 + $0x9d8] sm:$0xff]
        %v536 = vld [vmem:[%s173 + $0x9e0] sm:$0xff]
        %v537 = vld [vmem:[%s173 + $0x9e8] sm:$0xff]
        %v538 = vld [vmem:[%s173 + $0x9f0] sm:$0xff]
        %v539 = vld [vmem:[%s173 + $0x9f8] sm:$0xff]
        %v540 = vld [vmem:[%s173 + $0xa00] sm:$0xff]
        %v541 = vld [vmem:[%s173 + $0xa08] sm:$0xff]
        %v542 = vld [vmem:[%s173 + $0xa10] sm:$0xff]
        %v543 = vld [vmem:[%s173 + $0xa18] sm:$0xff]
        %v544 = vld [vmem:[%s173 + $0xa20] sm:$0xff]
        %v545 = vld [vmem:[%s173 + $0xa28] sm:$0xff]
        %v546 = vld [vmem:[%s173 + $0xa30] sm:$0xff]
        %v547 = vld [vmem:[%s173 + $0xa38] sm:$0xff]
        %v548 = vld [vmem:[%s173 + $0xa40] sm:$0xff]
        %v549 = vld [vmem:[%s173 + $0xa48] sm:$0xff]
        %v550 = vld [vmem:[%s173 + $0xa50] sm:$0xff]
        %v551 = vld [vmem:[%s173 + $0xa58] sm:$0xff]
        %v552 = vld [vmem:[%s173 + $0xa60] sm:$0xff]
        %v553 = vld [vmem:[%s173 + $0xa68] sm:$0xff]
        %v554 = vld [vmem:[%s173 + $0xa70] sm:$0xff]
        %v555 = vld [vmem:[%s173 + $0xa78] sm:$0xff]
        %v556 = vld [vmem:[%s173 + $0xa80] sm:$0xff]
        %v557 = vld [vmem:[%s173 + $0xa88] sm:$0xff]
        %v558 = vld [vmem:[%s173 + $0xa90] sm:$0xff]
        %v559 = vld [vmem:[%s173 + $0xa98] sm:$0xff]
        %v560 = vld [vmem:[%s173 + $0xaa0] sm:$0xff]
        %v561 = vld [vmem:[%s173 + $0xaa8] sm:$0xff]
        %v562 = vld [vmem:[%s173 + $0xab0] sm:$0xff]
        %v563 = vld [vmem:[%s173 + $0xab8] sm:$0xff]
        %v564 = vld [vmem:[%s173 + $0xac0] sm:$0xff]
        %v565 = vld [vmem:[%s173 + $0xac8] sm:$0xff]
        %v566 = vld [vmem:[%s173 + $0xad0] sm:$0xff]
        %v567 = vld [vmem:[%s173 + $0xad8] sm:$0xff]
        %v568 = vld [vmem:[%s173 + $0xae0] sm:$0xff]
        %v569 = vld [vmem:[%s173 + $0xae8] sm:$0xff]
        %v570 = vld [vmem:[%s173 + $0xaf0] sm:$0xff]
        %v571 = vld [vmem:[%s173 + $0xaf8] sm:$0xff]
        %v572 = vld [vmem:[%s173 + $0xb00] sm:$0xff]
        %v573 = vld [vmem:[%s173 + $0xb08] sm:$0xff]
        %v574 = vld [vmem:[%s173 + $0xb10] sm:$0xff]
        %v575 = vld [vmem:[%s173 + $0xb18] sm:$0xff]
        %v576 = vld [vmem:[%s173 + $0xb20] sm:$0xff]
        %v577 = vld [vmem:[%s173 + $0xb28] sm:$0xff]
        %v578 = vld [vmem:[%s173 + $0xb30] sm:$0xff]
        %v579 = vld [vmem:[%s173 + $0xb38] sm:$0xff]
        %v580 = vld [vmem:[%s173 + $0xb40] sm:$0xff]
        %v581 = vld [vmem:[%s173 + $0xb48] sm:$0xff]
        %v582 = vld [vmem:[%s173 + $0xb50] sm:$0xff]
        %v583 = vld [vmem:[%s173 + $0xb58] sm:$0xff]
        %v584 = vld [vmem:[%s173 + $0xb60] sm:$0xff]
        %v585 = vld [vmem:[%s173 + $0xb68] sm:$0xff]
        %v586 = vld [vmem:[%s173 + $0xb70] sm:$0xff]
        %v587 = vld [vmem:[%s173 + $0xb78] sm:$0xff]
        %v588 = vld [vmem:[%s173 + $0xb80] sm:$0xff]
        %v589 = vld [vmem:[%s173 + $0xb88] sm:$0xff]
        %v590 = vld [vmem:[%s173 + $0xb90] sm:$0xff]
        %v591 = vld [vmem:[%s173 + $0xb98] sm:$0xff]
        %v592 = vld [vmem:[%s173 + $0xba0] sm:$0xff]
        %v593 = vld [vmem:[%s173 + $0xba8] sm:$0xff]
        %v594 = vld [vmem:[%s173 + $0xbb0] sm:$0xff]
        %v595 = vld [vmem:[%s173 + $0xbb8] sm:$0xff]
        %v596 = vld [vmem:[%s173 + $0xbc0] sm:$0xff]
        %v597 = vld [vmem:[%s173 + $0xbc8] sm:$0xff]
        %v598 = vld [vmem:[%s173 + $0xbd0] sm:$0xff]
        %v599 = vld [vmem:[%s173 + $0xbd8] sm:$0xff]
        %v600 = vld [vmem:[%s173 + $0xbe0] sm:$0xff]
        %v601 = vld [vmem:[%s173 + $0xbe8] sm:$0xff]
        %v602 = vld [vmem:[%s173 + $0xbf0] sm:$0xff]
        %v603 = vld [vmem:[%s173 + $0xbf8] sm:$0xff]
        %v604 = vld [vmem:[%s173 + $0xc00] sm:$0xff]
        %v605 = vld [vmem:[%s173 + $0xc08] sm:$0xff]
        %v606 = vld [vmem:[%s173 + $0xc10] sm:$0xff]
        %v607 = vld [vmem:[%s173 + $0xc18] sm:$0xff]
        %v608 = vld [vmem:[%s173 + $0xc20] sm:$0xff]
        %v609 = vld [vmem:[%s173 + $0xc28] sm:$0xff]
        %v610 = vld [vmem:[%s173 + $0xc30] sm:$0xff]
        %v611 = vld [vmem:[%s173 + $0xc38] sm:$0xff]
        %v612 = vld [vmem:[%s173 + $0xc40] sm:$0xff]
        %v613 = vld [vmem:[%s173 + $0xc48] sm:$0xff]
        %v614 = vld [vmem:[%s173 + $0xc50] sm:$0xff]
        %v615 = vld [vmem:[%s173 + $0xc58] sm:$0xff]
        %v616 = vld [vmem:[%s173 + $0xc60] sm:$0xff]
        %v617 = vld [vmem:[%s173 + $0xc68] sm:$0xff]
        %v618 = vld [vmem:[%s173 + $0xc70] sm:$0xff]
        %v619 = vld [vmem:[%s173 + $0xc78] sm:$0xff]
        %v620 = vld [vmem:[%s173 + $0xc80] sm:$0xff]
        %v621 = vld [vmem:[%s173 + $0xc88] sm:$0xff]
        %v622 = vld [vmem:[%s173 + $0xc90] sm:$0xff]
        %v623 = vld [vmem:[%s173 + $0xc98] sm:$0xff]
        %v624 = vld [vmem:[%s173 + $0xca0] sm:$0xff]
        %v625 = vld [vmem:[%s173 + $0xca8] sm:$0xff]
        %v626 = vld [vmem:[%s173 + $0xcb0] sm:$0xff]
        %v627 = vld [vmem:[%s173 + $0xcb8] sm:$0xff]
        %v628 = vld [vmem:[%s173 + $0xcc0] sm:$0xff]
        %v629 = vld [vmem:[%s173 + $0xcc8] sm:$0xff]
        %v630 = vld [vmem:[%s173 + $0xcd0] sm:$0xff]
        %v631 = vld [vmem:[%s173 + $0xcd8] sm:$0xff]
        %v632 = vld [vmem:[%s173 + $0xce0] sm:$0xff]
        %v633 = vld [vmem:[%s173 + $0xce8] sm:$0xff]
        %v634 = vld [vmem:[%s173 + $0xcf0] sm:$0xff]
        %v635 = vld [vmem:[%s173 + $0xcf8] sm:$0xff]
        %v636 = vld [vmem:[%s173 + $0xd00] sm:$0xff]
        %v637 = vld [vmem:[%s173 + $0xd08] sm:$0xff]
        %v638 = vld [vmem:[%s173 + $0xd10] sm:$0xff]
        %v639 = vld [vmem:[%s173 + $0xd18] sm:$0xff]
        %v640 = vld [vmem:[%s173 + $0xd20] sm:$0xff]
        %v641 = vld [vmem:[%s173 + $0xd28] sm:$0xff]
        %v642 = vld [vmem:[%s173 + $0xd30] sm:$0xff]
        %v643 = vld [vmem:[%s173 + $0xd38] sm:$0xff]
        %v644 = vld [vmem:[%s173 + $0xd40] sm:$0xff]
        %v645 = vld [vmem:[%s173 + $0xd48] sm:$0xff]
        %v646 = vld [vmem:[%s173 + $0xd50] sm:$0xff]
        %v647 = vld [vmem:[%s173 + $0xd58] sm:$0xff]
        %v648 = vld [vmem:[%s173 + $0xd60] sm:$0xff]
        %v649 = vld [vmem:[%s173 + $0xd68] sm:$0xff]
        %v650 = vld [vmem:[%s173 + $0xd70] sm:$0xff]
        %v651 = vld [vmem:[%s173 + $0xd78] sm:$0xff]
        %v652 = vld [vmem:[%s173 + $0xd80] sm:$0xff]
        %v653 = vld [vmem:[%s173 + $0xd88] sm:$0xff]
        %v654 = vld [vmem:[%s173 + $0xd90] sm:$0xff]
        %v655 = vld [vmem:[%s173 + $0xd98] sm:$0xff]
        %v656 = vld [vmem:[%s173 + $0xda0] sm:$0xff]
        %v657 = vld [vmem:[%s173 + $0xda8] sm:$0xff]
        %v658 = vld [vmem:[%s173 + $0xdb0] sm:$0xff]
        %v659 = vld [vmem:[%s173 + $0xdb8] sm:$0xff]
        %v660 = vld [vmem:[%s173 + $0xdc0] sm:$0xff]
        %v661 = vld [vmem:[%s173 + $0xdc8] sm:$0xff]
        %v662 = vld [vmem:[%s173 + $0xdd0] sm:$0xff]
        %v663 = vld [vmem:[%s173 + $0xdd8] sm:$0xff]
        %v664 = vld [vmem:[%s173 + $0xde0] sm:$0xff]
        %v665 = vld [vmem:[%s173 + $0xde8] sm:$0xff]
        %v666 = vld [vmem:[%s173 + $0xdf0] sm:$0xff]
        %v667 = vld [vmem:[%s173 + $0xdf8] sm:$0xff]
        %v668 = vld [vmem:[%s173 + $0xe00] sm:$0xff]
        %v669 = vld [vmem:[%s173 + $0xe08] sm:$0xff]
        %v670 = vld [vmem:[%s173 + $0xe10] sm:$0xff]
        %v671 = vld [vmem:[%s173 + $0xe18] sm:$0xff]
        %v672 = vld [vmem:[%s173 + $0xe20] sm:$0xff]
        %v673 = vld [vmem:[%s173 + $0xe28] sm:$0xff]
        %v674 = vld [vmem:[%s173 + $0xe30] sm:$0xff]
        %v675 = vld [vmem:[%s173 + $0xe38] sm:$0xff]
        %v676 = vld [vmem:[%s173 + $0xe40] sm:$0xff]
        %v677 = vld [vmem:[%s173 + $0xe48] sm:$0xff]
        %v678 = vld [vmem:[%s173 + $0xe50] sm:$0xff]
        %v679 = vld [vmem:[%s173 + $0xe58] sm:$0xff]
        %v680 = vld [vmem:[%s173 + $0xe60] sm:$0xff]
        %v681 = vld [vmem:[%s173 + $0xe68] sm:$0xff]
        %v682 = vld [vmem:[%s173 + $0xe70] sm:$0xff]
        %v683 = vld [vmem:[%s173 + $0xe78] sm:$0xff]
        %v684 = vld [vmem:[%s173 + $0xe80] sm:$0xff]
        %v685 = vld [vmem:[%s173 + $0xe88] sm:$0xff]
        %v686 = vld [vmem:[%s173 + $0xe90] sm:$0xff]
        %v687 = vld [vmem:[%s173 + $0xe98] sm:$0xff]
        %v688 = vld [vmem:[%s173 + $0xea0] sm:$0xff]
        %v689 = vld [vmem:[%s173 + $0xea8] sm:$0xff]
        %v690 = vld [vmem:[%s173 + $0xeb0] sm:$0xff]
        %v691 = vld [vmem:[%s173 + $0xeb8] sm:$0xff]
        %v692 = vld [vmem:[%s173 + $0xec0] sm:$0xff]
        %v693 = vld [vmem:[%s173 + $0xec8] sm:$0xff]
        %v694 = vld [vmem:[%s173 + $0xed0] sm:$0xff]
        %v695 = vld [vmem:[%s173 + $0xed8] sm:$0xff]
        %v696 = vld [vmem:[%s173 + $0xee0] sm:$0xff]
        %v697 = vld [vmem:[%s173 + $0xee8] sm:$0xff]
        %v698 = vld [vmem:[%s173 + $0xef0] sm:$0xff]
        %v699 = vld [vmem:[%s173 + $0xef8] sm:$0xff]
        %v700 = vld [vmem:[%s173 + $0xf00] sm:$0xff]
        %v701 = vld [vmem:[%s173 + $0xf08] sm:$0xff]
        %v702 = vld [vmem:[%s173 + $0xf10] sm:$0xff]
        %v703 = vld [vmem:[%s173 + $0xf18] sm:$0xff]
        %v704 = vld [vmem:[%s173 + $0xf20] sm:$0xff]
        %v705 = vld [vmem:[%s173 + $0xf28] sm:$0xff]
        %v706 = vld [vmem:[%s173 + $0xf30] sm:$0xff]
        %v707 = vld [vmem:[%s173 + $0xf38] sm:$0xff]
        %v708 = vld [vmem:[%s173 + $0xf40] sm:$0xff]
        %v709 = vld [vmem:[%s173 + $0xf48] sm:$0xff]
        %v710 = vld [vmem:[%s173 + $0xf50] sm:$0xff]
        %v711 = vld [vmem:[%s173 + $0xf58] sm:$0xff]
        %v712 = vld [vmem:[%s173 + $0xf60] sm:$0xff]
        %v713 = vld [vmem:[%s173 + $0xf68] sm:$0xff]
        %v714 = vld [vmem:[%s173 + $0xf70] sm:$0xff]
        %v715 = vld [vmem:[%s173 + $0xf78] sm:$0xff]
        %v716 = vld [vmem:[%s173 + $0xf80] sm:$0xff]
        %v717 = vld [vmem:[%s173 + $0xf88] sm:$0xff]
        %v718 = vld [vmem:[%s173 + $0xf90] sm:$0xff]
        %v719 = vld [vmem:[%s173 + $0xf98] sm:$0xff]
        %v720 = vld [vmem:[%s173 + $0xfa0] sm:$0xff]
        %v721 = vld [vmem:[%s173 + $0xfa8] sm:$0xff]
        %v722 = vld [vmem:[%s173 + $0xfb0] sm:$0xff]
        %v723 = vld [vmem:[%s173 + $0xfb8] sm:$0xff]
        %v724 = vld [vmem:[%s173 + $0xfc0] sm:$0xff]
        %v725 = vld [vmem:[%s173 + $0xfc8] sm:$0xff]
        %v726 = vld [vmem:[%s173 + $0xfd0] sm:$0xff]
        %v727 = vld [vmem:[%s173 + $0xfd8] sm:$0xff]
        %v728 = vld [vmem:[%s173 + $0xfe0] sm:$0xff]
        %v729 = vld [vmem:[%s173 + $0xfe8] sm:$0xff]
        %v730 = vld [vmem:[%s173 + $0xff0] sm:$0xff]
        %v731 = vld [vmem:[%s173 + $0xff8] sm:$0xff]
        %v732 = vld [vmem:[%s173 + $0x1000] sm:$0xff]
        %v733 = vld [vmem:[%s173 + $0x1008] sm:$0xff]
        %v734 = vld [vmem:[%s173 + $0x1010] sm:$0xff]
        %v735 = vld [vmem:[%s173 + $0x1018] sm:$0xff]
        %v736 = vld [vmem:[%s173 + $0x1020] sm:$0xff]
        %v737 = vld [vmem:[%s173 + $0x1028] sm:$0xff]
        %v738 = vld [vmem:[%s173 + $0x1030] sm:$0xff]
        %v739 = vld [vmem:[%s173 + $0x1038] sm:$0xff]
        %v740 = vld [vmem:[%s173 + $0x1040] sm:$0xff]
        %v741 = vld [vmem:[%s173 + $0x1048] sm:$0xff]
        %v742 = vld [vmem:[%s173 + $0x1050] sm:$0xff]
        %v743 = vld [vmem:[%s173 + $0x1058] sm:$0xff]
        %v744 = vld [vmem:[%s173 + $0x1060] sm:$0xff]
        %v745 = vld [vmem:[%s173 + $0x1068] sm:$0xff]
        %v746 = vld [vmem:[%s173 + $0x1070] sm:$0xff]
        %v747 = vld [vmem:[%s173 + $0x1078] sm:$0xff]
        %v748 = vld [vmem:[%s173 + $0x1080] sm:$0xff]
        %v749 = vld [vmem:[%s173 + $0x1088] sm:$0xff]
        %v750 = vld [vmem:[%s173 + $0x1090] sm:$0xff]
        %v751 = vld [vmem:[%s173 + $0x1098] sm:$0xff]
        %v752 = vld [vmem:[%s173 + $0x10a0] sm:$0xff]
        %v753 = vld [vmem:[%s173 + $0x10a8] sm:$0xff]
        %v754 = vld [vmem:[%s173 + $0x10b0] sm:$0xff]
        %v755 = vld [vmem:[%s173 + $0x10b8] sm:$0xff]
        %v756 = vld [vmem:[%s173 + $0x10c0] sm:$0xff]
        %v757 = vld [vmem:[%s173 + $0x10c8] sm:$0xff]
        %v758 = vld [vmem:[%s173 + $0x10d0] sm:$0xff]
        %v759 = vld [vmem:[%s173 + $0x10d8] sm:$0xff]
        %v760 = vld [vmem:[%s173 + $0x10e0] sm:$0xff]
        %v761 = vld [vmem:[%s173 + $0x10e8] sm:$0xff]
        %v762 = vld [vmem:[%s173 + $0x10f0] sm:$0xff]
        %v763 = vld [vmem:[%s173 + $0x10f8] sm:$0xff]
        %v764 = vld [vmem:[%s173 + $0x1100] sm:$0xff]
        %v765 = vld [vmem:[%s173 + $0x1108] sm:$0xff]
        %v766 = vld [vmem:[%s173 + $0x1110] sm:$0xff]
        %v767 = vld [vmem:[%s173 + $0x1118] sm:$0xff]
        %v768 = vld [vmem:[%s173 + $0x1120] sm:$0xff]
        %v769 = vld [vmem:[%s173 + $0x1128] sm:$0xff]
        %v770 = vld [vmem:[%s173 + $0x1130] sm:$0xff]
        %v771 = vld [vmem:[%s173 + $0x1138] sm:$0xff]
        %v772 = vld [vmem:[%s173 + $0x1140] sm:$0xff]
        %v773 = vld [vmem:[%s173 + $0x1148] sm:$0xff]
        %v774 = vld [vmem:[%s173 + $0x1150] sm:$0xff]
        %v775 = vld [vmem:[%s173 + $0x1158] sm:$0xff]
        %v776 = vld [vmem:[%s173 + $0x1160] sm:$0xff]
        %v777 = vld [vmem:[%s173 + $0x1168] sm:$0xff]
        %v778 = vld [vmem:[%s173 + $0x1170] sm:$0xff]
        %v779 = vld [vmem:[%s173 + $0x1178] sm:$0xff]
        %v780 = vld [vmem:[%s173 + $0x1180] sm:$0xff]
        %v781 = vld [vmem:[%s173 + $0x1188] sm:$0xff]
        %v782 = vld [vmem:[%s173 + $0x1190] sm:$0xff]
        %v783 = vld [vmem:[%s173 + $0x1198] sm:$0xff]
        %v784 = vld [vmem:[%s173 + $0x11a0] sm:$0xff]
        %v785 = vld [vmem:[%s173 + $0x11a8] sm:$0xff]
        %v786 = vld [vmem:[%s173 + $0x11b0] sm:$0xff]
        %v787 = vld [vmem:[%s173 + $0x11b8] sm:$0xff]
        %v788 = vld [vmem:[%s173 + $0x11c0] sm:$0xff]
        %v789 = vld [vmem:[%s173 + $0x11c8] sm:$0xff]
        %v790 = vld [vmem:[%s173 + $0x11d0] sm:$0xff]
        %v791 = vld [vmem:[%s173 + $0x11d8] sm:$0xff]
        %v792 = vld [vmem:[%s173 + $0x11e0] sm:$0xff]
        %v793 = vld [vmem:[%s173 + $0x11e8] sm:$0xff]
        %v794 = vld [vmem:[%s173 + $0x11f0] sm:$0xff]
        %v795 = vld [vmem:[%s173 + $0x11f8] sm:$0xff]
        %v796 = vld [vmem:[%s173 + $0x1200] sm:$0xff]
        %v797 = vld [vmem:[%s173 + $0x1208] sm:$0xff]
        %v798 = vld [vmem:[%s173 + $0x1210] sm:$0xff]
        %v799 = vld [vmem:[%s173 + $0x1218] sm:$0xff]
        %v800 = vld [vmem:[%s173 + $0x1220] sm:$0xff]
        %v801 = vld [vmem:[%s173 + $0x1228] sm:$0xff]
        %v802 = vld [vmem:[%s173 + $0x1230] sm:$0xff]
        %v803 = vld [vmem:[%s173 + $0x1238] sm:$0xff]
        %v804 = vld [vmem:[%s173 + $0x1240] sm:$0xff]
        %v805 = vld [vmem:[%s173 + $0x1248] sm:$0xff]
        %v806 = vld [vmem:[%s173 + $0x1250] sm:$0xff]
        %v807 = vld [vmem:[%s173 + $0x1258] sm:$0xff]
        %v808 = vld [vmem:[%s173 + $0x1260] sm:$0xff]
        %v809 = vld [vmem:[%s173 + $0x1268] sm:$0xff]
        %v810 = vld [vmem:[%s173 + $0x1270] sm:$0xff]
        %v811 = vld [vmem:[%s173 + $0x1278] sm:$0xff]
        %v812 = vld [vmem:[%s173 + $0x1280] sm:$0xff]
        %v813 = vld [vmem:[%s173 + $0x1288] sm:$0xff]
        %v814 = vld [vmem:[%s173 + $0x1290] sm:$0xff]
        %v815 = vld [vmem:[%s173 + $0x1298] sm:$0xff]
        %v816 = vld [vmem:[%s173 + $0x12a0] sm:$0xff]
        %v817 = vld [vmem:[%s173 + $0x12a8] sm:$0xff]
        %v818 = vld [vmem:[%s173 + $0x12b0] sm:$0xff]
        %v819 = vld [vmem:[%s173 + $0x12b8] sm:$0xff]
        %v820 = vld [vmem:[%s173 + $0x12c0] sm:$0xff]
        %v821 = vld [vmem:[%s173 + $0x12c8] sm:$0xff]
        %v822 = vld [vmem:[%s173 + $0x12d0] sm:$0xff]
        %v823 = vld [vmem:[%s173 + $0x12d8] sm:$0xff]
        %v824 = vld [vmem:[%s173 + $0x12e0] sm:$0xff]
        %v825 = vld [vmem:[%s173 + $0x12e8] sm:$0xff]
        %v826 = vld [vmem:[%s173 + $0x12f0] sm:$0xff]
        %v827 = vld [vmem:[%s173 + $0x12f8] sm:$0xff]
        %v828 = vld [vmem:[%s173 + $0x1300] sm:$0xff]
        %v829 = vld [vmem:[%s173 + $0x1308] sm:$0xff]
        %v830 = vld [vmem:[%s173 + $0x1310] sm:$0xff]
        %v831 = vld [vmem:[%s173 + $0x1318] sm:$0xff]
        %v832 = vld [vmem:[%s173 + $0x1320] sm:$0xff]
        %v833 = vld [vmem:[%s173 + $0x1328] sm:$0xff]
        %v834 = vld [vmem:[%s173 + $0x1330] sm:$0xff]
        %v835 = vld [vmem:[%s173 + $0x1338] sm:$0xff]
        %v836 = vld [vmem:[%s173 + $0x1340] sm:$0xff]
        %v837 = vld [vmem:[%s173 + $0x1348] sm:$0xff]
        %v838 = vld [vmem:[%s173 + $0x1350] sm:$0xff]
        %v839 = vld [vmem:[%s173 + $0x1358] sm:$0xff]
        %v840 = vld [vmem:[%s173 + $0x1360] sm:$0xff]
        %v841 = vld [vmem:[%s173 + $0x1368] sm:$0xff]
        %v842 = vld [vmem:[%s173 + $0x1370] sm:$0xff]
        %v843 = vld [vmem:[%s173 + $0x1378] sm:$0xff]
        %v844 = vld [vmem:[%s173 + $0x1380] sm:$0xff]
        %v845 = vld [vmem:[%s173 + $0x1388] sm:$0xff]
        %v846 = vld [vmem:[%s173 + $0x1390] sm:$0xff]
        %v847 = vld [vmem:[%s173 + $0x1398] sm:$0xff]
        %v848 = vld [vmem:[%s173 + $0x13a0] sm:$0xff]
        %v849 = vld [vmem:[%s173 + $0x13a8] sm:$0xff]
        %v850 = vld [vmem:[%s173 + $0x13b0] sm:$0xff]
        %v851 = vld [vmem:[%s173 + $0x13b8] sm:$0xff]
        %v852 = vld [vmem:[%s173 + $0x13c0] sm:$0xff]
        %v853 = vld [vmem:[%s173 + $0x13c8] sm:$0xff]
        %v854 = vld [vmem:[%s173 + $0x13d0] sm:$0xff]
        %v855 = vld [vmem:[%s173 + $0x13d8] sm:$0xff]
        %v856 = vld [vmem:[%s173 + $0x13e0] sm:$0xff]
        %v857 = vld [vmem:[%s173 + $0x13e8] sm:$0xff]
        %v858 = vld [vmem:[%s173 + $0x13f0] sm:$0xff]
        %v859 = vld [vmem:[%s173 + $0x13f8] sm:$0xff]
        %v860 = vld [vmem:[%s173 + $0x1400] sm:$0xff]
        %v861 = vld [vmem:[%s173 + $0x1408] sm:$0xff]
        %v862 = vld [vmem:[%s173 + $0x1410] sm:$0xff]
        %v863 = vld [vmem:[%s173 + $0x1418] sm:$0xff]
        %v864 = vld [vmem:[%s173 + $0x1420] sm:$0xff]
        %v865 = vld [vmem:[%s173 + $0x1428] sm:$0xff]
        %v866 = vld [vmem:[%s173 + $0x1430] sm:$0xff]
        %v867 = vld [vmem:[%s173 + $0x1438] sm:$0xff]
        %v868 = vld [vmem:[%s173 + $0x1440] sm:$0xff]
        %v869 = vld [vmem:[%s173 + $0x1448] sm:$0xff]
        %v870 = vld [vmem:[%s173 + $0x1450] sm:$0xff]
        %v871 = vld [vmem:[%s173 + $0x1458] sm:$0xff]
        %v872 = vld [vmem:[%s173 + $0x1460] sm:$0xff]
        %v873 = vld [vmem:[%s173 + $0x1468] sm:$0xff]
        %v874 = vld [vmem:[%s173 + $0x1470] sm:$0xff]
        %v875 = vld [vmem:[%s173 + $0x1478] sm:$0xff]
        %v876 = vld [vmem:[%s173 + $0x1480] sm:$0xff]
        %v877 = vld [vmem:[%s173 + $0x1488] sm:$0xff]
        %v878 = vld [vmem:[%s173 + $0x1490] sm:$0xff]
        %v879 = vld [vmem:[%s173 + $0x1498] sm:$0xff]
        %v880 = vld [vmem:[%s173 + $0x14a0] sm:$0xff]
        %v881 = vld [vmem:[%s173 + $0x14a8] sm:$0xff]
        %v882 = vld [vmem:[%s173 + $0x14b0] sm:$0xff]
        %v883 = vld [vmem:[%s173 + $0x14b8] sm:$0xff]
        %v884 = vld [vmem:[%s173 + $0x14c0] sm:$0xff]
        %v885 = vld [vmem:[%s173 + $0x14c8] sm:$0xff]
        %v886 = vld [vmem:[%s173 + $0x14d0] sm:$0xff]
        %v887 = vld [vmem:[%s173 + $0x14d8] sm:$0xff]
        %v888 = vld [vmem:[%s173 + $0x14e0] sm:$0xff]
        %v889 = vld [vmem:[%s173 + $0x14e8] sm:$0xff]
        %v890 = vld [vmem:[%s173 + $0x14f0] sm:$0xff]
        %v891 = vld [vmem:[%s173 + $0x14f8] sm:$0xff]
        %v892 = vld [vmem:[%s173 + $0x1500] sm:$0xff]
        %v893 = vld [vmem:[%s173 + $0x1508] sm:$0xff]
        %v894 = vld [vmem:[%s173 + $0x1510] sm:$0xff]
        %v895 = vld [vmem:[%s173 + $0x1518] sm:$0xff]
        %v896 = vld [vmem:[%s173 + $0x1520] sm:$0xff]
        %v897 = vld [vmem:[%s173 + $0x1528] sm:$0xff]
        %v898 = vld [vmem:[%s173 + $0x1530] sm:$0xff]
        %v899 = vld [vmem:[%s173 + $0x1538] sm:$0xff]
        %v900 = vld [vmem:[%s173 + $0x1540] sm:$0xff]
        %v901 = vld [vmem:[%s173 + $0x1548] sm:$0xff]
        %v902 = vld [vmem:[%s173 + $0x1550] sm:$0xff]
        %v903 = vld [vmem:[%s173 + $0x1558] sm:$0xff]
        %v904 = vld [vmem:[%s173 + $0x1560] sm:$0xff]
        %v905 = vld [vmem:[%s173 + $0x1568] sm:$0xff]
        %v906 = vld [vmem:[%s173 + $0x1570] sm:$0xff]
        %v907 = vld [vmem:[%s173 + $0x1578] sm:$0xff]
        %v908 = vld [vmem:[%s173 + $0x1580] sm:$0xff]
        %v909 = vld [vmem:[%s173 + $0x1588] sm:$0xff]
        %v910 = vld [vmem:[%s173 + $0x1590] sm:$0xff]
        %v911 = vld [vmem:[%s173 + $0x1598] sm:$0xff]
        %v912 = vld [vmem:[%s173 + $0x15a0] sm:$0xff]
        %v913 = vld [vmem:[%s173 + $0x15a8] sm:$0xff]
        %v914 = vld [vmem:[%s173 + $0x15b0] sm:$0xff]
        %v915 = vld [vmem:[%s173 + $0x15b8] sm:$0xff]
        %v916 = vld [vmem:[%s173 + $0x15c0] sm:$0xff]
        %v917 = vld [vmem:[%s173 + $0x15c8] sm:$0xff]
        %v918 = vld [vmem:[%s173 + $0x15d0] sm:$0xff]
        %v919 = vld [vmem:[%s173 + $0x15d8] sm:$0xff]
        %v920 = vld [vmem:[%s173 + $0x15e0] sm:$0xff]
        %v921 = vld [vmem:[%s173 + $0x15e8] sm:$0xff]
        %v922 = vld [vmem:[%s173 + $0x15f0] sm:$0xff]
        %v923 = vld [vmem:[%s173 + $0x15f8] sm:$0xff]
        %v924 = vld [vmem:[%s173 + $0x1600] sm:$0xff]
        %v925 = vld [vmem:[%s173 + $0x1608] sm:$0xff]
        %v926 = vld [vmem:[%s173 + $0x1610] sm:$0xff]
        %v927 = vld [vmem:[%s173 + $0x1618] sm:$0xff]
        %v928 = vld [vmem:[%s173 + $0x1620] sm:$0xff]
        %v929 = vld [vmem:[%s173 + $0x1628] sm:$0xff]
        %v930 = vld [vmem:[%s173 + $0x1630] sm:$0xff]
        %v931 = vld [vmem:[%s173 + $0x1638] sm:$0xff]
        %v932 = vld [vmem:[%s173 + $0x1640] sm:$0xff]
        %v933 = vld [vmem:[%s173 + $0x1648] sm:$0xff]
        %v934 = vld [vmem:[%s173 + $0x1650] sm:$0xff]
        %v935 = vld [vmem:[%s173 + $0x1658] sm:$0xff]
        %v936 = vld [vmem:[%s173 + $0x1660] sm:$0xff]
        %v937 = vld [vmem:[%s173 + $0x1668] sm:$0xff]
        %v938 = vld [vmem:[%s173 + $0x1670] sm:$0xff]
        %v939 = vld [vmem:[%s173 + $0x1678] sm:$0xff]
        %v940 = vld [vmem:[%s173 + $0x1680] sm:$0xff]
        %v941 = vld [vmem:[%s173 + $0x1688] sm:$0xff]
        %v942 = vld [vmem:[%s173 + $0x1690] sm:$0xff]
        %v943 = vld [vmem:[%s173 + $0x1698] sm:$0xff]
        %v944 = vld [vmem:[%s173 + $0x16a0] sm:$0xff]
        %v945 = vld [vmem:[%s173 + $0x16a8] sm:$0xff]
        %v946 = vld [vmem:[%s173 + $0x16b0] sm:$0xff]
        %v947 = vld [vmem:[%s173 + $0x16b8] sm:$0xff]
        %v948 = vld [vmem:[%s173 + $0x16c0] sm:$0xff]
        %v949 = vld [vmem:[%s173 + $0x16c8] sm:$0xff]
        %v950 = vld [vmem:[%s173 + $0x16d0] sm:$0xff]
        %v951 = vld [vmem:[%s173 + $0x16d8] sm:$0xff]
        %v952 = vld [vmem:[%s173 + $0x16e0] sm:$0xff]
        %v953 = vld [vmem:[%s173 + $0x16e8] sm:$0xff]
        %v954 = vld [vmem:[%s173 + $0x16f0] sm:$0xff]
        %v955 = vld [vmem:[%s173 + $0x16f8] sm:$0xff]
        %v956 = vld [vmem:[%s173 + $0x1700] sm:$0xff]
        %v957 = vld [vmem:[%s173 + $0x1708] sm:$0xff]
        %v958 = vld [vmem:[%s173 + $0x1710] sm:$0xff]
        %v959 = vld [vmem:[%s173 + $0x1718] sm:$0xff]
        %v960 = vld [vmem:[%s173 + $0x1720] sm:$0xff]
        %v961 = vld [vmem:[%s173 + $0x1728] sm:$0xff]
        %v962 = vld [vmem:[%s173 + $0x1730] sm:$0xff]
        %v963 = vld [vmem:[%s173 + $0x1738] sm:$0xff]
        %v964 = vld [vmem:[%s173 + $0x1740] sm:$0xff]
        %v965 = vld [vmem:[%s173 + $0x1748] sm:$0xff]
        %v966 = vld [vmem:[%s173 + $0x1750] sm:$0xff]
        %v967 = vld [vmem:[%s173 + $0x1758] sm:$0xff]
        %v968 = vld [vmem:[%s173 + $0x1760] sm:$0xff]
        %v969 = vld [vmem:[%s173 + $0x1768] sm:$0xff]
        %v970 = vld [vmem:[%s173 + $0x1770] sm:$0xff]
        %v971 = vld [vmem:[%s173 + $0x1778] sm:$0xff]
        %v972 = vld [vmem:[%s173 + $0x1780] sm:$0xff]
        %v973 = vld [vmem:[%s173 + $0x1788] sm:$0xff]
        %v974 = vld [vmem:[%s173 + $0x1790] sm:$0xff]
        %v975 = vld [vmem:[%s173 + $0x1798] sm:$0xff]
        %v976 = vld [vmem:[%s173 + $0x17a0] sm:$0xff]
        %v977 = vld [vmem:[%s173 + $0x17a8] sm:$0xff]
        %v978 = vld [vmem:[%s173 + $0x17b0] sm:$0xff]
        %v979 = vld [vmem:[%s173 + $0x17b8] sm:$0xff]
        %v980 = vld [vmem:[%s173 + $0x17c0] sm:$0xff]
        %v981 = vld [vmem:[%s173 + $0x17c8] sm:$0xff]
        %v982 = vld [vmem:[%s173 + $0x17d0] sm:$0xff]
        %v983 = vld [vmem:[%s173 + $0x17d8] sm:$0xff]
        %v984 = vld [vmem:[%s173 + $0x17e0] sm:$0xff]
        %v985 = vld [vmem:[%s173 + $0x17e8] sm:$0xff]
        %v986 = vld [vmem:[%s173 + $0x17f0] sm:$0xff]
        %v987 = vld [vmem:[%s173 + $0x17f8] sm:$0xff]
        %v988 = vld [vmem:[%s173 + $0x1800] sm:$0xff]
        %v989 = vld [vmem:[%s173 + $0x1808] sm:$0xff]
        %v990 = vld [vmem:[%s173 + $0x1810] sm:$0xff]
        %v991 = vld [vmem:[%s173 + $0x1818] sm:$0xff]
        %v992 = vld [vmem:[%s173 + $0x1820] sm:$0xff]
        %v993 = vld [vmem:[%s173 + $0x1828] sm:$0xff]
        %v994 = vld [vmem:[%s173 + $0x1830] sm:$0xff]
        %v995 = vld [vmem:[%s173 + $0x1838] sm:$0xff]
        %v996 = vld [vmem:[%s173 + $0x1840] sm:$0xff]
        %v997 = vld [vmem:[%s173 + $0x1848] sm:$0xff]
        %v998 = vld [vmem:[%s173 + $0x1850] sm:$0xff]
        %v999 = vld [vmem:[%s173 + $0x1858] sm:$0xff]
        %v1000 = vld [vmem:[%s173 + $0x1860] sm:$0xff]
        %v1001 = vld [vmem:[%s173 + $0x1868] sm:$0xff]
        %v1002 = vld [vmem:[%s173 + $0x1870] sm:$0xff]
        %v1003 = vld [vmem:[%s173 + $0x1878] sm:$0xff]
        %v1004 = vld [vmem:[%s173 + $0x1880] sm:$0xff]
        %v1005 = vld [vmem:[%s173 + $0x1888] sm:$0xff]
        %v1006 = vld [vmem:[%s173 + $0x1890] sm:$0xff]
        %v1007 = vld [vmem:[%s173 + $0x1898] sm:$0xff]
        %v1008 = vld [vmem:[%s173 + $0x18a0] sm:$0xff]
        %v1009 = vld [vmem:[%s173 + $0x18a8] sm:$0xff]
        %v1010 = vld [vmem:[%s173 + $0x18b0] sm:$0xff]
        %v1011 = vld [vmem:[%s173 + $0x18b8] sm:$0xff]
        %v1012 = vld [vmem:[%s173 + $0x18c0] sm:$0xff]
        %v1013 = vld [vmem:[%s173 + $0x18c8] sm:$0xff]
        %v1014 = vld [vmem:[%s173 + $0x18d0] sm:$0xff]
        %v1015 = vld [vmem:[%s173 + $0x18d8] sm:$0xff]
        %v1016 = vld [vmem:[%s173 + $0x18e0] sm:$0xff]
        %v1017 = vld [vmem:[%s173 + $0x18e8] sm:$0xff]
        %v1018 = vld [vmem:[%s173 + $0x18f0] sm:$0xff]
        %v1019 = vld [vmem:[%s173 + $0x18f8] sm:$0xff]
        %v1020 = vld [vmem:[%s173 + $0x1900] sm:$0xff]
        %v1021 = vld [vmem:[%s173 + $0x1908] sm:$0xff]
        %v1022 = vld [vmem:[%s173 + $0x1910] sm:$0xff]
        %v1023 = vld [vmem:[%s173 + $0x1918] sm:$0xff]
        %v1024 = vld [vmem:[%s173 + $0x1920] sm:$0xff]
        %v1025 = vld [vmem:[%s173 + $0x1928] sm:$0xff]
        %v1026 = vld [vmem:[%s173 + $0x1930] sm:$0xff]
        %v1027 = vld [vmem:[%s173 + $0x1938] sm:$0xff]
        %v1028 = vld [vmem:[%s173 + $0x1940] sm:$0xff]
        %v1029 = vld [vmem:[%s173 + $0x1948] sm:$0xff]
        %v1030 = vld [vmem:[%s173 + $0x1950] sm:$0xff]
        %v1031 = vld [vmem:[%s173 + $0x1958] sm:$0xff]
        %v1032 = vld [vmem:[%s173 + $0x1960] sm:$0xff]
        %v1033 = vld [vmem:[%s173 + $0x1968] sm:$0xff]
        %v1034 = vld [vmem:[%s173 + $0x1970] sm:$0xff]
        %v1035 = vld [vmem:[%s173 + $0x1978] sm:$0xff]
        %v1036 = vld [vmem:[%s173 + $0x1980] sm:$0xff]
        %v1037 = vld [vmem:[%s173 + $0x1988] sm:$0xff]
        %v1038 = vld [vmem:[%s173 + $0x1990] sm:$0xff]
        %v1039 = vld [vmem:[%s173 + $0x1998] sm:$0xff]
        %v1040 = vld [vmem:[%s173 + $0x19a0] sm:$0xff]
        %v1041 = vld [vmem:[%s173 + $0x19a8] sm:$0xff]
        %v1042 = vld [vmem:[%s173 + $0x19b0] sm:$0xff]
        %v1043 = vld [vmem:[%s173 + $0x19b8] sm:$0xff]
        %v1044 = vld [vmem:[%s173 + $0x19c0] sm:$0xff]
        %v1045 = vld [vmem:[%s173 + $0x19c8] sm:$0xff]
        %v1046 = vld [vmem:[%s173 + $0x19d0] sm:$0xff]
        %v1047 = vld [vmem:[%s173 + $0x19d8] sm:$0xff]
        %v1048 = vld [vmem:[%s173 + $0x19e0] sm:$0xff]
        %v1049 = vld [vmem:[%s173 + $0x19e8] sm:$0xff]
        %v1050 = vld [vmem:[%s173 + $0x19f0] sm:$0xff]
        %v1051 = vld [vmem:[%s173 + $0x19f8] sm:$0xff]
        %v1052 = vld [vmem:[%s173 + $0x1a00] sm:$0xff]
        %v1053 = vld [vmem:[%s173 + $0x1a08] sm:$0xff]
        %v1054 = vld [vmem:[%s173 + $0x1a10] sm:$0xff]
        %v1055 = vld [vmem:[%s173 + $0x1a18] sm:$0xff]
        %v1056 = vld [vmem:[%s173 + $0x1a20] sm:$0xff]
        %v1057 = vld [vmem:[%s173 + $0x1a28] sm:$0xff]
        %v1058 = vld [vmem:[%s173 + $0x1a30] sm:$0xff]
        %v1059 = vld [vmem:[%s173 + $0x1a38] sm:$0xff]
        %v1060 = vld [vmem:[%s173 + $0x1a40] sm:$0xff]
        %v1061 = vld [vmem:[%s173 + $0x1a48] sm:$0xff]
        %v1062 = vld [vmem:[%s173 + $0x1a50] sm:$0xff]
        %v1063 = vld [vmem:[%s173 + $0x1a58] sm:$0xff]
        %v1064 = vld [vmem:[%s173 + $0x1a60] sm:$0xff]
        %v1065 = vld [vmem:[%s173 + $0x1a68] sm:$0xff]
        %v1066 = vld [vmem:[%s173 + $0x1a70] sm:$0xff]
        %v1067 = vld [vmem:[%s173 + $0x1a78] sm:$0xff]
        %v1068 = vld [vmem:[%s173 + $0x1a80] sm:$0xff]
        %v1069 = vld [vmem:[%s173 + $0x1a88] sm:$0xff]
        %v1070 = vld [vmem:[%s173 + $0x1a90] sm:$0xff]
        %v1071 = vld [vmem:[%s173 + $0x1a98] sm:$0xff]
        %v1072 = vld [vmem:[%s173 + $0x1aa0] sm:$0xff]
        %v1073 = vld [vmem:[%s173 + $0x1aa8] sm:$0xff]
        %v1074 = vld [vmem:[%s173 + $0x1ab0] sm:$0xff]
        %v1075 = vld [vmem:[%s173 + $0x1ab8] sm:$0xff]
        %v1076 = vld [vmem:[%s173 + $0x1ac0] sm:$0xff]
        %v1077 = vld [vmem:[%s173 + $0x1ac8] sm:$0xff]
        %v1078 = vld [vmem:[%s173 + $0x1ad0] sm:$0xff]
        %v1079 = vld [vmem:[%s173 + $0x1ad8] sm:$0xff]
        %v1080 = vld [vmem:[%s173 + $0x1ae0] sm:$0xff]
        %v1081 = vld [vmem:[%s173 + $0x1ae8] sm:$0xff]
        %v1082 = vld [vmem:[%s173 + $0x1af0] sm:$0xff]
        %v1083 = vld [vmem:[%s173 + $0x1af8] sm:$0xff]
        %v1084 = vld [vmem:[%s173 + $0x1b00] sm:$0xff]
        %v1085 = vld [vmem:[%s173 + $0x1b08] sm:$0xff]
        %v1086 = vld [vmem:[%s173 + $0x1b10] sm:$0xff]
        %v1087 = vld [vmem:[%s173 + $0x1b18] sm:$0xff]
        %v1088 = vld [vmem:[%s173 + $0x1b20] sm:$0xff]
        %v1089 = vld [vmem:[%s173 + $0x1b28] sm:$0xff]
        %v1090 = vld [vmem:[%s173 + $0x1b30] sm:$0xff]
        %v1091 = vld [vmem:[%s173 + $0x1b38] sm:$0xff]
        %v1092 = vld [vmem:[%s173 + $0x1b40] sm:$0xff]
        %v1093 = vld [vmem:[%s173 + $0x1b48] sm:$0xff]
        %v1094 = vld [vmem:[%s173 + $0x1b50] sm:$0xff]
        %v1095 = vld [vmem:[%s173 + $0x1b58] sm:$0xff]
        %v1096 = vld [vmem:[%s173 + $0x1b60] sm:$0xff]
        %v1097 = vld [vmem:[%s173 + $0x1b68] sm:$0xff]
        %v1098 = vld [vmem:[%s173 + $0x1b70] sm:$0xff]
        %v1099 = vld [vmem:[%s173 + $0x1b78] sm:$0xff]
        %v1100 = vld [vmem:[%s173 + $0x1b80] sm:$0xff]
        %v1101 = vld [vmem:[%s173 + $0x1b88] sm:$0xff]
        %v1102 = vld [vmem:[%s173 + $0x1b90] sm:$0xff]
        %v1103 = vld [vmem:[%s173 + $0x1b98] sm:$0xff]
        %v1104 = vld [vmem:[%s173 + $0x1ba0] sm:$0xff]
        %v1105 = vld [vmem:[%s173 + $0x1ba8] sm:$0xff]
        %v1106 = vld [vmem:[%s173 + $0x1bb0] sm:$0xff]
        %v1107 = vld [vmem:[%s173 + $0x1bb8] sm:$0xff]
        %v1108 = vld [vmem:[%s173 + $0x1bc0] sm:$0xff]
        %v1109 = vld [vmem:[%s173 + $0x1bc8] sm:$0xff]
        %v1110 = vld [vmem:[%s173 + $0x1bd0] sm:$0xff]
        %v1111 = vld [vmem:[%s173 + $0x1bd8] sm:$0xff]
        %v1112 = vld [vmem:[%s173 + $0x1be0] sm:$0xff]
        %v1113 = vld [vmem:[%s173 + $0x1be8] sm:$0xff]
        %v1114 = vld [vmem:[%s173 + $0x1bf0] sm:$0xff]
        %v1115 = vld [vmem:[%s173 + $0x1bf8] sm:$0xff]
        %v1116 = vld [vmem:[%s173 + $0x1c00] sm:$0xff]
        %v1117 = vld [vmem:[%s173 + $0x1c08] sm:$0xff]
        %v1118 = vld [vmem:[%s173 + $0x1c10] sm:$0xff]
        %v1119 = vld [vmem:[%s173 + $0x1c18] sm:$0xff]
        %v1120 = vld [vmem:[%s173 + $0x1c20] sm:$0xff]
        %v1121 = vld [vmem:[%s173 + $0x1c28] sm:$0xff]
        %v1122 = vld [vmem:[%s173 + $0x1c30] sm:$0xff]
        %v1123 = vld [vmem:[%s173 + $0x1c38] sm:$0xff]
        %v1124 = vld [vmem:[%s173 + $0x1c40] sm:$0xff]
        %v1125 = vld [vmem:[%s173 + $0x1c48] sm:$0xff]
        %v1126 = vld [vmem:[%s173 + $0x1c50] sm:$0xff]
        %v1127 = vld [vmem:[%s173 + $0x1c58] sm:$0xff]
        %v1128 = vld [vmem:[%s173 + $0x1c60] sm:$0xff]
        %v1129 = vld [vmem:[%s173 + $0x1c68] sm:$0xff]
        %v1130 = vld [vmem:[%s173 + $0x1c70] sm:$0xff]
        %v1131 = vld [vmem:[%s173 + $0x1c78] sm:$0xff]
        %v1132 = vld [vmem:[%s173 + $0x1c80] sm:$0xff]
        %v1133 = vld [vmem:[%s173 + $0x1c88] sm:$0xff]
        %v1134 = vld [vmem:[%s173 + $0x1c90] sm:$0xff]
        %v1135 = vld [vmem:[%s173 + $0x1c98] sm:$0xff]
        %v1136 = vld [vmem:[%s173 + $0x1ca0] sm:$0xff]
        %v1137 = vld [vmem:[%s173 + $0x1ca8] sm:$0xff]
        %v1138 = vld [vmem:[%s173 + $0x1cb0] sm:$0xff]
        %v1139 = vld [vmem:[%s173 + $0x1cb8] sm:$0xff]
        %v1140 = vld [vmem:[%s173 + $0x1cc0] sm:$0xff]
        %v1141 = vld [vmem:[%s173 + $0x1cc8] sm:$0xff]
        %v1142 = vld [vmem:[%s173 + $0x1cd0] sm:$0xff]
        %v1143 = vld [vmem:[%s173 + $0x1cd8] sm:$0xff]
        %v1144 = vld [vmem:[%s173 + $0x1ce0] sm:$0xff]
        %v1145 = vld [vmem:[%s173 + $0x1ce8] sm:$0xff]
        %v1146 = vld [vmem:[%s173 + $0x1cf0] sm:$0xff]
        %v1147 = vld [vmem:[%s173 + $0x1cf8] sm:$0xff]
        %v1148 = vld [vmem:[%s173 + $0x1d00] sm:$0xff]
        %v1149 = vld [vmem:[%s173 + $0x1d08] sm:$0xff]
        %v1150 = vld [vmem:[%s173 + $0x1d10] sm:$0xff]
        %v1151 = vld [vmem:[%s173 + $0x1d18] sm:$0xff]
        %v1152 = vld [vmem:[%s173 + $0x1d20] sm:$0xff]
        %v1153 = vld [vmem:[%s173 + $0x1d28] sm:$0xff]
        %v1154 = vld [vmem:[%s173 + $0x1d30] sm:$0xff]
        %v1155 = vld [vmem:[%s173 + $0x1d38] sm:$0xff]
        %v1156 = vld [vmem:[%s173 + $0x1d40] sm:$0xff]
        %v1157 = vld [vmem:[%s173 + $0x1d48] sm:$0xff]
        %v1158 = vld [vmem:[%s173 + $0x1d50] sm:$0xff]
        %v1159 = vld [vmem:[%s173 + $0x1d58] sm:$0xff]
        %v1160 = vld [vmem:[%s173 + $0x1d60] sm:$0xff]
        %v1161 = vld [vmem:[%s173 + $0x1d68] sm:$0xff]
        %v1162 = vld [vmem:[%s173 + $0x1d70] sm:$0xff]
        %v1163 = vld [vmem:[%s173 + $0x1d78] sm:$0xff]
        %v1164 = vld [vmem:[%s173 + $0x1d80] sm:$0xff]
        %v1165 = vld [vmem:[%s173 + $0x1d88] sm:$0xff]
        %v1166 = vld [vmem:[%s173 + $0x1d90] sm:$0xff]
        %v1167 = vld [vmem:[%s173 + $0x1d98] sm:$0xff]
        %v1168 = vld [vmem:[%s173 + $0x1da0] sm:$0xff]
        %v1169 = vld [vmem:[%s173 + $0x1da8] sm:$0xff]
        %v1170 = vld [vmem:[%s173 + $0x1db0] sm:$0xff]
        %v1171 = vld [vmem:[%s173 + $0x1db8] sm:$0xff]
        %v1172 = vld [vmem:[%s173 + $0x1dc0] sm:$0xff]
        %v1173 = vld [vmem:[%s173 + $0x1dc8] sm:$0xff]
        %v1174 = vld [vmem:[%s173 + $0x1dd0] sm:$0xff]
        %v1175 = vld [vmem:[%s173 + $0x1dd8] sm:$0xff]
        %v1176 = vld [vmem:[%s173 + $0x1de0] sm:$0xff]
        %v1177 = vld [vmem:[%s173 + $0x1de8] sm:$0xff]
        %v1178 = vld [vmem:[%s173 + $0x1df0] sm:$0xff]
        %v1179 = vld [vmem:[%s173 + $0x1df8] sm:$0xff]
        %v1180 = vld [vmem:[%s173 + $0x1e00] sm:$0xff]
        %v1181 = vld [vmem:[%s173 + $0x1e08] sm:$0xff]
        %v1182 = vld [vmem:[%s173 + $0x1e10] sm:$0xff]
        %v1183 = vld [vmem:[%s173 + $0x1e18] sm:$0xff]
        %v1184 = vld [vmem:[%s173 + $0x1e20] sm:$0xff]
        %v1185 = vld [vmem:[%s173 + $0x1e28] sm:$0xff]
        %v1186 = vld [vmem:[%s173 + $0x1e30] sm:$0xff]
        %v1187 = vld [vmem:[%s173 + $0x1e38] sm:$0xff]
        %v1188 = vld [vmem:[%s173 + $0x1e40] sm:$0xff]
        %v1189 = vld [vmem:[%s173 + $0x1e48] sm:$0xff]
        %v1190 = vld [vmem:[%s173 + $0x1e50] sm:$0xff]
        %v1191 = vld [vmem:[%s173 + $0x1e58] sm:$0xff]
        %v1192 = vld [vmem:[%s173 + $0x1e60] sm:$0xff]
        %v1193 = vld [vmem:[%s173 + $0x1e68] sm:$0xff]
        %v1194 = vld [vmem:[%s173 + $0x1e70] sm:$0xff]
        %v1195 = vld [vmem:[%s173 + $0x1e78] sm:$0xff]
        %v1196 = vld [vmem:[%s173 + $0x1e80] sm:$0xff]
        %v1197 = vld [vmem:[%s173 + $0x1e88] sm:$0xff]
        %v1198 = vld [vmem:[%s173 + $0x1e90] sm:$0xff]
        %v1199 = vld [vmem:[%s173 + $0x1e98] sm:$0xff]
        %v1200 = vld [vmem:[%s173 + $0x1ea0] sm:$0xff]
        %v1201 = vld [vmem:[%s173 + $0x1ea8] sm:$0xff]
        %v1202 = vld [vmem:[%s173 + $0x1eb0] sm:$0xff]
        %v1203 = vld [vmem:[%s173 + $0x1eb8] sm:$0xff]
        %v1204 = vld [vmem:[%s173 + $0x1ec0] sm:$0xff]
        %v1205 = vld [vmem:[%s173 + $0x1ec8] sm:$0xff]
        %v1206 = vld [vmem:[%s173 + $0x1ed0] sm:$0xff]
        %v1207 = vld [vmem:[%s173 + $0x1ed8] sm:$0xff]
        %v1208 = vld [vmem:[%s173 + $0x1ee0] sm:$0xff]
        %v1209 = vld [vmem:[%s173 + $0x1ee8] sm:$0xff]
        %v1210 = vld [vmem:[%s173 + $0x1ef0] sm:$0xff]
        %v1211 = vld [vmem:[%s173 + $0x1ef8] sm:$0xff]
        %v1212 = vld [vmem:[%s173 + $0x1f00] sm:$0xff]
        %v1213 = vld [vmem:[%s173 + $0x1f08] sm:$0xff]
        %v1214 = vld [vmem:[%s173 + $0x1f10] sm:$0xff]
        %v1215 = vld [vmem:[%s173 + $0x1f18] sm:$0xff]
        %v1216 = vld [vmem:[%s173 + $0x1f20] sm:$0xff]
        %v1217 = vld [vmem:[%s173 + $0x1f28] sm:$0xff]
        %v1218 = vld [vmem:[%s173 + $0x1f30] sm:$0xff]
        %v1219 = vld [vmem:[%s173 + $0x1f38] sm:$0xff]
        %v1220 = vld [vmem:[%s173 + $0x1f40] sm:$0xff]
        %v1221 = vld [vmem:[%s173 + $0x1f48] sm:$0xff]
        %v1222 = vld [vmem:[%s173 + $0x1f50] sm:$0xff]
        %v1223 = vld [vmem:[%s173 + $0x1f58] sm:$0xff]
        %v1224 = vld [vmem:[%s173 + $0x1f60] sm:$0xff]
        %v1225 = vld [vmem:[%s173 + $0x1f68] sm:$0xff]
        %v1226 = vld [vmem:[%s173 + $0x1f70] sm:$0xff]
        %v1227 = vld [vmem:[%s173 + $0x1f78] sm:$0xff]
        %v1228 = vld [vmem:[%s173 + $0x1f80] sm:$0xff]
        %v1229 = vld [vmem:[%s173 + $0x1f88] sm:$0xff]
        %v1230 = vld [vmem:[%s173 + $0x1f90] sm:$0xff]
        %v1231 = vld [vmem:[%s173 + $0x1f98] sm:$0xff]
        %v1232 = vld [vmem:[%s173 + $0x1fa0] sm:$0xff]
        %v1233 = vld [vmem:[%s173 + $0x1fa8] sm:$0xff]
        %v1234 = vld [vmem:[%s173 + $0x1fb0] sm:$0xff]
        %v1235 = vld [vmem:[%s173 + $0x1fb8] sm:$0xff]
        %v1236 = vld [vmem:[%s173 + $0x1fc0] sm:$0xff]
        %v1237 = vld [vmem:[%s173 + $0x1fc8] sm:$0xff]
        %v1238 = vld [vmem:[%s173 + $0x1fd0] sm:$0xff]
        %v1239 = vld [vmem:[%s173 + $0x1fd8] sm:$0xff]
        %v1240 = vld [vmem:[%s173 + $0x1fe0] sm:$0xff]
        %v1241 = vld [vmem:[%s173 + $0x1fe8] sm:$0xff]
        %v1242 = vld [vmem:[%s173 + $0x1ff0] sm:$0xff]
        %v1243 = vld [vmem:[%s173 + $0x1ff8] sm:$0xff]
        %v1244 = vld [vmem:[%s173 + $0x2000] sm:$0xff]
        %v1245 = vld [vmem:[%s173 + $0x2008] sm:$0xff]
        %v1246 = vld [vmem:[%s173 + $0x2010] sm:$0xff]
        %v1247 = vld [vmem:[%s173 + $0x2018] sm:$0xff]
        %v1248 = vld [vmem:[%s173 + $0x2020] sm:$0xff]
        %v1249 = vld [vmem:[%s173 + $0x2028] sm:$0xff]
        %v1250 = vld [vmem:[%s173 + $0x2030] sm:$0xff]
        %v1251 = vld [vmem:[%s173 + $0x2038] sm:$0xff]
        %v1252 = vld [vmem:[%s173 + $0x2040] sm:$0xff]
        %v1253 = vld [vmem:[%s173 + $0x2048] sm:$0xff]
        %v1254 = vld [vmem:[%s173 + $0x2050] sm:$0xff]
        %v1255 = vld [vmem:[%s173 + $0x2058] sm:$0xff]
        %v1256 = vld [vmem:[%s173 + $0x2060] sm:$0xff]
        %v1257 = vld [vmem:[%s173 + $0x2068] sm:$0xff]
        %v1258 = vld [vmem:[%s173 + $0x2070] sm:$0xff]
        %v1259 = vld [vmem:[%s173 + $0x2078] sm:$0xff]
        %v1260 = vld [vmem:[%s173 + $0x2080] sm:$0xff]
        %v1261 = vld [vmem:[%s173 + $0x2088] sm:$0xff]
        %v1262 = vld [vmem:[%s173 + $0x2090] sm:$0xff]
        %v1263 = vld [vmem:[%s173 + $0x2098] sm:$0xff]
        %v1264 = vld [vmem:[%s173 + $0x20a0] sm:$0xff]
        %v1265 = vld [vmem:[%s173 + $0x20a8] sm:$0xff]
        %v1266 = vld [vmem:[%s173 + $0x20b0] sm:$0xff]
        %v1267 = vld [vmem:[%s173 + $0x20b8] sm:$0xff]
        %v1268 = vld [vmem:[%s173 + $0x20c0] sm:$0xff]
        %v1269 = vld [vmem:[%s173 + $0x20c8] sm:$0xff]
        %v1270 = vld [vmem:[%s173 + $0x20d0] sm:$0xff]
        %v1271 = vld [vmem:[%s173 + $0x20d8] sm:$0xff]
        %v1272 = vld [vmem:[%s173 + $0x20e0] sm:$0xff]
        %v1273 = vld [vmem:[%s173 + $0x20e8] sm:$0xff]
        %v1274 = vld [vmem:[%s173 + $0x20f0] sm:$0xff]
        %v1275 = vld [vmem:[%s173 + $0x20f8] sm:$0xff]
        %v1276 = vld [vmem:[%s173 + $0x2100] sm:$0xff]
        %v1277 = vld [vmem:[%s173 + $0x2108] sm:$0xff]
        %v1278 = vld [vmem:[%s173 + $0x2110] sm:$0xff]
        %v1279 = vld [vmem:[%s173 + $0x2118] sm:$0xff]
        %v1280 = vld [vmem:[%s173 + $0x2120] sm:$0xff]
        %v1281 = vld [vmem:[%s173 + $0x2128] sm:$0xff]
        %v1282 = vld [vmem:[%s173 + $0x2130] sm:$0xff]
        %v1283 = vld [vmem:[%s173 + $0x2138] sm:$0xff]
        %v1284 = vld [vmem:[%s173 + $0x2140] sm:$0xff]
        %v1285 = vld [vmem:[%s173 + $0x2148] sm:$0xff]
        %v1286 = vld [vmem:[%s173 + $0x2150] sm:$0xff]
        %v1287 = vld [vmem:[%s173 + $0x2158] sm:$0xff]
        %v1288 = vld [vmem:[%s173 + $0x2160] sm:$0xff]
        %v1289 = vld [vmem:[%s173 + $0x2168] sm:$0xff]
        %v1290 = vld [vmem:[%s173 + $0x2170] sm:$0xff]
        %v1291 = vld [vmem:[%s173 + $0x2178] sm:$0xff]
        %v1292 = vld [vmem:[%s173 + $0x2180] sm:$0xff]
        %v1293 = vld [vmem:[%s173 + $0x2188] sm:$0xff]
        %v1294 = vld [vmem:[%s173 + $0x2190] sm:$0xff]
        %v1295 = vld [vmem:[%s173 + $0x2198] sm:$0xff]
        %v1296 = vld [vmem:[%s173 + $0x21a0] sm:$0xff]
        %v1297 = vld [vmem:[%s173 + $0x21a8] sm:$0xff]
        %v1298 = vld [vmem:[%s173 + $0x21b0] sm:$0xff]
        %v1299 = vld [vmem:[%s173 + $0x21b8] sm:$0xff]
        %v1300 = vld [vmem:[%s173 + $0x21c0] sm:$0xff]
        %v1301 = vld [vmem:[%s173 + $0x21c8] sm:$0xff]
        %v1302 = vld [vmem:[%s173 + $0x21d0] sm:$0xff]
        %v1303 = vld [vmem:[%s173 + $0x21d8] sm:$0xff]
        %v1304 = vld [vmem:[%s173 + $0x21e0] sm:$0xff]
        %v1305 = vld [vmem:[%s173 + $0x21e8] sm:$0xff]
        %v1306 = vld [vmem:[%s173 + $0x21f0] sm:$0xff]
        %v1307 = vld [vmem:[%s173 + $0x21f8] sm:$0xff]
        %v1308 = vld [vmem:[%s173 + $0x2200] sm:$0xff]
        %v1309 = vld [vmem:[%s173 + $0x2208] sm:$0xff]
        %v1310 = vld [vmem:[%s173 + $0x2210] sm:$0xff]
        %v1311 = vld [vmem:[%s173 + $0x2218] sm:$0xff]
        %v1312 = vld [vmem:[%s173 + $0x2220] sm:$0xff]
        %v1313 = vld [vmem:[%s173 + $0x2228] sm:$0xff]
        %v1314 = vld [vmem:[%s173 + $0x2230] sm:$0xff]
        %v1315 = vld [vmem:[%s173 + $0x2238] sm:$0xff]
        %v1316 = vld [vmem:[%s173 + $0x2240] sm:$0xff]
        %v1317 = vld [vmem:[%s173 + $0x2248] sm:$0xff]
        %v1318 = vld [vmem:[%s173 + $0x2250] sm:$0xff]
        %v1319 = vld [vmem:[%s173 + $0x2258] sm:$0xff]
        %v1320 = vld [vmem:[%s173 + $0x2260] sm:$0xff]
        %v1321 = vld [vmem:[%s173 + $0x2268] sm:$0xff]
        %v1322 = vld [vmem:[%s173 + $0x2270] sm:$0xff]
        %v1323 = vld [vmem:[%s173 + $0x2278] sm:$0xff]
        %v1324 = vld [vmem:[%s173 + $0x2280] sm:$0xff]
        %v1325 = vld [vmem:[%s173 + $0x2288] sm:$0xff]
        %v1326 = vld [vmem:[%s173 + $0x2290] sm:$0xff]
        %v1327 = vld [vmem:[%s173 + $0x2298] sm:$0xff]
        %v1328 = vld [vmem:[%s173 + $0x22a0] sm:$0xff]
        %v1329 = vld [vmem:[%s173 + $0x22a8] sm:$0xff]
        %v1330 = vld [vmem:[%s173 + $0x22b0] sm:$0xff]
        %v1331 = vld [vmem:[%s173 + $0x22b8] sm:$0xff]
        %v1332 = vld [vmem:[%s173 + $0x22c0] sm:$0xff]
        %v1333 = vld [vmem:[%s173 + $0x22c8] sm:$0xff]
        %v1334 = vld [vmem:[%s173 + $0x22d0] sm:$0xff]
        %v1335 = vld [vmem:[%s173 + $0x22d8] sm:$0xff]
        %v1336 = vld [vmem:[%s173 + $0x22e0] sm:$0xff]
        %v1337 = vld [vmem:[%s173 + $0x22e8] sm:$0xff]
        %v1338 = vld [vmem:[%s173 + $0x22f0] sm:$0xff]
        %v1339 = vld [vmem:[%s173 + $0x22f8] sm:$0xff]
        %v1340 = vld [vmem:[%s173 + $0x2300] sm:$0xff]
        %v1341 = vld [vmem:[%s173 + $0x2308] sm:$0xff]
        %v1342 = vld [vmem:[%s173 + $0x2310] sm:$0xff]
        %v1343 = vld [vmem:[%s173 + $0x2318] sm:$0xff]
        %v1344 = vld [vmem:[%s173 + $0x2320] sm:$0xff]
        %v1345 = vld [vmem:[%s173 + $0x2328] sm:$0xff]
        %v1346 = vld [vmem:[%s173 + $0x2330] sm:$0xff]
        %v1347 = vld [vmem:[%s173 + $0x2338] sm:$0xff]
        %v1348 = vld [vmem:[%s173 + $0x2340] sm:$0xff]
        %v1349 = vld [vmem:[%s173 + $0x2348] sm:$0xff]
        %v1350 = vld [vmem:[%s173 + $0x2350] sm:$0xff]
        %v1351 = vld [vmem:[%s173 + $0x2358] sm:$0xff]
        %v1352 = vld [vmem:[%s173 + $0x2360] sm:$0xff]
        %v1353 = vld [vmem:[%s173 + $0x2368] sm:$0xff]
        %v1354 = vld [vmem:[%s173 + $0x2370] sm:$0xff]
        %v1355 = vld [vmem:[%s173 + $0x2378] sm:$0xff]
        %v1356 = vld [vmem:[%s173 + $0x2380] sm:$0xff]
        %v1357 = vld [vmem:[%s173 + $0x2388] sm:$0xff]
        %v1358 = vld [vmem:[%s173 + $0x2390] sm:$0xff]
        %v1359 = vld [vmem:[%s173 + $0x2398] sm:$0xff]
        %v1360 = vld [vmem:[%s173 + $0x23a0] sm:$0xff]
        %v1361 = vld [vmem:[%s173 + $0x23a8] sm:$0xff]
        %v1362 = vld [vmem:[%s173 + $0x23b0] sm:$0xff]
        %v1363 = vld [vmem:[%s173 + $0x23b8] sm:$0xff]
        %v1364 = vld [vmem:[%s173 + $0x23c0] sm:$0xff]
        %v1365 = vld [vmem:[%s173 + $0x23c8] sm:$0xff]
        %v1366 = vld [vmem:[%s173 + $0x23d0] sm:$0xff]
        %v1367 = vld [vmem:[%s173 + $0x23d8] sm:$0xff]
        %v1368 = vld [vmem:[%s173 + $0x23e0] sm:$0xff]
        %v1369 = vld [vmem:[%s173 + $0x23e8] sm:$0xff]
        %v1370 = vld [vmem:[%s173 + $0x23f0] sm:$0xff]
        %v1371 = vld [vmem:[%s173 + $0x23f8] sm:$0xff]
        %v1372 = vld [vmem:[%s173 + $0x2400] sm:$0xff]
        %v1373 = vld [vmem:[%s173 + $0x2408] sm:$0xff]
        %v1374 = vld [vmem:[%s173 + $0x2410] sm:$0xff]
        %v1375 = vld [vmem:[%s173 + $0x2418] sm:$0xff]
        %v1376 = vld [vmem:[%s173 + $0x2420] sm:$0xff]
        %v1377 = vld [vmem:[%s173 + $0x2428] sm:$0xff]
        %v1378 = vld [vmem:[%s173 + $0x2430] sm:$0xff]
        %v1379 = vld [vmem:[%s173 + $0x2438] sm:$0xff]
        %v1380 = vld [vmem:[%s173 + $0x2440] sm:$0xff]
        %v1381 = vld [vmem:[%s173 + $0x2448] sm:$0xff]
        %v1382 = vld [vmem:[%s173 + $0x2450] sm:$0xff]
        %v1383 = vld [vmem:[%s173 + $0x2458] sm:$0xff]
        %v1384 = vld [vmem:[%s173 + $0x2460] sm:$0xff]
        %v1385 = vld [vmem:[%s173 + $0x2468] sm:$0xff]
        %v1386 = vld [vmem:[%s173 + $0x2470] sm:$0xff]
        %v1387 = vld [vmem:[%s173 + $0x2478] sm:$0xff]
        %v1388 = vld [vmem:[%s173 + $0x2480] sm:$0xff]
        %v1389 = vld [vmem:[%s173 + $0x2488] sm:$0xff]
        %v1390 = vld [vmem:[%s173 + $0x2490] sm:$0xff]
        %v1391 = vld [vmem:[%s173 + $0x2498] sm:$0xff]
        %v1392 = vld [vmem:[%s173 + $0x24a0] sm:$0xff]
        %v1393 = vld [vmem:[%s173 + $0x24a8] sm:$0xff]
        %v1394 = vld [vmem:[%s173 + $0x24b0] sm:$0xff]
        %v1395 = vld [vmem:[%s173 + $0x24b8] sm:$0xff]
        %v1396 = vld [vmem:[%s173 + $0x24c0] sm:$0xff]
        %v1397 = vld [vmem:[%s173 + $0x24c8] sm:$0xff]
        %v1398 = vld [vmem:[%s173 + $0x24d0] sm:$0xff]
        %v1399 = vld [vmem:[%s173 + $0x24d8] sm:$0xff]
        %v1400 = vld [vmem:[%s173 + $0x24e0] sm:$0xff]
        %v1401 = vld [vmem:[%s173 + $0x24e8] sm:$0xff]
        %v1402 = vld [vmem:[%s173 + $0x24f0] sm:$0xff]
        %v1403 = vld [vmem:[%s173 + $0x24f8] sm:$0xff]
        %v1404 = vld [vmem:[%s173 + $0x2500] sm:$0xff]
        %v1405 = vld [vmem:[%s173 + $0x2508] sm:$0xff]
        %v1406 = vld [vmem:[%s173 + $0x2510] sm:$0xff]
        %v1407 = vld [vmem:[%s173 + $0x2518] sm:$0xff]
        %v1408 = vld [vmem:[%s173 + $0x2520] sm:$0xff]
        %v1409 = vld [vmem:[%s173 + $0x2528] sm:$0xff]
        %v1410 = vld [vmem:[%s173 + $0x2530] sm:$0xff]
        %v1411 = vld [vmem:[%s173 + $0x2538] sm:$0xff]
        %v1412 = vld [vmem:[%s173 + $0x2540] sm:$0xff]
        %v1413 = vld [vmem:[%s173 + $0x2548] sm:$0xff]
        %v1414 = vld [vmem:[%s173 + $0x2550] sm:$0xff]
        %v1415 = vld [vmem:[%s173 + $0x2558] sm:$0xff]
        %v1416 = vld [vmem:[%s173 + $0x2560] sm:$0xff]
        %v1417 = vld [vmem:[%s173 + $0x2568] sm:$0xff]
        %v1418 = vld [vmem:[%s173 + $0x2570] sm:$0xff]
        %v1419 = vld [vmem:[%s173 + $0x2578] sm:$0xff]
        %v1420 = vld [vmem:[%s173 + $0x2580] sm:$0xff]
        %v1421 = vld [vmem:[%s173 + $0x2588] sm:$0xff]
        %v1422 = vld [vmem:[%s173 + $0x2590] sm:$0xff]
        %v1423 = vld [vmem:[%s173 + $0x2598] sm:$0xff]
        %v1424 = vld [vmem:[%s173 + $0x25a0] sm:$0xff]
        %v1425 = vld [vmem:[%s173 + $0x25a8] sm:$0xff]
        %v1426 = vld [vmem:[%s173 + $0x25b0] sm:$0xff]
        %v1427 = vld [vmem:[%s173 + $0x25b8] sm:$0xff]
        %v1428 = vld [vmem:[%s173 + $0x25c0] sm:$0xff]
        %v1429 = vld [vmem:[%s173 + $0x25c8] sm:$0xff]
        %v1430 = vld [vmem:[%s173 + $0x25d0] sm:$0xff]
        %v1431 = vld [vmem:[%s173 + $0x25d8] sm:$0xff]
        %v1432 = vld [vmem:[%s173 + $0x25e0] sm:$0xff]
        %v1433 = vld [vmem:[%s173 + $0x25e8] sm:$0xff]
        %v1434 = vld [vmem:[%s173 + $0x25f0] sm:$0xff]
        %v1435 = vld [vmem:[%s173 + $0x25f8] sm:$0xff]
        %v1436 = vld [vmem:[%s173 + $0x2600] sm:$0xff]
        %v1437 = vld [vmem:[%s173 + $0x2608] sm:$0xff]
        %v1438 = vld [vmem:[%s173 + $0x2610] sm:$0xff]
        %v1439 = vld [vmem:[%s173 + $0x2618] sm:$0xff]
        %v1440 = vld [vmem:[%s173 + $0x2620] sm:$0xff]
        %v1441 = vld [vmem:[%s173 + $0x2628] sm:$0xff]
        %v1442 = vld [vmem:[%s173 + $0x2630] sm:$0xff]
        %v1443 = vld [vmem:[%s173 + $0x2638] sm:$0xff]
        %v1444 = vld [vmem:[%s173 + $0x2640] sm:$0xff]
        %v1445 = vld [vmem:[%s173 + $0x2648] sm:$0xff]
        %v1446 = vld [vmem:[%s173 + $0x2650] sm:$0xff]
        %v1447 = vld [vmem:[%s173 + $0x2658] sm:$0xff]
        %v1448 = vld [vmem:[%s173 + $0x2660] sm:$0xff]
        %v1449 = vld [vmem:[%s173 + $0x2668] sm:$0xff]
        %v1450 = vld [vmem:[%s173 + $0x2670] sm:$0xff]
        %v1451 = vld [vmem:[%s173 + $0x2678] sm:$0xff]
        %v1452 = vld [vmem:[%s173 + $0x2680] sm:$0xff]
        %v1453 = vld [vmem:[%s173 + $0x2688] sm:$0xff]
        %v1454 = vld [vmem:[%s173 + $0x2690] sm:$0xff]
        %v1455 = vld [vmem:[%s173 + $0x2698] sm:$0xff]
        %v1456 = vld [vmem:[%s173 + $0x26a0] sm:$0xff]
        %v1457 = vld [vmem:[%s173 + $0x26a8] sm:$0xff]
        %v1458 = vld [vmem:[%s173 + $0x26b0] sm:$0xff]
        %v1459 = vld [vmem:[%s173 + $0x26b8] sm:$0xff]
        %v1460 = vld [vmem:[%s173 + $0x26c0] sm:$0xff]
        %v1461 = vld [vmem:[%s173 + $0x26c8] sm:$0xff]
        %v1462 = vld [vmem:[%s173 + $0x26d0] sm:$0xff]
        %v1463 = vld [vmem:[%s173 + $0x26d8] sm:$0xff]
        %v1464 = vld [vmem:[%s173 + $0x26e0] sm:$0xff]
        %v1465 = vld [vmem:[%s173 + $0x26e8] sm:$0xff]
        %v1466 = vld [vmem:[%s173 + $0x26f0] sm:$0xff]
        %v1467 = vld [vmem:[%s173 + $0x26f8] sm:$0xff]
        %v1468 = vld [vmem:[%s173 + $0x2700] sm:$0xff]
        %v1469 = vld [vmem:[%s173 + $0x2708] sm:$0xff]
        %v1470 = vld [vmem:[%s173 + $0x2710] sm:$0xff]
        %v1471 = vld [vmem:[%s173 + $0x2718] sm:$0xff]
        %v1472 = vld [vmem:[%s173 + $0x2720] sm:$0xff]
        %v1473 = vld [vmem:[%s173 + $0x2728] sm:$0xff]
        %v1474 = vld [vmem:[%s173 + $0x2730] sm:$0xff]
        %v1475 = vld [vmem:[%s173 + $0x2738] sm:$0xff]
        %v1476 = vld [vmem:[%s173 + $0x2740] sm:$0xff]
        %v1477 = vld [vmem:[%s173 + $0x2748] sm:$0xff]
        %v1478 = vld [vmem:[%s173 + $0x2750] sm:$0xff]
        %v1479 = vld [vmem:[%s173 + $0x2758] sm:$0xff]
        %v1480 = vld [vmem:[%s173 + $0x2760] sm:$0xff]
        %v1481 = vld [vmem:[%s173 + $0x2768] sm:$0xff]
        %v1482 = vld [vmem:[%s173 + $0x2770] sm:$0xff]
        %v1483 = vld [vmem:[%s173 + $0x2778] sm:$0xff]
        %v1484 = vld [vmem:[%s173 + $0x2780] sm:$0xff]
        %v1485 = vld [vmem:[%s173 + $0x2788] sm:$0xff]
        %v1486 = vld [vmem:[%s173 + $0x2790] sm:$0xff]
        %v1487 = vld [vmem:[%s173 + $0x2798] sm:$0xff]
        %v1488 = vld [vmem:[%s173 + $0x27a0] sm:$0xff]
        %v1489 = vld [vmem:[%s173 + $0x27a8] sm:$0xff]
        %v1490 = vld [vmem:[%s173 + $0x27b0] sm:$0xff]
        %v1491 = vld [vmem:[%s173 + $0x27b8] sm:$0xff]
        %v1492 = vld [vmem:[%s173 + $0x27c0] sm:$0xff]
        %v1493 = vld [vmem:[%s173 + $0x27c8] sm:$0xff]
        %v1494 = vld [vmem:[%s173 + $0x27d0] sm:$0xff]
        %v1495 = vld [vmem:[%s173 + $0x27d8] sm:$0xff]
        %v1496 = vld [vmem:[%s173 + $0x27e0] sm:$0xff]
        %v1497 = vld [vmem:[%s173 + $0x27e8] sm:$0xff]
        %v1498 = vld [vmem:[%s173 + $0x27f0] sm:$0xff]
        %v1499 = vld [vmem:[%s173 + $0x27f8] sm:$0xff]
        %v1500 = vld [vmem:[%s173 + $0x2800] sm:$0xff]
        %v1501 = vld [vmem:[%s173 + $0x2808] sm:$0xff]
        %v1502 = vld [vmem:[%s173 + $0x2810] sm:$0xff]
        %v1503 = vld [vmem:[%s173 + $0x2818] sm:$0xff]
        %v1504 = vld [vmem:[%s173 + $0x2820] sm:$0xff]
        %v1505 = vld [vmem:[%s173 + $0x2828] sm:$0xff]
        %v1506 = vld [vmem:[%s173 + $0x2830] sm:$0xff]
        %v1507 = vld [vmem:[%s173 + $0x2838] sm:$0xff]
        %v1508 = vld [vmem:[%s173 + $0x2840] sm:$0xff]
        %v1509 = vld [vmem:[%s173 + $0x2848] sm:$0xff]
        %v1510 = vld [vmem:[%s173 + $0x2850] sm:$0xff]
        %v1511 = vld [vmem:[%s173 + $0x2858] sm:$0xff]
        %v1512 = vld [vmem:[%s173 + $0x2860] sm:$0xff]
        %v1513 = vld [vmem:[%s173 + $0x2868] sm:$0xff]
        %v1514 = vld [vmem:[%s173 + $0x2870] sm:$0xff]
        %v1515 = vld [vmem:[%s173 + $0x2878] sm:$0xff]
        %v1516 = vld [vmem:[%s173 + $0x2880] sm:$0xff]
        %v1517 = vld [vmem:[%s173 + $0x2888] sm:$0xff]
        %v1518 = vld [vmem:[%s173 + $0x2890] sm:$0xff]
        %v1519 = vld [vmem:[%s173 + $0x2898] sm:$0xff]
        %v1520 = vld [vmem:[%s173 + $0x28a0] sm:$0xff]
        %v1521 = vld [vmem:[%s173 + $0x28a8] sm:$0xff]
        %v1522 = vld [vmem:[%s173 + $0x28b0] sm:$0xff]
        %v1523 = vld [vmem:[%s173 + $0x28b8] sm:$0xff]
        %v1524 = vld [vmem:[%s173 + $0x28c0] sm:$0xff]
        %v1525 = vld [vmem:[%s173 + $0x28c8] sm:$0xff]
        %v1526 = vld [vmem:[%s173 + $0x28d0] sm:$0xff]
        %v1527 = vld [vmem:[%s173 + $0x28d8] sm:$0xff]
        %v1528 = vld [vmem:[%s173 + $0x28e0] sm:$0xff]
        %v1529 = vld [vmem:[%s173 + $0x28e8] sm:$0xff]
        %v1530 = vld [vmem:[%s173 + $0x28f0] sm:$0xff]
        %v1531 = vld [vmem:[%s173 + $0x28f8] sm:$0xff]
        %v1532 = vld [vmem:[%s173 + $0x2900] sm:$0xff]
        %v1533 = vld [vmem:[%s173 + $0x2908] sm:$0xff]
        %v1534 = vld [vmem:[%s173 + $0x2910] sm:$0xff]
        %v1535 = vld [vmem:[%s173 + $0x2918] sm:$0xff]
        %v1536 = vld [vmem:[%s173 + $0x2920] sm:$0xff]
        %v1537 = vld [vmem:[%s173 + $0x2928] sm:$0xff]
        %v1538 = vld [vmem:[%s173 + $0x2930] sm:$0xff]
        %v1539 = vld [vmem:[%s173 + $0x2938] sm:$0xff]
        %v1540 = vld [vmem:[%s173 + $0x2940] sm:$0xff]
        %v1541 = vld [vmem:[%s173 + $0x2948] sm:$0xff]
        %v1542 = vld [vmem:[%s173 + $0x2950] sm:$0xff]
        %v1543 = vld [vmem:[%s173 + $0x2958] sm:$0xff]
        %v1544 = vld [vmem:[%s173 + $0x2960] sm:$0xff]
        %v1545 = vld [vmem:[%s173 + $0x2968] sm:$0xff]
        %v1546 = vld [vmem:[%s173 + $0x2970] sm:$0xff]
        %v1547 = vld [vmem:[%s173 + $0x2978] sm:$0xff]
        %v1548 = vld [vmem:[%s173 + $0x2980] sm:$0xff]
        %v1549 = vld [vmem:[%s173 + $0x2988] sm:$0xff]
        %v1550 = vld [vmem:[%s173 + $0x2990] sm:$0xff]
        %v1551 = vld [vmem:[%s173 + $0x2998] sm:$0xff]
        %v1552 = vld [vmem:[%s173 + $0x29a0] sm:$0xff]
        %v1553 = vld [vmem:[%s173 + $0x29a8] sm:$0xff]
        %v1554 = vld [vmem:[%s173 + $0x29b0] sm:$0xff]
        %v1555 = vld [vmem:[%s173 + $0x29b8] sm:$0xff]
        %v1556 = vld [vmem:[%s173 + $0x29c0] sm:$0xff]
        %v1557 = vld [vmem:[%s173 + $0x29c8] sm:$0xff]
        %v1558 = vld [vmem:[%s173 + $0x29d0] sm:$0xff]
        %v1559 = vld [vmem:[%s173 + $0x29d8] sm:$0xff]
        %v1560 = vld [vmem:[%s173 + $0x29e0] sm:$0xff]
        %v1561 = vld [vmem:[%s173 + $0x29e8] sm:$0xff]
        %v1562 = vld [vmem:[%s173 + $0x29f0] sm:$0xff]
        %v1563 = vld [vmem:[%s173 + $0x29f8] sm:$0xff]
        %v1564 = vld [vmem:[%s173 + $0x2a00] sm:$0xff]
        %v1565 = vld [vmem:[%s173 + $0x2a08] sm:$0xff]
        %v1566 = vld [vmem:[%s173 + $0x2a10] sm:$0xff]
        %v1567 = vld [vmem:[%s173 + $0x2a18] sm:$0xff]
        %v1568 = vld [vmem:[%s173 + $0x2a20] sm:$0xff]
        %v1569 = vld [vmem:[%s173 + $0x2a28] sm:$0xff]
        %v1570 = vld [vmem:[%s173 + $0x2a30] sm:$0xff]
        %v1571 = vld [vmem:[%s173 + $0x2a38] sm:$0xff]
        %v1572 = vld [vmem:[%s173 + $0x2a40] sm:$0xff]
        %v1573 = vld [vmem:[%s173 + $0x2a48] sm:$0xff]
        %v1574 = vld [vmem:[%s173 + $0x2a50] sm:$0xff]
        %v1575 = vld [vmem:[%s173 + $0x2a58] sm:$0xff]
        %v1576 = vld [vmem:[%s173 + $0x2a60] sm:$0xff]
        %v1577 = vld [vmem:[%s173 + $0x2a68] sm:$0xff]
        %v1578 = vld [vmem:[%s173 + $0x2a70] sm:$0xff]
        %v1579 = vld [vmem:[%s173 + $0x2a78] sm:$0xff]
        %v1580 = vld [vmem:[%s173 + $0x2a80] sm:$0xff]
        %v1581 = vld [vmem:[%s173 + $0x2a88] sm:$0xff]
        %v1582 = vld [vmem:[%s173 + $0x2a90] sm:$0xff]
        %v1583 = vld [vmem:[%s173 + $0x2a98] sm:$0xff]
        %v1584 = vld [vmem:[%s173 + $0x2aa0] sm:$0xff]
        %v1585 = vld [vmem:[%s173 + $0x2aa8] sm:$0xff]
        %v1586 = vld [vmem:[%s173 + $0x2ab0] sm:$0xff]
        %v1587 = vld [vmem:[%s173 + $0x2ab8] sm:$0xff]
        %v1588 = vld [vmem:[%s173 + $0x2ac0] sm:$0xff]
        %v1589 = vld [vmem:[%s173 + $0x2ac8] sm:$0xff]
        %v1590 = vld [vmem:[%s173 + $0x2ad0] sm:$0xff]
        %v1591 = vld [vmem:[%s173 + $0x2ad8] sm:$0xff]
        %v1592 = vld [vmem:[%s173 + $0x2ae0] sm:$0xff]
        %v1593 = vld [vmem:[%s173 + $0x2ae8] sm:$0xff]
        %v1594 = vld [vmem:[%s173 + $0x2af0] sm:$0xff]
        %v1595 = vld [vmem:[%s173 + $0x2af8] sm:$0xff]
        %v1596 = vld [vmem:[%s173 + $0x2b00] sm:$0xff]
        %v1597 = vld [vmem:[%s173 + $0x2b08] sm:$0xff]
        %v1598 = vld [vmem:[%s173 + $0x2b10] sm:$0xff]
        %v1599 = vld [vmem:[%s173 + $0x2b18] sm:$0xff]
        %v1600 = vld [vmem:[%s173 + $0x2b20] sm:$0xff]
        %v1601 = vld [vmem:[%s173 + $0x2b28] sm:$0xff]
        %v1602 = vld [vmem:[%s173 + $0x2b30] sm:$0xff]
        %v1603 = vld [vmem:[%s173 + $0x2b38] sm:$0xff]
        %v1604 = vld [vmem:[%s173 + $0x2b40] sm:$0xff]
        %v1605 = vld [vmem:[%s173 + $0x2b48] sm:$0xff]
        %v1606 = vld [vmem:[%s173 + $0x2b50] sm:$0xff]
        %v1607 = vld [vmem:[%s173 + $0x2b58] sm:$0xff]
        %v1608 = vld [vmem:[%s173 + $0x2b60] sm:$0xff]
        %v1609 = vld [vmem:[%s173 + $0x2b68] sm:$0xff]
        %v1610 = vld [vmem:[%s173 + $0x2b70] sm:$0xff]
        %v1611 = vld [vmem:[%s173 + $0x2b78] sm:$0xff]
        %v1612 = vld [vmem:[%s173 + $0x2b80] sm:$0xff]
        %v1613 = vld [vmem:[%s173 + $0x2b88] sm:$0xff]
        %v1614 = vld [vmem:[%s173 + $0x2b90] sm:$0xff]
        %v1615 = vld [vmem:[%s173 + $0x2b98] sm:$0xff]
        %v1616 = vld [vmem:[%s173 + $0x2ba0] sm:$0xff]
        %v1617 = vld [vmem:[%s173 + $0x2ba8] sm:$0xff]
        %v1618 = vld [vmem:[%s173 + $0x2bb0] sm:$0xff]
        %v1619 = vld [vmem:[%s173 + $0x2bb8] sm:$0xff]
        %v1620 = vld [vmem:[%s173 + $0x2bc0] sm:$0xff]
        %v1621 = vld [vmem:[%s173 + $0x2bc8] sm:$0xff]
        %v1622 = vld [vmem:[%s173 + $0x2bd0] sm:$0xff]
        %v1623 = vld [vmem:[%s173 + $0x2bd8] sm:$0xff]
        %v1624 = vld [vmem:[%s173 + $0x2be0] sm:$0xff]
        %v1625 = vld [vmem:[%s173 + $0x2be8] sm:$0xff]
        %v1626 = vld [vmem:[%s173 + $0x2bf0] sm:$0xff]
        %v1627 = vld [vmem:[%s173 + $0x2bf8] sm:$0xff]
        %v1628 = vld [vmem:[%s173 + $0x2c00] sm:$0xff]
        %v1629 = vld [vmem:[%s173 + $0x2c08] sm:$0xff]
        %v1630 = vld [vmem:[%s173 + $0x2c10] sm:$0xff]
        %v1631 = vld [vmem:[%s173 + $0x2c18] sm:$0xff]
        %v1632 = vld [vmem:[%s173 + $0x2c20] sm:$0xff]
        %v1633 = vld [vmem:[%s173 + $0x2c28] sm:$0xff]
        %v1634 = vld [vmem:[%s173 + $0x2c30] sm:$0xff]
        %v1635 = vld [vmem:[%s173 + $0x2c38] sm:$0xff]
        %v1636 = vld [vmem:[%s173 + $0x2c40] sm:$0xff]
        %v1637 = vld [vmem:[%s173 + $0x2c48] sm:$0xff]
        %v1638 = vld [vmem:[%s173 + $0x2c50] sm:$0xff]
        %v1639 = vld [vmem:[%s173 + $0x2c58] sm:$0xff]
        %v1640 = vld [vmem:[%s173 + $0x2c60] sm:$0xff]
        %v1641 = vld [vmem:[%s173 + $0x2c68] sm:$0xff]
        %v1642 = vld [vmem:[%s173 + $0x2c70] sm:$0xff]
        %v1643 = vld [vmem:[%s173 + $0x2c78] sm:$0xff]
        %v1644 = vld [vmem:[%s173 + $0x2c80] sm:$0xff]
        %v1645 = vld [vmem:[%s173 + $0x2c88] sm:$0xff]
        %v1646 = vld [vmem:[%s173 + $0x2c90] sm:$0xff]
        %v1647 = vld [vmem:[%s173 + $0x2c98] sm:$0xff]
        %v1648 = vld [vmem:[%s173 + $0x2ca0] sm:$0xff]
        %v1649 = vld [vmem:[%s173 + $0x2ca8] sm:$0xff]
        %v1650 = vld [vmem:[%s173 + $0x2cb0] sm:$0xff]
        %v1651 = vld [vmem:[%s173 + $0x2cb8] sm:$0xff]
        %v1652 = vld [vmem:[%s173 + $0x2cc0] sm:$0xff]
        %v1653 = vld [vmem:[%s173 + $0x2cc8] sm:$0xff]
        %v1654 = vld [vmem:[%s173 + $0x2cd0] sm:$0xff]
        %v1655 = vld [vmem:[%s173 + $0x2cd8] sm:$0xff]
        %v1656 = vld [vmem:[%s173 + $0x2ce0] sm:$0xff]
        %v1657 = vld [vmem:[%s173 + $0x2ce8] sm:$0xff]
        %v1658 = vld [vmem:[%s173 + $0x2cf0] sm:$0xff]
        %v1659 = vld [vmem:[%s173 + $0x2cf8] sm:$0xff]
        %v1660 = vld [vmem:[%s173 + $0x2d00] sm:$0xff]
        %v1661 = vld [vmem:[%s173 + $0x2d08] sm:$0xff]
        %v1662 = vld [vmem:[%s173 + $0x2d10] sm:$0xff]
        %v1663 = vld [vmem:[%s173 + $0x2d18] sm:$0xff]
        %v1664 = vld [vmem:[%s173 + $0x2d20] sm:$0xff]
        %v1665 = vld [vmem:[%s173 + $0x2d28] sm:$0xff]
        %v1666 = vld [vmem:[%s173 + $0x2d30] sm:$0xff]
        %v1667 = vld [vmem:[%s173 + $0x2d38] sm:$0xff]
        %v1668 = vld [vmem:[%s173 + $0x2d40] sm:$0xff]
        %v1669 = vld [vmem:[%s173 + $0x2d48] sm:$0xff]
        %v1670 = vld [vmem:[%s173 + $0x2d50] sm:$0xff]
        %v1671 = vld [vmem:[%s173 + $0x2d58] sm:$0xff]
        %v1672 = vld [vmem:[%s173 + $0x2d60] sm:$0xff]
        %v1673 = vld [vmem:[%s173 + $0x2d68] sm:$0xff]
        %v1674 = vld [vmem:[%s173 + $0x2d70] sm:$0xff]
        %v1675 = vld [vmem:[%s173 + $0x2d78] sm:$0xff]
        %v1676 = vld [vmem:[%s173 + $0x2d80] sm:$0xff]
        %v1677 = vld [vmem:[%s173 + $0x2d88] sm:$0xff]
        %v1678 = vld [vmem:[%s173 + $0x2d90] sm:$0xff]
        %v1679 = vld [vmem:[%s173 + $0x2d98] sm:$0xff]
        %v1680 = vld [vmem:[%s173 + $0x2da0] sm:$0xff]
        %v1681 = vld [vmem:[%s173 + $0x2da8] sm:$0xff]
        %v1682 = vld [vmem:[%s173 + $0x2db0] sm:$0xff]
        %v1683 = vld [vmem:[%s173 + $0x2db8] sm:$0xff]
        %v1684 = vld [vmem:[%s173 + $0x2dc0] sm:$0xff]
        %v1685 = vld [vmem:[%s173 + $0x2dc8] sm:$0xff]
        %v1686 = vld [vmem:[%s173 + $0x2dd0] sm:$0xff]
        %v1687 = vld [vmem:[%s173 + $0x2dd8] sm:$0xff]
        %v1688 = vld [vmem:[%s173 + $0x2de0] sm:$0xff]
        %v1689 = vld [vmem:[%s173 + $0x2de8] sm:$0xff]
        %v1690 = vld [vmem:[%s173 + $0x2df0] sm:$0xff]
        %v1691 = vld [vmem:[%s173 + $0x2df8] sm:$0xff]
        %v1692 = vld [vmem:[%s173 + $0x2e00] sm:$0xff]
        %v1693 = vld [vmem:[%s173 + $0x2e08] sm:$0xff]
        %v1694 = vld [vmem:[%s173 + $0x2e10] sm:$0xff]
        %v1695 = vld [vmem:[%s173 + $0x2e18] sm:$0xff]
        %v1696 = vld [vmem:[%s173 + $0x2e20] sm:$0xff]
        %v1697 = vld [vmem:[%s173 + $0x2e28] sm:$0xff]
        %v1698 = vld [vmem:[%s173 + $0x2e30] sm:$0xff]
        %v1699 = vld [vmem:[%s173 + $0x2e38] sm:$0xff]
        %v1700 = vld [vmem:[%s173 + $0x2e40] sm:$0xff]
        %v1701 = vld [vmem:[%s173 + $0x2e48] sm:$0xff]
        %v1702 = vld [vmem:[%s173 + $0x2e50] sm:$0xff]
        %v1703 = vld [vmem:[%s173 + $0x2e58] sm:$0xff]
        %v1704 = vld [vmem:[%s173 + $0x2e60] sm:$0xff]
        %v1705 = vld [vmem:[%s173 + $0x2e68] sm:$0xff]
        %v1706 = vld [vmem:[%s173 + $0x2e70] sm:$0xff]
        %v1707 = vld [vmem:[%s173 + $0x2e78] sm:$0xff]
        %v1708 = vld [vmem:[%s173 + $0x2e80] sm:$0xff]
        %v1709 = vld [vmem:[%s173 + $0x2e88] sm:$0xff]
        %v1710 = vld [vmem:[%s173 + $0x2e90] sm:$0xff]
        %v1711 = vld [vmem:[%s173 + $0x2e98] sm:$0xff]
        %v1712 = vld [vmem:[%s173 + $0x2ea0] sm:$0xff]
        %v1713 = vld [vmem:[%s173 + $0x2ea8] sm:$0xff]
        %v1714 = vld [vmem:[%s173 + $0x2eb0] sm:$0xff]
        %v1715 = vld [vmem:[%s173 + $0x2eb8] sm:$0xff]
        %v1716 = vld [vmem:[%s173 + $0x2ec0] sm:$0xff]
        %v1717 = vld [vmem:[%s173 + $0x2ec8] sm:$0xff]
        %v1718 = vld [vmem:[%s173 + $0x2ed0] sm:$0xff]
        %v1719 = vld [vmem:[%s173 + $0x2ed8] sm:$0xff]
        %v1720 = vld [vmem:[%s173 + $0x2ee0] sm:$0xff]
        %v1721 = vld [vmem:[%s173 + $0x2ee8] sm:$0xff]
        %v1722 = vld [vmem:[%s173 + $0x2ef0] sm:$0xff]
        %v1723 = vld [vmem:[%s173 + $0x2ef8] sm:$0xff]
        %v1724 = vld [vmem:[%s173 + $0x2f00] sm:$0xff]
        %v1725 = vld [vmem:[%s173 + $0x2f08] sm:$0xff]
        %v1726 = vld [vmem:[%s173 + $0x2f10] sm:$0xff]
        %v1727 = vld [vmem:[%s173 + $0x2f18] sm:$0xff]
        %v1728 = vld [vmem:[%s173 + $0x2f20] sm:$0xff]
        %v1729 = vld [vmem:[%s173 + $0x2f28] sm:$0xff]
        %v1730 = vld [vmem:[%s173 + $0x2f30] sm:$0xff]
        %v1731 = vld [vmem:[%s173 + $0x2f38] sm:$0xff]
        %v1732 = vld [vmem:[%s173 + $0x2f40] sm:$0xff]
        %v1733 = vld [vmem:[%s173 + $0x2f48] sm:$0xff]
        %v1734 = vld [vmem:[%s173 + $0x2f50] sm:$0xff]
        %v1735 = vld [vmem:[%s173 + $0x2f58] sm:$0xff]
        %v1736 = vld [vmem:[%s173 + $0x2f60] sm:$0xff]
        %v1737 = vld [vmem:[%s173 + $0x2f68] sm:$0xff]
        %v1738 = vld [vmem:[%s173 + $0x2f70] sm:$0xff]
        %v1739 = vld [vmem:[%s173 + $0x2f78] sm:$0xff]
        %v1740 = vld [vmem:[%s173 + $0x2f80] sm:$0xff]
        %v1741 = vld [vmem:[%s173 + $0x2f88] sm:$0xff]
        %v1742 = vld [vmem:[%s173 + $0x2f90] sm:$0xff]
        %v1743 = vld [vmem:[%s173 + $0x2f98] sm:$0xff]
        %v1744 = vld [vmem:[%s173 + $0x2fa0] sm:$0xff]
        %v1745 = vld [vmem:[%s173 + $0x2fa8] sm:$0xff]
        %v1746 = vld [vmem:[%s173 + $0x2fb0] sm:$0xff]
        %v1747 = vld [vmem:[%s173 + $0x2fb8] sm:$0xff]
        %v1748 = vld [vmem:[%s173 + $0x2fc0] sm:$0xff]
        %v1749 = vld [vmem:[%s173 + $0x2fc8] sm:$0xff]
        %v1750 = vld [vmem:[%s173 + $0x2fd0] sm:$0xff]
        %v1751 = vld [vmem:[%s173 + $0x2fd8] sm:$0xff]
        %v1752 = vld [vmem:[%s173 + $0x2fe0] sm:$0xff]
        %v1753 = vld [vmem:[%s173 + $0x2fe8] sm:$0xff]
        %v1754 = vld [vmem:[%s173 + $0x2ff0] sm:$0xff]
        %v1755 = vld [vmem:[%s173 + $0x2ff8] sm:$0xff]
        %v1756 = vld [vmem:[%s173 + $0x3000] sm:$0xff]
        %v1757 = vld [vmem:[%s173 + $0x3008] sm:$0xff]
        %v1758 = vld [vmem:[%s173 + $0x3010] sm:$0xff]
        %v1759 = vld [vmem:[%s173 + $0x3018] sm:$0xff]
        %v1760 = vld [vmem:[%s173 + $0x3020] sm:$0xff]
        %v1761 = vld [vmem:[%s173 + $0x3028] sm:$0xff]
        %v1762 = vld [vmem:[%s173 + $0x3030] sm:$0xff]
        %v1763 = vld [vmem:[%s173 + $0x3038] sm:$0xff]
        %v1764 = vld [vmem:[%s173 + $0x3040] sm:$0xff]
        %v1765 = vld [vmem:[%s173 + $0x3048] sm:$0xff]
        %v1766 = vld [vmem:[%s173 + $0x3050] sm:$0xff]
        %v1767 = vld [vmem:[%s173 + $0x3058] sm:$0xff]
        %v1768 = vld [vmem:[%s173 + $0x3060] sm:$0xff]
        %v1769 = vld [vmem:[%s173 + $0x3068] sm:$0xff]
        %v1770 = vld [vmem:[%s173 + $0x3070] sm:$0xff]
        %v1771 = vld [vmem:[%s173 + $0x3078] sm:$0xff]
        %v1772 = vld [vmem:[%s173 + $0x3080] sm:$0xff]
        %v1773 = vld [vmem:[%s173 + $0x3088] sm:$0xff]
        %v1774 = vld [vmem:[%s173 + $0x3090] sm:$0xff]
        %v1775 = vld [vmem:[%s173 + $0x3098] sm:$0xff]
        %v1776 = vld [vmem:[%s173 + $0x30a0] sm:$0xff]
        %v1777 = vld [vmem:[%s173 + $0x30a8] sm:$0xff]
        %v1778 = vld [vmem:[%s173 + $0x30b0] sm:$0xff]
        %v1779 = vld [vmem:[%s173 + $0x30b8] sm:$0xff]
        %v1780 = vld [vmem:[%s173 + $0x30c0] sm:$0xff]
        %v1781 = vld [vmem:[%s173 + $0x30c8] sm:$0xff]
        %v1782 = vld [vmem:[%s173 + $0x30d0] sm:$0xff]
        %v1783 = vld [vmem:[%s173 + $0x30d8] sm:$0xff]
        %v1784 = vld [vmem:[%s173 + $0x30e0] sm:$0xff]
        %v1785 = vld [vmem:[%s173 + $0x30e8] sm:$0xff]
        %v1786 = vld [vmem:[%s173 + $0x30f0] sm:$0xff]
        %v1787 = vld [vmem:[%s173 + $0x30f8] sm:$0xff]
        %v1788 = vld [vmem:[%s173 + $0x3100] sm:$0xff]
        %v1789 = vld [vmem:[%s173 + $0x3108] sm:$0xff]
        %v1790 = vld [vmem:[%s173 + $0x3110] sm:$0xff]
        %v1791 = vld [vmem:[%s173 + $0x3118] sm:$0xff]
        %v1792 = vld [vmem:[%s173 + $0x3120] sm:$0xff]
        %v1793 = vld [vmem:[%s173 + $0x3128] sm:$0xff]
        %v1794 = vld [vmem:[%s173 + $0x3130] sm:$0xff]
        %v1795 = vld [vmem:[%s173 + $0x3138] sm:$0xff]
        %v1796 = vld [vmem:[%s173 + $0x3140] sm:$0xff]
        %v1797 = vld [vmem:[%s173 + $0x3148] sm:$0xff]
        %v1798 = vld [vmem:[%s173 + $0x3150] sm:$0xff]
        %v1799 = vld [vmem:[%s173 + $0x3158] sm:$0xff]
        %v1800 = vld [vmem:[%s173 + $0x3160] sm:$0xff]
        %v1801 = vld [vmem:[%s173 + $0x3168] sm:$0xff]
        %v1802 = vld [vmem:[%s173 + $0x3170] sm:$0xff]
        %v1803 = vld [vmem:[%s173 + $0x3178] sm:$0xff]
        %v1804 = vld [vmem:[%s173 + $0x3180] sm:$0xff]
        %v1805 = vld [vmem:[%s173 + $0x3188] sm:$0xff]
        %v1806 = vld [vmem:[%s173 + $0x3190] sm:$0xff]
        %v1807 = vld [vmem:[%s173 + $0x3198] sm:$0xff]
        %v1808 = vld [vmem:[%s173 + $0x31a0] sm:$0xff]
        %v1809 = vld [vmem:[%s173 + $0x31a8] sm:$0xff]
        %v1810 = vld [vmem:[%s173 + $0x31b0] sm:$0xff]
        %v1811 = vld [vmem:[%s173 + $0x31b8] sm:$0xff]
        %v1812 = vld [vmem:[%s173 + $0x31c0] sm:$0xff]
        %v1813 = vld [vmem:[%s173 + $0x31c8] sm:$0xff]
        %v1814 = vld [vmem:[%s173 + $0x31d0] sm:$0xff]
        %v1815 = vld [vmem:[%s173 + $0x31d8] sm:$0xff]
        %v1816 = vld [vmem:[%s173 + $0x31e0] sm:$0xff]
        %v1817 = vld [vmem:[%s173 + $0x31e8] sm:$0xff]
        %v1818 = vld [vmem:[%s173 + $0x31f0] sm:$0xff]
        %v1819 = vld [vmem:[%s173 + $0x31f8] sm:$0xff]
        %v1820 = vld [vmem:[%s204] sm:$0xff]
        %v1821 = vld [vmem:[%s204 + $0x8] sm:$0xff]
        %v1822 = vld [vmem:[%s204 + $0x10] sm:$0xff]
        %v1823 = vld [vmem:[%s204 + $0x18] sm:$0xff]
        %v1824 = vld [vmem:[%s204 + $0x20] sm:$0xff]
        %v1825 = vld [vmem:[%s204 + $0x28] sm:$0xff]
        %v1826 = vld [vmem:[%s204 + $0x30] sm:$0x3]
        %v1834 = vlaneseq
        %v1835 = vshrl.u32 %v1834, 7
        %v1836 = vsub.s32 0, %v1835
        %v1837 = vrot.slane %v1820, %v1836
        %v1838 = vlaneseq
        %v1839 = vshrl.u32 %v1838, 7
        %v1840 = vsub.s32 1, %v1839
        %v1841 = vrot.slane %v1820, %v1840
        %v1842 = vlaneseq
        %v1843 = vshrl.u32 %v1842, 7
        %v1844 = vsub.s32 2, %v1843
        %v1845 = vrot.slane %v1820, %v1844
        %v1846 = vlaneseq
        %v1847 = vshrl.u32 %v1846, 7
        %v1848 = vsub.s32 3, %v1847
        %v1849 = vrot.slane %v1820, %v1848
        %v1850 = vlaneseq
        %v1851 = vshrl.u32 %v1850, 7
        %v1852 = vsub.s32 4, %v1851
        %v1853 = vrot.slane %v1820, %v1852
        %v1854 = vlaneseq
        %v1855 = vshrl.u32 %v1854, 7
        %v1856 = vsub.s32 5, %v1855
        %v1857 = vrot.slane %v1820, %v1856
        %v1858 = vlaneseq
        %v1859 = vshrl.u32 %v1858, 7
        %v1860 = vsub.s32 6, %v1859
        %v1861 = vrot.slane %v1820, %v1860
        %v1862 = vlaneseq
        %v1863 = vshrl.u32 %v1862, 7
        %v1864 = vsub.s32 7, %v1863
        %v1865 = vrot.slane %v1820, %v1864
        %v1866 = vlaneseq
        %v1867 = vshrl.u32 %v1866, 7
        %v1868 = vsub.s32 0, %v1867
        %v1869 = vrot.slane %v1821, %v1868
        %v1870 = vlaneseq
        %v1871 = vshrl.u32 %v1870, 7
        %v1872 = vsub.s32 1, %v1871
        %v1873 = vrot.slane %v1821, %v1872
        %v1874 = vlaneseq
        %v1875 = vshrl.u32 %v1874, 7
        %v1876 = vsub.s32 2, %v1875
        %v1877 = vrot.slane %v1821, %v1876
        %v1878 = vlaneseq
        %v1879 = vshrl.u32 %v1878, 7
        %v1880 = vsub.s32 3, %v1879
        %v1881 = vrot.slane %v1821, %v1880
        %v1882 = vlaneseq
        %v1883 = vshrl.u32 %v1882, 7
        %v1884 = vsub.s32 4, %v1883
        %v1885 = vrot.slane %v1821, %v1884
        %v1886 = vlaneseq
        %v1887 = vshrl.u32 %v1886, 7
        %v1888 = vsub.s32 5, %v1887
        %v1889 = vrot.slane %v1821, %v1888
        %v1890 = vlaneseq
        %v1891 = vshrl.u32 %v1890, 7
        %v1892 = vsub.s32 6, %v1891
        %v1893 = vrot.slane %v1821, %v1892
        %v1894 = vlaneseq
        %v1895 = vshrl.u32 %v1894, 7
        %v1896 = vsub.s32 7, %v1895
        %v1897 = vrot.slane %v1821, %v1896
        %v1898 = vlaneseq
        %v1899 = vshrl.u32 %v1898, 7
        %v1900 = vsub.s32 0, %v1899
        %v1901 = vrot.slane %v1822, %v1900
        %v1902 = vlaneseq
        %v1903 = vshrl.u32 %v1902, 7
        %v1904 = vsub.s32 1, %v1903
        %v1905 = vrot.slane %v1822, %v1904
        %v1906 = vlaneseq
        %v1907 = vshrl.u32 %v1906, 7
        %v1908 = vsub.s32 2, %v1907
        %v1909 = vrot.slane %v1822, %v1908
        %v1910 = vlaneseq
        %v1911 = vshrl.u32 %v1910, 7
        %v1912 = vsub.s32 3, %v1911
        %v1913 = vrot.slane %v1822, %v1912
        %v1914 = vlaneseq
        %v1915 = vshrl.u32 %v1914, 7
        %v1916 = vsub.s32 4, %v1915
        %v1917 = vrot.slane %v1822, %v1916
        %v1918 = vlaneseq
        %v1919 = vshrl.u32 %v1918, 7
        %v1920 = vsub.s32 5, %v1919
        %v1921 = vrot.slane %v1822, %v1920
        %v1922 = vlaneseq
        %v1923 = vshrl.u32 %v1922, 7
        %v1924 = vsub.s32 6, %v1923
        %v1925 = vrot.slane %v1822, %v1924
        %v1926 = vlaneseq
        %v1927 = vshrl.u32 %v1926, 7
        %v1928 = vsub.s32 7, %v1927
        %v1929 = vrot.slane %v1822, %v1928
        %v1930 = vlaneseq
        %v1931 = vshrl.u32 %v1930, 7
        %v1932 = vsub.s32 0, %v1931
        %v1933 = vrot.slane %v1823, %v1932
        %v1934 = vlaneseq
        %v1935 = vshrl.u32 %v1934, 7
        %v1936 = vsub.s32 1, %v1935
        %v1937 = vrot.slane %v1823, %v1936
        %v1938 = vlaneseq
        %v1939 = vshrl.u32 %v1938, 7
        %v1940 = vsub.s32 2, %v1939
        %v1941 = vrot.slane %v1823, %v1940
        %v1942 = vlaneseq
        %v1943 = vshrl.u32 %v1942, 7
        %v1944 = vsub.s32 3, %v1943
        %v1945 = vrot.slane %v1823, %v1944
        %v1946 = vlaneseq
        %v1947 = vshrl.u32 %v1946, 7
        %v1948 = vsub.s32 4, %v1947
        %v1949 = vrot.slane %v1823, %v1948
        %v1950 = vlaneseq
        %v1951 = vshrl.u32 %v1950, 7
        %v1952 = vsub.s32 5, %v1951
        %v1953 = vrot.slane %v1823, %v1952
        %v1954 = vlaneseq
        %v1955 = vshrl.u32 %v1954, 7
        %v1956 = vsub.s32 6, %v1955
        %v1957 = vrot.slane %v1823, %v1956
        %v1958 = vlaneseq
        %v1959 = vshrl.u32 %v1958, 7
        %v1960 = vsub.s32 7, %v1959
        %v1961 = vrot.slane %v1823, %v1960
        %v1962 = vlaneseq
        %v1963 = vshrl.u32 %v1962, 7
        %v1964 = vsub.s32 0, %v1963
        %v1965 = vrot.slane %v1824, %v1964
        %v1966 = vlaneseq
        %v1967 = vshrl.u32 %v1966, 7
        %v1968 = vsub.s32 1, %v1967
        %v1969 = vrot.slane %v1824, %v1968
        %v1970 = vlaneseq
        %v1971 = vshrl.u32 %v1970, 7
        %v1972 = vsub.s32 2, %v1971
        %v1973 = vrot.slane %v1824, %v1972
        %v1974 = vlaneseq
        %v1975 = vshrl.u32 %v1974, 7
        %v1976 = vsub.s32 3, %v1975
        %v1977 = vrot.slane %v1824, %v1976
        %v1978 = vlaneseq
        %v1979 = vshrl.u32 %v1978, 7
        %v1980 = vsub.s32 4, %v1979
        %v1981 = vrot.slane %v1824, %v1980
        %v1982 = vlaneseq
        %v1983 = vshrl.u32 %v1982, 7
        %v1984 = vsub.s32 5, %v1983
        %v1985 = vrot.slane %v1824, %v1984
        %v1986 = vlaneseq
        %v1987 = vshrl.u32 %v1986, 7
        %v1988 = vsub.s32 6, %v1987
        %v1989 = vrot.slane %v1824, %v1988
        %v1990 = vlaneseq
        %v1991 = vshrl.u32 %v1990, 7
        %v1992 = vsub.s32 7, %v1991
        %v1993 = vrot.slane %v1824, %v1992
        %v1994 = vlaneseq
        %v1995 = vshrl.u32 %v1994, 7
        %v1996 = vsub.s32 0, %v1995
        %v1997 = vrot.slane %v1825, %v1996
        %v1998 = vlaneseq
        %v1999 = vshrl.u32 %v1998, 7
        %v2000 = vsub.s32 1, %v1999
        %v2001 = vrot.slane %v1825, %v2000
        %v2002 = vlaneseq
        %v2003 = vshrl.u32 %v2002, 7
        %v2004 = vsub.s32 2, %v2003
        %v2005 = vrot.slane %v1825, %v2004
        %v2006 = vlaneseq
        %v2007 = vshrl.u32 %v2006, 7
        %v2008 = vsub.s32 3, %v2007
        %v2009 = vrot.slane %v1825, %v2008
        %v2010 = vlaneseq
        %v2011 = vshrl.u32 %v2010, 7
        %v2012 = vsub.s32 4, %v2011
        %v2013 = vrot.slane %v1825, %v2012
        %v2014 = vlaneseq
        %v2015 = vshrl.u32 %v2014, 7
        %v2016 = vsub.s32 5, %v2015
        %v2017 = vrot.slane %v1825, %v2016
        %v2018 = vlaneseq
        %v2019 = vshrl.u32 %v2018, 7
        %v2020 = vsub.s32 6, %v2019
        %v2021 = vrot.slane %v1825, %v2020
        %v2022 = vlaneseq
        %v2023 = vshrl.u32 %v2022, 7
        %v2024 = vsub.s32 7, %v2023
        %v2025 = vrot.slane %v1825, %v2024
        %v2026 = vlaneseq
        %v2027 = vshrl.u32 %v2026, 7
        %v2028 = vsub.s32 0, %v2027
        %v2029 = vrot.slane %v1826, %v2028
        %v2030 = vlaneseq
        %v2031 = vshrl.u32 %v2030, 7
        %v2032 = vsub.s32 1, %v2031
        %v2033 = vrot.slane %v1826, %v2032
        %v3684 = vunpack.c.l.b16 %v220
        %v3685 = vunpack.c.h.b16 %v220
        %v3686 = vunpack.c.l.b16 %v221
        %v3687 = vunpack.c.h.b16 %v221
        %v3688 = vunpack.c.l.b16 %v222
        %v3689 = vunpack.c.h.b16 %v222
        %v3690 = vunpack.c.l.b16 %v223
        %v3691 = vunpack.c.h.b16 %v223
        %v3692 = vunpack.c.l.b16 %v224
        %v3693 = vunpack.c.h.b16 %v224
        %v3694 = vunpack.c.l.b16 %v225
        %v3695 = vunpack.c.h.b16 %v225
        %v3696 = vunpack.c.l.b16 %v226
        %v3697 = vunpack.c.h.b16 %v226
        %v3698 = vunpack.c.l.b16 %v227
        %v3699 = vunpack.c.h.b16 %v227
        %v3700 = vunpack.c.l.b16 %v228
        %v3701 = vunpack.c.h.b16 %v228
        %v3702 = vunpack.c.l.b16 %v229
        %v3703 = vunpack.c.h.b16 %v229
        %v3704 = vunpack.c.l.b16 %v230
        %v3705 = vunpack.c.h.b16 %v230
        %v3706 = vunpack.c.l.b16 %v231
        %v3707 = vunpack.c.h.b16 %v231
        %v3708 = vunpack.c.l.b16 %v232
        %v3709 = vunpack.c.h.b16 %v232
        %v3710 = vunpack.c.l.b16 %v233
        %v3711 = vunpack.c.h.b16 %v233
        %v3712 = vunpack.c.l.b16 %v234
        %v3713 = vunpack.c.h.b16 %v234
        %v3714 = vunpack.c.l.b16 %v235
        %v3715 = vunpack.c.h.b16 %v235
        %v3716 = vunpack.c.l.b16 %v236
        %v3717 = vunpack.c.h.b16 %v236
        %v3718 = vunpack.c.l.b16 %v237
        %v3719 = vunpack.c.h.b16 %v237
        %v3720 = vunpack.c.l.b16 %v238
        %v3721 = vunpack.c.h.b16 %v238
        %v3722 = vunpack.c.l.b16 %v239
        %v3723 = vunpack.c.h.b16 %v239
        %v3724 = vunpack.c.l.b16 %v240
        %v3725 = vunpack.c.h.b16 %v240
        %v3726 = vunpack.c.l.b16 %v241
        %v3727 = vunpack.c.h.b16 %v241
        %v3728 = vunpack.c.l.b16 %v242
        %v3729 = vunpack.c.h.b16 %v242
        %v3730 = vunpack.c.l.b16 %v243
        %v3731 = vunpack.c.h.b16 %v243
        %v3732 = vunpack.c.l.b16 %v244
        %v3733 = vunpack.c.h.b16 %v244
        %v3734 = vunpack.c.l.b16 %v245
        %v3735 = vunpack.c.h.b16 %v245
        %v3736 = vunpack.c.l.b16 %v246
        %v3737 = vunpack.c.h.b16 %v246
        %v3738 = vunpack.c.l.b16 %v247
        %v3739 = vunpack.c.h.b16 %v247
        %v3740 = vunpack.c.l.b16 %v248
        %v3741 = vunpack.c.h.b16 %v248
        %v3742 = vunpack.c.l.b16 %v249
        %v3743 = vunpack.c.h.b16 %v249
        %v3744 = vunpack.c.l.b16 %v250
        %v3745 = vunpack.c.h.b16 %v250
        %v3746 = vunpack.c.l.b16 %v251
        %v3747 = vunpack.c.h.b16 %v251
        %v3748 = vunpack.c.l.b16 %v252
        %v3749 = vunpack.c.h.b16 %v252
        %v3750 = vunpack.c.l.b16 %v253
        %v3751 = vunpack.c.h.b16 %v253
        %v3752 = vunpack.c.l.b16 %v254
        %v3753 = vunpack.c.h.b16 %v254
        %v3754 = vunpack.c.l.b16 %v255
        %v3755 = vunpack.c.h.b16 %v255
        %v3756 = vunpack.c.l.b16 %v256
        %v3757 = vunpack.c.h.b16 %v256
        %v3758 = vunpack.c.l.b16 %v257
        %v3759 = vunpack.c.h.b16 %v257
        %v3760 = vunpack.c.l.b16 %v258
        %v3761 = vunpack.c.h.b16 %v258
        %v3762 = vunpack.c.l.b16 %v259
        %v3763 = vunpack.c.h.b16 %v259
        %v3764 = vunpack.c.l.b16 %v260
        %v3765 = vunpack.c.h.b16 %v260
        %v3766 = vunpack.c.l.b16 %v261
        %v3767 = vunpack.c.h.b16 %v261
        %v3768 = vunpack.c.l.b16 %v262
        %v3769 = vunpack.c.h.b16 %v262
        %v3770 = vunpack.c.l.b16 %v263
        %v3771 = vunpack.c.h.b16 %v263
        %v3772 = vunpack.c.l.b16 %v264
        %v3773 = vunpack.c.h.b16 %v264
        %v3774 = vunpack.c.l.b16 %v265
        %v3775 = vunpack.c.h.b16 %v265
        %v3776 = vunpack.c.l.b16 %v266
        %v3777 = vunpack.c.h.b16 %v266
        %v3778 = vunpack.c.l.b16 %v267
        %v3779 = vunpack.c.h.b16 %v267
        %v3780 = vunpack.c.l.b16 %v268
        %v3781 = vunpack.c.h.b16 %v268
        %v3782 = vunpack.c.l.b16 %v269
        %v3783 = vunpack.c.h.b16 %v269
        %v3784 = vunpack.c.l.b16 %v270
        %v3785 = vunpack.c.h.b16 %v270
        %v3786 = vunpack.c.l.b16 %v271
        %v3787 = vunpack.c.h.b16 %v271
        %v3788 = vunpack.c.l.b16 %v272
        %v3789 = vunpack.c.h.b16 %v272
        %v3790 = vunpack.c.l.b16 %v273
        %v3791 = vunpack.c.h.b16 %v273
        %v3792 = vunpack.c.l.b16 %v274
        %v3793 = vunpack.c.h.b16 %v274
        %v3794 = vunpack.c.l.b16 %v275
        %v3795 = vunpack.c.h.b16 %v275
        %v3796 = vunpack.c.l.b16 %v276
        %v3797 = vunpack.c.h.b16 %v276
        %v3798 = vunpack.c.l.b16 %v277
        %v3799 = vunpack.c.h.b16 %v277
        %v3800 = vunpack.c.l.b16 %v278
        %v3801 = vunpack.c.h.b16 %v278
        %v3802 = vunpack.c.l.b16 %v279
        %v3803 = vunpack.c.h.b16 %v279
        %v3804 = vunpack.c.l.b16 %v280
        %v3805 = vunpack.c.h.b16 %v280
        %v3806 = vunpack.c.l.b16 %v281
        %v3807 = vunpack.c.h.b16 %v281
        %v3808 = vunpack.c.l.b16 %v282
        %v3809 = vunpack.c.h.b16 %v282
        %v3810 = vunpack.c.l.b16 %v283
        %v3811 = vunpack.c.h.b16 %v283
        %v3812 = vunpack.c.l.b16 %v284
        %v3813 = vunpack.c.h.b16 %v284
        %v3814 = vunpack.c.l.b16 %v285
        %v3815 = vunpack.c.h.b16 %v285
        %v3816 = vunpack.c.l.b16 %v286
        %v3817 = vunpack.c.h.b16 %v286
        %v3818 = vunpack.c.l.b16 %v287
        %v3819 = vunpack.c.h.b16 %v287
        %v3820 = vunpack.c.l.b16 %v288
        %v3821 = vunpack.c.h.b16 %v288
        %v3822 = vunpack.c.l.b16 %v289
        %v3823 = vunpack.c.h.b16 %v289
        %v3824 = vunpack.c.l.b16 %v290
        %v3825 = vunpack.c.h.b16 %v290
        %v3826 = vunpack.c.l.b16 %v291
        %v3827 = vunpack.c.h.b16 %v291
        %v3828 = vunpack.c.l.b16 %v292
        %v3829 = vunpack.c.h.b16 %v292
        %v3830 = vunpack.c.l.b16 %v293
        %v3831 = vunpack.c.h.b16 %v293
        %v3832 = vunpack.c.l.b16 %v294
        %v3833 = vunpack.c.h.b16 %v294
        %v3834 = vunpack.c.l.b16 %v295
        %v3835 = vunpack.c.h.b16 %v295
        %v3836 = vunpack.c.l.b16 %v296
        %v3837 = vunpack.c.h.b16 %v296
        %v3838 = vunpack.c.l.b16 %v297
        %v3839 = vunpack.c.h.b16 %v297
        %v3840 = vunpack.c.l.b16 %v298
        %v3841 = vunpack.c.h.b16 %v298
        %v3842 = vunpack.c.l.b16 %v299
        %v3843 = vunpack.c.h.b16 %v299
        %v3844 = vunpack.c.l.b16 %v300
        %v3845 = vunpack.c.h.b16 %v300
        %v3846 = vunpack.c.l.b16 %v301
        %v3847 = vunpack.c.h.b16 %v301
        %v3848 = vunpack.c.l.b16 %v302
        %v3849 = vunpack.c.h.b16 %v302
        %v3850 = vunpack.c.l.b16 %v303
        %v3851 = vunpack.c.h.b16 %v303
        %v3852 = vunpack.c.l.b16 %v304
        %v3853 = vunpack.c.h.b16 %v304
        %v3854 = vunpack.c.l.b16 %v305
        %v3855 = vunpack.c.h.b16 %v305
        %v3856 = vunpack.c.l.b16 %v306
        %v3857 = vunpack.c.h.b16 %v306
        %v3858 = vunpack.c.l.b16 %v307
        %v3859 = vunpack.c.h.b16 %v307
        %v3860 = vunpack.c.l.b16 %v308
        %v3861 = vunpack.c.h.b16 %v308
        %v3862 = vunpack.c.l.b16 %v309
        %v3863 = vunpack.c.h.b16 %v309
        %v3864 = vunpack.c.l.b16 %v310
        %v3865 = vunpack.c.h.b16 %v310
        %v3866 = vunpack.c.l.b16 %v311
        %v3867 = vunpack.c.h.b16 %v311
        %v3868 = vunpack.c.l.b16 %v312
        %v3869 = vunpack.c.h.b16 %v312
        %v3870 = vunpack.c.l.b16 %v313
        %v3871 = vunpack.c.h.b16 %v313
        %v3872 = vunpack.c.l.b16 %v314
        %v3873 = vunpack.c.h.b16 %v314
        %v3874 = vunpack.c.l.b16 %v315
        %v3875 = vunpack.c.h.b16 %v315
        %v3876 = vunpack.c.l.b16 %v316
        %v3877 = vunpack.c.h.b16 %v316
        %v3878 = vunpack.c.l.b16 %v317
        %v3879 = vunpack.c.h.b16 %v317
        %v3880 = vunpack.c.l.b16 %v318
        %v3881 = vunpack.c.h.b16 %v318
        %v3882 = vunpack.c.l.b16 %v319
        %v3883 = vunpack.c.h.b16 %v319
        %v3884 = vunpack.c.l.b16 %v320
        %v3885 = vunpack.c.h.b16 %v320
        %v3886 = vunpack.c.l.b16 %v321
        %v3887 = vunpack.c.h.b16 %v321
        %v3888 = vunpack.c.l.b16 %v322
        %v3889 = vunpack.c.h.b16 %v322
        %v3890 = vunpack.c.l.b16 %v323
        %v3891 = vunpack.c.h.b16 %v323
        %v3892 = vunpack.c.l.b16 %v324
        %v3893 = vunpack.c.h.b16 %v324
        %v3894 = vunpack.c.l.b16 %v325
        %v3895 = vunpack.c.h.b16 %v325
        %v3896 = vunpack.c.l.b16 %v326
        %v3897 = vunpack.c.h.b16 %v326
        %v3898 = vunpack.c.l.b16 %v327
        %v3899 = vunpack.c.h.b16 %v327
        %v3900 = vunpack.c.l.b16 %v328
        %v3901 = vunpack.c.h.b16 %v328
        %v3902 = vunpack.c.l.b16 %v329
        %v3903 = vunpack.c.h.b16 %v329
        %v3904 = vunpack.c.l.b16 %v330
        %v3905 = vunpack.c.h.b16 %v330
        %v3906 = vunpack.c.l.b16 %v331
        %v3907 = vunpack.c.h.b16 %v331
        %v3908 = vunpack.c.l.b16 %v332
        %v3909 = vunpack.c.h.b16 %v332
        %v3910 = vunpack.c.l.b16 %v333
        %v3911 = vunpack.c.h.b16 %v333
        %v3912 = vunpack.c.l.b16 %v334
        %v3913 = vunpack.c.h.b16 %v334
        %v3914 = vunpack.c.l.b16 %v335
        %v3915 = vunpack.c.h.b16 %v335
        %v3916 = vunpack.c.l.b16 %v336
        %v3917 = vunpack.c.h.b16 %v336
        %v3918 = vunpack.c.l.b16 %v337
        %v3919 = vunpack.c.h.b16 %v337
        %v3920 = vunpack.c.l.b16 %v338
        %v3921 = vunpack.c.h.b16 %v338
        %v3922 = vunpack.c.l.b16 %v339
        %v3923 = vunpack.c.h.b16 %v339
        %v3924 = vunpack.c.l.b16 %v340
        %v3925 = vunpack.c.h.b16 %v340
        %v3926 = vunpack.c.l.b16 %v341
        %v3927 = vunpack.c.h.b16 %v341
        %v3928 = vunpack.c.l.b16 %v342
        %v3929 = vunpack.c.h.b16 %v342
        %v3930 = vunpack.c.l.b16 %v343
        %v3931 = vunpack.c.h.b16 %v343
        %v3932 = vunpack.c.l.b16 %v344
        %v3933 = vunpack.c.h.b16 %v344
        %v3934 = vunpack.c.l.b16 %v345
        %v3935 = vunpack.c.h.b16 %v345
        %v3936 = vunpack.c.l.b16 %v346
        %v3937 = vunpack.c.h.b16 %v346
        %v3938 = vunpack.c.l.b16 %v347
        %v3939 = vunpack.c.h.b16 %v347
        %v3940 = vunpack.c.l.b16 %v348
        %v3941 = vunpack.c.h.b16 %v348
        %v3942 = vunpack.c.l.b16 %v349
        %v3943 = vunpack.c.h.b16 %v349
        %v3944 = vunpack.c.l.b16 %v350
        %v3945 = vunpack.c.h.b16 %v350
        %v3946 = vunpack.c.l.b16 %v351
        %v3947 = vunpack.c.h.b16 %v351
        %v3948 = vunpack.c.l.b16 %v352
        %v3949 = vunpack.c.h.b16 %v352
        %v3950 = vunpack.c.l.b16 %v353
        %v3951 = vunpack.c.h.b16 %v353
        %v3952 = vunpack.c.l.b16 %v354
        %v3953 = vunpack.c.h.b16 %v354
        %v3954 = vunpack.c.l.b16 %v355
        %v3955 = vunpack.c.h.b16 %v355
        %v3956 = vunpack.c.l.b16 %v356
        %v3957 = vunpack.c.h.b16 %v356
        %v3958 = vunpack.c.l.b16 %v357
        %v3959 = vunpack.c.h.b16 %v357
        %v3960 = vunpack.c.l.b16 %v358
        %v3961 = vunpack.c.h.b16 %v358
        %v3962 = vunpack.c.l.b16 %v359
        %v3963 = vunpack.c.h.b16 %v359
        %v3964 = vunpack.c.l.b16 %v360
        %v3965 = vunpack.c.h.b16 %v360
        %v3966 = vunpack.c.l.b16 %v361
        %v3967 = vunpack.c.h.b16 %v361
        %v3968 = vunpack.c.l.b16 %v362
        %v3969 = vunpack.c.h.b16 %v362
        %v3970 = vunpack.c.l.b16 %v363
        %v3971 = vunpack.c.h.b16 %v363
        %v3972 = vunpack.c.l.b16 %v364
        %v3973 = vunpack.c.h.b16 %v364
        %v3974 = vunpack.c.l.b16 %v365
        %v3975 = vunpack.c.h.b16 %v365
        %v3976 = vunpack.c.l.b16 %v366
        %v3977 = vunpack.c.h.b16 %v366
        %v3978 = vunpack.c.l.b16 %v367
        %v3979 = vunpack.c.h.b16 %v367
        %v3980 = vunpack.c.l.b16 %v368
        %v3981 = vunpack.c.h.b16 %v368
        %v3982 = vunpack.c.l.b16 %v369
        %v3983 = vunpack.c.h.b16 %v369
        %v3984 = vunpack.c.l.b16 %v370
        %v3985 = vunpack.c.h.b16 %v370
        %v3986 = vunpack.c.l.b16 %v371
        %v3987 = vunpack.c.h.b16 %v371
        %v3988 = vunpack.c.l.b16 %v372
        %v3989 = vunpack.c.h.b16 %v372
        %v3990 = vunpack.c.l.b16 %v373
        %v3991 = vunpack.c.h.b16 %v373
        %v3992 = vunpack.c.l.b16 %v374
        %v3993 = vunpack.c.h.b16 %v374
        %v3994 = vunpack.c.l.b16 %v375
        %v3995 = vunpack.c.h.b16 %v375
        %v3996 = vunpack.c.l.b16 %v376
        %v3997 = vunpack.c.h.b16 %v376
        %v3998 = vunpack.c.l.b16 %v377
        %v3999 = vunpack.c.h.b16 %v377
        %v4000 = vunpack.c.l.b16 %v378
        %v4001 = vunpack.c.h.b16 %v378
        %v4002 = vunpack.c.l.b16 %v379
        %v4003 = vunpack.c.h.b16 %v379
        %v4004 = vunpack.c.l.b16 %v380
        %v4005 = vunpack.c.h.b16 %v380
        %v4006 = vunpack.c.l.b16 %v381
        %v4007 = vunpack.c.h.b16 %v381
        %v4008 = vunpack.c.l.b16 %v382
        %v4009 = vunpack.c.h.b16 %v382
        %v4010 = vunpack.c.l.b16 %v383
        %v4011 = vunpack.c.h.b16 %v383
        %v4012 = vunpack.c.l.b16 %v384
        %v4013 = vunpack.c.h.b16 %v384
        %v4014 = vunpack.c.l.b16 %v385
        %v4015 = vunpack.c.h.b16 %v385
        %v4016 = vunpack.c.l.b16 %v386
        %v4017 = vunpack.c.h.b16 %v386
        %v4018 = vunpack.c.l.b16 %v387
        %v4019 = vunpack.c.h.b16 %v387
        %v4020 = vunpack.c.l.b16 %v388
        %v4021 = vunpack.c.h.b16 %v388
        %v4022 = vunpack.c.l.b16 %v389
        %v4023 = vunpack.c.h.b16 %v389
        %v4024 = vunpack.c.l.b16 %v390
        %v4025 = vunpack.c.h.b16 %v390
        %v4026 = vunpack.c.l.b16 %v391
        %v4027 = vunpack.c.h.b16 %v391
        %v4028 = vunpack.c.l.b16 %v392
        %v4029 = vunpack.c.h.b16 %v392
        %v4030 = vunpack.c.l.b16 %v393
        %v4031 = vunpack.c.h.b16 %v393
        %v4032 = vunpack.c.l.b16 %v394
        %v4033 = vunpack.c.h.b16 %v394
        %v4034 = vunpack.c.l.b16 %v395
        %v4035 = vunpack.c.h.b16 %v395
        %v4036 = vunpack.c.l.b16 %v396
        %v4037 = vunpack.c.h.b16 %v396
        %v4038 = vunpack.c.l.b16 %v397
        %v4039 = vunpack.c.h.b16 %v397
        %v4040 = vunpack.c.l.b16 %v398
        %v4041 = vunpack.c.h.b16 %v398
        %v4042 = vunpack.c.l.b16 %v399
        %v4043 = vunpack.c.h.b16 %v399
        %v4044 = vunpack.c.l.b16 %v400
        %v4045 = vunpack.c.h.b16 %v400
        %v4046 = vunpack.c.l.b16 %v401
        %v4047 = vunpack.c.h.b16 %v401
        %v4048 = vunpack.c.l.b16 %v402
        %v4049 = vunpack.c.h.b16 %v402
        %v4050 = vunpack.c.l.b16 %v403
        %v4051 = vunpack.c.h.b16 %v403
        %v4052 = vunpack.c.l.b16 %v404
        %v4053 = vunpack.c.h.b16 %v404
        %v4054 = vunpack.c.l.b16 %v405
        %v4055 = vunpack.c.h.b16 %v405
        %v4056 = vunpack.c.l.b16 %v406
        %v4057 = vunpack.c.h.b16 %v406
        %v4058 = vunpack.c.l.b16 %v407
        %v4059 = vunpack.c.h.b16 %v407
        %v4060 = vunpack.c.l.b16 %v408
        %v4061 = vunpack.c.h.b16 %v408
        %v4062 = vunpack.c.l.b16 %v409
        %v4063 = vunpack.c.h.b16 %v409
        %v4064 = vunpack.c.l.b16 %v410
        %v4065 = vunpack.c.h.b16 %v410
        %v4066 = vunpack.c.l.b16 %v411
        %v4067 = vunpack.c.h.b16 %v411
        %v4068 = vunpack.c.l.b16 %v412
        %v4069 = vunpack.c.h.b16 %v412
        %v4070 = vunpack.c.l.b16 %v413
        %v4071 = vunpack.c.h.b16 %v413
        %v4072 = vunpack.c.l.b16 %v414
        %v4073 = vunpack.c.h.b16 %v414
        %v4074 = vunpack.c.l.b16 %v415
        %v4075 = vunpack.c.h.b16 %v415
        %v4076 = vunpack.c.l.b16 %v416
        %v4077 = vunpack.c.h.b16 %v416
        %v4078 = vunpack.c.l.b16 %v417
        %v4079 = vunpack.c.h.b16 %v417
        %v4080 = vunpack.c.l.b16 %v418
        %v4081 = vunpack.c.h.b16 %v418
        %v4082 = vunpack.c.l.b16 %v419
        %v4083 = vunpack.c.h.b16 %v419
        %v4084 = vunpack.c.l.b16 %v420
        %v4085 = vunpack.c.h.b16 %v420
        %v4086 = vunpack.c.l.b16 %v421
        %v4087 = vunpack.c.h.b16 %v421
        %v4088 = vunpack.c.l.b16 %v422
        %v4089 = vunpack.c.h.b16 %v422
        %v4090 = vunpack.c.l.b16 %v423
        %v4091 = vunpack.c.h.b16 %v423
        %v4092 = vunpack.c.l.b16 %v424
        %v4093 = vunpack.c.h.b16 %v424
        %v4094 = vunpack.c.l.b16 %v425
        %v4095 = vunpack.c.h.b16 %v425
        %v4096 = vunpack.c.l.b16 %v426
        %v4097 = vunpack.c.h.b16 %v426
        %v4098 = vunpack.c.l.b16 %v427
        %v4099 = vunpack.c.h.b16 %v427
        %v4100 = vunpack.c.l.b16 %v428
        %v4101 = vunpack.c.h.b16 %v428
        %v4102 = vunpack.c.l.b16 %v429
        %v4103 = vunpack.c.h.b16 %v429
        %v4104 = vunpack.c.l.b16 %v430
        %v4105 = vunpack.c.h.b16 %v430
        %v4106 = vunpack.c.l.b16 %v431
        %v4107 = vunpack.c.h.b16 %v431
        %v4108 = vunpack.c.l.b16 %v432
        %v4109 = vunpack.c.h.b16 %v432
        %v4110 = vunpack.c.l.b16 %v433
        %v4111 = vunpack.c.h.b16 %v433
        %v4112 = vunpack.c.l.b16 %v434
        %v4113 = vunpack.c.h.b16 %v434
        %v4114 = vunpack.c.l.b16 %v435
        %v4115 = vunpack.c.h.b16 %v435
        %v4116 = vunpack.c.l.b16 %v436
        %v4117 = vunpack.c.h.b16 %v436
        %v4118 = vunpack.c.l.b16 %v437
        %v4119 = vunpack.c.h.b16 %v437
        %v4120 = vunpack.c.l.b16 %v438
        %v4121 = vunpack.c.h.b16 %v438
        %v4122 = vunpack.c.l.b16 %v439
        %v4123 = vunpack.c.h.b16 %v439
        %v4124 = vunpack.c.l.b16 %v440
        %v4125 = vunpack.c.h.b16 %v440
        %v4126 = vunpack.c.l.b16 %v441
        %v4127 = vunpack.c.h.b16 %v441
        %v4128 = vunpack.c.l.b16 %v442
        %v4129 = vunpack.c.h.b16 %v442
        %v4130 = vunpack.c.l.b16 %v443
        %v4131 = vunpack.c.h.b16 %v443
        %v4132 = vunpack.c.l.b16 %v444
        %v4133 = vunpack.c.h.b16 %v444
        %v4134 = vunpack.c.l.b16 %v445
        %v4135 = vunpack.c.h.b16 %v445
        %v4136 = vunpack.c.l.b16 %v446
        %v4137 = vunpack.c.h.b16 %v446
        %v4138 = vunpack.c.l.b16 %v447
        %v4139 = vunpack.c.h.b16 %v447
        %v4140 = vunpack.c.l.b16 %v448
        %v4141 = vunpack.c.h.b16 %v448
        %v4142 = vunpack.c.l.b16 %v449
        %v4143 = vunpack.c.h.b16 %v449
        %v4144 = vunpack.c.l.b16 %v450
        %v4145 = vunpack.c.h.b16 %v450
        %v4146 = vunpack.c.l.b16 %v451
        %v4147 = vunpack.c.h.b16 %v451
        %v4148 = vunpack.c.l.b16 %v452
        %v4149 = vunpack.c.h.b16 %v452
        %v4150 = vunpack.c.l.b16 %v453
        %v4151 = vunpack.c.h.b16 %v453
        %v4152 = vunpack.c.l.b16 %v454
        %v4153 = vunpack.c.h.b16 %v454
        %v4154 = vunpack.c.l.b16 %v455
        %v4155 = vunpack.c.h.b16 %v455
        %v4156 = vunpack.c.l.b16 %v456
        %v4157 = vunpack.c.h.b16 %v456
        %v4158 = vunpack.c.l.b16 %v457
        %v4159 = vunpack.c.h.b16 %v457
        %v4160 = vunpack.c.l.b16 %v458
        %v4161 = vunpack.c.h.b16 %v458
        %v4162 = vunpack.c.l.b16 %v459
        %v4163 = vunpack.c.h.b16 %v459
        %v4164 = vunpack.c.l.b16 %v460
        %v4165 = vunpack.c.h.b16 %v460
        %v4166 = vunpack.c.l.b16 %v461
        %v4167 = vunpack.c.h.b16 %v461
        %v4168 = vunpack.c.l.b16 %v462
        %v4169 = vunpack.c.h.b16 %v462
        %v4170 = vunpack.c.l.b16 %v463
        %v4171 = vunpack.c.h.b16 %v463
        %v4172 = vunpack.c.l.b16 %v464
        %v4173 = vunpack.c.h.b16 %v464
        %v4174 = vunpack.c.l.b16 %v465
        %v4175 = vunpack.c.h.b16 %v465
        %v4176 = vunpack.c.l.b16 %v466
        %v4177 = vunpack.c.h.b16 %v466
        %v4178 = vunpack.c.l.b16 %v467
        %v4179 = vunpack.c.h.b16 %v467
        %v4180 = vunpack.c.l.b16 %v468
        %v4181 = vunpack.c.h.b16 %v468
        %v4182 = vunpack.c.l.b16 %v469
        %v4183 = vunpack.c.h.b16 %v469
        %v4184 = vunpack.c.l.b16 %v470
        %v4185 = vunpack.c.h.b16 %v470
        %v4186 = vunpack.c.l.b16 %v471
        %v4187 = vunpack.c.h.b16 %v471
        %v4188 = vunpack.c.l.b16 %v472
        %v4189 = vunpack.c.h.b16 %v472
        %v4190 = vunpack.c.l.b16 %v473
        %v4191 = vunpack.c.h.b16 %v473
        %v4192 = vunpack.c.l.b16 %v474
        %v4193 = vunpack.c.h.b16 %v474
        %v4194 = vunpack.c.l.b16 %v475
        %v4195 = vunpack.c.h.b16 %v475
        %v4196 = vunpack.c.l.b16 %v476
        %v4197 = vunpack.c.h.b16 %v476
        %v4198 = vunpack.c.l.b16 %v477
        %v4199 = vunpack.c.h.b16 %v477
        %v4200 = vunpack.c.l.b16 %v478
        %v4201 = vunpack.c.h.b16 %v478
        %v4202 = vunpack.c.l.b16 %v479
        %v4203 = vunpack.c.h.b16 %v479
        %v4204 = vunpack.c.l.b16 %v480
        %v4205 = vunpack.c.h.b16 %v480
        %v4206 = vunpack.c.l.b16 %v481
        %v4207 = vunpack.c.h.b16 %v481
        %v4208 = vunpack.c.l.b16 %v482
        %v4209 = vunpack.c.h.b16 %v482
        %v4210 = vunpack.c.l.b16 %v483
        %v4211 = vunpack.c.h.b16 %v483
        %v4212 = vunpack.c.l.b16 %v484
        %v4213 = vunpack.c.h.b16 %v484
        %v4214 = vunpack.c.l.b16 %v485
        %v4215 = vunpack.c.h.b16 %v485
        %v4216 = vunpack.c.l.b16 %v486
        %v4217 = vunpack.c.h.b16 %v486
        %v4218 = vunpack.c.l.b16 %v487
        %v4219 = vunpack.c.h.b16 %v487
        %v4220 = vunpack.c.l.b16 %v488
        %v4221 = vunpack.c.h.b16 %v488
        %v4222 = vunpack.c.l.b16 %v489
        %v4223 = vunpack.c.h.b16 %v489
        %v4224 = vunpack.c.l.b16 %v490
        %v4225 = vunpack.c.h.b16 %v490
        %v4226 = vunpack.c.l.b16 %v491
        %v4227 = vunpack.c.h.b16 %v491
        %v4228 = vunpack.c.l.b16 %v492
        %v4229 = vunpack.c.h.b16 %v492
        %v4230 = vunpack.c.l.b16 %v493
        %v4231 = vunpack.c.h.b16 %v493
        %v4232 = vunpack.c.l.b16 %v494
        %v4233 = vunpack.c.h.b16 %v494
        %v4234 = vunpack.c.l.b16 %v495
        %v4235 = vunpack.c.h.b16 %v495
        %v4236 = vunpack.c.l.b16 %v496
        %v4237 = vunpack.c.h.b16 %v496
        %v4238 = vunpack.c.l.b16 %v497
        %v4239 = vunpack.c.h.b16 %v497
        %v4240 = vunpack.c.l.b16 %v498
        %v4241 = vunpack.c.h.b16 %v498
        %v4242 = vunpack.c.l.b16 %v499
        %v4243 = vunpack.c.h.b16 %v499
        %v4244 = vunpack.c.l.b16 %v500
        %v4245 = vunpack.c.h.b16 %v500
        %v4246 = vunpack.c.l.b16 %v501
        %v4247 = vunpack.c.h.b16 %v501
        %v4248 = vunpack.c.l.b16 %v502
        %v4249 = vunpack.c.h.b16 %v502
        %v4250 = vunpack.c.l.b16 %v503
        %v4251 = vunpack.c.h.b16 %v503
        %v4252 = vunpack.c.l.b16 %v504
        %v4253 = vunpack.c.h.b16 %v504
        %v4254 = vunpack.c.l.b16 %v505
        %v4255 = vunpack.c.h.b16 %v505
        %v4256 = vunpack.c.l.b16 %v506
        %v4257 = vunpack.c.h.b16 %v506
        %v4258 = vunpack.c.l.b16 %v507
        %v4259 = vunpack.c.h.b16 %v507
        %v4260 = vunpack.c.l.b16 %v508
        %v4261 = vunpack.c.h.b16 %v508
        %v4262 = vunpack.c.l.b16 %v509
        %v4263 = vunpack.c.h.b16 %v509
        %v4264 = vunpack.c.l.b16 %v510
        %v4265 = vunpack.c.h.b16 %v510
        %v4266 = vunpack.c.l.b16 %v511
        %v4267 = vunpack.c.h.b16 %v511
        %v4268 = vunpack.c.l.b16 %v512
        %v4269 = vunpack.c.h.b16 %v512
        %v4270 = vunpack.c.l.b16 %v513
        %v4271 = vunpack.c.h.b16 %v513
        %v4272 = vunpack.c.l.b16 %v514
        %v4273 = vunpack.c.h.b16 %v514
        %v4274 = vunpack.c.l.b16 %v515
        %v4275 = vunpack.c.h.b16 %v515
        %v4276 = vunpack.c.l.b16 %v516
        %v4277 = vunpack.c.h.b16 %v516
        %v4278 = vunpack.c.l.b16 %v517
        %v4279 = vunpack.c.h.b16 %v517
        %v4280 = vunpack.c.l.b16 %v518
        %v4281 = vunpack.c.h.b16 %v518
        %v4282 = vunpack.c.l.b16 %v519
        %v4283 = vunpack.c.h.b16 %v519
        %v4284 = vunpack.c.l.b16 %v520
        %v4285 = vunpack.c.h.b16 %v520
        %v4286 = vunpack.c.l.b16 %v521
        %v4287 = vunpack.c.h.b16 %v521
        %v4288 = vunpack.c.l.b16 %v522
        %v4289 = vunpack.c.h.b16 %v522
        %v4290 = vunpack.c.l.b16 %v523
        %v4291 = vunpack.c.h.b16 %v523
        %v4292 = vunpack.c.l.b16 %v524
        %v4293 = vunpack.c.h.b16 %v524
        %v4294 = vunpack.c.l.b16 %v525
        %v4295 = vunpack.c.h.b16 %v525
        %v4296 = vunpack.c.l.b16 %v526
        %v4297 = vunpack.c.h.b16 %v526
        %v4298 = vunpack.c.l.b16 %v527
        %v4299 = vunpack.c.h.b16 %v527
        %v4300 = vunpack.c.l.b16 %v528
        %v4301 = vunpack.c.h.b16 %v528
        %v4302 = vunpack.c.l.b16 %v529
        %v4303 = vunpack.c.h.b16 %v529
        %v4304 = vunpack.c.l.b16 %v530
        %v4305 = vunpack.c.h.b16 %v530
        %v4306 = vunpack.c.l.b16 %v531
        %v4307 = vunpack.c.h.b16 %v531
        %v4308 = vunpack.c.l.b16 %v532
        %v4309 = vunpack.c.h.b16 %v532
        %v4310 = vunpack.c.l.b16 %v533
        %v4311 = vunpack.c.h.b16 %v533
        %v4312 = vunpack.c.l.b16 %v534
        %v4313 = vunpack.c.h.b16 %v534
        %v4314 = vunpack.c.l.b16 %v535
        %v4315 = vunpack.c.h.b16 %v535
        %v4316 = vunpack.c.l.b16 %v536
        %v4317 = vunpack.c.h.b16 %v536
        %v4318 = vunpack.c.l.b16 %v537
        %v4319 = vunpack.c.h.b16 %v537
        %v4320 = vunpack.c.l.b16 %v538
        %v4321 = vunpack.c.h.b16 %v538
        %v4322 = vunpack.c.l.b16 %v539
        %v4323 = vunpack.c.h.b16 %v539
        %v4324 = vunpack.c.l.b16 %v540
        %v4325 = vunpack.c.h.b16 %v540
        %v4326 = vunpack.c.l.b16 %v541
        %v4327 = vunpack.c.h.b16 %v541
        %v4328 = vunpack.c.l.b16 %v542
        %v4329 = vunpack.c.h.b16 %v542
        %v4330 = vunpack.c.l.b16 %v543
        %v4331 = vunpack.c.h.b16 %v543
        %v4332 = vunpack.c.l.b16 %v544
        %v4333 = vunpack.c.h.b16 %v544
        %v4334 = vunpack.c.l.b16 %v545
        %v4335 = vunpack.c.h.b16 %v545
        %v4336 = vunpack.c.l.b16 %v546
        %v4337 = vunpack.c.h.b16 %v546
        %v4338 = vunpack.c.l.b16 %v547
        %v4339 = vunpack.c.h.b16 %v547
        %v4340 = vunpack.c.l.b16 %v548
        %v4341 = vunpack.c.h.b16 %v548
        %v4342 = vunpack.c.l.b16 %v549
        %v4343 = vunpack.c.h.b16 %v549
        %v4344 = vunpack.c.l.b16 %v550
        %v4345 = vunpack.c.h.b16 %v550
        %v4346 = vunpack.c.l.b16 %v551
        %v4347 = vunpack.c.h.b16 %v551
        %v4348 = vunpack.c.l.b16 %v552
        %v4349 = vunpack.c.h.b16 %v552
        %v4350 = vunpack.c.l.b16 %v553
        %v4351 = vunpack.c.h.b16 %v553
        %v4352 = vunpack.c.l.b16 %v554
        %v4353 = vunpack.c.h.b16 %v554
        %v4354 = vunpack.c.l.b16 %v555
        %v4355 = vunpack.c.h.b16 %v555
        %v4356 = vunpack.c.l.b16 %v556
        %v4357 = vunpack.c.h.b16 %v556
        %v4358 = vunpack.c.l.b16 %v557
        %v4359 = vunpack.c.h.b16 %v557
        %v4360 = vunpack.c.l.b16 %v558
        %v4361 = vunpack.c.h.b16 %v558
        %v4362 = vunpack.c.l.b16 %v559
        %v4363 = vunpack.c.h.b16 %v559
        %v4364 = vunpack.c.l.b16 %v560
        %v4365 = vunpack.c.h.b16 %v560
        %v4366 = vunpack.c.l.b16 %v561
        %v4367 = vunpack.c.h.b16 %v561
        %v4368 = vunpack.c.l.b16 %v562
        %v4369 = vunpack.c.h.b16 %v562
        %v4370 = vunpack.c.l.b16 %v563
        %v4371 = vunpack.c.h.b16 %v563
        %v4372 = vunpack.c.l.b16 %v564
        %v4373 = vunpack.c.h.b16 %v564
        %v4374 = vunpack.c.l.b16 %v565
        %v4375 = vunpack.c.h.b16 %v565
        %v4376 = vunpack.c.l.b16 %v566
        %v4377 = vunpack.c.h.b16 %v566
        %v4378 = vunpack.c.l.b16 %v567
        %v4379 = vunpack.c.h.b16 %v567
        %v4380 = vunpack.c.l.b16 %v568
        %v4381 = vunpack.c.h.b16 %v568
        %v4382 = vunpack.c.l.b16 %v569
        %v4383 = vunpack.c.h.b16 %v569
        %v4384 = vunpack.c.l.b16 %v570
        %v4385 = vunpack.c.h.b16 %v570
        %v4386 = vunpack.c.l.b16 %v571
        %v4387 = vunpack.c.h.b16 %v571
        %v4388 = vunpack.c.l.b16 %v572
        %v4389 = vunpack.c.h.b16 %v572
        %v4390 = vunpack.c.l.b16 %v573
        %v4391 = vunpack.c.h.b16 %v573
        %v4392 = vunpack.c.l.b16 %v574
        %v4393 = vunpack.c.h.b16 %v574
        %v4394 = vunpack.c.l.b16 %v575
        %v4395 = vunpack.c.h.b16 %v575
        %v4396 = vunpack.c.l.b16 %v576
        %v4397 = vunpack.c.h.b16 %v576
        %v4398 = vunpack.c.l.b16 %v577
        %v4399 = vunpack.c.h.b16 %v577
        %v4400 = vunpack.c.l.b16 %v578
        %v4401 = vunpack.c.h.b16 %v578
        %v4402 = vunpack.c.l.b16 %v579
        %v4403 = vunpack.c.h.b16 %v579
        %v4404 = vunpack.c.l.b16 %v580
        %v4405 = vunpack.c.h.b16 %v580
        %v4406 = vunpack.c.l.b16 %v581
        %v4407 = vunpack.c.h.b16 %v581
        %v4408 = vunpack.c.l.b16 %v582
        %v4409 = vunpack.c.h.b16 %v582
        %v4410 = vunpack.c.l.b16 %v583
        %v4411 = vunpack.c.h.b16 %v583
        %v4412 = vunpack.c.l.b16 %v584
        %v4413 = vunpack.c.h.b16 %v584
        %v4414 = vunpack.c.l.b16 %v585
        %v4415 = vunpack.c.h.b16 %v585
        %v4416 = vunpack.c.l.b16 %v586
        %v4417 = vunpack.c.h.b16 %v586
        %v4418 = vunpack.c.l.b16 %v587
        %v4419 = vunpack.c.h.b16 %v587
        %v4420 = vunpack.c.l.b16 %v588
        %v4421 = vunpack.c.h.b16 %v588
        %v4422 = vunpack.c.l.b16 %v589
        %v4423 = vunpack.c.h.b16 %v589
        %v4424 = vunpack.c.l.b16 %v590
        %v4425 = vunpack.c.h.b16 %v590
        %v4426 = vunpack.c.l.b16 %v591
        %v4427 = vunpack.c.h.b16 %v591
        %v4428 = vunpack.c.l.b16 %v592
        %v4429 = vunpack.c.h.b16 %v592
        %v4430 = vunpack.c.l.b16 %v593
        %v4431 = vunpack.c.h.b16 %v593
        %v4432 = vunpack.c.l.b16 %v594
        %v4433 = vunpack.c.h.b16 %v594
        %v4434 = vunpack.c.l.b16 %v595
        %v4435 = vunpack.c.h.b16 %v595
        %v4436 = vunpack.c.l.b16 %v596
        %v4437 = vunpack.c.h.b16 %v596
        %v4438 = vunpack.c.l.b16 %v597
        %v4439 = vunpack.c.h.b16 %v597
        %v4440 = vunpack.c.l.b16 %v598
        %v4441 = vunpack.c.h.b16 %v598
        %v4442 = vunpack.c.l.b16 %v599
        %v4443 = vunpack.c.h.b16 %v599
        %v4444 = vunpack.c.l.b16 %v600
        %v4445 = vunpack.c.h.b16 %v600
        %v4446 = vunpack.c.l.b16 %v601
        %v4447 = vunpack.c.h.b16 %v601
        %v4448 = vunpack.c.l.b16 %v602
        %v4449 = vunpack.c.h.b16 %v602
        %v4450 = vunpack.c.l.b16 %v603
        %v4451 = vunpack.c.h.b16 %v603
        %v4452 = vunpack.c.l.b16 %v604
        %v4453 = vunpack.c.h.b16 %v604
        %v4454 = vunpack.c.l.b16 %v605
        %v4455 = vunpack.c.h.b16 %v605
        %v4456 = vunpack.c.l.b16 %v606
        %v4457 = vunpack.c.h.b16 %v606
        %v4458 = vunpack.c.l.b16 %v607
        %v4459 = vunpack.c.h.b16 %v607
        %v4460 = vunpack.c.l.b16 %v608
        %v4461 = vunpack.c.h.b16 %v608
        %v4462 = vunpack.c.l.b16 %v609
        %v4463 = vunpack.c.h.b16 %v609
        %v4464 = vunpack.c.l.b16 %v610
        %v4465 = vunpack.c.h.b16 %v610
        %v4466 = vunpack.c.l.b16 %v611
        %v4467 = vunpack.c.h.b16 %v611
        %v4468 = vunpack.c.l.b16 %v612
        %v4469 = vunpack.c.h.b16 %v612
        %v4470 = vunpack.c.l.b16 %v613
        %v4471 = vunpack.c.h.b16 %v613
        %v4472 = vunpack.c.l.b16 %v614
        %v4473 = vunpack.c.h.b16 %v614
        %v4474 = vunpack.c.l.b16 %v615
        %v4475 = vunpack.c.h.b16 %v615
        %v4476 = vunpack.c.l.b16 %v616
        %v4477 = vunpack.c.h.b16 %v616
        %v4478 = vunpack.c.l.b16 %v617
        %v4479 = vunpack.c.h.b16 %v617
        %v4480 = vunpack.c.l.b16 %v618
        %v4481 = vunpack.c.h.b16 %v618
        %v4482 = vunpack.c.l.b16 %v619
        %v4483 = vunpack.c.h.b16 %v619
        %v4484 = vunpack.c.l.b16 %v620
        %v4485 = vunpack.c.h.b16 %v620
        %v4486 = vunpack.c.l.b16 %v621
        %v4487 = vunpack.c.h.b16 %v621
        %v4488 = vunpack.c.l.b16 %v622
        %v4489 = vunpack.c.h.b16 %v622
        %v4490 = vunpack.c.l.b16 %v623
        %v4491 = vunpack.c.h.b16 %v623
        %v4492 = vunpack.c.l.b16 %v624
        %v4493 = vunpack.c.h.b16 %v624
        %v4494 = vunpack.c.l.b16 %v625
        %v4495 = vunpack.c.h.b16 %v625
        %v4496 = vunpack.c.l.b16 %v626
        %v4497 = vunpack.c.h.b16 %v626
        %v4498 = vunpack.c.l.b16 %v627
        %v4499 = vunpack.c.h.b16 %v627
        %v4500 = vunpack.c.l.b16 %v628
        %v4501 = vunpack.c.h.b16 %v628
        %v4502 = vunpack.c.l.b16 %v629
        %v4503 = vunpack.c.h.b16 %v629
        %v4504 = vunpack.c.l.b16 %v630
        %v4505 = vunpack.c.h.b16 %v630
        %v4506 = vunpack.c.l.b16 %v631
        %v4507 = vunpack.c.h.b16 %v631
        %v4508 = vunpack.c.l.b16 %v632
        %v4509 = vunpack.c.h.b16 %v632
        %v4510 = vunpack.c.l.b16 %v633
        %v4511 = vunpack.c.h.b16 %v633
        %v4512 = vunpack.c.l.b16 %v634
        %v4513 = vunpack.c.h.b16 %v634
        %v4514 = vunpack.c.l.b16 %v635
        %v4515 = vunpack.c.h.b16 %v635
        %v4516 = vunpack.c.l.b16 %v636
        %v4517 = vunpack.c.h.b16 %v636
        %v4518 = vunpack.c.l.b16 %v637
        %v4519 = vunpack.c.h.b16 %v637
        %v4520 = vunpack.c.l.b16 %v638
        %v4521 = vunpack.c.h.b16 %v638
        %v4522 = vunpack.c.l.b16 %v639
        %v4523 = vunpack.c.h.b16 %v639
        %v4524 = vunpack.c.l.b16 %v640
        %v4525 = vunpack.c.h.b16 %v640
        %v4526 = vunpack.c.l.b16 %v641
        %v4527 = vunpack.c.h.b16 %v641
        %v4528 = vunpack.c.l.b16 %v642
        %v4529 = vunpack.c.h.b16 %v642
        %v4530 = vunpack.c.l.b16 %v643
        %v4531 = vunpack.c.h.b16 %v643
        %v4532 = vunpack.c.l.b16 %v644
        %v4533 = vunpack.c.h.b16 %v644
        %v4534 = vunpack.c.l.b16 %v645
        %v4535 = vunpack.c.h.b16 %v645
        %v4536 = vunpack.c.l.b16 %v646
        %v4537 = vunpack.c.h.b16 %v646
        %v4538 = vunpack.c.l.b16 %v647
        %v4539 = vunpack.c.h.b16 %v647
        %v4540 = vunpack.c.l.b16 %v648
        %v4541 = vunpack.c.h.b16 %v648
        %v4542 = vunpack.c.l.b16 %v649
        %v4543 = vunpack.c.h.b16 %v649
        %v4544 = vunpack.c.l.b16 %v650
        %v4545 = vunpack.c.h.b16 %v650
        %v4546 = vunpack.c.l.b16 %v651
        %v4547 = vunpack.c.h.b16 %v651
        %v4548 = vunpack.c.l.b16 %v652
        %v4549 = vunpack.c.h.b16 %v652
        %v4550 = vunpack.c.l.b16 %v653
        %v4551 = vunpack.c.h.b16 %v653
        %v4552 = vunpack.c.l.b16 %v654
        %v4553 = vunpack.c.h.b16 %v654
        %v4554 = vunpack.c.l.b16 %v655
        %v4555 = vunpack.c.h.b16 %v655
        %v4556 = vunpack.c.l.b16 %v656
        %v4557 = vunpack.c.h.b16 %v656
        %v4558 = vunpack.c.l.b16 %v657
        %v4559 = vunpack.c.h.b16 %v657
        %v4560 = vunpack.c.l.b16 %v658
        %v4561 = vunpack.c.h.b16 %v658
        %v4562 = vunpack.c.l.b16 %v659
        %v4563 = vunpack.c.h.b16 %v659
        %v4564 = vunpack.c.l.b16 %v660
        %v4565 = vunpack.c.h.b16 %v660
        %v4566 = vunpack.c.l.b16 %v661
        %v4567 = vunpack.c.h.b16 %v661
        %v4568 = vunpack.c.l.b16 %v662
        %v4569 = vunpack.c.h.b16 %v662
        %v4570 = vunpack.c.l.b16 %v663
        %v4571 = vunpack.c.h.b16 %v663
        %v4572 = vunpack.c.l.b16 %v664
        %v4573 = vunpack.c.h.b16 %v664
        %v4574 = vunpack.c.l.b16 %v665
        %v4575 = vunpack.c.h.b16 %v665
        %v4576 = vunpack.c.l.b16 %v666
        %v4577 = vunpack.c.h.b16 %v666
        %v4578 = vunpack.c.l.b16 %v667
        %v4579 = vunpack.c.h.b16 %v667
        %v4580 = vunpack.c.l.b16 %v668
        %v4581 = vunpack.c.h.b16 %v668
        %v4582 = vunpack.c.l.b16 %v669
        %v4583 = vunpack.c.h.b16 %v669
        %v4584 = vunpack.c.l.b16 %v670
        %v4585 = vunpack.c.h.b16 %v670
        %v4586 = vunpack.c.l.b16 %v671
        %v4587 = vunpack.c.h.b16 %v671
        %v4588 = vunpack.c.l.b16 %v672
        %v4589 = vunpack.c.h.b16 %v672
        %v4590 = vunpack.c.l.b16 %v673
        %v4591 = vunpack.c.h.b16 %v673
        %v4592 = vunpack.c.l.b16 %v674
        %v4593 = vunpack.c.h.b16 %v674
        %v4594 = vunpack.c.l.b16 %v675
        %v4595 = vunpack.c.h.b16 %v675
        %v4596 = vunpack.c.l.b16 %v676
        %v4597 = vunpack.c.h.b16 %v676
        %v4598 = vunpack.c.l.b16 %v677
        %v4599 = vunpack.c.h.b16 %v677
        %v4600 = vunpack.c.l.b16 %v678
        %v4601 = vunpack.c.h.b16 %v678
        %v4602 = vunpack.c.l.b16 %v679
        %v4603 = vunpack.c.h.b16 %v679
        %v4604 = vunpack.c.l.b16 %v680
        %v4605 = vunpack.c.h.b16 %v680
        %v4606 = vunpack.c.l.b16 %v681
        %v4607 = vunpack.c.h.b16 %v681
        %v4608 = vunpack.c.l.b16 %v682
        %v4609 = vunpack.c.h.b16 %v682
        %v4610 = vunpack.c.l.b16 %v683
        %v4611 = vunpack.c.h.b16 %v683
        %v4612 = vunpack.c.l.b16 %v684
        %v4613 = vunpack.c.h.b16 %v684
        %v4614 = vunpack.c.l.b16 %v685
        %v4615 = vunpack.c.h.b16 %v685
        %v4616 = vunpack.c.l.b16 %v686
        %v4617 = vunpack.c.h.b16 %v686
        %v4618 = vunpack.c.l.b16 %v687
        %v4619 = vunpack.c.h.b16 %v687
        %v4620 = vunpack.c.l.b16 %v688
        %v4621 = vunpack.c.h.b16 %v688
        %v4622 = vunpack.c.l.b16 %v689
        %v4623 = vunpack.c.h.b16 %v689
        %v4624 = vunpack.c.l.b16 %v690
        %v4625 = vunpack.c.h.b16 %v690
        %v4626 = vunpack.c.l.b16 %v691
        %v4627 = vunpack.c.h.b16 %v691
        %v4628 = vunpack.c.l.b16 %v692
        %v4629 = vunpack.c.h.b16 %v692
        %v4630 = vunpack.c.l.b16 %v693
        %v4631 = vunpack.c.h.b16 %v693
        %v4632 = vunpack.c.l.b16 %v694
        %v4633 = vunpack.c.h.b16 %v694
        %v4634 = vunpack.c.l.b16 %v695
        %v4635 = vunpack.c.h.b16 %v695
        %v4636 = vunpack.c.l.b16 %v696
        %v4637 = vunpack.c.h.b16 %v696
        %v4638 = vunpack.c.l.b16 %v697
        %v4639 = vunpack.c.h.b16 %v697
        %v4640 = vunpack.c.l.b16 %v698
        %v4641 = vunpack.c.h.b16 %v698
        %v4642 = vunpack.c.l.b16 %v699
        %v4643 = vunpack.c.h.b16 %v699
        %v4644 = vunpack.c.l.b16 %v700
        %v4645 = vunpack.c.h.b16 %v700
        %v4646 = vunpack.c.l.b16 %v701
        %v4647 = vunpack.c.h.b16 %v701
        %v4648 = vunpack.c.l.b16 %v702
        %v4649 = vunpack.c.h.b16 %v702
        %v4650 = vunpack.c.l.b16 %v703
        %v4651 = vunpack.c.h.b16 %v703
        %v4652 = vunpack.c.l.b16 %v704
        %v4653 = vunpack.c.h.b16 %v704
        %v4654 = vunpack.c.l.b16 %v705
        %v4655 = vunpack.c.h.b16 %v705
        %v4656 = vunpack.c.l.b16 %v706
        %v4657 = vunpack.c.h.b16 %v706
        %v4658 = vunpack.c.l.b16 %v707
        %v4659 = vunpack.c.h.b16 %v707
        %v4660 = vunpack.c.l.b16 %v708
        %v4661 = vunpack.c.h.b16 %v708
        %v4662 = vunpack.c.l.b16 %v709
        %v4663 = vunpack.c.h.b16 %v709
        %v4664 = vunpack.c.l.b16 %v710
        %v4665 = vunpack.c.h.b16 %v710
        %v4666 = vunpack.c.l.b16 %v711
        %v4667 = vunpack.c.h.b16 %v711
        %v4668 = vunpack.c.l.b16 %v712
        %v4669 = vunpack.c.h.b16 %v712
        %v4670 = vunpack.c.l.b16 %v713
        %v4671 = vunpack.c.h.b16 %v713
        %v4672 = vunpack.c.l.b16 %v714
        %v4673 = vunpack.c.h.b16 %v714
        %v4674 = vunpack.c.l.b16 %v715
        %v4675 = vunpack.c.h.b16 %v715
        %v4676 = vunpack.c.l.b16 %v716
        %v4677 = vunpack.c.h.b16 %v716
        %v4678 = vunpack.c.l.b16 %v717
        %v4679 = vunpack.c.h.b16 %v717
        %v4680 = vunpack.c.l.b16 %v718
        %v4681 = vunpack.c.h.b16 %v718
        %v4682 = vunpack.c.l.b16 %v719
        %v4683 = vunpack.c.h.b16 %v719
        %v4684 = vunpack.c.l.b16 %v720
        %v4685 = vunpack.c.h.b16 %v720
        %v4686 = vunpack.c.l.b16 %v721
        %v4687 = vunpack.c.h.b16 %v721
        %v4688 = vunpack.c.l.b16 %v722
        %v4689 = vunpack.c.h.b16 %v722
        %v4690 = vunpack.c.l.b16 %v723
        %v4691 = vunpack.c.h.b16 %v723
        %v4692 = vunpack.c.l.b16 %v724
        %v4693 = vunpack.c.h.b16 %v724
        %v4694 = vunpack.c.l.b16 %v725
        %v4695 = vunpack.c.h.b16 %v725
        %v4696 = vunpack.c.l.b16 %v726
        %v4697 = vunpack.c.h.b16 %v726
        %v4698 = vunpack.c.l.b16 %v727
        %v4699 = vunpack.c.h.b16 %v727
        %v4700 = vunpack.c.l.b16 %v728
        %v4701 = vunpack.c.h.b16 %v728
        %v4702 = vunpack.c.l.b16 %v729
        %v4703 = vunpack.c.h.b16 %v729
        %v4704 = vunpack.c.l.b16 %v730
        %v4705 = vunpack.c.h.b16 %v730
        %v4706 = vunpack.c.l.b16 %v731
        %v4707 = vunpack.c.h.b16 %v731
        %v4708 = vunpack.c.l.b16 %v732
        %v4709 = vunpack.c.h.b16 %v732
        %v4710 = vunpack.c.l.b16 %v733
        %v4711 = vunpack.c.h.b16 %v733
        %v4712 = vunpack.c.l.b16 %v734
        %v4713 = vunpack.c.h.b16 %v734
        %v4714 = vunpack.c.l.b16 %v735
        %v4715 = vunpack.c.h.b16 %v735
        %v4716 = vunpack.c.l.b16 %v736
        %v4717 = vunpack.c.h.b16 %v736
        %v4718 = vunpack.c.l.b16 %v737
        %v4719 = vunpack.c.h.b16 %v737
        %v4720 = vunpack.c.l.b16 %v738
        %v4721 = vunpack.c.h.b16 %v738
        %v4722 = vunpack.c.l.b16 %v739
        %v4723 = vunpack.c.h.b16 %v739
        %v4724 = vunpack.c.l.b16 %v740
        %v4725 = vunpack.c.h.b16 %v740
        %v4726 = vunpack.c.l.b16 %v741
        %v4727 = vunpack.c.h.b16 %v741
        %v4728 = vunpack.c.l.b16 %v742
        %v4729 = vunpack.c.h.b16 %v742
        %v4730 = vunpack.c.l.b16 %v743
        %v4731 = vunpack.c.h.b16 %v743
        %v4732 = vunpack.c.l.b16 %v744
        %v4733 = vunpack.c.h.b16 %v744
        %v4734 = vunpack.c.l.b16 %v745
        %v4735 = vunpack.c.h.b16 %v745
        %v4736 = vunpack.c.l.b16 %v746
        %v4737 = vunpack.c.h.b16 %v746
        %v4738 = vunpack.c.l.b16 %v747
        %v4739 = vunpack.c.h.b16 %v747
        %v4740 = vunpack.c.l.b16 %v748
        %v4741 = vunpack.c.h.b16 %v748
        %v4742 = vunpack.c.l.b16 %v749
        %v4743 = vunpack.c.h.b16 %v749
        %v4744 = vunpack.c.l.b16 %v750
        %v4745 = vunpack.c.h.b16 %v750
        %v4746 = vunpack.c.l.b16 %v751
        %v4747 = vunpack.c.h.b16 %v751
        %v4748 = vunpack.c.l.b16 %v752
        %v4749 = vunpack.c.h.b16 %v752
        %v4750 = vunpack.c.l.b16 %v753
        %v4751 = vunpack.c.h.b16 %v753
        %v4752 = vunpack.c.l.b16 %v754
        %v4753 = vunpack.c.h.b16 %v754
        %v4754 = vunpack.c.l.b16 %v755
        %v4755 = vunpack.c.h.b16 %v755
        %v4756 = vunpack.c.l.b16 %v756
        %v4757 = vunpack.c.h.b16 %v756
        %v4758 = vunpack.c.l.b16 %v757
        %v4759 = vunpack.c.h.b16 %v757
        %v4760 = vunpack.c.l.b16 %v758
        %v4761 = vunpack.c.h.b16 %v758
        %v4762 = vunpack.c.l.b16 %v759
        %v4763 = vunpack.c.h.b16 %v759
        %v4764 = vunpack.c.l.b16 %v760
        %v4765 = vunpack.c.h.b16 %v760
        %v4766 = vunpack.c.l.b16 %v761
        %v4767 = vunpack.c.h.b16 %v761
        %v4768 = vunpack.c.l.b16 %v762
        %v4769 = vunpack.c.h.b16 %v762
        %v4770 = vunpack.c.l.b16 %v763
        %v4771 = vunpack.c.h.b16 %v763
        %v4772 = vunpack.c.l.b16 %v764
        %v4773 = vunpack.c.h.b16 %v764
        %v4774 = vunpack.c.l.b16 %v765
        %v4775 = vunpack.c.h.b16 %v765
        %v4776 = vunpack.c.l.b16 %v766
        %v4777 = vunpack.c.h.b16 %v766
        %v4778 = vunpack.c.l.b16 %v767
        %v4779 = vunpack.c.h.b16 %v767
        %v4780 = vunpack.c.l.b16 %v768
        %v4781 = vunpack.c.h.b16 %v768
        %v4782 = vunpack.c.l.b16 %v769
        %v4783 = vunpack.c.h.b16 %v769
        %v4784 = vunpack.c.l.b16 %v770
        %v4785 = vunpack.c.h.b16 %v770
        %v4786 = vunpack.c.l.b16 %v771
        %v4787 = vunpack.c.h.b16 %v771
        %v4788 = vunpack.c.l.b16 %v772
        %v4789 = vunpack.c.h.b16 %v772
        %v4790 = vunpack.c.l.b16 %v773
        %v4791 = vunpack.c.h.b16 %v773
        %v4792 = vunpack.c.l.b16 %v774
        %v4793 = vunpack.c.h.b16 %v774
        %v4794 = vunpack.c.l.b16 %v775
        %v4795 = vunpack.c.h.b16 %v775
        %v4796 = vunpack.c.l.b16 %v776
        %v4797 = vunpack.c.h.b16 %v776
        %v4798 = vunpack.c.l.b16 %v777
        %v4799 = vunpack.c.h.b16 %v777
        %v4800 = vunpack.c.l.b16 %v778
        %v4801 = vunpack.c.h.b16 %v778
        %v4802 = vunpack.c.l.b16 %v779
        %v4803 = vunpack.c.h.b16 %v779
        %v4804 = vunpack.c.l.b16 %v780
        %v4805 = vunpack.c.h.b16 %v780
        %v4806 = vunpack.c.l.b16 %v781
        %v4807 = vunpack.c.h.b16 %v781
        %v4808 = vunpack.c.l.b16 %v782
        %v4809 = vunpack.c.h.b16 %v782
        %v4810 = vunpack.c.l.b16 %v783
        %v4811 = vunpack.c.h.b16 %v783
        %v4812 = vunpack.c.l.b16 %v784
        %v4813 = vunpack.c.h.b16 %v784
        %v4814 = vunpack.c.l.b16 %v785
        %v4815 = vunpack.c.h.b16 %v785
        %v4816 = vunpack.c.l.b16 %v786
        %v4817 = vunpack.c.h.b16 %v786
        %v4818 = vunpack.c.l.b16 %v787
        %v4819 = vunpack.c.h.b16 %v787
        %v4820 = vunpack.c.l.b16 %v788
        %v4821 = vunpack.c.h.b16 %v788
        %v4822 = vunpack.c.l.b16 %v789
        %v4823 = vunpack.c.h.b16 %v789
        %v4824 = vunpack.c.l.b16 %v790
        %v4825 = vunpack.c.h.b16 %v790
        %v4826 = vunpack.c.l.b16 %v791
        %v4827 = vunpack.c.h.b16 %v791
        %v4828 = vunpack.c.l.b16 %v792
        %v4829 = vunpack.c.h.b16 %v792
        %v4830 = vunpack.c.l.b16 %v793
        %v4831 = vunpack.c.h.b16 %v793
        %v4832 = vunpack.c.l.b16 %v794
        %v4833 = vunpack.c.h.b16 %v794
        %v4834 = vunpack.c.l.b16 %v795
        %v4835 = vunpack.c.h.b16 %v795
        %v4836 = vunpack.c.l.b16 %v796
        %v4837 = vunpack.c.h.b16 %v796
        %v4838 = vunpack.c.l.b16 %v797
        %v4839 = vunpack.c.h.b16 %v797
        %v4840 = vunpack.c.l.b16 %v798
        %v4841 = vunpack.c.h.b16 %v798
        %v4842 = vunpack.c.l.b16 %v799
        %v4843 = vunpack.c.h.b16 %v799
        %v4844 = vunpack.c.l.b16 %v800
        %v4845 = vunpack.c.h.b16 %v800
        %v4846 = vunpack.c.l.b16 %v801
        %v4847 = vunpack.c.h.b16 %v801
        %v4848 = vunpack.c.l.b16 %v802
        %v4849 = vunpack.c.h.b16 %v802
        %v4850 = vunpack.c.l.b16 %v803
        %v4851 = vunpack.c.h.b16 %v803
        %v4852 = vunpack.c.l.b16 %v804
        %v4853 = vunpack.c.h.b16 %v804
        %v4854 = vunpack.c.l.b16 %v805
        %v4855 = vunpack.c.h.b16 %v805
        %v4856 = vunpack.c.l.b16 %v806
        %v4857 = vunpack.c.h.b16 %v806
        %v4858 = vunpack.c.l.b16 %v807
        %v4859 = vunpack.c.h.b16 %v807
        %v4860 = vunpack.c.l.b16 %v808
        %v4861 = vunpack.c.h.b16 %v808
        %v4862 = vunpack.c.l.b16 %v809
        %v4863 = vunpack.c.h.b16 %v809
        %v4864 = vunpack.c.l.b16 %v810
        %v4865 = vunpack.c.h.b16 %v810
        %v4866 = vunpack.c.l.b16 %v811
        %v4867 = vunpack.c.h.b16 %v811
        %v4868 = vunpack.c.l.b16 %v812
        %v4869 = vunpack.c.h.b16 %v812
        %v4870 = vunpack.c.l.b16 %v813
        %v4871 = vunpack.c.h.b16 %v813
        %v4872 = vunpack.c.l.b16 %v814
        %v4873 = vunpack.c.h.b16 %v814
        %v4874 = vunpack.c.l.b16 %v815
        %v4875 = vunpack.c.h.b16 %v815
        %v4876 = vunpack.c.l.b16 %v816
        %v4877 = vunpack.c.h.b16 %v816
        %v4878 = vunpack.c.l.b16 %v817
        %v4879 = vunpack.c.h.b16 %v817
        %v4880 = vunpack.c.l.b16 %v818
        %v4881 = vunpack.c.h.b16 %v818
        %v4882 = vunpack.c.l.b16 %v819
        %v4883 = vunpack.c.h.b16 %v819
        %v4884 = vunpack.c.l.b16 %v820
        %v4885 = vunpack.c.h.b16 %v820
        %v4886 = vunpack.c.l.b16 %v821
        %v4887 = vunpack.c.h.b16 %v821
        %v4888 = vunpack.c.l.b16 %v822
        %v4889 = vunpack.c.h.b16 %v822
        %v4890 = vunpack.c.l.b16 %v823
        %v4891 = vunpack.c.h.b16 %v823
        %v4892 = vunpack.c.l.b16 %v824
        %v4893 = vunpack.c.h.b16 %v824
        %v4894 = vunpack.c.l.b16 %v825
        %v4895 = vunpack.c.h.b16 %v825
        %v4896 = vunpack.c.l.b16 %v826
        %v4897 = vunpack.c.h.b16 %v826
        %v4898 = vunpack.c.l.b16 %v827
        %v4899 = vunpack.c.h.b16 %v827
        %v4900 = vunpack.c.l.b16 %v828
        %v4901 = vunpack.c.h.b16 %v828
        %v4902 = vunpack.c.l.b16 %v829
        %v4903 = vunpack.c.h.b16 %v829
        %v4904 = vunpack.c.l.b16 %v830
        %v4905 = vunpack.c.h.b16 %v830
        %v4906 = vunpack.c.l.b16 %v831
        %v4907 = vunpack.c.h.b16 %v831
        %v4908 = vunpack.c.l.b16 %v832
        %v4909 = vunpack.c.h.b16 %v832
        %v4910 = vunpack.c.l.b16 %v833
        %v4911 = vunpack.c.h.b16 %v833
        %v4912 = vunpack.c.l.b16 %v834
        %v4913 = vunpack.c.h.b16 %v834
        %v4914 = vunpack.c.l.b16 %v835
        %v4915 = vunpack.c.h.b16 %v835
        %v4916 = vunpack.c.l.b16 %v836
        %v4917 = vunpack.c.h.b16 %v836
        %v4918 = vunpack.c.l.b16 %v837
        %v4919 = vunpack.c.h.b16 %v837
        %v4920 = vunpack.c.l.b16 %v838
        %v4921 = vunpack.c.h.b16 %v838
        %v4922 = vunpack.c.l.b16 %v839
        %v4923 = vunpack.c.h.b16 %v839
        %v4924 = vunpack.c.l.b16 %v840
        %v4925 = vunpack.c.h.b16 %v840
        %v4926 = vunpack.c.l.b16 %v841
        %v4927 = vunpack.c.h.b16 %v841
        %v4928 = vunpack.c.l.b16 %v842
        %v4929 = vunpack.c.h.b16 %v842
        %v4930 = vunpack.c.l.b16 %v843
        %v4931 = vunpack.c.h.b16 %v843
        %v4932 = vunpack.c.l.b16 %v844
        %v4933 = vunpack.c.h.b16 %v844
        %v4934 = vunpack.c.l.b16 %v845
        %v4935 = vunpack.c.h.b16 %v845
        %v4936 = vunpack.c.l.b16 %v846
        %v4937 = vunpack.c.h.b16 %v846
        %v4938 = vunpack.c.l.b16 %v847
        %v4939 = vunpack.c.h.b16 %v847
        %v4940 = vunpack.c.l.b16 %v848
        %v4941 = vunpack.c.h.b16 %v848
        %v4942 = vunpack.c.l.b16 %v849
        %v4943 = vunpack.c.h.b16 %v849
        %v4944 = vunpack.c.l.b16 %v850
        %v4945 = vunpack.c.h.b16 %v850
        %v4946 = vunpack.c.l.b16 %v851
        %v4947 = vunpack.c.h.b16 %v851
        %v4948 = vunpack.c.l.b16 %v852
        %v4949 = vunpack.c.h.b16 %v852
        %v4950 = vunpack.c.l.b16 %v853
        %v4951 = vunpack.c.h.b16 %v853
        %v4952 = vunpack.c.l.b16 %v854
        %v4953 = vunpack.c.h.b16 %v854
        %v4954 = vunpack.c.l.b16 %v855
        %v4955 = vunpack.c.h.b16 %v855
        %v4956 = vunpack.c.l.b16 %v856
        %v4957 = vunpack.c.h.b16 %v856
        %v4958 = vunpack.c.l.b16 %v857
        %v4959 = vunpack.c.h.b16 %v857
        %v4960 = vunpack.c.l.b16 %v858
        %v4961 = vunpack.c.h.b16 %v858
        %v4962 = vunpack.c.l.b16 %v859
        %v4963 = vunpack.c.h.b16 %v859
        %v4964 = vunpack.c.l.b16 %v860
        %v4965 = vunpack.c.h.b16 %v860
        %v4966 = vunpack.c.l.b16 %v861
        %v4967 = vunpack.c.h.b16 %v861
        %v4968 = vunpack.c.l.b16 %v862
        %v4969 = vunpack.c.h.b16 %v862
        %v4970 = vunpack.c.l.b16 %v863
        %v4971 = vunpack.c.h.b16 %v863
        %v4972 = vunpack.c.l.b16 %v864
        %v4973 = vunpack.c.h.b16 %v864
        %v4974 = vunpack.c.l.b16 %v865
        %v4975 = vunpack.c.h.b16 %v865
        %v4976 = vunpack.c.l.b16 %v866
        %v4977 = vunpack.c.h.b16 %v866
        %v4978 = vunpack.c.l.b16 %v867
        %v4979 = vunpack.c.h.b16 %v867
        %v4980 = vunpack.c.l.b16 %v868
        %v4981 = vunpack.c.h.b16 %v868
        %v4982 = vunpack.c.l.b16 %v869
        %v4983 = vunpack.c.h.b16 %v869
        %v4984 = vunpack.c.l.b16 %v870
        %v4985 = vunpack.c.h.b16 %v870
        %v4986 = vunpack.c.l.b16 %v871
        %v4987 = vunpack.c.h.b16 %v871
        %v4988 = vunpack.c.l.b16 %v872
        %v4989 = vunpack.c.h.b16 %v872
        %v4990 = vunpack.c.l.b16 %v873
        %v4991 = vunpack.c.h.b16 %v873
        %v4992 = vunpack.c.l.b16 %v874
        %v4993 = vunpack.c.h.b16 %v874
        %v4994 = vunpack.c.l.b16 %v875
        %v4995 = vunpack.c.h.b16 %v875
        %v4996 = vunpack.c.l.b16 %v876
        %v4997 = vunpack.c.h.b16 %v876
        %v4998 = vunpack.c.l.b16 %v877
        %v4999 = vunpack.c.h.b16 %v877
        %v5000 = vunpack.c.l.b16 %v878
        %v5001 = vunpack.c.h.b16 %v878
        %v5002 = vunpack.c.l.b16 %v879
        %v5003 = vunpack.c.h.b16 %v879
        %v5004 = vunpack.c.l.b16 %v880
        %v5005 = vunpack.c.h.b16 %v880
        %v5006 = vunpack.c.l.b16 %v881
        %v5007 = vunpack.c.h.b16 %v881
        %v5008 = vunpack.c.l.b16 %v882
        %v5009 = vunpack.c.h.b16 %v882
        %v5010 = vunpack.c.l.b16 %v883
        %v5011 = vunpack.c.h.b16 %v883
        %v5012 = vunpack.c.l.b16 %v884
        %v5013 = vunpack.c.h.b16 %v884
        %v5014 = vunpack.c.l.b16 %v885
        %v5015 = vunpack.c.h.b16 %v885
        %v5016 = vunpack.c.l.b16 %v886
        %v5017 = vunpack.c.h.b16 %v886
        %v5018 = vunpack.c.l.b16 %v887
        %v5019 = vunpack.c.h.b16 %v887
        %v5020 = vunpack.c.l.b16 %v888
        %v5021 = vunpack.c.h.b16 %v888
        %v5022 = vunpack.c.l.b16 %v889
        %v5023 = vunpack.c.h.b16 %v889
        %v5024 = vunpack.c.l.b16 %v890
        %v5025 = vunpack.c.h.b16 %v890
        %v5026 = vunpack.c.l.b16 %v891
        %v5027 = vunpack.c.h.b16 %v891
        %v5028 = vunpack.c.l.b16 %v892
        %v5029 = vunpack.c.h.b16 %v892
        %v5030 = vunpack.c.l.b16 %v893
        %v5031 = vunpack.c.h.b16 %v893
        %v5032 = vunpack.c.l.b16 %v894
        %v5033 = vunpack.c.h.b16 %v894
        %v5034 = vunpack.c.l.b16 %v895
        %v5035 = vunpack.c.h.b16 %v895
        %v5036 = vunpack.c.l.b16 %v896
        %v5037 = vunpack.c.h.b16 %v896
        %v5038 = vunpack.c.l.b16 %v897
        %v5039 = vunpack.c.h.b16 %v897
        %v5040 = vunpack.c.l.b16 %v898
        %v5041 = vunpack.c.h.b16 %v898
        %v5042 = vunpack.c.l.b16 %v899
        %v5043 = vunpack.c.h.b16 %v899
        %v5044 = vunpack.c.l.b16 %v900
        %v5045 = vunpack.c.h.b16 %v900
        %v5046 = vunpack.c.l.b16 %v901
        %v5047 = vunpack.c.h.b16 %v901
        %v5048 = vunpack.c.l.b16 %v902
        %v5049 = vunpack.c.h.b16 %v902
        %v5050 = vunpack.c.l.b16 %v903
        %v5051 = vunpack.c.h.b16 %v903
        %v5052 = vunpack.c.l.b16 %v904
        %v5053 = vunpack.c.h.b16 %v904
        %v5054 = vunpack.c.l.b16 %v905
        %v5055 = vunpack.c.h.b16 %v905
        %v5056 = vunpack.c.l.b16 %v906
        %v5057 = vunpack.c.h.b16 %v906
        %v5058 = vunpack.c.l.b16 %v907
        %v5059 = vunpack.c.h.b16 %v907
        %v5060 = vunpack.c.l.b16 %v908
        %v5061 = vunpack.c.h.b16 %v908
        %v5062 = vunpack.c.l.b16 %v909
        %v5063 = vunpack.c.h.b16 %v909
        %v5064 = vunpack.c.l.b16 %v910
        %v5065 = vunpack.c.h.b16 %v910
        %v5066 = vunpack.c.l.b16 %v911
        %v5067 = vunpack.c.h.b16 %v911
        %v5068 = vunpack.c.l.b16 %v912
        %v5069 = vunpack.c.h.b16 %v912
        %v5070 = vunpack.c.l.b16 %v913
        %v5071 = vunpack.c.h.b16 %v913
        %v5072 = vunpack.c.l.b16 %v914
        %v5073 = vunpack.c.h.b16 %v914
        %v5074 = vunpack.c.l.b16 %v915
        %v5075 = vunpack.c.h.b16 %v915
        %v5076 = vunpack.c.l.b16 %v916
        %v5077 = vunpack.c.h.b16 %v916
        %v5078 = vunpack.c.l.b16 %v917
        %v5079 = vunpack.c.h.b16 %v917
        %v5080 = vunpack.c.l.b16 %v918
        %v5081 = vunpack.c.h.b16 %v918
        %v5082 = vunpack.c.l.b16 %v919
        %v5083 = vunpack.c.h.b16 %v919
        %v5084 = vunpack.c.l.b16 %v920
        %v5085 = vunpack.c.h.b16 %v920
        %v5086 = vunpack.c.l.b16 %v921
        %v5087 = vunpack.c.h.b16 %v921
        %v5088 = vunpack.c.l.b16 %v922
        %v5089 = vunpack.c.h.b16 %v922
        %v5090 = vunpack.c.l.b16 %v923
        %v5091 = vunpack.c.h.b16 %v923
        %v5092 = vunpack.c.l.b16 %v924
        %v5093 = vunpack.c.h.b16 %v924
        %v5094 = vunpack.c.l.b16 %v925
        %v5095 = vunpack.c.h.b16 %v925
        %v5096 = vunpack.c.l.b16 %v926
        %v5097 = vunpack.c.h.b16 %v926
        %v5098 = vunpack.c.l.b16 %v927
        %v5099 = vunpack.c.h.b16 %v927
        %v5100 = vunpack.c.l.b16 %v928
        %v5101 = vunpack.c.h.b16 %v928
        %v5102 = vunpack.c.l.b16 %v929
        %v5103 = vunpack.c.h.b16 %v929
        %v5104 = vunpack.c.l.b16 %v930
        %v5105 = vunpack.c.h.b16 %v930
        %v5106 = vunpack.c.l.b16 %v931
        %v5107 = vunpack.c.h.b16 %v931
        %v5108 = vunpack.c.l.b16 %v932
        %v5109 = vunpack.c.h.b16 %v932
        %v5110 = vunpack.c.l.b16 %v933
        %v5111 = vunpack.c.h.b16 %v933
        %v5112 = vunpack.c.l.b16 %v934
        %v5113 = vunpack.c.h.b16 %v934
        %v5114 = vunpack.c.l.b16 %v935
        %v5115 = vunpack.c.h.b16 %v935
        %v5116 = vunpack.c.l.b16 %v936
        %v5117 = vunpack.c.h.b16 %v936
        %v5118 = vunpack.c.l.b16 %v937
        %v5119 = vunpack.c.h.b16 %v937
        %v5120 = vunpack.c.l.b16 %v938
        %v5121 = vunpack.c.h.b16 %v938
        %v5122 = vunpack.c.l.b16 %v939
        %v5123 = vunpack.c.h.b16 %v939
        %v5124 = vunpack.c.l.b16 %v940
        %v5125 = vunpack.c.h.b16 %v940
        %v5126 = vunpack.c.l.b16 %v941
        %v5127 = vunpack.c.h.b16 %v941
        %v5128 = vunpack.c.l.b16 %v942
        %v5129 = vunpack.c.h.b16 %v942
        %v5130 = vunpack.c.l.b16 %v943
        %v5131 = vunpack.c.h.b16 %v943
        %v5132 = vunpack.c.l.b16 %v944
        %v5133 = vunpack.c.h.b16 %v944
        %v5134 = vunpack.c.l.b16 %v945
        %v5135 = vunpack.c.h.b16 %v945
        %v5136 = vunpack.c.l.b16 %v946
        %v5137 = vunpack.c.h.b16 %v946
        %v5138 = vunpack.c.l.b16 %v947
        %v5139 = vunpack.c.h.b16 %v947
        %v5140 = vunpack.c.l.b16 %v948
        %v5141 = vunpack.c.h.b16 %v948
        %v5142 = vunpack.c.l.b16 %v949
        %v5143 = vunpack.c.h.b16 %v949
        %v5144 = vunpack.c.l.b16 %v950
        %v5145 = vunpack.c.h.b16 %v950
        %v5146 = vunpack.c.l.b16 %v951
        %v5147 = vunpack.c.h.b16 %v951
        %v5148 = vunpack.c.l.b16 %v952
        %v5149 = vunpack.c.h.b16 %v952
        %v5150 = vunpack.c.l.b16 %v953
        %v5151 = vunpack.c.h.b16 %v953
        %v5152 = vunpack.c.l.b16 %v954
        %v5153 = vunpack.c.h.b16 %v954
        %v5154 = vunpack.c.l.b16 %v955
        %v5155 = vunpack.c.h.b16 %v955
        %v5156 = vunpack.c.l.b16 %v956
        %v5157 = vunpack.c.h.b16 %v956
        %v5158 = vunpack.c.l.b16 %v957
        %v5159 = vunpack.c.h.b16 %v957
        %v5160 = vunpack.c.l.b16 %v958
        %v5161 = vunpack.c.h.b16 %v958
        %v5162 = vunpack.c.l.b16 %v959
        %v5163 = vunpack.c.h.b16 %v959
        %v5164 = vunpack.c.l.b16 %v960
        %v5165 = vunpack.c.h.b16 %v960
        %v5166 = vunpack.c.l.b16 %v961
        %v5167 = vunpack.c.h.b16 %v961
        %v5168 = vunpack.c.l.b16 %v962
        %v5169 = vunpack.c.h.b16 %v962
        %v5170 = vunpack.c.l.b16 %v963
        %v5171 = vunpack.c.h.b16 %v963
        %v5172 = vunpack.c.l.b16 %v964
        %v5173 = vunpack.c.h.b16 %v964
        %v5174 = vunpack.c.l.b16 %v965
        %v5175 = vunpack.c.h.b16 %v965
        %v5176 = vunpack.c.l.b16 %v966
        %v5177 = vunpack.c.h.b16 %v966
        %v5178 = vunpack.c.l.b16 %v967
        %v5179 = vunpack.c.h.b16 %v967
        %v5180 = vunpack.c.l.b16 %v968
        %v5181 = vunpack.c.h.b16 %v968
        %v5182 = vunpack.c.l.b16 %v969
        %v5183 = vunpack.c.h.b16 %v969
        %v5184 = vunpack.c.l.b16 %v970
        %v5185 = vunpack.c.h.b16 %v970
        %v5186 = vunpack.c.l.b16 %v971
        %v5187 = vunpack.c.h.b16 %v971
        %v5188 = vunpack.c.l.b16 %v972
        %v5189 = vunpack.c.h.b16 %v972
        %v5190 = vunpack.c.l.b16 %v973
        %v5191 = vunpack.c.h.b16 %v973
        %v5192 = vunpack.c.l.b16 %v974
        %v5193 = vunpack.c.h.b16 %v974
        %v5194 = vunpack.c.l.b16 %v975
        %v5195 = vunpack.c.h.b16 %v975
        %v5196 = vunpack.c.l.b16 %v976
        %v5197 = vunpack.c.h.b16 %v976
        %v5198 = vunpack.c.l.b16 %v977
        %v5199 = vunpack.c.h.b16 %v977
        %v5200 = vunpack.c.l.b16 %v978
        %v5201 = vunpack.c.h.b16 %v978
        %v5202 = vunpack.c.l.b16 %v979
        %v5203 = vunpack.c.h.b16 %v979
        %v5204 = vunpack.c.l.b16 %v980
        %v5205 = vunpack.c.h.b16 %v980
        %v5206 = vunpack.c.l.b16 %v981
        %v5207 = vunpack.c.h.b16 %v981
        %v5208 = vunpack.c.l.b16 %v982
        %v5209 = vunpack.c.h.b16 %v982
        %v5210 = vunpack.c.l.b16 %v983
        %v5211 = vunpack.c.h.b16 %v983
        %v5212 = vunpack.c.l.b16 %v984
        %v5213 = vunpack.c.h.b16 %v984
        %v5214 = vunpack.c.l.b16 %v985
        %v5215 = vunpack.c.h.b16 %v985
        %v5216 = vunpack.c.l.b16 %v986
        %v5217 = vunpack.c.h.b16 %v986
        %v5218 = vunpack.c.l.b16 %v987
        %v5219 = vunpack.c.h.b16 %v987
        %v5220 = vunpack.c.l.b16 %v988
        %v5221 = vunpack.c.h.b16 %v988
        %v5222 = vunpack.c.l.b16 %v989
        %v5223 = vunpack.c.h.b16 %v989
        %v5224 = vunpack.c.l.b16 %v990
        %v5225 = vunpack.c.h.b16 %v990
        %v5226 = vunpack.c.l.b16 %v991
        %v5227 = vunpack.c.h.b16 %v991
        %v5228 = vunpack.c.l.b16 %v992
        %v5229 = vunpack.c.h.b16 %v992
        %v5230 = vunpack.c.l.b16 %v993
        %v5231 = vunpack.c.h.b16 %v993
        %v5232 = vunpack.c.l.b16 %v994
        %v5233 = vunpack.c.h.b16 %v994
        %v5234 = vunpack.c.l.b16 %v995
        %v5235 = vunpack.c.h.b16 %v995
        %v5236 = vunpack.c.l.b16 %v996
        %v5237 = vunpack.c.h.b16 %v996
        %v5238 = vunpack.c.l.b16 %v997
        %v5239 = vunpack.c.h.b16 %v997
        %v5240 = vunpack.c.l.b16 %v998
        %v5241 = vunpack.c.h.b16 %v998
        %v5242 = vunpack.c.l.b16 %v999
        %v5243 = vunpack.c.h.b16 %v999
        %v5244 = vunpack.c.l.b16 %v1000
        %v5245 = vunpack.c.h.b16 %v1000
        %v5246 = vunpack.c.l.b16 %v1001
        %v5247 = vunpack.c.h.b16 %v1001
        %v5248 = vunpack.c.l.b16 %v1002
        %v5249 = vunpack.c.h.b16 %v1002
        %v5250 = vunpack.c.l.b16 %v1003
        %v5251 = vunpack.c.h.b16 %v1003
        %v5252 = vunpack.c.l.b16 %v1004
        %v5253 = vunpack.c.h.b16 %v1004
        %v5254 = vunpack.c.l.b16 %v1005
        %v5255 = vunpack.c.h.b16 %v1005
        %v5256 = vunpack.c.l.b16 %v1006
        %v5257 = vunpack.c.h.b16 %v1006
        %v5258 = vunpack.c.l.b16 %v1007
        %v5259 = vunpack.c.h.b16 %v1007
        %v5260 = vunpack.c.l.b16 %v1008
        %v5261 = vunpack.c.h.b16 %v1008
        %v5262 = vunpack.c.l.b16 %v1009
        %v5263 = vunpack.c.h.b16 %v1009
        %v5264 = vunpack.c.l.b16 %v1010
        %v5265 = vunpack.c.h.b16 %v1010
        %v5266 = vunpack.c.l.b16 %v1011
        %v5267 = vunpack.c.h.b16 %v1011
        %v5268 = vunpack.c.l.b16 %v1012
        %v5269 = vunpack.c.h.b16 %v1012
        %v5270 = vunpack.c.l.b16 %v1013
        %v5271 = vunpack.c.h.b16 %v1013
        %v5272 = vunpack.c.l.b16 %v1014
        %v5273 = vunpack.c.h.b16 %v1014
        %v5274 = vunpack.c.l.b16 %v1015
        %v5275 = vunpack.c.h.b16 %v1015
        %v5276 = vunpack.c.l.b16 %v1016
        %v5277 = vunpack.c.h.b16 %v1016
        %v5278 = vunpack.c.l.b16 %v1017
        %v5279 = vunpack.c.h.b16 %v1017
        %v5280 = vunpack.c.l.b16 %v1018
        %v5281 = vunpack.c.h.b16 %v1018
        %v5282 = vunpack.c.l.b16 %v1019
        %v5283 = vunpack.c.h.b16 %v1019
        %v5284 = vunpack.c.l.b16 %v1020
        %v5285 = vunpack.c.h.b16 %v1020
        %v5286 = vunpack.c.l.b16 %v1021
        %v5287 = vunpack.c.h.b16 %v1021
        %v5288 = vunpack.c.l.b16 %v1022
        %v5289 = vunpack.c.h.b16 %v1022
        %v5290 = vunpack.c.l.b16 %v1023
        %v5291 = vunpack.c.h.b16 %v1023
        %v5292 = vunpack.c.l.b16 %v1024
        %v5293 = vunpack.c.h.b16 %v1024
        %v5294 = vunpack.c.l.b16 %v1025
        %v5295 = vunpack.c.h.b16 %v1025
        %v5296 = vunpack.c.l.b16 %v1026
        %v5297 = vunpack.c.h.b16 %v1026
        %v5298 = vunpack.c.l.b16 %v1027
        %v5299 = vunpack.c.h.b16 %v1027
        %v5300 = vunpack.c.l.b16 %v1028
        %v5301 = vunpack.c.h.b16 %v1028
        %v5302 = vunpack.c.l.b16 %v1029
        %v5303 = vunpack.c.h.b16 %v1029
        %v5304 = vunpack.c.l.b16 %v1030
        %v5305 = vunpack.c.h.b16 %v1030
        %v5306 = vunpack.c.l.b16 %v1031
        %v5307 = vunpack.c.h.b16 %v1031
        %v5308 = vunpack.c.l.b16 %v1032
        %v5309 = vunpack.c.h.b16 %v1032
        %v5310 = vunpack.c.l.b16 %v1033
        %v5311 = vunpack.c.h.b16 %v1033
        %v5312 = vunpack.c.l.b16 %v1034
        %v5313 = vunpack.c.h.b16 %v1034
        %v5314 = vunpack.c.l.b16 %v1035
        %v5315 = vunpack.c.h.b16 %v1035
        %v5316 = vunpack.c.l.b16 %v1036
        %v5317 = vunpack.c.h.b16 %v1036
        %v5318 = vunpack.c.l.b16 %v1037
        %v5319 = vunpack.c.h.b16 %v1037
        %v5320 = vunpack.c.l.b16 %v1038
        %v5321 = vunpack.c.h.b16 %v1038
        %v5322 = vunpack.c.l.b16 %v1039
        %v5323 = vunpack.c.h.b16 %v1039
        %v5324 = vunpack.c.l.b16 %v1040
        %v5325 = vunpack.c.h.b16 %v1040
        %v5326 = vunpack.c.l.b16 %v1041
        %v5327 = vunpack.c.h.b16 %v1041
        %v5328 = vunpack.c.l.b16 %v1042
        %v5329 = vunpack.c.h.b16 %v1042
        %v5330 = vunpack.c.l.b16 %v1043
        %v5331 = vunpack.c.h.b16 %v1043
        %v5332 = vunpack.c.l.b16 %v1044
        %v5333 = vunpack.c.h.b16 %v1044
        %v5334 = vunpack.c.l.b16 %v1045
        %v5335 = vunpack.c.h.b16 %v1045
        %v5336 = vunpack.c.l.b16 %v1046
        %v5337 = vunpack.c.h.b16 %v1046
        %v5338 = vunpack.c.l.b16 %v1047
        %v5339 = vunpack.c.h.b16 %v1047
        %v5340 = vunpack.c.l.b16 %v1048
        %v5341 = vunpack.c.h.b16 %v1048
        %v5342 = vunpack.c.l.b16 %v1049
        %v5343 = vunpack.c.h.b16 %v1049
        %v5344 = vunpack.c.l.b16 %v1050
        %v5345 = vunpack.c.h.b16 %v1050
        %v5346 = vunpack.c.l.b16 %v1051
        %v5347 = vunpack.c.h.b16 %v1051
        %v5348 = vunpack.c.l.b16 %v1052
        %v5349 = vunpack.c.h.b16 %v1052
        %v5350 = vunpack.c.l.b16 %v1053
        %v5351 = vunpack.c.h.b16 %v1053
        %v5352 = vunpack.c.l.b16 %v1054
        %v5353 = vunpack.c.h.b16 %v1054
        %v5354 = vunpack.c.l.b16 %v1055
        %v5355 = vunpack.c.h.b16 %v1055
        %v5356 = vunpack.c.l.b16 %v1056
        %v5357 = vunpack.c.h.b16 %v1056
        %v5358 = vunpack.c.l.b16 %v1057
        %v5359 = vunpack.c.h.b16 %v1057
        %v5360 = vunpack.c.l.b16 %v1058
        %v5361 = vunpack.c.h.b16 %v1058
        %v5362 = vunpack.c.l.b16 %v1059
        %v5363 = vunpack.c.h.b16 %v1059
        %v5364 = vunpack.c.l.b16 %v1060
        %v5365 = vunpack.c.h.b16 %v1060
        %v5366 = vunpack.c.l.b16 %v1061
        %v5367 = vunpack.c.h.b16 %v1061
        %v5368 = vunpack.c.l.b16 %v1062
        %v5369 = vunpack.c.h.b16 %v1062
        %v5370 = vunpack.c.l.b16 %v1063
        %v5371 = vunpack.c.h.b16 %v1063
        %v5372 = vunpack.c.l.b16 %v1064
        %v5373 = vunpack.c.h.b16 %v1064
        %v5374 = vunpack.c.l.b16 %v1065
        %v5375 = vunpack.c.h.b16 %v1065
        %v5376 = vunpack.c.l.b16 %v1066
        %v5377 = vunpack.c.h.b16 %v1066
        %v5378 = vunpack.c.l.b16 %v1067
        %v5379 = vunpack.c.h.b16 %v1067
        %v5380 = vunpack.c.l.b16 %v1068
        %v5381 = vunpack.c.h.b16 %v1068
        %v5382 = vunpack.c.l.b16 %v1069
        %v5383 = vunpack.c.h.b16 %v1069
        %v5384 = vunpack.c.l.b16 %v1070
        %v5385 = vunpack.c.h.b16 %v1070
        %v5386 = vunpack.c.l.b16 %v1071
        %v5387 = vunpack.c.h.b16 %v1071
        %v5388 = vunpack.c.l.b16 %v1072
        %v5389 = vunpack.c.h.b16 %v1072
        %v5390 = vunpack.c.l.b16 %v1073
        %v5391 = vunpack.c.h.b16 %v1073
        %v5392 = vunpack.c.l.b16 %v1074
        %v5393 = vunpack.c.h.b16 %v1074
        %v5394 = vunpack.c.l.b16 %v1075
        %v5395 = vunpack.c.h.b16 %v1075
        %v5396 = vunpack.c.l.b16 %v1076
        %v5397 = vunpack.c.h.b16 %v1076
        %v5398 = vunpack.c.l.b16 %v1077
        %v5399 = vunpack.c.h.b16 %v1077
        %v5400 = vunpack.c.l.b16 %v1078
        %v5401 = vunpack.c.h.b16 %v1078
        %v5402 = vunpack.c.l.b16 %v1079
        %v5403 = vunpack.c.h.b16 %v1079
        %v5404 = vunpack.c.l.b16 %v1080
        %v5405 = vunpack.c.h.b16 %v1080
        %v5406 = vunpack.c.l.b16 %v1081
        %v5407 = vunpack.c.h.b16 %v1081
        %v5408 = vunpack.c.l.b16 %v1082
        %v5409 = vunpack.c.h.b16 %v1082
        %v5410 = vunpack.c.l.b16 %v1083
        %v5411 = vunpack.c.h.b16 %v1083
        %v5412 = vunpack.c.l.b16 %v1084
        %v5413 = vunpack.c.h.b16 %v1084
        %v5414 = vunpack.c.l.b16 %v1085
        %v5415 = vunpack.c.h.b16 %v1085
        %v5416 = vunpack.c.l.b16 %v1086
        %v5417 = vunpack.c.h.b16 %v1086
        %v5418 = vunpack.c.l.b16 %v1087
        %v5419 = vunpack.c.h.b16 %v1087
        %v5420 = vunpack.c.l.b16 %v1088
        %v5421 = vunpack.c.h.b16 %v1088
        %v5422 = vunpack.c.l.b16 %v1089
        %v5423 = vunpack.c.h.b16 %v1089
        %v5424 = vunpack.c.l.b16 %v1090
        %v5425 = vunpack.c.h.b16 %v1090
        %v5426 = vunpack.c.l.b16 %v1091
        %v5427 = vunpack.c.h.b16 %v1091
        %v5428 = vunpack.c.l.b16 %v1092
        %v5429 = vunpack.c.h.b16 %v1092
        %v5430 = vunpack.c.l.b16 %v1093
        %v5431 = vunpack.c.h.b16 %v1093
        %v5432 = vunpack.c.l.b16 %v1094
        %v5433 = vunpack.c.h.b16 %v1094
        %v5434 = vunpack.c.l.b16 %v1095
        %v5435 = vunpack.c.h.b16 %v1095
        %v5436 = vunpack.c.l.b16 %v1096
        %v5437 = vunpack.c.h.b16 %v1096
        %v5438 = vunpack.c.l.b16 %v1097
        %v5439 = vunpack.c.h.b16 %v1097
        %v5440 = vunpack.c.l.b16 %v1098
        %v5441 = vunpack.c.h.b16 %v1098
        %v5442 = vunpack.c.l.b16 %v1099
        %v5443 = vunpack.c.h.b16 %v1099
        %v5444 = vunpack.c.l.b16 %v1100
        %v5445 = vunpack.c.h.b16 %v1100
        %v5446 = vunpack.c.l.b16 %v1101
        %v5447 = vunpack.c.h.b16 %v1101
        %v5448 = vunpack.c.l.b16 %v1102
        %v5449 = vunpack.c.h.b16 %v1102
        %v5450 = vunpack.c.l.b16 %v1103
        %v5451 = vunpack.c.h.b16 %v1103
        %v5452 = vunpack.c.l.b16 %v1104
        %v5453 = vunpack.c.h.b16 %v1104
        %v5454 = vunpack.c.l.b16 %v1105
        %v5455 = vunpack.c.h.b16 %v1105
        %v5456 = vunpack.c.l.b16 %v1106
        %v5457 = vunpack.c.h.b16 %v1106
        %v5458 = vunpack.c.l.b16 %v1107
        %v5459 = vunpack.c.h.b16 %v1107
        %v5460 = vunpack.c.l.b16 %v1108
        %v5461 = vunpack.c.h.b16 %v1108
        %v5462 = vunpack.c.l.b16 %v1109
        %v5463 = vunpack.c.h.b16 %v1109
        %v5464 = vunpack.c.l.b16 %v1110
        %v5465 = vunpack.c.h.b16 %v1110
        %v5466 = vunpack.c.l.b16 %v1111
        %v5467 = vunpack.c.h.b16 %v1111
        %v5468 = vunpack.c.l.b16 %v1112
        %v5469 = vunpack.c.h.b16 %v1112
        %v5470 = vunpack.c.l.b16 %v1113
        %v5471 = vunpack.c.h.b16 %v1113
        %v5472 = vunpack.c.l.b16 %v1114
        %v5473 = vunpack.c.h.b16 %v1114
        %v5474 = vunpack.c.l.b16 %v1115
        %v5475 = vunpack.c.h.b16 %v1115
        %v5476 = vunpack.c.l.b16 %v1116
        %v5477 = vunpack.c.h.b16 %v1116
        %v5478 = vunpack.c.l.b16 %v1117
        %v5479 = vunpack.c.h.b16 %v1117
        %v5480 = vunpack.c.l.b16 %v1118
        %v5481 = vunpack.c.h.b16 %v1118
        %v5482 = vunpack.c.l.b16 %v1119
        %v5483 = vunpack.c.h.b16 %v1119
        %v5484 = vunpack.c.l.b16 %v1120
        %v5485 = vunpack.c.h.b16 %v1120
        %v5486 = vunpack.c.l.b16 %v1121
        %v5487 = vunpack.c.h.b16 %v1121
        %v5488 = vunpack.c.l.b16 %v1122
        %v5489 = vunpack.c.h.b16 %v1122
        %v5490 = vunpack.c.l.b16 %v1123
        %v5491 = vunpack.c.h.b16 %v1123
        %v5492 = vunpack.c.l.b16 %v1124
        %v5493 = vunpack.c.h.b16 %v1124
        %v5494 = vunpack.c.l.b16 %v1125
        %v5495 = vunpack.c.h.b16 %v1125
        %v5496 = vunpack.c.l.b16 %v1126
        %v5497 = vunpack.c.h.b16 %v1126
        %v5498 = vunpack.c.l.b16 %v1127
        %v5499 = vunpack.c.h.b16 %v1127
        %v5500 = vunpack.c.l.b16 %v1128
        %v5501 = vunpack.c.h.b16 %v1128
        %v5502 = vunpack.c.l.b16 %v1129
        %v5503 = vunpack.c.h.b16 %v1129
        %v5504 = vunpack.c.l.b16 %v1130
        %v5505 = vunpack.c.h.b16 %v1130
        %v5506 = vunpack.c.l.b16 %v1131
        %v5507 = vunpack.c.h.b16 %v1131
        %v5508 = vunpack.c.l.b16 %v1132
        %v5509 = vunpack.c.h.b16 %v1132
        %v5510 = vunpack.c.l.b16 %v1133
        %v5511 = vunpack.c.h.b16 %v1133
        %v5512 = vunpack.c.l.b16 %v1134
        %v5513 = vunpack.c.h.b16 %v1134
        %v5514 = vunpack.c.l.b16 %v1135
        %v5515 = vunpack.c.h.b16 %v1135
        %v5516 = vunpack.c.l.b16 %v1136
        %v5517 = vunpack.c.h.b16 %v1136
        %v5518 = vunpack.c.l.b16 %v1137
        %v5519 = vunpack.c.h.b16 %v1137
        %v5520 = vunpack.c.l.b16 %v1138
        %v5521 = vunpack.c.h.b16 %v1138
        %v5522 = vunpack.c.l.b16 %v1139
        %v5523 = vunpack.c.h.b16 %v1139
        %v5524 = vunpack.c.l.b16 %v1140
        %v5525 = vunpack.c.h.b16 %v1140
        %v5526 = vunpack.c.l.b16 %v1141
        %v5527 = vunpack.c.h.b16 %v1141
        %v5528 = vunpack.c.l.b16 %v1142
        %v5529 = vunpack.c.h.b16 %v1142
        %v5530 = vunpack.c.l.b16 %v1143
        %v5531 = vunpack.c.h.b16 %v1143
        %v5532 = vunpack.c.l.b16 %v1144
        %v5533 = vunpack.c.h.b16 %v1144
        %v5534 = vunpack.c.l.b16 %v1145
        %v5535 = vunpack.c.h.b16 %v1145
        %v5536 = vunpack.c.l.b16 %v1146
        %v5537 = vunpack.c.h.b16 %v1146
        %v5538 = vunpack.c.l.b16 %v1147
        %v5539 = vunpack.c.h.b16 %v1147
        %v5540 = vunpack.c.l.b16 %v1148
        %v5541 = vunpack.c.h.b16 %v1148
        %v5542 = vunpack.c.l.b16 %v1149
        %v5543 = vunpack.c.h.b16 %v1149
        %v5544 = vunpack.c.l.b16 %v1150
        %v5545 = vunpack.c.h.b16 %v1150
        %v5546 = vunpack.c.l.b16 %v1151
        %v5547 = vunpack.c.h.b16 %v1151
        %v5548 = vunpack.c.l.b16 %v1152
        %v5549 = vunpack.c.h.b16 %v1152
        %v5550 = vunpack.c.l.b16 %v1153
        %v5551 = vunpack.c.h.b16 %v1153
        %v5552 = vunpack.c.l.b16 %v1154
        %v5553 = vunpack.c.h.b16 %v1154
        %v5554 = vunpack.c.l.b16 %v1155
        %v5555 = vunpack.c.h.b16 %v1155
        %v5556 = vunpack.c.l.b16 %v1156
        %v5557 = vunpack.c.h.b16 %v1156
        %v5558 = vunpack.c.l.b16 %v1157
        %v5559 = vunpack.c.h.b16 %v1157
        %v5560 = vunpack.c.l.b16 %v1158
        %v5561 = vunpack.c.h.b16 %v1158
        %v5562 = vunpack.c.l.b16 %v1159
        %v5563 = vunpack.c.h.b16 %v1159
        %v5564 = vunpack.c.l.b16 %v1160
        %v5565 = vunpack.c.h.b16 %v1160
        %v5566 = vunpack.c.l.b16 %v1161
        %v5567 = vunpack.c.h.b16 %v1161
        %v5568 = vunpack.c.l.b16 %v1162
        %v5569 = vunpack.c.h.b16 %v1162
        %v5570 = vunpack.c.l.b16 %v1163
        %v5571 = vunpack.c.h.b16 %v1163
        %v5572 = vunpack.c.l.b16 %v1164
        %v5573 = vunpack.c.h.b16 %v1164
        %v5574 = vunpack.c.l.b16 %v1165
        %v5575 = vunpack.c.h.b16 %v1165
        %v5576 = vunpack.c.l.b16 %v1166
        %v5577 = vunpack.c.h.b16 %v1166
        %v5578 = vunpack.c.l.b16 %v1167
        %v5579 = vunpack.c.h.b16 %v1167
        %v5580 = vunpack.c.l.b16 %v1168
        %v5581 = vunpack.c.h.b16 %v1168
        %v5582 = vunpack.c.l.b16 %v1169
        %v5583 = vunpack.c.h.b16 %v1169
        %v5584 = vunpack.c.l.b16 %v1170
        %v5585 = vunpack.c.h.b16 %v1170
        %v5586 = vunpack.c.l.b16 %v1171
        %v5587 = vunpack.c.h.b16 %v1171
        %v5588 = vunpack.c.l.b16 %v1172
        %v5589 = vunpack.c.h.b16 %v1172
        %v5590 = vunpack.c.l.b16 %v1173
        %v5591 = vunpack.c.h.b16 %v1173
        %v5592 = vunpack.c.l.b16 %v1174
        %v5593 = vunpack.c.h.b16 %v1174
        %v5594 = vunpack.c.l.b16 %v1175
        %v5595 = vunpack.c.h.b16 %v1175
        %v5596 = vunpack.c.l.b16 %v1176
        %v5597 = vunpack.c.h.b16 %v1176
        %v5598 = vunpack.c.l.b16 %v1177
        %v5599 = vunpack.c.h.b16 %v1177
        %v5600 = vunpack.c.l.b16 %v1178
        %v5601 = vunpack.c.h.b16 %v1178
        %v5602 = vunpack.c.l.b16 %v1179
        %v5603 = vunpack.c.h.b16 %v1179
        %v5604 = vunpack.c.l.b16 %v1180
        %v5605 = vunpack.c.h.b16 %v1180
        %v5606 = vunpack.c.l.b16 %v1181
        %v5607 = vunpack.c.h.b16 %v1181
        %v5608 = vunpack.c.l.b16 %v1182
        %v5609 = vunpack.c.h.b16 %v1182
        %v5610 = vunpack.c.l.b16 %v1183
        %v5611 = vunpack.c.h.b16 %v1183
        %v5612 = vunpack.c.l.b16 %v1184
        %v5613 = vunpack.c.h.b16 %v1184
        %v5614 = vunpack.c.l.b16 %v1185
        %v5615 = vunpack.c.h.b16 %v1185
        %v5616 = vunpack.c.l.b16 %v1186
        %v5617 = vunpack.c.h.b16 %v1186
        %v5618 = vunpack.c.l.b16 %v1187
        %v5619 = vunpack.c.h.b16 %v1187
        %v5620 = vunpack.c.l.b16 %v1188
        %v5621 = vunpack.c.h.b16 %v1188
        %v5622 = vunpack.c.l.b16 %v1189
        %v5623 = vunpack.c.h.b16 %v1189
        %v5624 = vunpack.c.l.b16 %v1190
        %v5625 = vunpack.c.h.b16 %v1190
        %v5626 = vunpack.c.l.b16 %v1191
        %v5627 = vunpack.c.h.b16 %v1191
        %v5628 = vunpack.c.l.b16 %v1192
        %v5629 = vunpack.c.h.b16 %v1192
        %v5630 = vunpack.c.l.b16 %v1193
        %v5631 = vunpack.c.h.b16 %v1193
        %v5632 = vunpack.c.l.b16 %v1194
        %v5633 = vunpack.c.h.b16 %v1194
        %v5634 = vunpack.c.l.b16 %v1195
        %v5635 = vunpack.c.h.b16 %v1195
        %v5636 = vunpack.c.l.b16 %v1196
        %v5637 = vunpack.c.h.b16 %v1196
        %v5638 = vunpack.c.l.b16 %v1197
        %v5639 = vunpack.c.h.b16 %v1197
        %v5640 = vunpack.c.l.b16 %v1198
        %v5641 = vunpack.c.h.b16 %v1198
        %v5642 = vunpack.c.l.b16 %v1199
        %v5643 = vunpack.c.h.b16 %v1199
        %v5644 = vunpack.c.l.b16 %v1200
        %v5645 = vunpack.c.h.b16 %v1200
        %v5646 = vunpack.c.l.b16 %v1201
        %v5647 = vunpack.c.h.b16 %v1201
        %v5648 = vunpack.c.l.b16 %v1202
        %v5649 = vunpack.c.h.b16 %v1202
        %v5650 = vunpack.c.l.b16 %v1203
        %v5651 = vunpack.c.h.b16 %v1203
        %v5652 = vunpack.c.l.b16 %v1204
        %v5653 = vunpack.c.h.b16 %v1204
        %v5654 = vunpack.c.l.b16 %v1205
        %v5655 = vunpack.c.h.b16 %v1205
        %v5656 = vunpack.c.l.b16 %v1206
        %v5657 = vunpack.c.h.b16 %v1206
        %v5658 = vunpack.c.l.b16 %v1207
        %v5659 = vunpack.c.h.b16 %v1207
        %v5660 = vunpack.c.l.b16 %v1208
        %v5661 = vunpack.c.h.b16 %v1208
        %v5662 = vunpack.c.l.b16 %v1209
        %v5663 = vunpack.c.h.b16 %v1209
        %v5664 = vunpack.c.l.b16 %v1210
        %v5665 = vunpack.c.h.b16 %v1210
        %v5666 = vunpack.c.l.b16 %v1211
        %v5667 = vunpack.c.h.b16 %v1211
        %v5668 = vunpack.c.l.b16 %v1212
        %v5669 = vunpack.c.h.b16 %v1212
        %v5670 = vunpack.c.l.b16 %v1213
        %v5671 = vunpack.c.h.b16 %v1213
        %v5672 = vunpack.c.l.b16 %v1214
        %v5673 = vunpack.c.h.b16 %v1214
        %v5674 = vunpack.c.l.b16 %v1215
        %v5675 = vunpack.c.h.b16 %v1215
        %v5676 = vunpack.c.l.b16 %v1216
        %v5677 = vunpack.c.h.b16 %v1216
        %v5678 = vunpack.c.l.b16 %v1217
        %v5679 = vunpack.c.h.b16 %v1217
        %v5680 = vunpack.c.l.b16 %v1218
        %v5681 = vunpack.c.h.b16 %v1218
        %v5682 = vunpack.c.l.b16 %v1219
        %v5683 = vunpack.c.h.b16 %v1219
        %v5684 = vunpack.c.l.b16 %v1220
        %v5685 = vunpack.c.h.b16 %v1220
        %v5686 = vunpack.c.l.b16 %v1221
        %v5687 = vunpack.c.h.b16 %v1221
        %v5688 = vunpack.c.l.b16 %v1222
        %v5689 = vunpack.c.h.b16 %v1222
        %v5690 = vunpack.c.l.b16 %v1223
        %v5691 = vunpack.c.h.b16 %v1223
        %v5692 = vunpack.c.l.b16 %v1224
        %v5693 = vunpack.c.h.b16 %v1224
        %v5694 = vunpack.c.l.b16 %v1225
        %v5695 = vunpack.c.h.b16 %v1225
        %v5696 = vunpack.c.l.b16 %v1226
        %v5697 = vunpack.c.h.b16 %v1226
        %v5698 = vunpack.c.l.b16 %v1227
        %v5699 = vunpack.c.h.b16 %v1227
        %v5700 = vunpack.c.l.b16 %v1228
        %v5701 = vunpack.c.h.b16 %v1228
        %v5702 = vunpack.c.l.b16 %v1229
        %v5703 = vunpack.c.h.b16 %v1229
        %v5704 = vunpack.c.l.b16 %v1230
        %v5705 = vunpack.c.h.b16 %v1230
        %v5706 = vunpack.c.l.b16 %v1231
        %v5707 = vunpack.c.h.b16 %v1231
        %v5708 = vunpack.c.l.b16 %v1232
        %v5709 = vunpack.c.h.b16 %v1232
        %v5710 = vunpack.c.l.b16 %v1233
        %v5711 = vunpack.c.h.b16 %v1233
        %v5712 = vunpack.c.l.b16 %v1234
        %v5713 = vunpack.c.h.b16 %v1234
        %v5714 = vunpack.c.l.b16 %v1235
        %v5715 = vunpack.c.h.b16 %v1235
        %v5716 = vunpack.c.l.b16 %v1236
        %v5717 = vunpack.c.h.b16 %v1236
        %v5718 = vunpack.c.l.b16 %v1237
        %v5719 = vunpack.c.h.b16 %v1237
        %v5720 = vunpack.c.l.b16 %v1238
        %v5721 = vunpack.c.h.b16 %v1238
        %v5722 = vunpack.c.l.b16 %v1239
        %v5723 = vunpack.c.h.b16 %v1239
        %v5724 = vunpack.c.l.b16 %v1240
        %v5725 = vunpack.c.h.b16 %v1240
        %v5726 = vunpack.c.l.b16 %v1241
        %v5727 = vunpack.c.h.b16 %v1241
        %v5728 = vunpack.c.l.b16 %v1242
        %v5729 = vunpack.c.h.b16 %v1242
        %v5730 = vunpack.c.l.b16 %v1243
        %v5731 = vunpack.c.h.b16 %v1243
        %v5732 = vunpack.c.l.b16 %v1244
        %v5733 = vunpack.c.h.b16 %v1244
        %v5734 = vunpack.c.l.b16 %v1245
        %v5735 = vunpack.c.h.b16 %v1245
        %v5736 = vunpack.c.l.b16 %v1246
        %v5737 = vunpack.c.h.b16 %v1246
        %v5738 = vunpack.c.l.b16 %v1247
        %v5739 = vunpack.c.h.b16 %v1247
        %v5740 = vunpack.c.l.b16 %v1248
        %v5741 = vunpack.c.h.b16 %v1248
        %v5742 = vunpack.c.l.b16 %v1249
        %v5743 = vunpack.c.h.b16 %v1249
        %v5744 = vunpack.c.l.b16 %v1250
        %v5745 = vunpack.c.h.b16 %v1250
        %v5746 = vunpack.c.l.b16 %v1251
        %v5747 = vunpack.c.h.b16 %v1251
        %v5748 = vunpack.c.l.b16 %v1252
        %v5749 = vunpack.c.h.b16 %v1252
        %v5750 = vunpack.c.l.b16 %v1253
        %v5751 = vunpack.c.h.b16 %v1253
        %v5752 = vunpack.c.l.b16 %v1254
        %v5753 = vunpack.c.h.b16 %v1254
        %v5754 = vunpack.c.l.b16 %v1255
        %v5755 = vunpack.c.h.b16 %v1255
        %v5756 = vunpack.c.l.b16 %v1256
        %v5757 = vunpack.c.h.b16 %v1256
        %v5758 = vunpack.c.l.b16 %v1257
        %v5759 = vunpack.c.h.b16 %v1257
        %v5760 = vunpack.c.l.b16 %v1258
        %v5761 = vunpack.c.h.b16 %v1258
        %v5762 = vunpack.c.l.b16 %v1259
        %v5763 = vunpack.c.h.b16 %v1259
        %v5764 = vunpack.c.l.b16 %v1260
        %v5765 = vunpack.c.h.b16 %v1260
        %v5766 = vunpack.c.l.b16 %v1261
        %v5767 = vunpack.c.h.b16 %v1261
        %v5768 = vunpack.c.l.b16 %v1262
        %v5769 = vunpack.c.h.b16 %v1262
        %v5770 = vunpack.c.l.b16 %v1263
        %v5771 = vunpack.c.h.b16 %v1263
        %v5772 = vunpack.c.l.b16 %v1264
        %v5773 = vunpack.c.h.b16 %v1264
        %v5774 = vunpack.c.l.b16 %v1265
        %v5775 = vunpack.c.h.b16 %v1265
        %v5776 = vunpack.c.l.b16 %v1266
        %v5777 = vunpack.c.h.b16 %v1266
        %v5778 = vunpack.c.l.b16 %v1267
        %v5779 = vunpack.c.h.b16 %v1267
        %v5780 = vunpack.c.l.b16 %v1268
        %v5781 = vunpack.c.h.b16 %v1268
        %v5782 = vunpack.c.l.b16 %v1269
        %v5783 = vunpack.c.h.b16 %v1269
        %v5784 = vunpack.c.l.b16 %v1270
        %v5785 = vunpack.c.h.b16 %v1270
        %v5786 = vunpack.c.l.b16 %v1271
        %v5787 = vunpack.c.h.b16 %v1271
        %v5788 = vunpack.c.l.b16 %v1272
        %v5789 = vunpack.c.h.b16 %v1272
        %v5790 = vunpack.c.l.b16 %v1273
        %v5791 = vunpack.c.h.b16 %v1273
        %v5792 = vunpack.c.l.b16 %v1274
        %v5793 = vunpack.c.h.b16 %v1274
        %v5794 = vunpack.c.l.b16 %v1275
        %v5795 = vunpack.c.h.b16 %v1275
        %v5796 = vunpack.c.l.b16 %v1276
        %v5797 = vunpack.c.h.b16 %v1276
        %v5798 = vunpack.c.l.b16 %v1277
        %v5799 = vunpack.c.h.b16 %v1277
        %v5800 = vunpack.c.l.b16 %v1278
        %v5801 = vunpack.c.h.b16 %v1278
        %v5802 = vunpack.c.l.b16 %v1279
        %v5803 = vunpack.c.h.b16 %v1279
        %v5804 = vunpack.c.l.b16 %v1280
        %v5805 = vunpack.c.h.b16 %v1280
        %v5806 = vunpack.c.l.b16 %v1281
        %v5807 = vunpack.c.h.b16 %v1281
        %v5808 = vunpack.c.l.b16 %v1282
        %v5809 = vunpack.c.h.b16 %v1282
        %v5810 = vunpack.c.l.b16 %v1283
        %v5811 = vunpack.c.h.b16 %v1283
        %v5812 = vunpack.c.l.b16 %v1284
        %v5813 = vunpack.c.h.b16 %v1284
        %v5814 = vunpack.c.l.b16 %v1285
        %v5815 = vunpack.c.h.b16 %v1285
        %v5816 = vunpack.c.l.b16 %v1286
        %v5817 = vunpack.c.h.b16 %v1286
        %v5818 = vunpack.c.l.b16 %v1287
        %v5819 = vunpack.c.h.b16 %v1287
        %v5820 = vunpack.c.l.b16 %v1288
        %v5821 = vunpack.c.h.b16 %v1288
        %v5822 = vunpack.c.l.b16 %v1289
        %v5823 = vunpack.c.h.b16 %v1289
        %v5824 = vunpack.c.l.b16 %v1290
        %v5825 = vunpack.c.h.b16 %v1290
        %v5826 = vunpack.c.l.b16 %v1291
        %v5827 = vunpack.c.h.b16 %v1291
        %v5828 = vunpack.c.l.b16 %v1292
        %v5829 = vunpack.c.h.b16 %v1292
        %v5830 = vunpack.c.l.b16 %v1293
        %v5831 = vunpack.c.h.b16 %v1293
        %v5832 = vunpack.c.l.b16 %v1294
        %v5833 = vunpack.c.h.b16 %v1294
        %v5834 = vunpack.c.l.b16 %v1295
        %v5835 = vunpack.c.h.b16 %v1295
        %v5836 = vunpack.c.l.b16 %v1296
        %v5837 = vunpack.c.h.b16 %v1296
        %v5838 = vunpack.c.l.b16 %v1297
        %v5839 = vunpack.c.h.b16 %v1297
        %v5840 = vunpack.c.l.b16 %v1298
        %v5841 = vunpack.c.h.b16 %v1298
        %v5842 = vunpack.c.l.b16 %v1299
        %v5843 = vunpack.c.h.b16 %v1299
        %v5844 = vunpack.c.l.b16 %v1300
        %v5845 = vunpack.c.h.b16 %v1300
        %v5846 = vunpack.c.l.b16 %v1301
        %v5847 = vunpack.c.h.b16 %v1301
        %v5848 = vunpack.c.l.b16 %v1302
        %v5849 = vunpack.c.h.b16 %v1302
        %v5850 = vunpack.c.l.b16 %v1303
        %v5851 = vunpack.c.h.b16 %v1303
        %v5852 = vunpack.c.l.b16 %v1304
        %v5853 = vunpack.c.h.b16 %v1304
        %v5854 = vunpack.c.l.b16 %v1305
        %v5855 = vunpack.c.h.b16 %v1305
        %v5856 = vunpack.c.l.b16 %v1306
        %v5857 = vunpack.c.h.b16 %v1306
        %v5858 = vunpack.c.l.b16 %v1307
        %v5859 = vunpack.c.h.b16 %v1307
        %v5860 = vunpack.c.l.b16 %v1308
        %v5861 = vunpack.c.h.b16 %v1308
        %v5862 = vunpack.c.l.b16 %v1309
        %v5863 = vunpack.c.h.b16 %v1309
        %v5864 = vunpack.c.l.b16 %v1310
        %v5865 = vunpack.c.h.b16 %v1310
        %v5866 = vunpack.c.l.b16 %v1311
        %v5867 = vunpack.c.h.b16 %v1311
        %v5868 = vunpack.c.l.b16 %v1312
        %v5869 = vunpack.c.h.b16 %v1312
        %v5870 = vunpack.c.l.b16 %v1313
        %v5871 = vunpack.c.h.b16 %v1313
        %v5872 = vunpack.c.l.b16 %v1314
        %v5873 = vunpack.c.h.b16 %v1314
        %v5874 = vunpack.c.l.b16 %v1315
        %v5875 = vunpack.c.h.b16 %v1315
        %v5876 = vunpack.c.l.b16 %v1316
        %v5877 = vunpack.c.h.b16 %v1316
        %v5878 = vunpack.c.l.b16 %v1317
        %v5879 = vunpack.c.h.b16 %v1317
        %v5880 = vunpack.c.l.b16 %v1318
        %v5881 = vunpack.c.h.b16 %v1318
        %v5882 = vunpack.c.l.b16 %v1319
        %v5883 = vunpack.c.h.b16 %v1319
        %v5884 = vunpack.c.l.b16 %v1320
        %v5885 = vunpack.c.h.b16 %v1320
        %v5886 = vunpack.c.l.b16 %v1321
        %v5887 = vunpack.c.h.b16 %v1321
        %v5888 = vunpack.c.l.b16 %v1322
        %v5889 = vunpack.c.h.b16 %v1322
        %v5890 = vunpack.c.l.b16 %v1323
        %v5891 = vunpack.c.h.b16 %v1323
        %v5892 = vunpack.c.l.b16 %v1324
        %v5893 = vunpack.c.h.b16 %v1324
        %v5894 = vunpack.c.l.b16 %v1325
        %v5895 = vunpack.c.h.b16 %v1325
        %v5896 = vunpack.c.l.b16 %v1326
        %v5897 = vunpack.c.h.b16 %v1326
        %v5898 = vunpack.c.l.b16 %v1327
        %v5899 = vunpack.c.h.b16 %v1327
        %v5900 = vunpack.c.l.b16 %v1328
        %v5901 = vunpack.c.h.b16 %v1328
        %v5902 = vunpack.c.l.b16 %v1329
        %v5903 = vunpack.c.h.b16 %v1329
        %v5904 = vunpack.c.l.b16 %v1330
        %v5905 = vunpack.c.h.b16 %v1330
        %v5906 = vunpack.c.l.b16 %v1331
        %v5907 = vunpack.c.h.b16 %v1331
        %v5908 = vunpack.c.l.b16 %v1332
        %v5909 = vunpack.c.h.b16 %v1332
        %v5910 = vunpack.c.l.b16 %v1333
        %v5911 = vunpack.c.h.b16 %v1333
        %v5912 = vunpack.c.l.b16 %v1334
        %v5913 = vunpack.c.h.b16 %v1334
        %v5914 = vunpack.c.l.b16 %v1335
        %v5915 = vunpack.c.h.b16 %v1335
        %v5916 = vunpack.c.l.b16 %v1336
        %v5917 = vunpack.c.h.b16 %v1336
        %v5918 = vunpack.c.l.b16 %v1337
        %v5919 = vunpack.c.h.b16 %v1337
        %v5920 = vunpack.c.l.b16 %v1338
        %v5921 = vunpack.c.h.b16 %v1338
        %v5922 = vunpack.c.l.b16 %v1339
        %v5923 = vunpack.c.h.b16 %v1339
        %v5924 = vunpack.c.l.b16 %v1340
        %v5925 = vunpack.c.h.b16 %v1340
        %v5926 = vunpack.c.l.b16 %v1341
        %v5927 = vunpack.c.h.b16 %v1341
        %v5928 = vunpack.c.l.b16 %v1342
        %v5929 = vunpack.c.h.b16 %v1342
        %v5930 = vunpack.c.l.b16 %v1343
        %v5931 = vunpack.c.h.b16 %v1343
        %v5932 = vunpack.c.l.b16 %v1344
        %v5933 = vunpack.c.h.b16 %v1344
        %v5934 = vunpack.c.l.b16 %v1345
        %v5935 = vunpack.c.h.b16 %v1345
        %v5936 = vunpack.c.l.b16 %v1346
        %v5937 = vunpack.c.h.b16 %v1346
        %v5938 = vunpack.c.l.b16 %v1347
        %v5939 = vunpack.c.h.b16 %v1347
        %v5940 = vunpack.c.l.b16 %v1348
        %v5941 = vunpack.c.h.b16 %v1348
        %v5942 = vunpack.c.l.b16 %v1349
        %v5943 = vunpack.c.h.b16 %v1349
        %v5944 = vunpack.c.l.b16 %v1350
        %v5945 = vunpack.c.h.b16 %v1350
        %v5946 = vunpack.c.l.b16 %v1351
        %v5947 = vunpack.c.h.b16 %v1351
        %v5948 = vunpack.c.l.b16 %v1352
        %v5949 = vunpack.c.h.b16 %v1352
        %v5950 = vunpack.c.l.b16 %v1353
        %v5951 = vunpack.c.h.b16 %v1353
        %v5952 = vunpack.c.l.b16 %v1354
        %v5953 = vunpack.c.h.b16 %v1354
        %v5954 = vunpack.c.l.b16 %v1355
        %v5955 = vunpack.c.h.b16 %v1355
        %v5956 = vunpack.c.l.b16 %v1356
        %v5957 = vunpack.c.h.b16 %v1356
        %v5958 = vunpack.c.l.b16 %v1357
        %v5959 = vunpack.c.h.b16 %v1357
        %v5960 = vunpack.c.l.b16 %v1358
        %v5961 = vunpack.c.h.b16 %v1358
        %v5962 = vunpack.c.l.b16 %v1359
        %v5963 = vunpack.c.h.b16 %v1359
        %v5964 = vunpack.c.l.b16 %v1360
        %v5965 = vunpack.c.h.b16 %v1360
        %v5966 = vunpack.c.l.b16 %v1361
        %v5967 = vunpack.c.h.b16 %v1361
        %v5968 = vunpack.c.l.b16 %v1362
        %v5969 = vunpack.c.h.b16 %v1362
        %v5970 = vunpack.c.l.b16 %v1363
        %v5971 = vunpack.c.h.b16 %v1363
        %v5972 = vunpack.c.l.b16 %v1364
        %v5973 = vunpack.c.h.b16 %v1364
        %v5974 = vunpack.c.l.b16 %v1365
        %v5975 = vunpack.c.h.b16 %v1365
        %v5976 = vunpack.c.l.b16 %v1366
        %v5977 = vunpack.c.h.b16 %v1366
        %v5978 = vunpack.c.l.b16 %v1367
        %v5979 = vunpack.c.h.b16 %v1367
        %v5980 = vunpack.c.l.b16 %v1368
        %v5981 = vunpack.c.h.b16 %v1368
        %v5982 = vunpack.c.l.b16 %v1369
        %v5983 = vunpack.c.h.b16 %v1369
        %v5984 = vunpack.c.l.b16 %v1370
        %v5985 = vunpack.c.h.b16 %v1370
        %v5986 = vunpack.c.l.b16 %v1371
        %v5987 = vunpack.c.h.b16 %v1371
        %v5988 = vunpack.c.l.b16 %v1372
        %v5989 = vunpack.c.h.b16 %v1372
        %v5990 = vunpack.c.l.b16 %v1373
        %v5991 = vunpack.c.h.b16 %v1373
        %v5992 = vunpack.c.l.b16 %v1374
        %v5993 = vunpack.c.h.b16 %v1374
        %v5994 = vunpack.c.l.b16 %v1375
        %v5995 = vunpack.c.h.b16 %v1375
        %v5996 = vunpack.c.l.b16 %v1376
        %v5997 = vunpack.c.h.b16 %v1376
        %v5998 = vunpack.c.l.b16 %v1377
        %v5999 = vunpack.c.h.b16 %v1377
        %v6000 = vunpack.c.l.b16 %v1378
        %v6001 = vunpack.c.h.b16 %v1378
        %v6002 = vunpack.c.l.b16 %v1379
        %v6003 = vunpack.c.h.b16 %v1379
        %v6004 = vunpack.c.l.b16 %v1380
        %v6005 = vunpack.c.h.b16 %v1380
        %v6006 = vunpack.c.l.b16 %v1381
        %v6007 = vunpack.c.h.b16 %v1381
        %v6008 = vunpack.c.l.b16 %v1382
        %v6009 = vunpack.c.h.b16 %v1382
        %v6010 = vunpack.c.l.b16 %v1383
        %v6011 = vunpack.c.h.b16 %v1383
        %v6012 = vunpack.c.l.b16 %v1384
        %v6013 = vunpack.c.h.b16 %v1384
        %v6014 = vunpack.c.l.b16 %v1385
        %v6015 = vunpack.c.h.b16 %v1385
        %v6016 = vunpack.c.l.b16 %v1386
        %v6017 = vunpack.c.h.b16 %v1386
        %v6018 = vunpack.c.l.b16 %v1387
        %v6019 = vunpack.c.h.b16 %v1387
        %v6020 = vunpack.c.l.b16 %v1388
        %v6021 = vunpack.c.h.b16 %v1388
        %v6022 = vunpack.c.l.b16 %v1389
        %v6023 = vunpack.c.h.b16 %v1389
        %v6024 = vunpack.c.l.b16 %v1390
        %v6025 = vunpack.c.h.b16 %v1390
        %v6026 = vunpack.c.l.b16 %v1391
        %v6027 = vunpack.c.h.b16 %v1391
        %v6028 = vunpack.c.l.b16 %v1392
        %v6029 = vunpack.c.h.b16 %v1392
        %v6030 = vunpack.c.l.b16 %v1393
        %v6031 = vunpack.c.h.b16 %v1393
        %v6032 = vunpack.c.l.b16 %v1394
        %v6033 = vunpack.c.h.b16 %v1394
        %v6034 = vunpack.c.l.b16 %v1395
        %v6035 = vunpack.c.h.b16 %v1395
        %v6036 = vunpack.c.l.b16 %v1396
        %v6037 = vunpack.c.h.b16 %v1396
        %v6038 = vunpack.c.l.b16 %v1397
        %v6039 = vunpack.c.h.b16 %v1397
        %v6040 = vunpack.c.l.b16 %v1398
        %v6041 = vunpack.c.h.b16 %v1398
        %v6042 = vunpack.c.l.b16 %v1399
        %v6043 = vunpack.c.h.b16 %v1399
        %v6044 = vunpack.c.l.b16 %v1400
        %v6045 = vunpack.c.h.b16 %v1400
        %v6046 = vunpack.c.l.b16 %v1401
        %v6047 = vunpack.c.h.b16 %v1401
        %v6048 = vunpack.c.l.b16 %v1402
        %v6049 = vunpack.c.h.b16 %v1402
        %v6050 = vunpack.c.l.b16 %v1403
        %v6051 = vunpack.c.h.b16 %v1403
        %v6052 = vunpack.c.l.b16 %v1404
        %v6053 = vunpack.c.h.b16 %v1404
        %v6054 = vunpack.c.l.b16 %v1405
        %v6055 = vunpack.c.h.b16 %v1405
        %v6056 = vunpack.c.l.b16 %v1406
        %v6057 = vunpack.c.h.b16 %v1406
        %v6058 = vunpack.c.l.b16 %v1407
        %v6059 = vunpack.c.h.b16 %v1407
        %v6060 = vunpack.c.l.b16 %v1408
        %v6061 = vunpack.c.h.b16 %v1408
        %v6062 = vunpack.c.l.b16 %v1409
        %v6063 = vunpack.c.h.b16 %v1409
        %v6064 = vunpack.c.l.b16 %v1410
        %v6065 = vunpack.c.h.b16 %v1410
        %v6066 = vunpack.c.l.b16 %v1411
        %v6067 = vunpack.c.h.b16 %v1411
        %v6068 = vunpack.c.l.b16 %v1412
        %v6069 = vunpack.c.h.b16 %v1412
        %v6070 = vunpack.c.l.b16 %v1413
        %v6071 = vunpack.c.h.b16 %v1413
        %v6072 = vunpack.c.l.b16 %v1414
        %v6073 = vunpack.c.h.b16 %v1414
        %v6074 = vunpack.c.l.b16 %v1415
        %v6075 = vunpack.c.h.b16 %v1415
        %v6076 = vunpack.c.l.b16 %v1416
        %v6077 = vunpack.c.h.b16 %v1416
        %v6078 = vunpack.c.l.b16 %v1417
        %v6079 = vunpack.c.h.b16 %v1417
        %v6080 = vunpack.c.l.b16 %v1418
        %v6081 = vunpack.c.h.b16 %v1418
        %v6082 = vunpack.c.l.b16 %v1419
        %v6083 = vunpack.c.h.b16 %v1419
        %v6084 = vunpack.c.l.b16 %v1420
        %v6085 = vunpack.c.h.b16 %v1420
        %v6086 = vunpack.c.l.b16 %v1421
        %v6087 = vunpack.c.h.b16 %v1421
        %v6088 = vunpack.c.l.b16 %v1422
        %v6089 = vunpack.c.h.b16 %v1422
        %v6090 = vunpack.c.l.b16 %v1423
        %v6091 = vunpack.c.h.b16 %v1423
        %v6092 = vunpack.c.l.b16 %v1424
        %v6093 = vunpack.c.h.b16 %v1424
        %v6094 = vunpack.c.l.b16 %v1425
        %v6095 = vunpack.c.h.b16 %v1425
        %v6096 = vunpack.c.l.b16 %v1426
        %v6097 = vunpack.c.h.b16 %v1426
        %v6098 = vunpack.c.l.b16 %v1427
        %v6099 = vunpack.c.h.b16 %v1427
        %v6100 = vunpack.c.l.b16 %v1428
        %v6101 = vunpack.c.h.b16 %v1428
        %v6102 = vunpack.c.l.b16 %v1429
        %v6103 = vunpack.c.h.b16 %v1429
        %v6104 = vunpack.c.l.b16 %v1430
        %v6105 = vunpack.c.h.b16 %v1430
        %v6106 = vunpack.c.l.b16 %v1431
        %v6107 = vunpack.c.h.b16 %v1431
        %v6108 = vunpack.c.l.b16 %v1432
        %v6109 = vunpack.c.h.b16 %v1432
        %v6110 = vunpack.c.l.b16 %v1433
        %v6111 = vunpack.c.h.b16 %v1433
        %v6112 = vunpack.c.l.b16 %v1434
        %v6113 = vunpack.c.h.b16 %v1434
        %v6114 = vunpack.c.l.b16 %v1435
        %v6115 = vunpack.c.h.b16 %v1435
        %v6116 = vunpack.c.l.b16 %v1436
        %v6117 = vunpack.c.h.b16 %v1436
        %v6118 = vunpack.c.l.b16 %v1437
        %v6119 = vunpack.c.h.b16 %v1437
        %v6120 = vunpack.c.l.b16 %v1438
        %v6121 = vunpack.c.h.b16 %v1438
        %v6122 = vunpack.c.l.b16 %v1439
        %v6123 = vunpack.c.h.b16 %v1439
        %v6124 = vunpack.c.l.b16 %v1440
        %v6125 = vunpack.c.h.b16 %v1440
        %v6126 = vunpack.c.l.b16 %v1441
        %v6127 = vunpack.c.h.b16 %v1441
        %v6128 = vunpack.c.l.b16 %v1442
        %v6129 = vunpack.c.h.b16 %v1442
        %v6130 = vunpack.c.l.b16 %v1443
        %v6131 = vunpack.c.h.b16 %v1443
        %v6132 = vunpack.c.l.b16 %v1444
        %v6133 = vunpack.c.h.b16 %v1444
        %v6134 = vunpack.c.l.b16 %v1445
        %v6135 = vunpack.c.h.b16 %v1445
        %v6136 = vunpack.c.l.b16 %v1446
        %v6137 = vunpack.c.h.b16 %v1446
        %v6138 = vunpack.c.l.b16 %v1447
        %v6139 = vunpack.c.h.b16 %v1447
        %v6140 = vunpack.c.l.b16 %v1448
        %v6141 = vunpack.c.h.b16 %v1448
        %v6142 = vunpack.c.l.b16 %v1449
        %v6143 = vunpack.c.h.b16 %v1449
        %v6144 = vunpack.c.l.b16 %v1450
        %v6145 = vunpack.c.h.b16 %v1450
        %v6146 = vunpack.c.l.b16 %v1451
        %v6147 = vunpack.c.h.b16 %v1451
        %v6148 = vunpack.c.l.b16 %v1452
        %v6149 = vunpack.c.h.b16 %v1452
        %v6150 = vunpack.c.l.b16 %v1453
        %v6151 = vunpack.c.h.b16 %v1453
        %v6152 = vunpack.c.l.b16 %v1454
        %v6153 = vunpack.c.h.b16 %v1454
        %v6154 = vunpack.c.l.b16 %v1455
        %v6155 = vunpack.c.h.b16 %v1455
        %v6156 = vunpack.c.l.b16 %v1456
        %v6157 = vunpack.c.h.b16 %v1456
        %v6158 = vunpack.c.l.b16 %v1457
        %v6159 = vunpack.c.h.b16 %v1457
        %v6160 = vunpack.c.l.b16 %v1458
        %v6161 = vunpack.c.h.b16 %v1458
        %v6162 = vunpack.c.l.b16 %v1459
        %v6163 = vunpack.c.h.b16 %v1459
        %v6164 = vunpack.c.l.b16 %v1460
        %v6165 = vunpack.c.h.b16 %v1460
        %v6166 = vunpack.c.l.b16 %v1461
        %v6167 = vunpack.c.h.b16 %v1461
        %v6168 = vunpack.c.l.b16 %v1462
        %v6169 = vunpack.c.h.b16 %v1462
        %v6170 = vunpack.c.l.b16 %v1463
        %v6171 = vunpack.c.h.b16 %v1463
        %v6172 = vunpack.c.l.b16 %v1464
        %v6173 = vunpack.c.h.b16 %v1464
        %v6174 = vunpack.c.l.b16 %v1465
        %v6175 = vunpack.c.h.b16 %v1465
        %v6176 = vunpack.c.l.b16 %v1466
        %v6177 = vunpack.c.h.b16 %v1466
        %v6178 = vunpack.c.l.b16 %v1467
        %v6179 = vunpack.c.h.b16 %v1467
        %v6180 = vunpack.c.l.b16 %v1468
        %v6181 = vunpack.c.h.b16 %v1468
        %v6182 = vunpack.c.l.b16 %v1469
        %v6183 = vunpack.c.h.b16 %v1469
        %v6184 = vunpack.c.l.b16 %v1470
        %v6185 = vunpack.c.h.b16 %v1470
        %v6186 = vunpack.c.l.b16 %v1471
        %v6187 = vunpack.c.h.b16 %v1471
        %v6188 = vunpack.c.l.b16 %v1472
        %v6189 = vunpack.c.h.b16 %v1472
        %v6190 = vunpack.c.l.b16 %v1473
        %v6191 = vunpack.c.h.b16 %v1473
        %v6192 = vunpack.c.l.b16 %v1474
        %v6193 = vunpack.c.h.b16 %v1474
        %v6194 = vunpack.c.l.b16 %v1475
        %v6195 = vunpack.c.h.b16 %v1475
        %v6196 = vunpack.c.l.b16 %v1476
        %v6197 = vunpack.c.h.b16 %v1476
        %v6198 = vunpack.c.l.b16 %v1477
        %v6199 = vunpack.c.h.b16 %v1477
        %v6200 = vunpack.c.l.b16 %v1478
        %v6201 = vunpack.c.h.b16 %v1478
        %v6202 = vunpack.c.l.b16 %v1479
        %v6203 = vunpack.c.h.b16 %v1479
        %v6204 = vunpack.c.l.b16 %v1480
        %v6205 = vunpack.c.h.b16 %v1480
        %v6206 = vunpack.c.l.b16 %v1481
        %v6207 = vunpack.c.h.b16 %v1481
        %v6208 = vunpack.c.l.b16 %v1482
        %v6209 = vunpack.c.h.b16 %v1482
        %v6210 = vunpack.c.l.b16 %v1483
        %v6211 = vunpack.c.h.b16 %v1483
        %v6212 = vunpack.c.l.b16 %v1484
        %v6213 = vunpack.c.h.b16 %v1484
        %v6214 = vunpack.c.l.b16 %v1485
        %v6215 = vunpack.c.h.b16 %v1485
        %v6216 = vunpack.c.l.b16 %v1486
        %v6217 = vunpack.c.h.b16 %v1486
        %v6218 = vunpack.c.l.b16 %v1487
        %v6219 = vunpack.c.h.b16 %v1487
        %v6220 = vunpack.c.l.b16 %v1488
        %v6221 = vunpack.c.h.b16 %v1488
        %v6222 = vunpack.c.l.b16 %v1489
        %v6223 = vunpack.c.h.b16 %v1489
        %v6224 = vunpack.c.l.b16 %v1490
        %v6225 = vunpack.c.h.b16 %v1490
        %v6226 = vunpack.c.l.b16 %v1491
        %v6227 = vunpack.c.h.b16 %v1491
        %v6228 = vunpack.c.l.b16 %v1492
        %v6229 = vunpack.c.h.b16 %v1492
        %v6230 = vunpack.c.l.b16 %v1493
        %v6231 = vunpack.c.h.b16 %v1493
        %v6232 = vunpack.c.l.b16 %v1494
        %v6233 = vunpack.c.h.b16 %v1494
        %v6234 = vunpack.c.l.b16 %v1495
        %v6235 = vunpack.c.h.b16 %v1495
        %v6236 = vunpack.c.l.b16 %v1496
        %v6237 = vunpack.c.h.b16 %v1496
        %v6238 = vunpack.c.l.b16 %v1497
        %v6239 = vunpack.c.h.b16 %v1497
        %v6240 = vunpack.c.l.b16 %v1498
        %v6241 = vunpack.c.h.b16 %v1498
        %v6242 = vunpack.c.l.b16 %v1499
        %v6243 = vunpack.c.h.b16 %v1499
        %v6244 = vunpack.c.l.b16 %v1500
        %v6245 = vunpack.c.h.b16 %v1500
        %v6246 = vunpack.c.l.b16 %v1501
        %v6247 = vunpack.c.h.b16 %v1501
        %v6248 = vunpack.c.l.b16 %v1502
        %v6249 = vunpack.c.h.b16 %v1502
        %v6250 = vunpack.c.l.b16 %v1503
        %v6251 = vunpack.c.h.b16 %v1503
        %v6252 = vunpack.c.l.b16 %v1504
        %v6253 = vunpack.c.h.b16 %v1504
        %v6254 = vunpack.c.l.b16 %v1505
        %v6255 = vunpack.c.h.b16 %v1505
        %v6256 = vunpack.c.l.b16 %v1506
        %v6257 = vunpack.c.h.b16 %v1506
        %v6258 = vunpack.c.l.b16 %v1507
        %v6259 = vunpack.c.h.b16 %v1507
        %v6260 = vunpack.c.l.b16 %v1508
        %v6261 = vunpack.c.h.b16 %v1508
        %v6262 = vunpack.c.l.b16 %v1509
        %v6263 = vunpack.c.h.b16 %v1509
        %v6264 = vunpack.c.l.b16 %v1510
        %v6265 = vunpack.c.h.b16 %v1510
        %v6266 = vunpack.c.l.b16 %v1511
        %v6267 = vunpack.c.h.b16 %v1511
        %v6268 = vunpack.c.l.b16 %v1512
        %v6269 = vunpack.c.h.b16 %v1512
        %v6270 = vunpack.c.l.b16 %v1513
        %v6271 = vunpack.c.h.b16 %v1513
        %v6272 = vunpack.c.l.b16 %v1514
        %v6273 = vunpack.c.h.b16 %v1514
        %v6274 = vunpack.c.l.b16 %v1515
        %v6275 = vunpack.c.h.b16 %v1515
        %v6276 = vunpack.c.l.b16 %v1516
        %v6277 = vunpack.c.h.b16 %v1516
        %v6278 = vunpack.c.l.b16 %v1517
        %v6279 = vunpack.c.h.b16 %v1517
        %v6280 = vunpack.c.l.b16 %v1518
        %v6281 = vunpack.c.h.b16 %v1518
        %v6282 = vunpack.c.l.b16 %v1519
        %v6283 = vunpack.c.h.b16 %v1519
        %v6284 = vunpack.c.l.b16 %v1520
        %v6285 = vunpack.c.h.b16 %v1520
        %v6286 = vunpack.c.l.b16 %v1521
        %v6287 = vunpack.c.h.b16 %v1521
        %v6288 = vunpack.c.l.b16 %v1522
        %v6289 = vunpack.c.h.b16 %v1522
        %v6290 = vunpack.c.l.b16 %v1523
        %v6291 = vunpack.c.h.b16 %v1523
        %v6292 = vunpack.c.l.b16 %v1524
        %v6293 = vunpack.c.h.b16 %v1524
        %v6294 = vunpack.c.l.b16 %v1525
        %v6295 = vunpack.c.h.b16 %v1525
        %v6296 = vunpack.c.l.b16 %v1526
        %v6297 = vunpack.c.h.b16 %v1526
        %v6298 = vunpack.c.l.b16 %v1527
        %v6299 = vunpack.c.h.b16 %v1527
        %v6300 = vunpack.c.l.b16 %v1528
        %v6301 = vunpack.c.h.b16 %v1528
        %v6302 = vunpack.c.l.b16 %v1529
        %v6303 = vunpack.c.h.b16 %v1529
        %v6304 = vunpack.c.l.b16 %v1530
        %v6305 = vunpack.c.h.b16 %v1530
        %v6306 = vunpack.c.l.b16 %v1531
        %v6307 = vunpack.c.h.b16 %v1531
        %v6308 = vunpack.c.l.b16 %v1532
        %v6309 = vunpack.c.h.b16 %v1532
        %v6310 = vunpack.c.l.b16 %v1533
        %v6311 = vunpack.c.h.b16 %v1533
        %v6312 = vunpack.c.l.b16 %v1534
        %v6313 = vunpack.c.h.b16 %v1534
        %v6314 = vunpack.c.l.b16 %v1535
        %v6315 = vunpack.c.h.b16 %v1535
        %v6316 = vunpack.c.l.b16 %v1536
        %v6317 = vunpack.c.h.b16 %v1536
        %v6318 = vunpack.c.l.b16 %v1537
        %v6319 = vunpack.c.h.b16 %v1537
        %v6320 = vunpack.c.l.b16 %v1538
        %v6321 = vunpack.c.h.b16 %v1538
        %v6322 = vunpack.c.l.b16 %v1539
        %v6323 = vunpack.c.h.b16 %v1539
        %v6324 = vunpack.c.l.b16 %v1540
        %v6325 = vunpack.c.h.b16 %v1540
        %v6326 = vunpack.c.l.b16 %v1541
        %v6327 = vunpack.c.h.b16 %v1541
        %v6328 = vunpack.c.l.b16 %v1542
        %v6329 = vunpack.c.h.b16 %v1542
        %v6330 = vunpack.c.l.b16 %v1543
        %v6331 = vunpack.c.h.b16 %v1543
        %v6332 = vunpack.c.l.b16 %v1544
        %v6333 = vunpack.c.h.b16 %v1544
        %v6334 = vunpack.c.l.b16 %v1545
        %v6335 = vunpack.c.h.b16 %v1545
        %v6336 = vunpack.c.l.b16 %v1546
        %v6337 = vunpack.c.h.b16 %v1546
        %v6338 = vunpack.c.l.b16 %v1547
        %v6339 = vunpack.c.h.b16 %v1547
        %v6340 = vunpack.c.l.b16 %v1548
        %v6341 = vunpack.c.h.b16 %v1548
        %v6342 = vunpack.c.l.b16 %v1549
        %v6343 = vunpack.c.h.b16 %v1549
        %v6344 = vunpack.c.l.b16 %v1550
        %v6345 = vunpack.c.h.b16 %v1550
        %v6346 = vunpack.c.l.b16 %v1551
        %v6347 = vunpack.c.h.b16 %v1551
        %v6348 = vunpack.c.l.b16 %v1552
        %v6349 = vunpack.c.h.b16 %v1552
        %v6350 = vunpack.c.l.b16 %v1553
        %v6351 = vunpack.c.h.b16 %v1553
        %v6352 = vunpack.c.l.b16 %v1554
        %v6353 = vunpack.c.h.b16 %v1554
        %v6354 = vunpack.c.l.b16 %v1555
        %v6355 = vunpack.c.h.b16 %v1555
        %v6356 = vunpack.c.l.b16 %v1556
        %v6357 = vunpack.c.h.b16 %v1556
        %v6358 = vunpack.c.l.b16 %v1557
        %v6359 = vunpack.c.h.b16 %v1557
        %v6360 = vunpack.c.l.b16 %v1558
        %v6361 = vunpack.c.h.b16 %v1558
        %v6362 = vunpack.c.l.b16 %v1559
        %v6363 = vunpack.c.h.b16 %v1559
        %v6364 = vunpack.c.l.b16 %v1560
        %v6365 = vunpack.c.h.b16 %v1560
        %v6366 = vunpack.c.l.b16 %v1561
        %v6367 = vunpack.c.h.b16 %v1561
        %v6368 = vunpack.c.l.b16 %v1562
        %v6369 = vunpack.c.h.b16 %v1562
        %v6370 = vunpack.c.l.b16 %v1563
        %v6371 = vunpack.c.h.b16 %v1563
        %v6372 = vunpack.c.l.b16 %v1564
        %v6373 = vunpack.c.h.b16 %v1564
        %v6374 = vunpack.c.l.b16 %v1565
        %v6375 = vunpack.c.h.b16 %v1565
        %v6376 = vunpack.c.l.b16 %v1566
        %v6377 = vunpack.c.h.b16 %v1566
        %v6378 = vunpack.c.l.b16 %v1567
        %v6379 = vunpack.c.h.b16 %v1567
        %v6380 = vunpack.c.l.b16 %v1568
        %v6381 = vunpack.c.h.b16 %v1568
        %v6382 = vunpack.c.l.b16 %v1569
        %v6383 = vunpack.c.h.b16 %v1569
        %v6384 = vunpack.c.l.b16 %v1570
        %v6385 = vunpack.c.h.b16 %v1570
        %v6386 = vunpack.c.l.b16 %v1571
        %v6387 = vunpack.c.h.b16 %v1571
        %v6388 = vunpack.c.l.b16 %v1572
        %v6389 = vunpack.c.h.b16 %v1572
        %v6390 = vunpack.c.l.b16 %v1573
        %v6391 = vunpack.c.h.b16 %v1573
        %v6392 = vunpack.c.l.b16 %v1574
        %v6393 = vunpack.c.h.b16 %v1574
        %v6394 = vunpack.c.l.b16 %v1575
        %v6395 = vunpack.c.h.b16 %v1575
        %v6396 = vunpack.c.l.b16 %v1576
        %v6397 = vunpack.c.h.b16 %v1576
        %v6398 = vunpack.c.l.b16 %v1577
        %v6399 = vunpack.c.h.b16 %v1577
        %v6400 = vunpack.c.l.b16 %v1578
        %v6401 = vunpack.c.h.b16 %v1578
        %v6402 = vunpack.c.l.b16 %v1579
        %v6403 = vunpack.c.h.b16 %v1579
        %v6404 = vunpack.c.l.b16 %v1580
        %v6405 = vunpack.c.h.b16 %v1580
        %v6406 = vunpack.c.l.b16 %v1581
        %v6407 = vunpack.c.h.b16 %v1581
        %v6408 = vunpack.c.l.b16 %v1582
        %v6409 = vunpack.c.h.b16 %v1582
        %v6410 = vunpack.c.l.b16 %v1583
        %v6411 = vunpack.c.h.b16 %v1583
        %v6412 = vunpack.c.l.b16 %v1584
        %v6413 = vunpack.c.h.b16 %v1584
        %v6414 = vunpack.c.l.b16 %v1585
        %v6415 = vunpack.c.h.b16 %v1585
        %v6416 = vunpack.c.l.b16 %v1586
        %v6417 = vunpack.c.h.b16 %v1586
        %v6418 = vunpack.c.l.b16 %v1587
        %v6419 = vunpack.c.h.b16 %v1587
        %v6420 = vunpack.c.l.b16 %v1588
        %v6421 = vunpack.c.h.b16 %v1588
        %v6422 = vunpack.c.l.b16 %v1589
        %v6423 = vunpack.c.h.b16 %v1589
        %v6424 = vunpack.c.l.b16 %v1590
        %v6425 = vunpack.c.h.b16 %v1590
        %v6426 = vunpack.c.l.b16 %v1591
        %v6427 = vunpack.c.h.b16 %v1591
        %v6428 = vunpack.c.l.b16 %v1592
        %v6429 = vunpack.c.h.b16 %v1592
        %v6430 = vunpack.c.l.b16 %v1593
        %v6431 = vunpack.c.h.b16 %v1593
        %v6432 = vunpack.c.l.b16 %v1594
        %v6433 = vunpack.c.h.b16 %v1594
        %v6434 = vunpack.c.l.b16 %v1595
        %v6435 = vunpack.c.h.b16 %v1595
        %v6436 = vunpack.c.l.b16 %v1596
        %v6437 = vunpack.c.h.b16 %v1596
        %v6438 = vunpack.c.l.b16 %v1597
        %v6439 = vunpack.c.h.b16 %v1597
        %v6440 = vunpack.c.l.b16 %v1598
        %v6441 = vunpack.c.h.b16 %v1598
        %v6442 = vunpack.c.l.b16 %v1599
        %v6443 = vunpack.c.h.b16 %v1599
        %v6444 = vunpack.c.l.b16 %v1600
        %v6445 = vunpack.c.h.b16 %v1600
        %v6446 = vunpack.c.l.b16 %v1601
        %v6447 = vunpack.c.h.b16 %v1601
        %v6448 = vunpack.c.l.b16 %v1602
        %v6449 = vunpack.c.h.b16 %v1602
        %v6450 = vunpack.c.l.b16 %v1603
        %v6451 = vunpack.c.h.b16 %v1603
        %v6452 = vunpack.c.l.b16 %v1604
        %v6453 = vunpack.c.h.b16 %v1604
        %v6454 = vunpack.c.l.b16 %v1605
        %v6455 = vunpack.c.h.b16 %v1605
        %v6456 = vunpack.c.l.b16 %v1606
        %v6457 = vunpack.c.h.b16 %v1606
        %v6458 = vunpack.c.l.b16 %v1607
        %v6459 = vunpack.c.h.b16 %v1607
        %v6460 = vunpack.c.l.b16 %v1608
        %v6461 = vunpack.c.h.b16 %v1608
        %v6462 = vunpack.c.l.b16 %v1609
        %v6463 = vunpack.c.h.b16 %v1609
        %v6464 = vunpack.c.l.b16 %v1610
        %v6465 = vunpack.c.h.b16 %v1610
        %v6466 = vunpack.c.l.b16 %v1611
        %v6467 = vunpack.c.h.b16 %v1611
        %v6468 = vunpack.c.l.b16 %v1612
        %v6469 = vunpack.c.h.b16 %v1612
        %v6470 = vunpack.c.l.b16 %v1613
        %v6471 = vunpack.c.h.b16 %v1613
        %v6472 = vunpack.c.l.b16 %v1614
        %v6473 = vunpack.c.h.b16 %v1614
        %v6474 = vunpack.c.l.b16 %v1615
        %v6475 = vunpack.c.h.b16 %v1615
        %v6476 = vunpack.c.l.b16 %v1616
        %v6477 = vunpack.c.h.b16 %v1616
        %v6478 = vunpack.c.l.b16 %v1617
        %v6479 = vunpack.c.h.b16 %v1617
        %v6480 = vunpack.c.l.b16 %v1618
        %v6481 = vunpack.c.h.b16 %v1618
        %v6482 = vunpack.c.l.b16 %v1619
        %v6483 = vunpack.c.h.b16 %v1619
        %v6484 = vunpack.c.l.b16 %v1620
        %v6485 = vunpack.c.h.b16 %v1620
        %v6486 = vunpack.c.l.b16 %v1621
        %v6487 = vunpack.c.h.b16 %v1621
        %v6488 = vunpack.c.l.b16 %v1622
        %v6489 = vunpack.c.h.b16 %v1622
        %v6490 = vunpack.c.l.b16 %v1623
        %v6491 = vunpack.c.h.b16 %v1623
        %v6492 = vunpack.c.l.b16 %v1624
        %v6493 = vunpack.c.h.b16 %v1624
        %v6494 = vunpack.c.l.b16 %v1625
        %v6495 = vunpack.c.h.b16 %v1625
        %v6496 = vunpack.c.l.b16 %v1626
        %v6497 = vunpack.c.h.b16 %v1626
        %v6498 = vunpack.c.l.b16 %v1627
        %v6499 = vunpack.c.h.b16 %v1627
        %v6500 = vunpack.c.l.b16 %v1628
        %v6501 = vunpack.c.h.b16 %v1628
        %v6502 = vunpack.c.l.b16 %v1629
        %v6503 = vunpack.c.h.b16 %v1629
        %v6504 = vunpack.c.l.b16 %v1630
        %v6505 = vunpack.c.h.b16 %v1630
        %v6506 = vunpack.c.l.b16 %v1631
        %v6507 = vunpack.c.h.b16 %v1631
        %v6508 = vunpack.c.l.b16 %v1632
        %v6509 = vunpack.c.h.b16 %v1632
        %v6510 = vunpack.c.l.b16 %v1633
        %v6511 = vunpack.c.h.b16 %v1633
        %v6512 = vunpack.c.l.b16 %v1634
        %v6513 = vunpack.c.h.b16 %v1634
        %v6514 = vunpack.c.l.b16 %v1635
        %v6515 = vunpack.c.h.b16 %v1635
        %v6516 = vunpack.c.l.b16 %v1636
        %v6517 = vunpack.c.h.b16 %v1636
        %v6518 = vunpack.c.l.b16 %v1637
        %v6519 = vunpack.c.h.b16 %v1637
        %v6520 = vunpack.c.l.b16 %v1638
        %v6521 = vunpack.c.h.b16 %v1638
        %v6522 = vunpack.c.l.b16 %v1639
        %v6523 = vunpack.c.h.b16 %v1639
        %v6524 = vunpack.c.l.b16 %v1640
        %v6525 = vunpack.c.h.b16 %v1640
        %v6526 = vunpack.c.l.b16 %v1641
        %v6527 = vunpack.c.h.b16 %v1641
        %v6528 = vunpack.c.l.b16 %v1642
        %v6529 = vunpack.c.h.b16 %v1642
        %v6530 = vunpack.c.l.b16 %v1643
        %v6531 = vunpack.c.h.b16 %v1643
        %v6532 = vunpack.c.l.b16 %v1644
        %v6533 = vunpack.c.h.b16 %v1644
        %v6534 = vunpack.c.l.b16 %v1645
        %v6535 = vunpack.c.h.b16 %v1645
        %v6536 = vunpack.c.l.b16 %v1646
        %v6537 = vunpack.c.h.b16 %v1646
        %v6538 = vunpack.c.l.b16 %v1647
        %v6539 = vunpack.c.h.b16 %v1647
        %v6540 = vunpack.c.l.b16 %v1648
        %v6541 = vunpack.c.h.b16 %v1648
        %v6542 = vunpack.c.l.b16 %v1649
        %v6543 = vunpack.c.h.b16 %v1649
        %v6544 = vunpack.c.l.b16 %v1650
        %v6545 = vunpack.c.h.b16 %v1650
        %v6546 = vunpack.c.l.b16 %v1651
        %v6547 = vunpack.c.h.b16 %v1651
        %v6548 = vunpack.c.l.b16 %v1652
        %v6549 = vunpack.c.h.b16 %v1652
        %v6550 = vunpack.c.l.b16 %v1653
        %v6551 = vunpack.c.h.b16 %v1653
        %v6552 = vunpack.c.l.b16 %v1654
        %v6553 = vunpack.c.h.b16 %v1654
        %v6554 = vunpack.c.l.b16 %v1655
        %v6555 = vunpack.c.h.b16 %v1655
        %v6556 = vunpack.c.l.b16 %v1656
        %v6557 = vunpack.c.h.b16 %v1656
        %v6558 = vunpack.c.l.b16 %v1657
        %v6559 = vunpack.c.h.b16 %v1657
        %v6560 = vunpack.c.l.b16 %v1658
        %v6561 = vunpack.c.h.b16 %v1658
        %v6562 = vunpack.c.l.b16 %v1659
        %v6563 = vunpack.c.h.b16 %v1659
        %v6564 = vunpack.c.l.b16 %v1660
        %v6565 = vunpack.c.h.b16 %v1660
        %v6566 = vunpack.c.l.b16 %v1661
        %v6567 = vunpack.c.h.b16 %v1661
        %v6568 = vunpack.c.l.b16 %v1662
        %v6569 = vunpack.c.h.b16 %v1662
        %v6570 = vunpack.c.l.b16 %v1663
        %v6571 = vunpack.c.h.b16 %v1663
        %v6572 = vunpack.c.l.b16 %v1664
        %v6573 = vunpack.c.h.b16 %v1664
        %v6574 = vunpack.c.l.b16 %v1665
        %v6575 = vunpack.c.h.b16 %v1665
        %v6576 = vunpack.c.l.b16 %v1666
        %v6577 = vunpack.c.h.b16 %v1666
        %v6578 = vunpack.c.l.b16 %v1667
        %v6579 = vunpack.c.h.b16 %v1667
        %v6580 = vunpack.c.l.b16 %v1668
        %v6581 = vunpack.c.h.b16 %v1668
        %v6582 = vunpack.c.l.b16 %v1669
        %v6583 = vunpack.c.h.b16 %v1669
        %v6584 = vunpack.c.l.b16 %v1670
        %v6585 = vunpack.c.h.b16 %v1670
        %v6586 = vunpack.c.l.b16 %v1671
        %v6587 = vunpack.c.h.b16 %v1671
        %v6588 = vunpack.c.l.b16 %v1672
        %v6589 = vunpack.c.h.b16 %v1672
        %v6590 = vunpack.c.l.b16 %v1673
        %v6591 = vunpack.c.h.b16 %v1673
        %v6592 = vunpack.c.l.b16 %v1674
        %v6593 = vunpack.c.h.b16 %v1674
        %v6594 = vunpack.c.l.b16 %v1675
        %v6595 = vunpack.c.h.b16 %v1675
        %v6596 = vunpack.c.l.b16 %v1676
        %v6597 = vunpack.c.h.b16 %v1676
        %v6598 = vunpack.c.l.b16 %v1677
        %v6599 = vunpack.c.h.b16 %v1677
        %v6600 = vunpack.c.l.b16 %v1678
        %v6601 = vunpack.c.h.b16 %v1678
        %v6602 = vunpack.c.l.b16 %v1679
        %v6603 = vunpack.c.h.b16 %v1679
        %v6604 = vunpack.c.l.b16 %v1680
        %v6605 = vunpack.c.h.b16 %v1680
        %v6606 = vunpack.c.l.b16 %v1681
        %v6607 = vunpack.c.h.b16 %v1681
        %v6608 = vunpack.c.l.b16 %v1682
        %v6609 = vunpack.c.h.b16 %v1682
        %v6610 = vunpack.c.l.b16 %v1683
        %v6611 = vunpack.c.h.b16 %v1683
        %v6612 = vunpack.c.l.b16 %v1684
        %v6613 = vunpack.c.h.b16 %v1684
        %v6614 = vunpack.c.l.b16 %v1685
        %v6615 = vunpack.c.h.b16 %v1685
        %v6616 = vunpack.c.l.b16 %v1686
        %v6617 = vunpack.c.h.b16 %v1686
        %v6618 = vunpack.c.l.b16 %v1687
        %v6619 = vunpack.c.h.b16 %v1687
        %v6620 = vunpack.c.l.b16 %v1688
        %v6621 = vunpack.c.h.b16 %v1688
        %v6622 = vunpack.c.l.b16 %v1689
        %v6623 = vunpack.c.h.b16 %v1689
        %v6624 = vunpack.c.l.b16 %v1690
        %v6625 = vunpack.c.h.b16 %v1690
        %v6626 = vunpack.c.l.b16 %v1691
        %v6627 = vunpack.c.h.b16 %v1691
        %v6628 = vunpack.c.l.b16 %v1692
        %v6629 = vunpack.c.h.b16 %v1692
        %v6630 = vunpack.c.l.b16 %v1693
        %v6631 = vunpack.c.h.b16 %v1693
        %v6632 = vunpack.c.l.b16 %v1694
        %v6633 = vunpack.c.h.b16 %v1694
        %v6634 = vunpack.c.l.b16 %v1695
        %v6635 = vunpack.c.h.b16 %v1695
        %v6636 = vunpack.c.l.b16 %v1696
        %v6637 = vunpack.c.h.b16 %v1696
        %v6638 = vunpack.c.l.b16 %v1697
        %v6639 = vunpack.c.h.b16 %v1697
        %v6640 = vunpack.c.l.b16 %v1698
        %v6641 = vunpack.c.h.b16 %v1698
        %v6642 = vunpack.c.l.b16 %v1699
        %v6643 = vunpack.c.h.b16 %v1699
        %v6644 = vunpack.c.l.b16 %v1700
        %v6645 = vunpack.c.h.b16 %v1700
        %v6646 = vunpack.c.l.b16 %v1701
        %v6647 = vunpack.c.h.b16 %v1701
        %v6648 = vunpack.c.l.b16 %v1702
        %v6649 = vunpack.c.h.b16 %v1702
        %v6650 = vunpack.c.l.b16 %v1703
        %v6651 = vunpack.c.h.b16 %v1703
        %v6652 = vunpack.c.l.b16 %v1704
        %v6653 = vunpack.c.h.b16 %v1704
        %v6654 = vunpack.c.l.b16 %v1705
        %v6655 = vunpack.c.h.b16 %v1705
        %v6656 = vunpack.c.l.b16 %v1706
        %v6657 = vunpack.c.h.b16 %v1706
        %v6658 = vunpack.c.l.b16 %v1707
        %v6659 = vunpack.c.h.b16 %v1707
        %v6660 = vunpack.c.l.b16 %v1708
        %v6661 = vunpack.c.h.b16 %v1708
        %v6662 = vunpack.c.l.b16 %v1709
        %v6663 = vunpack.c.h.b16 %v1709
        %v6664 = vunpack.c.l.b16 %v1710
        %v6665 = vunpack.c.h.b16 %v1710
        %v6666 = vunpack.c.l.b16 %v1711
        %v6667 = vunpack.c.h.b16 %v1711
        %v6668 = vunpack.c.l.b16 %v1712
        %v6669 = vunpack.c.h.b16 %v1712
        %v6670 = vunpack.c.l.b16 %v1713
        %v6671 = vunpack.c.h.b16 %v1713
        %v6672 = vunpack.c.l.b16 %v1714
        %v6673 = vunpack.c.h.b16 %v1714
        %v6674 = vunpack.c.l.b16 %v1715
        %v6675 = vunpack.c.h.b16 %v1715
        %v6676 = vunpack.c.l.b16 %v1716
        %v6677 = vunpack.c.h.b16 %v1716
        %v6678 = vunpack.c.l.b16 %v1717
        %v6679 = vunpack.c.h.b16 %v1717
        %v6680 = vunpack.c.l.b16 %v1718
        %v6681 = vunpack.c.h.b16 %v1718
        %v6682 = vunpack.c.l.b16 %v1719
        %v6683 = vunpack.c.h.b16 %v1719
        %v6684 = vunpack.c.l.b16 %v1720
        %v6685 = vunpack.c.h.b16 %v1720
        %v6686 = vunpack.c.l.b16 %v1721
        %v6687 = vunpack.c.h.b16 %v1721
        %v6688 = vunpack.c.l.b16 %v1722
        %v6689 = vunpack.c.h.b16 %v1722
        %v6690 = vunpack.c.l.b16 %v1723
        %v6691 = vunpack.c.h.b16 %v1723
        %v6692 = vunpack.c.l.b16 %v1724
        %v6693 = vunpack.c.h.b16 %v1724
        %v6694 = vunpack.c.l.b16 %v1725
        %v6695 = vunpack.c.h.b16 %v1725
        %v6696 = vunpack.c.l.b16 %v1726
        %v6697 = vunpack.c.h.b16 %v1726
        %v6698 = vunpack.c.l.b16 %v1727
        %v6699 = vunpack.c.h.b16 %v1727
        %v6700 = vunpack.c.l.b16 %v1728
        %v6701 = vunpack.c.h.b16 %v1728
        %v6702 = vunpack.c.l.b16 %v1729
        %v6703 = vunpack.c.h.b16 %v1729
        %v6704 = vunpack.c.l.b16 %v1730
        %v6705 = vunpack.c.h.b16 %v1730
        %v6706 = vunpack.c.l.b16 %v1731
        %v6707 = vunpack.c.h.b16 %v1731
        %v6708 = vunpack.c.l.b16 %v1732
        %v6709 = vunpack.c.h.b16 %v1732
        %v6710 = vunpack.c.l.b16 %v1733
        %v6711 = vunpack.c.h.b16 %v1733
        %v6712 = vunpack.c.l.b16 %v1734
        %v6713 = vunpack.c.h.b16 %v1734
        %v6714 = vunpack.c.l.b16 %v1735
        %v6715 = vunpack.c.h.b16 %v1735
        %v6716 = vunpack.c.l.b16 %v1736
        %v6717 = vunpack.c.h.b16 %v1736
        %v6718 = vunpack.c.l.b16 %v1737
        %v6719 = vunpack.c.h.b16 %v1737
        %v6720 = vunpack.c.l.b16 %v1738
        %v6721 = vunpack.c.h.b16 %v1738
        %v6722 = vunpack.c.l.b16 %v1739
        %v6723 = vunpack.c.h.b16 %v1739
        %v6724 = vunpack.c.l.b16 %v1740
        %v6725 = vunpack.c.h.b16 %v1740
        %v6726 = vunpack.c.l.b16 %v1741
        %v6727 = vunpack.c.h.b16 %v1741
        %v6728 = vunpack.c.l.b16 %v1742
        %v6729 = vunpack.c.h.b16 %v1742
        %v6730 = vunpack.c.l.b16 %v1743
        %v6731 = vunpack.c.h.b16 %v1743
        %v6732 = vunpack.c.l.b16 %v1744
        %v6733 = vunpack.c.h.b16 %v1744
        %v6734 = vunpack.c.l.b16 %v1745
        %v6735 = vunpack.c.h.b16 %v1745
        %v6736 = vunpack.c.l.b16 %v1746
        %v6737 = vunpack.c.h.b16 %v1746
        %v6738 = vunpack.c.l.b16 %v1747
        %v6739 = vunpack.c.h.b16 %v1747
        %v6740 = vunpack.c.l.b16 %v1748
        %v6741 = vunpack.c.h.b16 %v1748
        %v6742 = vunpack.c.l.b16 %v1749
        %v6743 = vunpack.c.h.b16 %v1749
        %v6744 = vunpack.c.l.b16 %v1750
        %v6745 = vunpack.c.h.b16 %v1750
        %v6746 = vunpack.c.l.b16 %v1751
        %v6747 = vunpack.c.h.b16 %v1751
        %v6748 = vunpack.c.l.b16 %v1752
        %v6749 = vunpack.c.h.b16 %v1752
        %v6750 = vunpack.c.l.b16 %v1753
        %v6751 = vunpack.c.h.b16 %v1753
        %v6752 = vunpack.c.l.b16 %v1754
        %v6753 = vunpack.c.h.b16 %v1754
        %v6754 = vunpack.c.l.b16 %v1755
        %v6755 = vunpack.c.h.b16 %v1755
        %v6756 = vunpack.c.l.b16 %v1756
        %v6757 = vunpack.c.h.b16 %v1756
        %v6758 = vunpack.c.l.b16 %v1757
        %v6759 = vunpack.c.h.b16 %v1757
        %v6760 = vunpack.c.l.b16 %v1758
        %v6761 = vunpack.c.h.b16 %v1758
        %v6762 = vunpack.c.l.b16 %v1759
        %v6763 = vunpack.c.h.b16 %v1759
        %v6764 = vunpack.c.l.b16 %v1760
        %v6765 = vunpack.c.h.b16 %v1760
        %v6766 = vunpack.c.l.b16 %v1761
        %v6767 = vunpack.c.h.b16 %v1761
        %v6768 = vunpack.c.l.b16 %v1762
        %v6769 = vunpack.c.h.b16 %v1762
        %v6770 = vunpack.c.l.b16 %v1763
        %v6771 = vunpack.c.h.b16 %v1763
        %v6772 = vunpack.c.l.b16 %v1764
        %v6773 = vunpack.c.h.b16 %v1764
        %v6774 = vunpack.c.l.b16 %v1765
        %v6775 = vunpack.c.h.b16 %v1765
        %v6776 = vunpack.c.l.b16 %v1766
        %v6777 = vunpack.c.h.b16 %v1766
        %v6778 = vunpack.c.l.b16 %v1767
        %v6779 = vunpack.c.h.b16 %v1767
        %v6780 = vunpack.c.l.b16 %v1768
        %v6781 = vunpack.c.h.b16 %v1768
        %v6782 = vunpack.c.l.b16 %v1769
        %v6783 = vunpack.c.h.b16 %v1769
        %v6784 = vunpack.c.l.b16 %v1770
        %v6785 = vunpack.c.h.b16 %v1770
        %v6786 = vunpack.c.l.b16 %v1771
        %v6787 = vunpack.c.h.b16 %v1771
        %v6788 = vunpack.c.l.b16 %v1772
        %v6789 = vunpack.c.h.b16 %v1772
        %v6790 = vunpack.c.l.b16 %v1773
        %v6791 = vunpack.c.h.b16 %v1773
        %v6792 = vunpack.c.l.b16 %v1774
        %v6793 = vunpack.c.h.b16 %v1774
        %v6794 = vunpack.c.l.b16 %v1775
        %v6795 = vunpack.c.h.b16 %v1775
        %v6796 = vunpack.c.l.b16 %v1776
        %v6797 = vunpack.c.h.b16 %v1776
        %v6798 = vunpack.c.l.b16 %v1777
        %v6799 = vunpack.c.h.b16 %v1777
        %v6800 = vunpack.c.l.b16 %v1778
        %v6801 = vunpack.c.h.b16 %v1778
        %v6802 = vunpack.c.l.b16 %v1779
        %v6803 = vunpack.c.h.b16 %v1779
        %v6804 = vunpack.c.l.b16 %v1780
        %v6805 = vunpack.c.h.b16 %v1780
        %v6806 = vunpack.c.l.b16 %v1781
        %v6807 = vunpack.c.h.b16 %v1781
        %v6808 = vunpack.c.l.b16 %v1782
        %v6809 = vunpack.c.h.b16 %v1782
        %v6810 = vunpack.c.l.b16 %v1783
        %v6811 = vunpack.c.h.b16 %v1783
        %v6812 = vunpack.c.l.b16 %v1784
        %v6813 = vunpack.c.h.b16 %v1784
        %v6814 = vunpack.c.l.b16 %v1785
        %v6815 = vunpack.c.h.b16 %v1785
        %v6816 = vunpack.c.l.b16 %v1786
        %v6817 = vunpack.c.h.b16 %v1786
        %v6818 = vunpack.c.l.b16 %v1787
        %v6819 = vunpack.c.h.b16 %v1787
        %v6820 = vunpack.c.l.b16 %v1788
        %v6821 = vunpack.c.h.b16 %v1788
        %v6822 = vunpack.c.l.b16 %v1789
        %v6823 = vunpack.c.h.b16 %v1789
        %v6824 = vunpack.c.l.b16 %v1790
        %v6825 = vunpack.c.h.b16 %v1790
        %v6826 = vunpack.c.l.b16 %v1791
        %v6827 = vunpack.c.h.b16 %v1791
        %v6828 = vunpack.c.l.b16 %v1792
        %v6829 = vunpack.c.h.b16 %v1792
        %v6830 = vunpack.c.l.b16 %v1793
        %v6831 = vunpack.c.h.b16 %v1793
        %v6832 = vunpack.c.l.b16 %v1794
        %v6833 = vunpack.c.h.b16 %v1794
        %v6834 = vunpack.c.l.b16 %v1795
        %v6835 = vunpack.c.h.b16 %v1795
        %v6836 = vunpack.c.l.b16 %v1796
        %v6837 = vunpack.c.h.b16 %v1796
        %v6838 = vunpack.c.l.b16 %v1797
        %v6839 = vunpack.c.h.b16 %v1797
        %v6840 = vunpack.c.l.b16 %v1798
        %v6841 = vunpack.c.h.b16 %v1798
        %v6842 = vunpack.c.l.b16 %v1799
        %v6843 = vunpack.c.h.b16 %v1799
        %v6844 = vunpack.c.l.b16 %v1800
        %v6845 = vunpack.c.h.b16 %v1800
        %v6846 = vunpack.c.l.b16 %v1801
        %v6847 = vunpack.c.h.b16 %v1801
        %v6848 = vunpack.c.l.b16 %v1802
        %v6849 = vunpack.c.h.b16 %v1802
        %v6850 = vunpack.c.l.b16 %v1803
        %v6851 = vunpack.c.h.b16 %v1803
        %v6852 = vunpack.c.l.b16 %v1804
        %v6853 = vunpack.c.h.b16 %v1804
        %v6854 = vunpack.c.l.b16 %v1805
        %v6855 = vunpack.c.h.b16 %v1805
        %v6856 = vunpack.c.l.b16 %v1806
        %v6857 = vunpack.c.h.b16 %v1806
        %v6858 = vunpack.c.l.b16 %v1807
        %v6859 = vunpack.c.h.b16 %v1807
        %v6860 = vunpack.c.l.b16 %v1808
        %v6861 = vunpack.c.h.b16 %v1808
        %v6862 = vunpack.c.l.b16 %v1809
        %v6863 = vunpack.c.h.b16 %v1809
        %v6864 = vunpack.c.l.b16 %v1810
        %v6865 = vunpack.c.h.b16 %v1810
        %v6866 = vunpack.c.l.b16 %v1811
        %v6867 = vunpack.c.h.b16 %v1811
        %v6868 = vunpack.c.l.b16 %v1812
        %v6869 = vunpack.c.h.b16 %v1812
        %v6870 = vunpack.c.l.b16 %v1813
        %v6871 = vunpack.c.h.b16 %v1813
        %v6872 = vunpack.c.l.b16 %v1814
        %v6873 = vunpack.c.h.b16 %v1814
        %v6874 = vunpack.c.l.b16 %v1815
        %v6875 = vunpack.c.h.b16 %v1815
        %v6876 = vunpack.c.l.b16 %v1816
        %v6877 = vunpack.c.h.b16 %v1816
        %v6878 = vunpack.c.l.b16 %v1817
        %v6879 = vunpack.c.h.b16 %v1817
        %v6880 = vunpack.c.l.b16 %v1818
        %v6881 = vunpack.c.h.b16 %v1818
        %v6882 = vunpack.c.l.b16 %v1819
        %v6883 = vunpack.c.h.b16 %v1819
        %v6884 = vpack.c.b16 %v3734, %v3684
        %v6885 = vpack.c.b16 %v3735, %v3685
        %v6886 = vpack.c.b16 %v3736, %v3686
        %v6887 = vpack.c.b16 %v3737, %v3687
        %v6888 = vpack.c.b16 %v3738, %v3688
        %v6889 = vpack.c.b16 %v3739, %v3689
        %v6890 = vpack.c.b16 %v3740, %v3690
        %v6891 = vpack.c.b16 %v3741, %v3691
        %v6892 = vpack.c.b16 %v3742, %v3692
        %v6893 = vpack.c.b16 %v3743, %v3693
        %v6894 = vpack.c.b16 %v3744, %v3694
        %v6895 = vpack.c.b16 %v3745, %v3695
        %v6896 = vpack.c.b16 %v3746, %v3696
        %v6897 = vpack.c.b16 %v3747, %v3697
        %v6898 = vpack.c.b16 %v3748, %v3698
        %v6899 = vpack.c.b16 %v3749, %v3699
        %v6900 = vpack.c.b16 %v3750, %v3700
        %v6901 = vpack.c.b16 %v3751, %v3701
        %v6902 = vpack.c.b16 %v3752, %v3702
        %v6903 = vpack.c.b16 %v3753, %v3703
        %v6904 = vpack.c.b16 %v3754, %v3704
        %v6905 = vpack.c.b16 %v3755, %v3705
        %v6906 = vpack.c.b16 %v3756, %v3706
        %v6907 = vpack.c.b16 %v3757, %v3707
        %v6908 = vpack.c.b16 %v3758, %v3708
        %v6909 = vpack.c.b16 %v3759, %v3709
        %v6910 = vpack.c.b16 %v3760, %v3710
        %v6911 = vpack.c.b16 %v3761, %v3711
        %v6912 = vpack.c.b16 %v3762, %v3712
        %v6913 = vpack.c.b16 %v3763, %v3713
        %v6914 = vpack.c.b16 %v3764, %v3714
        %v6915 = vpack.c.b16 %v3765, %v3715
        %v6916 = vpack.c.b16 %v3766, %v3716
        %v6917 = vpack.c.b16 %v3767, %v3717
        %v6918 = vpack.c.b16 %v3768, %v3718
        %v6919 = vpack.c.b16 %v3769, %v3719
        %v6920 = vpack.c.b16 %v3770, %v3720
        %v6921 = vpack.c.b16 %v3771, %v3721
        %v6922 = vpack.c.b16 %v3772, %v3722
        %v6923 = vpack.c.b16 %v3773, %v3723
        %v6924 = vpack.c.b16 %v3774, %v3724
        %v6925 = vpack.c.b16 %v3775, %v3725
        %v6926 = vpack.c.b16 %v3776, %v3726
        %v6927 = vpack.c.b16 %v3777, %v3727
        %v6928 = vpack.c.b16 %v3778, %v3728
        %v6929 = vpack.c.b16 %v3779, %v3729
        %v6930 = vpack.c.b16 %v3780, %v3730
        %v6931 = vpack.c.b16 %v3781, %v3731
        %v6932 = vpack.c.b16 %v3782, %v3732
        %v6933 = vpack.c.b16 %v3783, %v3733
        %v6934 = vpack.c.b16 %v3834, %v3784
        %v6935 = vpack.c.b16 %v3835, %v3785
        %v6936 = vpack.c.b16 %v3836, %v3786
        %v6937 = vpack.c.b16 %v3837, %v3787
        %v6938 = vpack.c.b16 %v3838, %v3788
        %v6939 = vpack.c.b16 %v3839, %v3789
        %v6940 = vpack.c.b16 %v3840, %v3790
        %v6941 = vpack.c.b16 %v3841, %v3791
        %v6942 = vpack.c.b16 %v3842, %v3792
        %v6943 = vpack.c.b16 %v3843, %v3793
        %v6944 = vpack.c.b16 %v3844, %v3794
        %v6945 = vpack.c.b16 %v3845, %v3795
        %v6946 = vpack.c.b16 %v3846, %v3796
        %v6947 = vpack.c.b16 %v3847, %v3797
        %v6948 = vpack.c.b16 %v3848, %v3798
        %v6949 = vpack.c.b16 %v3849, %v3799
        %v6950 = vpack.c.b16 %v3850, %v3800
        %v6951 = vpack.c.b16 %v3851, %v3801
        %v6952 = vpack.c.b16 %v3852, %v3802
        %v6953 = vpack.c.b16 %v3853, %v3803
        %v6954 = vpack.c.b16 %v3854, %v3804
        %v6955 = vpack.c.b16 %v3855, %v3805
        %v6956 = vpack.c.b16 %v3856, %v3806
        %v6957 = vpack.c.b16 %v3857, %v3807
        %v6958 = vpack.c.b16 %v3858, %v3808
        %v6959 = vpack.c.b16 %v3859, %v3809
        %v6960 = vpack.c.b16 %v3860, %v3810
        %v6961 = vpack.c.b16 %v3861, %v3811
        %v6962 = vpack.c.b16 %v3862, %v3812
        %v6963 = vpack.c.b16 %v3863, %v3813
        %v6964 = vpack.c.b16 %v3864, %v3814
        %v6965 = vpack.c.b16 %v3865, %v3815
        %v6966 = vpack.c.b16 %v3866, %v3816
        %v6967 = vpack.c.b16 %v3867, %v3817
        %v6968 = vpack.c.b16 %v3868, %v3818
        %v6969 = vpack.c.b16 %v3869, %v3819
        %v6970 = vpack.c.b16 %v3870, %v3820
        %v6971 = vpack.c.b16 %v3871, %v3821
        %v6972 = vpack.c.b16 %v3872, %v3822
        %v6973 = vpack.c.b16 %v3873, %v3823
        %v6974 = vpack.c.b16 %v3874, %v3824
        %v6975 = vpack.c.b16 %v3875, %v3825
        %v6976 = vpack.c.b16 %v3876, %v3826
        %v6977 = vpack.c.b16 %v3877, %v3827
        %v6978 = vpack.c.b16 %v3878, %v3828
        %v6979 = vpack.c.b16 %v3879, %v3829
        %v6980 = vpack.c.b16 %v3880, %v3830
        %v6981 = vpack.c.b16 %v3881, %v3831
        %v6982 = vpack.c.b16 %v3882, %v3832
        %v6983 = vpack.c.b16 %v3883, %v3833
        %v6984 = vpack.c.b16 %v3934, %v3884
        %v6985 = vpack.c.b16 %v3935, %v3885
        %v6986 = vpack.c.b16 %v3936, %v3886
        %v6987 = vpack.c.b16 %v3937, %v3887
        %v6988 = vpack.c.b16 %v3938, %v3888
        %v6989 = vpack.c.b16 %v3939, %v3889
        %v6990 = vpack.c.b16 %v3940, %v3890
        %v6991 = vpack.c.b16 %v3941, %v3891
        %v6992 = vpack.c.b16 %v3942, %v3892
        %v6993 = vpack.c.b16 %v3943, %v3893
        %v6994 = vpack.c.b16 %v3944, %v3894
        %v6995 = vpack.c.b16 %v3945, %v3895
        %v6996 = vpack.c.b16 %v3946, %v3896
        %v6997 = vpack.c.b16 %v3947, %v3897
        %v6998 = vpack.c.b16 %v3948, %v3898
        %v6999 = vpack.c.b16 %v3949, %v3899
        %v7000 = vpack.c.b16 %v3950, %v3900
        %v7001 = vpack.c.b16 %v3951, %v3901
        %v7002 = vpack.c.b16 %v3952, %v3902
        %v7003 = vpack.c.b16 %v3953, %v3903
        %v7004 = vpack.c.b16 %v3954, %v3904
        %v7005 = vpack.c.b16 %v3955, %v3905
        %v7006 = vpack.c.b16 %v3956, %v3906
        %v7007 = vpack.c.b16 %v3957, %v3907
        %v7008 = vpack.c.b16 %v3958, %v3908
        %v7009 = vpack.c.b16 %v3959, %v3909
        %v7010 = vpack.c.b16 %v3960, %v3910
        %v7011 = vpack.c.b16 %v3961, %v3911
        %v7012 = vpack.c.b16 %v3962, %v3912
        %v7013 = vpack.c.b16 %v3963, %v3913
        %v7014 = vpack.c.b16 %v3964, %v3914
        %v7015 = vpack.c.b16 %v3965, %v3915
        %v7016 = vpack.c.b16 %v3966, %v3916
        %v7017 = vpack.c.b16 %v3967, %v3917
        %v7018 = vpack.c.b16 %v3968, %v3918
        %v7019 = vpack.c.b16 %v3969, %v3919
        %v7020 = vpack.c.b16 %v3970, %v3920
        %v7021 = vpack.c.b16 %v3971, %v3921
        %v7022 = vpack.c.b16 %v3972, %v3922
        %v7023 = vpack.c.b16 %v3973, %v3923
        %v7024 = vpack.c.b16 %v3974, %v3924
        %v7025 = vpack.c.b16 %v3975, %v3925
        %v7026 = vpack.c.b16 %v3976, %v3926
        %v7027 = vpack.c.b16 %v3977, %v3927
        %v7028 = vpack.c.b16 %v3978, %v3928
        %v7029 = vpack.c.b16 %v3979, %v3929
        %v7030 = vpack.c.b16 %v3980, %v3930
        %v7031 = vpack.c.b16 %v3981, %v3931
        %v7032 = vpack.c.b16 %v3982, %v3932
        %v7033 = vpack.c.b16 %v3983, %v3933
        %v7034 = vpack.c.b16 %v4034, %v3984
        %v7035 = vpack.c.b16 %v4035, %v3985
        %v7036 = vpack.c.b16 %v4036, %v3986
        %v7037 = vpack.c.b16 %v4037, %v3987
        %v7038 = vpack.c.b16 %v4038, %v3988
        %v7039 = vpack.c.b16 %v4039, %v3989
        %v7040 = vpack.c.b16 %v4040, %v3990
        %v7041 = vpack.c.b16 %v4041, %v3991
        %v7042 = vpack.c.b16 %v4042, %v3992
        %v7043 = vpack.c.b16 %v4043, %v3993
        %v7044 = vpack.c.b16 %v4044, %v3994
        %v7045 = vpack.c.b16 %v4045, %v3995
        %v7046 = vpack.c.b16 %v4046, %v3996
        %v7047 = vpack.c.b16 %v4047, %v3997
        %v7048 = vpack.c.b16 %v4048, %v3998
        %v7049 = vpack.c.b16 %v4049, %v3999
        %v7050 = vpack.c.b16 %v4050, %v4000
        %v7051 = vpack.c.b16 %v4051, %v4001
        %v7052 = vpack.c.b16 %v4052, %v4002
        %v7053 = vpack.c.b16 %v4053, %v4003
        %v7054 = vpack.c.b16 %v4054, %v4004
        %v7055 = vpack.c.b16 %v4055, %v4005
        %v7056 = vpack.c.b16 %v4056, %v4006
        %v7057 = vpack.c.b16 %v4057, %v4007
        %v7058 = vpack.c.b16 %v4058, %v4008
        %v7059 = vpack.c.b16 %v4059, %v4009
        %v7060 = vpack.c.b16 %v4060, %v4010
        %v7061 = vpack.c.b16 %v4061, %v4011
        %v7062 = vpack.c.b16 %v4062, %v4012
        %v7063 = vpack.c.b16 %v4063, %v4013
        %v7064 = vpack.c.b16 %v4064, %v4014
        %v7065 = vpack.c.b16 %v4065, %v4015
        %v7066 = vpack.c.b16 %v4066, %v4016
        %v7067 = vpack.c.b16 %v4067, %v4017
        %v7068 = vpack.c.b16 %v4068, %v4018
        %v7069 = vpack.c.b16 %v4069, %v4019
        %v7070 = vpack.c.b16 %v4070, %v4020
        %v7071 = vpack.c.b16 %v4071, %v4021
        %v7072 = vpack.c.b16 %v4072, %v4022
        %v7073 = vpack.c.b16 %v4073, %v4023
        %v7074 = vpack.c.b16 %v4074, %v4024
        %v7075 = vpack.c.b16 %v4075, %v4025
        %v7076 = vpack.c.b16 %v4076, %v4026
        %v7077 = vpack.c.b16 %v4077, %v4027
        %v7078 = vpack.c.b16 %v4078, %v4028
        %v7079 = vpack.c.b16 %v4079, %v4029
        %v7080 = vpack.c.b16 %v4080, %v4030
        %v7081 = vpack.c.b16 %v4081, %v4031
        %v7082 = vpack.c.b16 %v4082, %v4032
        %v7083 = vpack.c.b16 %v4083, %v4033
        %v7084 = vpack.c.b16 %v4134, %v4084
        %v7085 = vpack.c.b16 %v4135, %v4085
        %v7086 = vpack.c.b16 %v4136, %v4086
        %v7087 = vpack.c.b16 %v4137, %v4087
        %v7088 = vpack.c.b16 %v4138, %v4088
        %v7089 = vpack.c.b16 %v4139, %v4089
        %v7090 = vpack.c.b16 %v4140, %v4090
        %v7091 = vpack.c.b16 %v4141, %v4091
        %v7092 = vpack.c.b16 %v4142, %v4092
        %v7093 = vpack.c.b16 %v4143, %v4093
        %v7094 = vpack.c.b16 %v4144, %v4094
        %v7095 = vpack.c.b16 %v4145, %v4095
        %v7096 = vpack.c.b16 %v4146, %v4096
        %v7097 = vpack.c.b16 %v4147, %v4097
        %v7098 = vpack.c.b16 %v4148, %v4098
        %v7099 = vpack.c.b16 %v4149, %v4099
        %v7100 = vpack.c.b16 %v4150, %v4100
        %v7101 = vpack.c.b16 %v4151, %v4101
        %v7102 = vpack.c.b16 %v4152, %v4102
        %v7103 = vpack.c.b16 %v4153, %v4103
        %v7104 = vpack.c.b16 %v4154, %v4104
        %v7105 = vpack.c.b16 %v4155, %v4105
        %v7106 = vpack.c.b16 %v4156, %v4106
        %v7107 = vpack.c.b16 %v4157, %v4107
        %v7108 = vpack.c.b16 %v4158, %v4108
        %v7109 = vpack.c.b16 %v4159, %v4109
        %v7110 = vpack.c.b16 %v4160, %v4110
        %v7111 = vpack.c.b16 %v4161, %v4111
        %v7112 = vpack.c.b16 %v4162, %v4112
        %v7113 = vpack.c.b16 %v4163, %v4113
        %v7114 = vpack.c.b16 %v4164, %v4114
        %v7115 = vpack.c.b16 %v4165, %v4115
        %v7116 = vpack.c.b16 %v4166, %v4116
        %v7117 = vpack.c.b16 %v4167, %v4117
        %v7118 = vpack.c.b16 %v4168, %v4118
        %v7119 = vpack.c.b16 %v4169, %v4119
        %v7120 = vpack.c.b16 %v4170, %v4120
        %v7121 = vpack.c.b16 %v4171, %v4121
        %v7122 = vpack.c.b16 %v4172, %v4122
        %v7123 = vpack.c.b16 %v4173, %v4123
        %v7124 = vpack.c.b16 %v4174, %v4124
        %v7125 = vpack.c.b16 %v4175, %v4125
        %v7126 = vpack.c.b16 %v4176, %v4126
        %v7127 = vpack.c.b16 %v4177, %v4127
        %v7128 = vpack.c.b16 %v4178, %v4128
        %v7129 = vpack.c.b16 %v4179, %v4129
        %v7130 = vpack.c.b16 %v4180, %v4130
        %v7131 = vpack.c.b16 %v4181, %v4131
        %v7132 = vpack.c.b16 %v4182, %v4132
        %v7133 = vpack.c.b16 %v4183, %v4133
        %v7134 = vpack.c.b16 %v4234, %v4184
        %v7135 = vpack.c.b16 %v4235, %v4185
        %v7136 = vpack.c.b16 %v4236, %v4186
        %v7137 = vpack.c.b16 %v4237, %v4187
        %v7138 = vpack.c.b16 %v4238, %v4188
        %v7139 = vpack.c.b16 %v4239, %v4189
        %v7140 = vpack.c.b16 %v4240, %v4190
        %v7141 = vpack.c.b16 %v4241, %v4191
        %v7142 = vpack.c.b16 %v4242, %v4192
        %v7143 = vpack.c.b16 %v4243, %v4193
        %v7144 = vpack.c.b16 %v4244, %v4194
        %v7145 = vpack.c.b16 %v4245, %v4195
        %v7146 = vpack.c.b16 %v4246, %v4196
        %v7147 = vpack.c.b16 %v4247, %v4197
        %v7148 = vpack.c.b16 %v4248, %v4198
        %v7149 = vpack.c.b16 %v4249, %v4199
        %v7150 = vpack.c.b16 %v4250, %v4200
        %v7151 = vpack.c.b16 %v4251, %v4201
        %v7152 = vpack.c.b16 %v4252, %v4202
        %v7153 = vpack.c.b16 %v4253, %v4203
        %v7154 = vpack.c.b16 %v4254, %v4204
        %v7155 = vpack.c.b16 %v4255, %v4205
        %v7156 = vpack.c.b16 %v4256, %v4206
        %v7157 = vpack.c.b16 %v4257, %v4207
        %v7158 = vpack.c.b16 %v4258, %v4208
        %v7159 = vpack.c.b16 %v4259, %v4209
        %v7160 = vpack.c.b16 %v4260, %v4210
        %v7161 = vpack.c.b16 %v4261, %v4211
        %v7162 = vpack.c.b16 %v4262, %v4212
        %v7163 = vpack.c.b16 %v4263, %v4213
        %v7164 = vpack.c.b16 %v4264, %v4214
        %v7165 = vpack.c.b16 %v4265, %v4215
        %v7166 = vpack.c.b16 %v4266, %v4216
        %v7167 = vpack.c.b16 %v4267, %v4217
        %v7168 = vpack.c.b16 %v4268, %v4218
        %v7169 = vpack.c.b16 %v4269, %v4219
        %v7170 = vpack.c.b16 %v4270, %v4220
        %v7171 = vpack.c.b16 %v4271, %v4221
        %v7172 = vpack.c.b16 %v4272, %v4222
        %v7173 = vpack.c.b16 %v4273, %v4223
        %v7174 = vpack.c.b16 %v4274, %v4224
        %v7175 = vpack.c.b16 %v4275, %v4225
        %v7176 = vpack.c.b16 %v4276, %v4226
        %v7177 = vpack.c.b16 %v4277, %v4227
        %v7178 = vpack.c.b16 %v4278, %v4228
        %v7179 = vpack.c.b16 %v4279, %v4229
        %v7180 = vpack.c.b16 %v4280, %v4230
        %v7181 = vpack.c.b16 %v4281, %v4231
        %v7182 = vpack.c.b16 %v4282, %v4232
        %v7183 = vpack.c.b16 %v4283, %v4233
        %v7184 = vpack.c.b16 %v4334, %v4284
        %v7185 = vpack.c.b16 %v4335, %v4285
        %v7186 = vpack.c.b16 %v4336, %v4286
        %v7187 = vpack.c.b16 %v4337, %v4287
        %v7188 = vpack.c.b16 %v4338, %v4288
        %v7189 = vpack.c.b16 %v4339, %v4289
        %v7190 = vpack.c.b16 %v4340, %v4290
        %v7191 = vpack.c.b16 %v4341, %v4291
        %v7192 = vpack.c.b16 %v4342, %v4292
        %v7193 = vpack.c.b16 %v4343, %v4293
        %v7194 = vpack.c.b16 %v4344, %v4294
        %v7195 = vpack.c.b16 %v4345, %v4295
        %v7196 = vpack.c.b16 %v4346, %v4296
        %v7197 = vpack.c.b16 %v4347, %v4297
        %v7198 = vpack.c.b16 %v4348, %v4298
        %v7199 = vpack.c.b16 %v4349, %v4299
        %v7200 = vpack.c.b16 %v4350, %v4300
        %v7201 = vpack.c.b16 %v4351, %v4301
        %v7202 = vpack.c.b16 %v4352, %v4302
        %v7203 = vpack.c.b16 %v4353, %v4303
        %v7204 = vpack.c.b16 %v4354, %v4304
        %v7205 = vpack.c.b16 %v4355, %v4305
        %v7206 = vpack.c.b16 %v4356, %v4306
        %v7207 = vpack.c.b16 %v4357, %v4307
        %v7208 = vpack.c.b16 %v4358, %v4308
        %v7209 = vpack.c.b16 %v4359, %v4309
        %v7210 = vpack.c.b16 %v4360, %v4310
        %v7211 = vpack.c.b16 %v4361, %v4311
        %v7212 = vpack.c.b16 %v4362, %v4312
        %v7213 = vpack.c.b16 %v4363, %v4313
        %v7214 = vpack.c.b16 %v4364, %v4314
        %v7215 = vpack.c.b16 %v4365, %v4315
        %v7216 = vpack.c.b16 %v4366, %v4316
        %v7217 = vpack.c.b16 %v4367, %v4317
        %v7218 = vpack.c.b16 %v4368, %v4318
        %v7219 = vpack.c.b16 %v4369, %v4319
        %v7220 = vpack.c.b16 %v4370, %v4320
        %v7221 = vpack.c.b16 %v4371, %v4321
        %v7222 = vpack.c.b16 %v4372, %v4322
        %v7223 = vpack.c.b16 %v4373, %v4323
        %v7224 = vpack.c.b16 %v4374, %v4324
        %v7225 = vpack.c.b16 %v4375, %v4325
        %v7226 = vpack.c.b16 %v4376, %v4326
        %v7227 = vpack.c.b16 %v4377, %v4327
        %v7228 = vpack.c.b16 %v4378, %v4328
        %v7229 = vpack.c.b16 %v4379, %v4329
        %v7230 = vpack.c.b16 %v4380, %v4330
        %v7231 = vpack.c.b16 %v4381, %v4331
        %v7232 = vpack.c.b16 %v4382, %v4332
        %v7233 = vpack.c.b16 %v4383, %v4333
        %v7234 = vpack.c.b16 %v4434, %v4384
        %v7235 = vpack.c.b16 %v4435, %v4385
        %v7236 = vpack.c.b16 %v4436, %v4386
        %v7237 = vpack.c.b16 %v4437, %v4387
        %v7238 = vpack.c.b16 %v4438, %v4388
        %v7239 = vpack.c.b16 %v4439, %v4389
        %v7240 = vpack.c.b16 %v4440, %v4390
        %v7241 = vpack.c.b16 %v4441, %v4391
        %v7242 = vpack.c.b16 %v4442, %v4392
        %v7243 = vpack.c.b16 %v4443, %v4393
        %v7244 = vpack.c.b16 %v4444, %v4394
        %v7245 = vpack.c.b16 %v4445, %v4395
        %v7246 = vpack.c.b16 %v4446, %v4396
        %v7247 = vpack.c.b16 %v4447, %v4397
        %v7248 = vpack.c.b16 %v4448, %v4398
        %v7249 = vpack.c.b16 %v4449, %v4399
        %v7250 = vpack.c.b16 %v4450, %v4400
        %v7251 = vpack.c.b16 %v4451, %v4401
        %v7252 = vpack.c.b16 %v4452, %v4402
        %v7253 = vpack.c.b16 %v4453, %v4403
        %v7254 = vpack.c.b16 %v4454, %v4404
        %v7255 = vpack.c.b16 %v4455, %v4405
        %v7256 = vpack.c.b16 %v4456, %v4406
        %v7257 = vpack.c.b16 %v4457, %v4407
        %v7258 = vpack.c.b16 %v4458, %v4408
        %v7259 = vpack.c.b16 %v4459, %v4409
        %v7260 = vpack.c.b16 %v4460, %v4410
        %v7261 = vpack.c.b16 %v4461, %v4411
        %v7262 = vpack.c.b16 %v4462, %v4412
        %v7263 = vpack.c.b16 %v4463, %v4413
        %v7264 = vpack.c.b16 %v4464, %v4414
        %v7265 = vpack.c.b16 %v4465, %v4415
        %v7266 = vpack.c.b16 %v4466, %v4416
        %v7267 = vpack.c.b16 %v4467, %v4417
        %v7268 = vpack.c.b16 %v4468, %v4418
        %v7269 = vpack.c.b16 %v4469, %v4419
        %v7270 = vpack.c.b16 %v4470, %v4420
        %v7271 = vpack.c.b16 %v4471, %v4421
        %v7272 = vpack.c.b16 %v4472, %v4422
        %v7273 = vpack.c.b16 %v4473, %v4423
        %v7274 = vpack.c.b16 %v4474, %v4424
        %v7275 = vpack.c.b16 %v4475, %v4425
        %v7276 = vpack.c.b16 %v4476, %v4426
        %v7277 = vpack.c.b16 %v4477, %v4427
        %v7278 = vpack.c.b16 %v4478, %v4428
        %v7279 = vpack.c.b16 %v4479, %v4429
        %v7280 = vpack.c.b16 %v4480, %v4430
        %v7281 = vpack.c.b16 %v4481, %v4431
        %v7282 = vpack.c.b16 %v4482, %v4432
        %v7283 = vpack.c.b16 %v4483, %v4433
        %v7284 = vpack.c.b16 %v4534, %v4484
        %v7285 = vpack.c.b16 %v4535, %v4485
        %v7286 = vpack.c.b16 %v4536, %v4486
        %v7287 = vpack.c.b16 %v4537, %v4487
        %v7288 = vpack.c.b16 %v4538, %v4488
        %v7289 = vpack.c.b16 %v4539, %v4489
        %v7290 = vpack.c.b16 %v4540, %v4490
        %v7291 = vpack.c.b16 %v4541, %v4491
        %v7292 = vpack.c.b16 %v4542, %v4492
        %v7293 = vpack.c.b16 %v4543, %v4493
        %v7294 = vpack.c.b16 %v4544, %v4494
        %v7295 = vpack.c.b16 %v4545, %v4495
        %v7296 = vpack.c.b16 %v4546, %v4496
        %v7297 = vpack.c.b16 %v4547, %v4497
        %v7298 = vpack.c.b16 %v4548, %v4498
        %v7299 = vpack.c.b16 %v4549, %v4499
        %v7300 = vpack.c.b16 %v4550, %v4500
        %v7301 = vpack.c.b16 %v4551, %v4501
        %v7302 = vpack.c.b16 %v4552, %v4502
        %v7303 = vpack.c.b16 %v4553, %v4503
        %v7304 = vpack.c.b16 %v4554, %v4504
        %v7305 = vpack.c.b16 %v4555, %v4505
        %v7306 = vpack.c.b16 %v4556, %v4506
        %v7307 = vpack.c.b16 %v4557, %v4507
        %v7308 = vpack.c.b16 %v4558, %v4508
        %v7309 = vpack.c.b16 %v4559, %v4509
        %v7310 = vpack.c.b16 %v4560, %v4510
        %v7311 = vpack.c.b16 %v4561, %v4511
        %v7312 = vpack.c.b16 %v4562, %v4512
        %v7313 = vpack.c.b16 %v4563, %v4513
        %v7314 = vpack.c.b16 %v4564, %v4514
        %v7315 = vpack.c.b16 %v4565, %v4515
        %v7316 = vpack.c.b16 %v4566, %v4516
        %v7317 = vpack.c.b16 %v4567, %v4517
        %v7318 = vpack.c.b16 %v4568, %v4518
        %v7319 = vpack.c.b16 %v4569, %v4519
        %v7320 = vpack.c.b16 %v4570, %v4520
        %v7321 = vpack.c.b16 %v4571, %v4521
        %v7322 = vpack.c.b16 %v4572, %v4522
        %v7323 = vpack.c.b16 %v4573, %v4523
        %v7324 = vpack.c.b16 %v4574, %v4524
        %v7325 = vpack.c.b16 %v4575, %v4525
        %v7326 = vpack.c.b16 %v4576, %v4526
        %v7327 = vpack.c.b16 %v4577, %v4527
        %v7328 = vpack.c.b16 %v4578, %v4528
        %v7329 = vpack.c.b16 %v4579, %v4529
        %v7330 = vpack.c.b16 %v4580, %v4530
        %v7331 = vpack.c.b16 %v4581, %v4531
        %v7332 = vpack.c.b16 %v4582, %v4532
        %v7333 = vpack.c.b16 %v4583, %v4533
        %v7334 = vpack.c.b16 %v4634, %v4584
        %v7335 = vpack.c.b16 %v4635, %v4585
        %v7336 = vpack.c.b16 %v4636, %v4586
        %v7337 = vpack.c.b16 %v4637, %v4587
        %v7338 = vpack.c.b16 %v4638, %v4588
        %v7339 = vpack.c.b16 %v4639, %v4589
        %v7340 = vpack.c.b16 %v4640, %v4590
        %v7341 = vpack.c.b16 %v4641, %v4591
        %v7342 = vpack.c.b16 %v4642, %v4592
        %v7343 = vpack.c.b16 %v4643, %v4593
        %v7344 = vpack.c.b16 %v4644, %v4594
        %v7345 = vpack.c.b16 %v4645, %v4595
        %v7346 = vpack.c.b16 %v4646, %v4596
        %v7347 = vpack.c.b16 %v4647, %v4597
        %v7348 = vpack.c.b16 %v4648, %v4598
        %v7349 = vpack.c.b16 %v4649, %v4599
        %v7350 = vpack.c.b16 %v4650, %v4600
        %v7351 = vpack.c.b16 %v4651, %v4601
        %v7352 = vpack.c.b16 %v4652, %v4602
        %v7353 = vpack.c.b16 %v4653, %v4603
        %v7354 = vpack.c.b16 %v4654, %v4604
        %v7355 = vpack.c.b16 %v4655, %v4605
        %v7356 = vpack.c.b16 %v4656, %v4606
        %v7357 = vpack.c.b16 %v4657, %v4607
        %v7358 = vpack.c.b16 %v4658, %v4608
        %v7359 = vpack.c.b16 %v4659, %v4609
        %v7360 = vpack.c.b16 %v4660, %v4610
        %v7361 = vpack.c.b16 %v4661, %v4611
        %v7362 = vpack.c.b16 %v4662, %v4612
        %v7363 = vpack.c.b16 %v4663, %v4613
        %v7364 = vpack.c.b16 %v4664, %v4614
        %v7365 = vpack.c.b16 %v4665, %v4615
        %v7366 = vpack.c.b16 %v4666, %v4616
        %v7367 = vpack.c.b16 %v4667, %v4617
        %v7368 = vpack.c.b16 %v4668, %v4618
        %v7369 = vpack.c.b16 %v4669, %v4619
        %v7370 = vpack.c.b16 %v4670, %v4620
        %v7371 = vpack.c.b16 %v4671, %v4621
        %v7372 = vpack.c.b16 %v4672, %v4622
        %v7373 = vpack.c.b16 %v4673, %v4623
        %v7374 = vpack.c.b16 %v4674, %v4624
        %v7375 = vpack.c.b16 %v4675, %v4625
        %v7376 = vpack.c.b16 %v4676, %v4626
        %v7377 = vpack.c.b16 %v4677, %v4627
        %v7378 = vpack.c.b16 %v4678, %v4628
        %v7379 = vpack.c.b16 %v4679, %v4629
        %v7380 = vpack.c.b16 %v4680, %v4630
        %v7381 = vpack.c.b16 %v4681, %v4631
        %v7382 = vpack.c.b16 %v4682, %v4632
        %v7383 = vpack.c.b16 %v4683, %v4633
        %v7384 = vpack.c.b16 %v4734, %v4684
        %v7385 = vpack.c.b16 %v4735, %v4685
        %v7386 = vpack.c.b16 %v4736, %v4686
        %v7387 = vpack.c.b16 %v4737, %v4687
        %v7388 = vpack.c.b16 %v4738, %v4688
        %v7389 = vpack.c.b16 %v4739, %v4689
        %v7390 = vpack.c.b16 %v4740, %v4690
        %v7391 = vpack.c.b16 %v4741, %v4691
        %v7392 = vpack.c.b16 %v4742, %v4692
        %v7393 = vpack.c.b16 %v4743, %v4693
        %v7394 = vpack.c.b16 %v4744, %v4694
        %v7395 = vpack.c.b16 %v4745, %v4695
        %v7396 = vpack.c.b16 %v4746, %v4696
        %v7397 = vpack.c.b16 %v4747, %v4697
        %v7398 = vpack.c.b16 %v4748, %v4698
        %v7399 = vpack.c.b16 %v4749, %v4699
        %v7400 = vpack.c.b16 %v4750, %v4700
        %v7401 = vpack.c.b16 %v4751, %v4701
        %v7402 = vpack.c.b16 %v4752, %v4702
        %v7403 = vpack.c.b16 %v4753, %v4703
        %v7404 = vpack.c.b16 %v4754, %v4704
        %v7405 = vpack.c.b16 %v4755, %v4705
        %v7406 = vpack.c.b16 %v4756, %v4706
        %v7407 = vpack.c.b16 %v4757, %v4707
        %v7408 = vpack.c.b16 %v4758, %v4708
        %v7409 = vpack.c.b16 %v4759, %v4709
        %v7410 = vpack.c.b16 %v4760, %v4710
        %v7411 = vpack.c.b16 %v4761, %v4711
        %v7412 = vpack.c.b16 %v4762, %v4712
        %v7413 = vpack.c.b16 %v4763, %v4713
        %v7414 = vpack.c.b16 %v4764, %v4714
        %v7415 = vpack.c.b16 %v4765, %v4715
        %v7416 = vpack.c.b16 %v4766, %v4716
        %v7417 = vpack.c.b16 %v4767, %v4717
        %v7418 = vpack.c.b16 %v4768, %v4718
        %v7419 = vpack.c.b16 %v4769, %v4719
        %v7420 = vpack.c.b16 %v4770, %v4720
        %v7421 = vpack.c.b16 %v4771, %v4721
        %v7422 = vpack.c.b16 %v4772, %v4722
        %v7423 = vpack.c.b16 %v4773, %v4723
        %v7424 = vpack.c.b16 %v4774, %v4724
        %v7425 = vpack.c.b16 %v4775, %v4725
        %v7426 = vpack.c.b16 %v4776, %v4726
        %v7427 = vpack.c.b16 %v4777, %v4727
        %v7428 = vpack.c.b16 %v4778, %v4728
        %v7429 = vpack.c.b16 %v4779, %v4729
        %v7430 = vpack.c.b16 %v4780, %v4730
        %v7431 = vpack.c.b16 %v4781, %v4731
        %v7432 = vpack.c.b16 %v4782, %v4732
        %v7433 = vpack.c.b16 %v4783, %v4733
        %v7434 = vpack.c.b16 %v4834, %v4784
        %v7435 = vpack.c.b16 %v4835, %v4785
        %v7436 = vpack.c.b16 %v4836, %v4786
        %v7437 = vpack.c.b16 %v4837, %v4787
        %v7438 = vpack.c.b16 %v4838, %v4788
        %v7439 = vpack.c.b16 %v4839, %v4789
        %v7440 = vpack.c.b16 %v4840, %v4790
        %v7441 = vpack.c.b16 %v4841, %v4791
        %v7442 = vpack.c.b16 %v4842, %v4792
        %v7443 = vpack.c.b16 %v4843, %v4793
        %v7444 = vpack.c.b16 %v4844, %v4794
        %v7445 = vpack.c.b16 %v4845, %v4795
        %v7446 = vpack.c.b16 %v4846, %v4796
        %v7447 = vpack.c.b16 %v4847, %v4797
        %v7448 = vpack.c.b16 %v4848, %v4798
        %v7449 = vpack.c.b16 %v4849, %v4799
        %v7450 = vpack.c.b16 %v4850, %v4800
        %v7451 = vpack.c.b16 %v4851, %v4801
        %v7452 = vpack.c.b16 %v4852, %v4802
        %v7453 = vpack.c.b16 %v4853, %v4803
        %v7454 = vpack.c.b16 %v4854, %v4804
        %v7455 = vpack.c.b16 %v4855, %v4805
        %v7456 = vpack.c.b16 %v4856, %v4806
        %v7457 = vpack.c.b16 %v4857, %v4807
        %v7458 = vpack.c.b16 %v4858, %v4808
        %v7459 = vpack.c.b16 %v4859, %v4809
        %v7460 = vpack.c.b16 %v4860, %v4810
        %v7461 = vpack.c.b16 %v4861, %v4811
        %v7462 = vpack.c.b16 %v4862, %v4812
        %v7463 = vpack.c.b16 %v4863, %v4813
        %v7464 = vpack.c.b16 %v4864, %v4814
        %v7465 = vpack.c.b16 %v4865, %v4815
        %v7466 = vpack.c.b16 %v4866, %v4816
        %v7467 = vpack.c.b16 %v4867, %v4817
        %v7468 = vpack.c.b16 %v4868, %v4818
        %v7469 = vpack.c.b16 %v4869, %v4819
        %v7470 = vpack.c.b16 %v4870, %v4820
        %v7471 = vpack.c.b16 %v4871, %v4821
        %v7472 = vpack.c.b16 %v4872, %v4822
        %v7473 = vpack.c.b16 %v4873, %v4823
        %v7474 = vpack.c.b16 %v4874, %v4824
        %v7475 = vpack.c.b16 %v4875, %v4825
        %v7476 = vpack.c.b16 %v4876, %v4826
        %v7477 = vpack.c.b16 %v4877, %v4827
        %v7478 = vpack.c.b16 %v4878, %v4828
        %v7479 = vpack.c.b16 %v4879, %v4829
        %v7480 = vpack.c.b16 %v4880, %v4830
        %v7481 = vpack.c.b16 %v4881, %v4831
        %v7482 = vpack.c.b16 %v4882, %v4832
        %v7483 = vpack.c.b16 %v4883, %v4833
        %v7484 = vpack.c.b16 %v4934, %v4884
        %v7485 = vpack.c.b16 %v4935, %v4885
        %v7486 = vpack.c.b16 %v4936, %v4886
        %v7487 = vpack.c.b16 %v4937, %v4887
        %v7488 = vpack.c.b16 %v4938, %v4888
        %v7489 = vpack.c.b16 %v4939, %v4889
        %v7490 = vpack.c.b16 %v4940, %v4890
        %v7491 = vpack.c.b16 %v4941, %v4891
        %v7492 = vpack.c.b16 %v4942, %v4892
        %v7493 = vpack.c.b16 %v4943, %v4893
        %v7494 = vpack.c.b16 %v4944, %v4894
        %v7495 = vpack.c.b16 %v4945, %v4895
        %v7496 = vpack.c.b16 %v4946, %v4896
        %v7497 = vpack.c.b16 %v4947, %v4897
        %v7498 = vpack.c.b16 %v4948, %v4898
        %v7499 = vpack.c.b16 %v4949, %v4899
        %v7500 = vpack.c.b16 %v4950, %v4900
        %v7501 = vpack.c.b16 %v4951, %v4901
        %v7502 = vpack.c.b16 %v4952, %v4902
        %v7503 = vpack.c.b16 %v4953, %v4903
        %v7504 = vpack.c.b16 %v4954, %v4904
        %v7505 = vpack.c.b16 %v4955, %v4905
        %v7506 = vpack.c.b16 %v4956, %v4906
        %v7507 = vpack.c.b16 %v4957, %v4907
        %v7508 = vpack.c.b16 %v4958, %v4908
        %v7509 = vpack.c.b16 %v4959, %v4909
        %v7510 = vpack.c.b16 %v4960, %v4910
        %v7511 = vpack.c.b16 %v4961, %v4911
        %v7512 = vpack.c.b16 %v4962, %v4912
        %v7513 = vpack.c.b16 %v4963, %v4913
        %v7514 = vpack.c.b16 %v4964, %v4914
        %v7515 = vpack.c.b16 %v4965, %v4915
        %v7516 = vpack.c.b16 %v4966, %v4916
        %v7517 = vpack.c.b16 %v4967, %v4917
        %v7518 = vpack.c.b16 %v4968, %v4918
        %v7519 = vpack.c.b16 %v4969, %v4919
        %v7520 = vpack.c.b16 %v4970, %v4920
        %v7521 = vpack.c.b16 %v4971, %v4921
        %v7522 = vpack.c.b16 %v4972, %v4922
        %v7523 = vpack.c.b16 %v4973, %v4923
        %v7524 = vpack.c.b16 %v4974, %v4924
        %v7525 = vpack.c.b16 %v4975, %v4925
        %v7526 = vpack.c.b16 %v4976, %v4926
        %v7527 = vpack.c.b16 %v4977, %v4927
        %v7528 = vpack.c.b16 %v4978, %v4928
        %v7529 = vpack.c.b16 %v4979, %v4929
        %v7530 = vpack.c.b16 %v4980, %v4930
        %v7531 = vpack.c.b16 %v4981, %v4931
        %v7532 = vpack.c.b16 %v4982, %v4932
        %v7533 = vpack.c.b16 %v4983, %v4933
        %v7534 = vpack.c.b16 %v5034, %v4984
        %v7535 = vpack.c.b16 %v5035, %v4985
        %v7536 = vpack.c.b16 %v5036, %v4986
        %v7537 = vpack.c.b16 %v5037, %v4987
        %v7538 = vpack.c.b16 %v5038, %v4988
        %v7539 = vpack.c.b16 %v5039, %v4989
        %v7540 = vpack.c.b16 %v5040, %v4990
        %v7541 = vpack.c.b16 %v5041, %v4991
        %v7542 = vpack.c.b16 %v5042, %v4992
        %v7543 = vpack.c.b16 %v5043, %v4993
        %v7544 = vpack.c.b16 %v5044, %v4994
        %v7545 = vpack.c.b16 %v5045, %v4995
        %v7546 = vpack.c.b16 %v5046, %v4996
        %v7547 = vpack.c.b16 %v5047, %v4997
        %v7548 = vpack.c.b16 %v5048, %v4998
        %v7549 = vpack.c.b16 %v5049, %v4999
        %v7550 = vpack.c.b16 %v5050, %v5000
        %v7551 = vpack.c.b16 %v5051, %v5001
        %v7552 = vpack.c.b16 %v5052, %v5002
        %v7553 = vpack.c.b16 %v5053, %v5003
        %v7554 = vpack.c.b16 %v5054, %v5004
        %v7555 = vpack.c.b16 %v5055, %v5005
        %v7556 = vpack.c.b16 %v5056, %v5006
        %v7557 = vpack.c.b16 %v5057, %v5007
        %v7558 = vpack.c.b16 %v5058, %v5008
        %v7559 = vpack.c.b16 %v5059, %v5009
        %v7560 = vpack.c.b16 %v5060, %v5010
        %v7561 = vpack.c.b16 %v5061, %v5011
        %v7562 = vpack.c.b16 %v5062, %v5012
        %v7563 = vpack.c.b16 %v5063, %v5013
        %v7564 = vpack.c.b16 %v5064, %v5014
        %v7565 = vpack.c.b16 %v5065, %v5015
        %v7566 = vpack.c.b16 %v5066, %v5016
        %v7567 = vpack.c.b16 %v5067, %v5017
        %v7568 = vpack.c.b16 %v5068, %v5018
        %v7569 = vpack.c.b16 %v5069, %v5019
        %v7570 = vpack.c.b16 %v5070, %v5020
        %v7571 = vpack.c.b16 %v5071, %v5021
        %v7572 = vpack.c.b16 %v5072, %v5022
        %v7573 = vpack.c.b16 %v5073, %v5023
        %v7574 = vpack.c.b16 %v5074, %v5024
        %v7575 = vpack.c.b16 %v5075, %v5025
        %v7576 = vpack.c.b16 %v5076, %v5026
        %v7577 = vpack.c.b16 %v5077, %v5027
        %v7578 = vpack.c.b16 %v5078, %v5028
        %v7579 = vpack.c.b16 %v5079, %v5029
        %v7580 = vpack.c.b16 %v5080, %v5030
        %v7581 = vpack.c.b16 %v5081, %v5031
        %v7582 = vpack.c.b16 %v5082, %v5032
        %v7583 = vpack.c.b16 %v5083, %v5033
        %v7584 = vpack.c.b16 %v5134, %v5084
        %v7585 = vpack.c.b16 %v5135, %v5085
        %v7586 = vpack.c.b16 %v5136, %v5086
        %v7587 = vpack.c.b16 %v5137, %v5087
        %v7588 = vpack.c.b16 %v5138, %v5088
        %v7589 = vpack.c.b16 %v5139, %v5089
        %v7590 = vpack.c.b16 %v5140, %v5090
        %v7591 = vpack.c.b16 %v5141, %v5091
        %v7592 = vpack.c.b16 %v5142, %v5092
        %v7593 = vpack.c.b16 %v5143, %v5093
        %v7594 = vpack.c.b16 %v5144, %v5094
        %v7595 = vpack.c.b16 %v5145, %v5095
        %v7596 = vpack.c.b16 %v5146, %v5096
        %v7597 = vpack.c.b16 %v5147, %v5097
        %v7598 = vpack.c.b16 %v5148, %v5098
        %v7599 = vpack.c.b16 %v5149, %v5099
        %v7600 = vpack.c.b16 %v5150, %v5100
        %v7601 = vpack.c.b16 %v5151, %v5101
        %v7602 = vpack.c.b16 %v5152, %v5102
        %v7603 = vpack.c.b16 %v5153, %v5103
        %v7604 = vpack.c.b16 %v5154, %v5104
        %v7605 = vpack.c.b16 %v5155, %v5105
        %v7606 = vpack.c.b16 %v5156, %v5106
        %v7607 = vpack.c.b16 %v5157, %v5107
        %v7608 = vpack.c.b16 %v5158, %v5108
        %v7609 = vpack.c.b16 %v5159, %v5109
        %v7610 = vpack.c.b16 %v5160, %v5110
        %v7611 = vpack.c.b16 %v5161, %v5111
        %v7612 = vpack.c.b16 %v5162, %v5112
        %v7613 = vpack.c.b16 %v5163, %v5113
        %v7614 = vpack.c.b16 %v5164, %v5114
        %v7615 = vpack.c.b16 %v5165, %v5115
        %v7616 = vpack.c.b16 %v5166, %v5116
        %v7617 = vpack.c.b16 %v5167, %v5117
        %v7618 = vpack.c.b16 %v5168, %v5118
        %v7619 = vpack.c.b16 %v5169, %v5119
        %v7620 = vpack.c.b16 %v5170, %v5120
        %v7621 = vpack.c.b16 %v5171, %v5121
        %v7622 = vpack.c.b16 %v5172, %v5122
        %v7623 = vpack.c.b16 %v5173, %v5123
        %v7624 = vpack.c.b16 %v5174, %v5124
        %v7625 = vpack.c.b16 %v5175, %v5125
        %v7626 = vpack.c.b16 %v5176, %v5126
        %v7627 = vpack.c.b16 %v5177, %v5127
        %v7628 = vpack.c.b16 %v5178, %v5128
        %v7629 = vpack.c.b16 %v5179, %v5129
        %v7630 = vpack.c.b16 %v5180, %v5130
        %v7631 = vpack.c.b16 %v5181, %v5131
        %v7632 = vpack.c.b16 %v5182, %v5132
        %v7633 = vpack.c.b16 %v5183, %v5133
        %v7634 = vpack.c.b16 %v5234, %v5184
        %v7635 = vpack.c.b16 %v5235, %v5185
        %v7636 = vpack.c.b16 %v5236, %v5186
        %v7637 = vpack.c.b16 %v5237, %v5187
        %v7638 = vpack.c.b16 %v5238, %v5188
        %v7639 = vpack.c.b16 %v5239, %v5189
        %v7640 = vpack.c.b16 %v5240, %v5190
        %v7641 = vpack.c.b16 %v5241, %v5191
        %v7642 = vpack.c.b16 %v5242, %v5192
        %v7643 = vpack.c.b16 %v5243, %v5193
        %v7644 = vpack.c.b16 %v5244, %v5194
        %v7645 = vpack.c.b16 %v5245, %v5195
        %v7646 = vpack.c.b16 %v5246, %v5196
        %v7647 = vpack.c.b16 %v5247, %v5197
        %v7648 = vpack.c.b16 %v5248, %v5198
        %v7649 = vpack.c.b16 %v5249, %v5199
        %v7650 = vpack.c.b16 %v5250, %v5200
        %v7651 = vpack.c.b16 %v5251, %v5201
        %v7652 = vpack.c.b16 %v5252, %v5202
        %v7653 = vpack.c.b16 %v5253, %v5203
        %v7654 = vpack.c.b16 %v5254, %v5204
        %v7655 = vpack.c.b16 %v5255, %v5205
        %v7656 = vpack.c.b16 %v5256, %v5206
        %v7657 = vpack.c.b16 %v5257, %v5207
        %v7658 = vpack.c.b16 %v5258, %v5208
        %v7659 = vpack.c.b16 %v5259, %v5209
        %v7660 = vpack.c.b16 %v5260, %v5210
        %v7661 = vpack.c.b16 %v5261, %v5211
        %v7662 = vpack.c.b16 %v5262, %v5212
        %v7663 = vpack.c.b16 %v5263, %v5213
        %v7664 = vpack.c.b16 %v5264, %v5214
        %v7665 = vpack.c.b16 %v5265, %v5215
        %v7666 = vpack.c.b16 %v5266, %v5216
        %v7667 = vpack.c.b16 %v5267, %v5217
        %v7668 = vpack.c.b16 %v5268, %v5218
        %v7669 = vpack.c.b16 %v5269, %v5219
        %v7670 = vpack.c.b16 %v5270, %v5220
        %v7671 = vpack.c.b16 %v5271, %v5221
        %v7672 = vpack.c.b16 %v5272, %v5222
        %v7673 = vpack.c.b16 %v5273, %v5223
        %v7674 = vpack.c.b16 %v5274, %v5224
        %v7675 = vpack.c.b16 %v5275, %v5225
        %v7676 = vpack.c.b16 %v5276, %v5226
        %v7677 = vpack.c.b16 %v5277, %v5227
        %v7678 = vpack.c.b16 %v5278, %v5228
        %v7679 = vpack.c.b16 %v5279, %v5229
        %v7680 = vpack.c.b16 %v5280, %v5230
        %v7681 = vpack.c.b16 %v5281, %v5231
        %v7682 = vpack.c.b16 %v5282, %v5232
        %v7683 = vpack.c.b16 %v5283, %v5233
        %v7684 = vpack.c.b16 %v5334, %v5284
        %v7685 = vpack.c.b16 %v5335, %v5285
        %v7686 = vpack.c.b16 %v5336, %v5286
        %v7687 = vpack.c.b16 %v5337, %v5287
        %v7688 = vpack.c.b16 %v5338, %v5288
        %v7689 = vpack.c.b16 %v5339, %v5289
        %v7690 = vpack.c.b16 %v5340, %v5290
        %v7691 = vpack.c.b16 %v5341, %v5291
        %v7692 = vpack.c.b16 %v5342, %v5292
        %v7693 = vpack.c.b16 %v5343, %v5293
        %v7694 = vpack.c.b16 %v5344, %v5294
        %v7695 = vpack.c.b16 %v5345, %v5295
        %v7696 = vpack.c.b16 %v5346, %v5296
        %v7697 = vpack.c.b16 %v5347, %v5297
        %v7698 = vpack.c.b16 %v5348, %v5298
        %v7699 = vpack.c.b16 %v5349, %v5299
        %v7700 = vpack.c.b16 %v5350, %v5300
        %v7701 = vpack.c.b16 %v5351, %v5301
        %v7702 = vpack.c.b16 %v5352, %v5302
        %v7703 = vpack.c.b16 %v5353, %v5303
        %v7704 = vpack.c.b16 %v5354, %v5304
        %v7705 = vpack.c.b16 %v5355, %v5305
        %v7706 = vpack.c.b16 %v5356, %v5306
        %v7707 = vpack.c.b16 %v5357, %v5307
        %v7708 = vpack.c.b16 %v5358, %v5308
        %v7709 = vpack.c.b16 %v5359, %v5309
        %v7710 = vpack.c.b16 %v5360, %v5310
        %v7711 = vpack.c.b16 %v5361, %v5311
        %v7712 = vpack.c.b16 %v5362, %v5312
        %v7713 = vpack.c.b16 %v5363, %v5313
        %v7714 = vpack.c.b16 %v5364, %v5314
        %v7715 = vpack.c.b16 %v5365, %v5315
        %v7716 = vpack.c.b16 %v5366, %v5316
        %v7717 = vpack.c.b16 %v5367, %v5317
        %v7718 = vpack.c.b16 %v5368, %v5318
        %v7719 = vpack.c.b16 %v5369, %v5319
        %v7720 = vpack.c.b16 %v5370, %v5320
        %v7721 = vpack.c.b16 %v5371, %v5321
        %v7722 = vpack.c.b16 %v5372, %v5322
        %v7723 = vpack.c.b16 %v5373, %v5323
        %v7724 = vpack.c.b16 %v5374, %v5324
        %v7725 = vpack.c.b16 %v5375, %v5325
        %v7726 = vpack.c.b16 %v5376, %v5326
        %v7727 = vpack.c.b16 %v5377, %v5327
        %v7728 = vpack.c.b16 %v5378, %v5328
        %v7729 = vpack.c.b16 %v5379, %v5329
        %v7730 = vpack.c.b16 %v5380, %v5330
        %v7731 = vpack.c.b16 %v5381, %v5331
        %v7732 = vpack.c.b16 %v5382, %v5332
        %v7733 = vpack.c.b16 %v5383, %v5333
        %v7734 = vpack.c.b16 %v5434, %v5384
        %v7735 = vpack.c.b16 %v5435, %v5385
        %v7736 = vpack.c.b16 %v5436, %v5386
        %v7737 = vpack.c.b16 %v5437, %v5387
        %v7738 = vpack.c.b16 %v5438, %v5388
        %v7739 = vpack.c.b16 %v5439, %v5389
        %v7740 = vpack.c.b16 %v5440, %v5390
        %v7741 = vpack.c.b16 %v5441, %v5391
        %v7742 = vpack.c.b16 %v5442, %v5392
        %v7743 = vpack.c.b16 %v5443, %v5393
        %v7744 = vpack.c.b16 %v5444, %v5394
        %v7745 = vpack.c.b16 %v5445, %v5395
        %v7746 = vpack.c.b16 %v5446, %v5396
        %v7747 = vpack.c.b16 %v5447, %v5397
        %v7748 = vpack.c.b16 %v5448, %v5398
        %v7749 = vpack.c.b16 %v5449, %v5399
        %v7750 = vpack.c.b16 %v5450, %v5400
        %v7751 = vpack.c.b16 %v5451, %v5401
        %v7752 = vpack.c.b16 %v5452, %v5402
        %v7753 = vpack.c.b16 %v5453, %v5403
        %v7754 = vpack.c.b16 %v5454, %v5404
        %v7755 = vpack.c.b16 %v5455, %v5405
        %v7756 = vpack.c.b16 %v5456, %v5406
        %v7757 = vpack.c.b16 %v5457, %v5407
        %v7758 = vpack.c.b16 %v5458, %v5408
        %v7759 = vpack.c.b16 %v5459, %v5409
        %v7760 = vpack.c.b16 %v5460, %v5410
        %v7761 = vpack.c.b16 %v5461, %v5411
        %v7762 = vpack.c.b16 %v5462, %v5412
        %v7763 = vpack.c.b16 %v5463, %v5413
        %v7764 = vpack.c.b16 %v5464, %v5414
        %v7765 = vpack.c.b16 %v5465, %v5415
        %v7766 = vpack.c.b16 %v5466, %v5416
        %v7767 = vpack.c.b16 %v5467, %v5417
        %v7768 = vpack.c.b16 %v5468, %v5418
        %v7769 = vpack.c.b16 %v5469, %v5419
        %v7770 = vpack.c.b16 %v5470, %v5420
        %v7771 = vpack.c.b16 %v5471, %v5421
        %v7772 = vpack.c.b16 %v5472, %v5422
        %v7773 = vpack.c.b16 %v5473, %v5423
        %v7774 = vpack.c.b16 %v5474, %v5424
        %v7775 = vpack.c.b16 %v5475, %v5425
        %v7776 = vpack.c.b16 %v5476, %v5426
        %v7777 = vpack.c.b16 %v5477, %v5427
        %v7778 = vpack.c.b16 %v5478, %v5428
        %v7779 = vpack.c.b16 %v5479, %v5429
        %v7780 = vpack.c.b16 %v5480, %v5430
        %v7781 = vpack.c.b16 %v5481, %v5431
        %v7782 = vpack.c.b16 %v5482, %v5432
        %v7783 = vpack.c.b16 %v5483, %v5433
        %v7784 = vpack.c.b16 %v5534, %v5484
        %v7785 = vpack.c.b16 %v5535, %v5485
        %v7786 = vpack.c.b16 %v5536, %v5486
        %v7787 = vpack.c.b16 %v5537, %v5487
        %v7788 = vpack.c.b16 %v5538, %v5488
        %v7789 = vpack.c.b16 %v5539, %v5489
        %v7790 = vpack.c.b16 %v5540, %v5490
        %v7791 = vpack.c.b16 %v5541, %v5491
        %v7792 = vpack.c.b16 %v5542, %v5492
        %v7793 = vpack.c.b16 %v5543, %v5493
        %v7794 = vpack.c.b16 %v5544, %v5494
        %v7795 = vpack.c.b16 %v5545, %v5495
        %v7796 = vpack.c.b16 %v5546, %v5496
        %v7797 = vpack.c.b16 %v5547, %v5497
        %v7798 = vpack.c.b16 %v5548, %v5498
        %v7799 = vpack.c.b16 %v5549, %v5499
        %v7800 = vpack.c.b16 %v5550, %v5500
        %v7801 = vpack.c.b16 %v5551, %v5501
        %v7802 = vpack.c.b16 %v5552, %v5502
        %v7803 = vpack.c.b16 %v5553, %v5503
        %v7804 = vpack.c.b16 %v5554, %v5504
        %v7805 = vpack.c.b16 %v5555, %v5505
        %v7806 = vpack.c.b16 %v5556, %v5506
        %v7807 = vpack.c.b16 %v5557, %v5507
        %v7808 = vpack.c.b16 %v5558, %v5508
        %v7809 = vpack.c.b16 %v5559, %v5509
        %v7810 = vpack.c.b16 %v5560, %v5510
        %v7811 = vpack.c.b16 %v5561, %v5511
        %v7812 = vpack.c.b16 %v5562, %v5512
        %v7813 = vpack.c.b16 %v5563, %v5513
        %v7814 = vpack.c.b16 %v5564, %v5514
        %v7815 = vpack.c.b16 %v5565, %v5515
        %v7816 = vpack.c.b16 %v5566, %v5516
        %v7817 = vpack.c.b16 %v5567, %v5517
        %v7818 = vpack.c.b16 %v5568, %v5518
        %v7819 = vpack.c.b16 %v5569, %v5519
        %v7820 = vpack.c.b16 %v5570, %v5520
        %v7821 = vpack.c.b16 %v5571, %v5521
        %v7822 = vpack.c.b16 %v5572, %v5522
        %v7823 = vpack.c.b16 %v5573, %v5523
        %v7824 = vpack.c.b16 %v5574, %v5524
        %v7825 = vpack.c.b16 %v5575, %v5525
        %v7826 = vpack.c.b16 %v5576, %v5526
        %v7827 = vpack.c.b16 %v5577, %v5527
        %v7828 = vpack.c.b16 %v5578, %v5528
        %v7829 = vpack.c.b16 %v5579, %v5529
        %v7830 = vpack.c.b16 %v5580, %v5530
        %v7831 = vpack.c.b16 %v5581, %v5531
        %v7832 = vpack.c.b16 %v5582, %v5532
        %v7833 = vpack.c.b16 %v5583, %v5533
        %v7834 = vpack.c.b16 %v5634, %v5584
        %v7835 = vpack.c.b16 %v5635, %v5585
        %v7836 = vpack.c.b16 %v5636, %v5586
        %v7837 = vpack.c.b16 %v5637, %v5587
        %v7838 = vpack.c.b16 %v5638, %v5588
        %v7839 = vpack.c.b16 %v5639, %v5589
        %v7840 = vpack.c.b16 %v5640, %v5590
        %v7841 = vpack.c.b16 %v5641, %v5591
        %v7842 = vpack.c.b16 %v5642, %v5592
        %v7843 = vpack.c.b16 %v5643, %v5593
        %v7844 = vpack.c.b16 %v5644, %v5594
        %v7845 = vpack.c.b16 %v5645, %v5595
        %v7846 = vpack.c.b16 %v5646, %v5596
        %v7847 = vpack.c.b16 %v5647, %v5597
        %v7848 = vpack.c.b16 %v5648, %v5598
        %v7849 = vpack.c.b16 %v5649, %v5599
        %v7850 = vpack.c.b16 %v5650, %v5600
        %v7851 = vpack.c.b16 %v5651, %v5601
        %v7852 = vpack.c.b16 %v5652, %v5602
        %v7853 = vpack.c.b16 %v5653, %v5603
        %v7854 = vpack.c.b16 %v5654, %v5604
        %v7855 = vpack.c.b16 %v5655, %v5605
        %v7856 = vpack.c.b16 %v5656, %v5606
        %v7857 = vpack.c.b16 %v5657, %v5607
        %v7858 = vpack.c.b16 %v5658, %v5608
        %v7859 = vpack.c.b16 %v5659, %v5609
        %v7860 = vpack.c.b16 %v5660, %v5610
        %v7861 = vpack.c.b16 %v5661, %v5611
        %v7862 = vpack.c.b16 %v5662, %v5612
        %v7863 = vpack.c.b16 %v5663, %v5613
        %v7864 = vpack.c.b16 %v5664, %v5614
        %v7865 = vpack.c.b16 %v5665, %v5615
        %v7866 = vpack.c.b16 %v5666, %v5616
        %v7867 = vpack.c.b16 %v5667, %v5617
        %v7868 = vpack.c.b16 %v5668, %v5618
        %v7869 = vpack.c.b16 %v5669, %v5619
        %v7870 = vpack.c.b16 %v5670, %v5620
        %v7871 = vpack.c.b16 %v5671, %v5621
        %v7872 = vpack.c.b16 %v5672, %v5622
        %v7873 = vpack.c.b16 %v5673, %v5623
        %v7874 = vpack.c.b16 %v5674, %v5624
        %v7875 = vpack.c.b16 %v5675, %v5625
        %v7876 = vpack.c.b16 %v5676, %v5626
        %v7877 = vpack.c.b16 %v5677, %v5627
        %v7878 = vpack.c.b16 %v5678, %v5628
        %v7879 = vpack.c.b16 %v5679, %v5629
        %v7880 = vpack.c.b16 %v5680, %v5630
        %v7881 = vpack.c.b16 %v5681, %v5631
        %v7882 = vpack.c.b16 %v5682, %v5632
        %v7883 = vpack.c.b16 %v5683, %v5633
        %v7884 = vpack.c.b16 %v5734, %v5684
        %v7885 = vpack.c.b16 %v5735, %v5685
        %v7886 = vpack.c.b16 %v5736, %v5686
        %v7887 = vpack.c.b16 %v5737, %v5687
        %v7888 = vpack.c.b16 %v5738, %v5688
        %v7889 = vpack.c.b16 %v5739, %v5689
        %v7890 = vpack.c.b16 %v5740, %v5690
        %v7891 = vpack.c.b16 %v5741, %v5691
        %v7892 = vpack.c.b16 %v5742, %v5692
        %v7893 = vpack.c.b16 %v5743, %v5693
        %v7894 = vpack.c.b16 %v5744, %v5694
        %v7895 = vpack.c.b16 %v5745, %v5695
        %v7896 = vpack.c.b16 %v5746, %v5696
        %v7897 = vpack.c.b16 %v5747, %v5697
        %v7898 = vpack.c.b16 %v5748, %v5698
        %v7899 = vpack.c.b16 %v5749, %v5699
        %v7900 = vpack.c.b16 %v5750, %v5700
        %v7901 = vpack.c.b16 %v5751, %v5701
        %v7902 = vpack.c.b16 %v5752, %v5702
        %v7903 = vpack.c.b16 %v5753, %v5703
        %v7904 = vpack.c.b16 %v5754, %v5704
        %v7905 = vpack.c.b16 %v5755, %v5705
        %v7906 = vpack.c.b16 %v5756, %v5706
        %v7907 = vpack.c.b16 %v5757, %v5707
        %v7908 = vpack.c.b16 %v5758, %v5708
        %v7909 = vpack.c.b16 %v5759, %v5709
        %v7910 = vpack.c.b16 %v5760, %v5710
        %v7911 = vpack.c.b16 %v5761, %v5711
        %v7912 = vpack.c.b16 %v5762, %v5712
        %v7913 = vpack.c.b16 %v5763, %v5713
        %v7914 = vpack.c.b16 %v5764, %v5714
        %v7915 = vpack.c.b16 %v5765, %v5715
        %v7916 = vpack.c.b16 %v5766, %v5716
        %v7917 = vpack.c.b16 %v5767, %v5717
        %v7918 = vpack.c.b16 %v5768, %v5718
        %v7919 = vpack.c.b16 %v5769, %v5719
        %v7920 = vpack.c.b16 %v5770, %v5720
        %v7921 = vpack.c.b16 %v5771, %v5721
        %v7922 = vpack.c.b16 %v5772, %v5722
        %v7923 = vpack.c.b16 %v5773, %v5723
        %v7924 = vpack.c.b16 %v5774, %v5724
        %v7925 = vpack.c.b16 %v5775, %v5725
        %v7926 = vpack.c.b16 %v5776, %v5726
        %v7927 = vpack.c.b16 %v5777, %v5727
        %v7928 = vpack.c.b16 %v5778, %v5728
        %v7929 = vpack.c.b16 %v5779, %v5729
        %v7930 = vpack.c.b16 %v5780, %v5730
        %v7931 = vpack.c.b16 %v5781, %v5731
        %v7932 = vpack.c.b16 %v5782, %v5732
        %v7933 = vpack.c.b16 %v5783, %v5733
        %v7934 = vpack.c.b16 %v5834, %v5784
        %v7935 = vpack.c.b16 %v5835, %v5785
        %v7936 = vpack.c.b16 %v5836, %v5786
        %v7937 = vpack.c.b16 %v5837, %v5787
        %v7938 = vpack.c.b16 %v5838, %v5788
        %v7939 = vpack.c.b16 %v5839, %v5789
        %v7940 = vpack.c.b16 %v5840, %v5790
        %v7941 = vpack.c.b16 %v5841, %v5791
        %v7942 = vpack.c.b16 %v5842, %v5792
        %v7943 = vpack.c.b16 %v5843, %v5793
        %v7944 = vpack.c.b16 %v5844, %v5794
        %v7945 = vpack.c.b16 %v5845, %v5795
        %v7946 = vpack.c.b16 %v5846, %v5796
        %v7947 = vpack.c.b16 %v5847, %v5797
        %v7948 = vpack.c.b16 %v5848, %v5798
        %v7949 = vpack.c.b16 %v5849, %v5799
        %v7950 = vpack.c.b16 %v5850, %v5800
        %v7951 = vpack.c.b16 %v5851, %v5801
        %v7952 = vpack.c.b16 %v5852, %v5802
        %v7953 = vpack.c.b16 %v5853, %v5803
        %v7954 = vpack.c.b16 %v5854, %v5804
        %v7955 = vpack.c.b16 %v5855, %v5805
        %v7956 = vpack.c.b16 %v5856, %v5806
        %v7957 = vpack.c.b16 %v5857, %v5807
        %v7958 = vpack.c.b16 %v5858, %v5808
        %v7959 = vpack.c.b16 %v5859, %v5809
        %v7960 = vpack.c.b16 %v5860, %v5810
        %v7961 = vpack.c.b16 %v5861, %v5811
        %v7962 = vpack.c.b16 %v5862, %v5812
        %v7963 = vpack.c.b16 %v5863, %v5813
        %v7964 = vpack.c.b16 %v5864, %v5814
        %v7965 = vpack.c.b16 %v5865, %v5815
        %v7966 = vpack.c.b16 %v5866, %v5816
        %v7967 = vpack.c.b16 %v5867, %v5817
        %v7968 = vpack.c.b16 %v5868, %v5818
        %v7969 = vpack.c.b16 %v5869, %v5819
        %v7970 = vpack.c.b16 %v5870, %v5820
        %v7971 = vpack.c.b16 %v5871, %v5821
        %v7972 = vpack.c.b16 %v5872, %v5822
        %v7973 = vpack.c.b16 %v5873, %v5823
        %v7974 = vpack.c.b16 %v5874, %v5824
        %v7975 = vpack.c.b16 %v5875, %v5825
        %v7976 = vpack.c.b16 %v5876, %v5826
        %v7977 = vpack.c.b16 %v5877, %v5827
        %v7978 = vpack.c.b16 %v5878, %v5828
        %v7979 = vpack.c.b16 %v5879, %v5829
        %v7980 = vpack.c.b16 %v5880, %v5830
        %v7981 = vpack.c.b16 %v5881, %v5831
        %v7982 = vpack.c.b16 %v5882, %v5832
        %v7983 = vpack.c.b16 %v5883, %v5833
        %v7984 = vpack.c.b16 %v5934, %v5884
        %v7985 = vpack.c.b16 %v5935, %v5885
        %v7986 = vpack.c.b16 %v5936, %v5886
        %v7987 = vpack.c.b16 %v5937, %v5887
        %v7988 = vpack.c.b16 %v5938, %v5888
        %v7989 = vpack.c.b16 %v5939, %v5889
        %v7990 = vpack.c.b16 %v5940, %v5890
        %v7991 = vpack.c.b16 %v5941, %v5891
        %v7992 = vpack.c.b16 %v5942, %v5892
        %v7993 = vpack.c.b16 %v5943, %v5893
        %v7994 = vpack.c.b16 %v5944, %v5894
        %v7995 = vpack.c.b16 %v5945, %v5895
        %v7996 = vpack.c.b16 %v5946, %v5896
        %v7997 = vpack.c.b16 %v5947, %v5897
        %v7998 = vpack.c.b16 %v5948, %v5898
        %v7999 = vpack.c.b16 %v5949, %v5899
        %v8000 = vpack.c.b16 %v5950, %v5900
        %v8001 = vpack.c.b16 %v5951, %v5901
        %v8002 = vpack.c.b16 %v5952, %v5902
        %v8003 = vpack.c.b16 %v5953, %v5903
        %v8004 = vpack.c.b16 %v5954, %v5904
        %v8005 = vpack.c.b16 %v5955, %v5905
        %v8006 = vpack.c.b16 %v5956, %v5906
        %v8007 = vpack.c.b16 %v5957, %v5907
        %v8008 = vpack.c.b16 %v5958, %v5908
        %v8009 = vpack.c.b16 %v5959, %v5909
        %v8010 = vpack.c.b16 %v5960, %v5910
        %v8011 = vpack.c.b16 %v5961, %v5911
        %v8012 = vpack.c.b16 %v5962, %v5912
        %v8013 = vpack.c.b16 %v5963, %v5913
        %v8014 = vpack.c.b16 %v5964, %v5914
        %v8015 = vpack.c.b16 %v5965, %v5915
        %v8016 = vpack.c.b16 %v5966, %v5916
        %v8017 = vpack.c.b16 %v5967, %v5917
        %v8018 = vpack.c.b16 %v5968, %v5918
        %v8019 = vpack.c.b16 %v5969, %v5919
        %v8020 = vpack.c.b16 %v5970, %v5920
        %v8021 = vpack.c.b16 %v5971, %v5921
        %v8022 = vpack.c.b16 %v5972, %v5922
        %v8023 = vpack.c.b16 %v5973, %v5923
        %v8024 = vpack.c.b16 %v5974, %v5924
        %v8025 = vpack.c.b16 %v5975, %v5925
        %v8026 = vpack.c.b16 %v5976, %v5926
        %v8027 = vpack.c.b16 %v5977, %v5927
        %v8028 = vpack.c.b16 %v5978, %v5928
        %v8029 = vpack.c.b16 %v5979, %v5929
        %v8030 = vpack.c.b16 %v5980, %v5930
        %v8031 = vpack.c.b16 %v5981, %v5931
        %v8032 = vpack.c.b16 %v5982, %v5932
        %v8033 = vpack.c.b16 %v5983, %v5933
        %v8034 = vpack.c.b16 %v6034, %v5984
        %v8035 = vpack.c.b16 %v6035, %v5985
        %v8036 = vpack.c.b16 %v6036, %v5986
        %v8037 = vpack.c.b16 %v6037, %v5987
        %v8038 = vpack.c.b16 %v6038, %v5988
        %v8039 = vpack.c.b16 %v6039, %v5989
        %v8040 = vpack.c.b16 %v6040, %v5990
        %v8041 = vpack.c.b16 %v6041, %v5991
        %v8042 = vpack.c.b16 %v6042, %v5992
        %v8043 = vpack.c.b16 %v6043, %v5993
        %v8044 = vpack.c.b16 %v6044, %v5994
        %v8045 = vpack.c.b16 %v6045, %v5995
        %v8046 = vpack.c.b16 %v6046, %v5996
        %v8047 = vpack.c.b16 %v6047, %v5997
        %v8048 = vpack.c.b16 %v6048, %v5998
        %v8049 = vpack.c.b16 %v6049, %v5999
        %v8050 = vpack.c.b16 %v6050, %v6000
        %v8051 = vpack.c.b16 %v6051, %v6001
        %v8052 = vpack.c.b16 %v6052, %v6002
        %v8053 = vpack.c.b16 %v6053, %v6003
        %v8054 = vpack.c.b16 %v6054, %v6004
        %v8055 = vpack.c.b16 %v6055, %v6005
        %v8056 = vpack.c.b16 %v6056, %v6006
        %v8057 = vpack.c.b16 %v6057, %v6007
        %v8058 = vpack.c.b16 %v6058, %v6008
        %v8059 = vpack.c.b16 %v6059, %v6009
        %v8060 = vpack.c.b16 %v6060, %v6010
        %v8061 = vpack.c.b16 %v6061, %v6011
        %v8062 = vpack.c.b16 %v6062, %v6012
        %v8063 = vpack.c.b16 %v6063, %v6013
        %v8064 = vpack.c.b16 %v6064, %v6014
        %v8065 = vpack.c.b16 %v6065, %v6015
        %v8066 = vpack.c.b16 %v6066, %v6016
        %v8067 = vpack.c.b16 %v6067, %v6017
        %v8068 = vpack.c.b16 %v6068, %v6018
        %v8069 = vpack.c.b16 %v6069, %v6019
        %v8070 = vpack.c.b16 %v6070, %v6020
        %v8071 = vpack.c.b16 %v6071, %v6021
        %v8072 = vpack.c.b16 %v6072, %v6022
        %v8073 = vpack.c.b16 %v6073, %v6023
        %v8074 = vpack.c.b16 %v6074, %v6024
        %v8075 = vpack.c.b16 %v6075, %v6025
        %v8076 = vpack.c.b16 %v6076, %v6026
        %v8077 = vpack.c.b16 %v6077, %v6027
        %v8078 = vpack.c.b16 %v6078, %v6028
        %v8079 = vpack.c.b16 %v6079, %v6029
        %v8080 = vpack.c.b16 %v6080, %v6030
        %v8081 = vpack.c.b16 %v6081, %v6031
        %v8082 = vpack.c.b16 %v6082, %v6032
        %v8083 = vpack.c.b16 %v6083, %v6033
        %v8084 = vpack.c.b16 %v6134, %v6084
        %v8085 = vpack.c.b16 %v6135, %v6085
        %v8086 = vpack.c.b16 %v6136, %v6086
        %v8087 = vpack.c.b16 %v6137, %v6087
        %v8088 = vpack.c.b16 %v6138, %v6088
        %v8089 = vpack.c.b16 %v6139, %v6089
        %v8090 = vpack.c.b16 %v6140, %v6090
        %v8091 = vpack.c.b16 %v6141, %v6091
        %v8092 = vpack.c.b16 %v6142, %v6092
        %v8093 = vpack.c.b16 %v6143, %v6093
        %v8094 = vpack.c.b16 %v6144, %v6094
        %v8095 = vpack.c.b16 %v6145, %v6095
        %v8096 = vpack.c.b16 %v6146, %v6096
        %v8097 = vpack.c.b16 %v6147, %v6097
        %v8098 = vpack.c.b16 %v6148, %v6098
        %v8099 = vpack.c.b16 %v6149, %v6099
        %v8100 = vpack.c.b16 %v6150, %v6100
        %v8101 = vpack.c.b16 %v6151, %v6101
        %v8102 = vpack.c.b16 %v6152, %v6102
        %v8103 = vpack.c.b16 %v6153, %v6103
        %v8104 = vpack.c.b16 %v6154, %v6104
        %v8105 = vpack.c.b16 %v6155, %v6105
        %v8106 = vpack.c.b16 %v6156, %v6106
        %v8107 = vpack.c.b16 %v6157, %v6107
        %v8108 = vpack.c.b16 %v6158, %v6108
        %v8109 = vpack.c.b16 %v6159, %v6109
        %v8110 = vpack.c.b16 %v6160, %v6110
        %v8111 = vpack.c.b16 %v6161, %v6111
        %v8112 = vpack.c.b16 %v6162, %v6112
        %v8113 = vpack.c.b16 %v6163, %v6113
        %v8114 = vpack.c.b16 %v6164, %v6114
        %v8115 = vpack.c.b16 %v6165, %v6115
        %v8116 = vpack.c.b16 %v6166, %v6116
        %v8117 = vpack.c.b16 %v6167, %v6117
        %v8118 = vpack.c.b16 %v6168, %v6118
        %v8119 = vpack.c.b16 %v6169, %v6119
        %v8120 = vpack.c.b16 %v6170, %v6120
        %v8121 = vpack.c.b16 %v6171, %v6121
        %v8122 = vpack.c.b16 %v6172, %v6122
        %v8123 = vpack.c.b16 %v6173, %v6123
        %v8124 = vpack.c.b16 %v6174, %v6124
        %v8125 = vpack.c.b16 %v6175, %v6125
        %v8126 = vpack.c.b16 %v6176, %v6126
        %v8127 = vpack.c.b16 %v6177, %v6127
        %v8128 = vpack.c.b16 %v6178, %v6128
        %v8129 = vpack.c.b16 %v6179, %v6129
        %v8130 = vpack.c.b16 %v6180, %v6130
        %v8131 = vpack.c.b16 %v6181, %v6131
        %v8132 = vpack.c.b16 %v6182, %v6132
        %v8133 = vpack.c.b16 %v6183, %v6133
        %v8134 = vpack.c.b16 %v6234, %v6184
        %v8135 = vpack.c.b16 %v6235, %v6185
        %v8136 = vpack.c.b16 %v6236, %v6186
        %v8137 = vpack.c.b16 %v6237, %v6187
        %v8138 = vpack.c.b16 %v6238, %v6188
        %v8139 = vpack.c.b16 %v6239, %v6189
        %v8140 = vpack.c.b16 %v6240, %v6190
        %v8141 = vpack.c.b16 %v6241, %v6191
        %v8142 = vpack.c.b16 %v6242, %v6192
        %v8143 = vpack.c.b16 %v6243, %v6193
        %v8144 = vpack.c.b16 %v6244, %v6194
        %v8145 = vpack.c.b16 %v6245, %v6195
        %v8146 = vpack.c.b16 %v6246, %v6196
        %v8147 = vpack.c.b16 %v6247, %v6197
        %v8148 = vpack.c.b16 %v6248, %v6198
        %v8149 = vpack.c.b16 %v6249, %v6199
        %v8150 = vpack.c.b16 %v6250, %v6200
        %v8151 = vpack.c.b16 %v6251, %v6201
        %v8152 = vpack.c.b16 %v6252, %v6202
        %v8153 = vpack.c.b16 %v6253, %v6203
        %v8154 = vpack.c.b16 %v6254, %v6204
        %v8155 = vpack.c.b16 %v6255, %v6205
        %v8156 = vpack.c.b16 %v6256, %v6206
        %v8157 = vpack.c.b16 %v6257, %v6207
        %v8158 = vpack.c.b16 %v6258, %v6208
        %v8159 = vpack.c.b16 %v6259, %v6209
        %v8160 = vpack.c.b16 %v6260, %v6210
        %v8161 = vpack.c.b16 %v6261, %v6211
        %v8162 = vpack.c.b16 %v6262, %v6212
        %v8163 = vpack.c.b16 %v6263, %v6213
        %v8164 = vpack.c.b16 %v6264, %v6214
        %v8165 = vpack.c.b16 %v6265, %v6215
        %v8166 = vpack.c.b16 %v6266, %v6216
        %v8167 = vpack.c.b16 %v6267, %v6217
        %v8168 = vpack.c.b16 %v6268, %v6218
        %v8169 = vpack.c.b16 %v6269, %v6219
        %v8170 = vpack.c.b16 %v6270, %v6220
        %v8171 = vpack.c.b16 %v6271, %v6221
        %v8172 = vpack.c.b16 %v6272, %v6222
        %v8173 = vpack.c.b16 %v6273, %v6223
        %v8174 = vpack.c.b16 %v6274, %v6224
        %v8175 = vpack.c.b16 %v6275, %v6225
        %v8176 = vpack.c.b16 %v6276, %v6226
        %v8177 = vpack.c.b16 %v6277, %v6227
        %v8178 = vpack.c.b16 %v6278, %v6228
        %v8179 = vpack.c.b16 %v6279, %v6229
        %v8180 = vpack.c.b16 %v6280, %v6230
        %v8181 = vpack.c.b16 %v6281, %v6231
        %v8182 = vpack.c.b16 %v6282, %v6232
        %v8183 = vpack.c.b16 %v6283, %v6233
        %v8184 = vpack.c.b16 %v6334, %v6284
        %v8185 = vpack.c.b16 %v6335, %v6285
        %v8186 = vpack.c.b16 %v6336, %v6286
        %v8187 = vpack.c.b16 %v6337, %v6287
        %v8188 = vpack.c.b16 %v6338, %v6288
        %v8189 = vpack.c.b16 %v6339, %v6289
        %v8190 = vpack.c.b16 %v6340, %v6290
        %v8191 = vpack.c.b16 %v6341, %v6291
        %v8192 = vpack.c.b16 %v6342, %v6292
        %v8193 = vpack.c.b16 %v6343, %v6293
        %v8194 = vpack.c.b16 %v6344, %v6294
        %v8195 = vpack.c.b16 %v6345, %v6295
        %v8196 = vpack.c.b16 %v6346, %v6296
        %v8197 = vpack.c.b16 %v6347, %v6297
        %v8198 = vpack.c.b16 %v6348, %v6298
        %v8199 = vpack.c.b16 %v6349, %v6299
        %v8200 = vpack.c.b16 %v6350, %v6300
        %v8201 = vpack.c.b16 %v6351, %v6301
        %v8202 = vpack.c.b16 %v6352, %v6302
        %v8203 = vpack.c.b16 %v6353, %v6303
        %v8204 = vpack.c.b16 %v6354, %v6304
        %v8205 = vpack.c.b16 %v6355, %v6305
        %v8206 = vpack.c.b16 %v6356, %v6306
        %v8207 = vpack.c.b16 %v6357, %v6307
        %v8208 = vpack.c.b16 %v6358, %v6308
        %v8209 = vpack.c.b16 %v6359, %v6309
        %v8210 = vpack.c.b16 %v6360, %v6310
        %v8211 = vpack.c.b16 %v6361, %v6311
        %v8212 = vpack.c.b16 %v6362, %v6312
        %v8213 = vpack.c.b16 %v6363, %v6313
        %v8214 = vpack.c.b16 %v6364, %v6314
        %v8215 = vpack.c.b16 %v6365, %v6315
        %v8216 = vpack.c.b16 %v6366, %v6316
        %v8217 = vpack.c.b16 %v6367, %v6317
        %v8218 = vpack.c.b16 %v6368, %v6318
        %v8219 = vpack.c.b16 %v6369, %v6319
        %v8220 = vpack.c.b16 %v6370, %v6320
        %v8221 = vpack.c.b16 %v6371, %v6321
        %v8222 = vpack.c.b16 %v6372, %v6322
        %v8223 = vpack.c.b16 %v6373, %v6323
        %v8224 = vpack.c.b16 %v6374, %v6324
        %v8225 = vpack.c.b16 %v6375, %v6325
        %v8226 = vpack.c.b16 %v6376, %v6326
        %v8227 = vpack.c.b16 %v6377, %v6327
        %v8228 = vpack.c.b16 %v6378, %v6328
        %v8229 = vpack.c.b16 %v6379, %v6329
        %v8230 = vpack.c.b16 %v6380, %v6330
        %v8231 = vpack.c.b16 %v6381, %v6331
        %v8232 = vpack.c.b16 %v6382, %v6332
        %v8233 = vpack.c.b16 %v6383, %v6333
        %v8234 = vpack.c.b16 %v6434, %v6384
        %v8235 = vpack.c.b16 %v6435, %v6385
        %v8236 = vpack.c.b16 %v6436, %v6386
        %v8237 = vpack.c.b16 %v6437, %v6387
        %v8238 = vpack.c.b16 %v6438, %v6388
        %v8239 = vpack.c.b16 %v6439, %v6389
        %v8240 = vpack.c.b16 %v6440, %v6390
        %v8241 = vpack.c.b16 %v6441, %v6391
        %v8242 = vpack.c.b16 %v6442, %v6392
        %v8243 = vpack.c.b16 %v6443, %v6393
        %v8244 = vpack.c.b16 %v6444, %v6394
        %v8245 = vpack.c.b16 %v6445, %v6395
        %v8246 = vpack.c.b16 %v6446, %v6396
        %v8247 = vpack.c.b16 %v6447, %v6397
        %v8248 = vpack.c.b16 %v6448, %v6398
        %v8249 = vpack.c.b16 %v6449, %v6399
        %v8250 = vpack.c.b16 %v6450, %v6400
        %v8251 = vpack.c.b16 %v6451, %v6401
        %v8252 = vpack.c.b16 %v6452, %v6402
        %v8253 = vpack.c.b16 %v6453, %v6403
        %v8254 = vpack.c.b16 %v6454, %v6404
        %v8255 = vpack.c.b16 %v6455, %v6405
        %v8256 = vpack.c.b16 %v6456, %v6406
        %v8257 = vpack.c.b16 %v6457, %v6407
        %v8258 = vpack.c.b16 %v6458, %v6408
        %v8259 = vpack.c.b16 %v6459, %v6409
        %v8260 = vpack.c.b16 %v6460, %v6410
        %v8261 = vpack.c.b16 %v6461, %v6411
        %v8262 = vpack.c.b16 %v6462, %v6412
        %v8263 = vpack.c.b16 %v6463, %v6413
        %v8264 = vpack.c.b16 %v6464, %v6414
        %v8265 = vpack.c.b16 %v6465, %v6415
        %v8266 = vpack.c.b16 %v6466, %v6416
        %v8267 = vpack.c.b16 %v6467, %v6417
        %v8268 = vpack.c.b16 %v6468, %v6418
        %v8269 = vpack.c.b16 %v6469, %v6419
        %v8270 = vpack.c.b16 %v6470, %v6420
        %v8271 = vpack.c.b16 %v6471, %v6421
        %v8272 = vpack.c.b16 %v6472, %v6422
        %v8273 = vpack.c.b16 %v6473, %v6423
        %v8274 = vpack.c.b16 %v6474, %v6424
        %v8275 = vpack.c.b16 %v6475, %v6425
        %v8276 = vpack.c.b16 %v6476, %v6426
        %v8277 = vpack.c.b16 %v6477, %v6427
        %v8278 = vpack.c.b16 %v6478, %v6428
        %v8279 = vpack.c.b16 %v6479, %v6429
        %v8280 = vpack.c.b16 %v6480, %v6430
        %v8281 = vpack.c.b16 %v6481, %v6431
        %v8282 = vpack.c.b16 %v6482, %v6432
        %v8283 = vpack.c.b16 %v6483, %v6433
        %v8284 = vpack.c.b16 %v6534, %v6484
        %v8285 = vpack.c.b16 %v6535, %v6485
        %v8286 = vpack.c.b16 %v6536, %v6486
        %v8287 = vpack.c.b16 %v6537, %v6487
        %v8288 = vpack.c.b16 %v6538, %v6488
        %v8289 = vpack.c.b16 %v6539, %v6489
        %v8290 = vpack.c.b16 %v6540, %v6490
        %v8291 = vpack.c.b16 %v6541, %v6491
        %v8292 = vpack.c.b16 %v6542, %v6492
        %v8293 = vpack.c.b16 %v6543, %v6493
        %v8294 = vpack.c.b16 %v6544, %v6494
        %v8295 = vpack.c.b16 %v6545, %v6495
        %v8296 = vpack.c.b16 %v6546, %v6496
        %v8297 = vpack.c.b16 %v6547, %v6497
        %v8298 = vpack.c.b16 %v6548, %v6498
        %v8299 = vpack.c.b16 %v6549, %v6499
        %v8300 = vpack.c.b16 %v6550, %v6500
        %v8301 = vpack.c.b16 %v6551, %v6501
        %v8302 = vpack.c.b16 %v6552, %v6502
        %v8303 = vpack.c.b16 %v6553, %v6503
        %v8304 = vpack.c.b16 %v6554, %v6504
        %v8305 = vpack.c.b16 %v6555, %v6505
        %v8306 = vpack.c.b16 %v6556, %v6506
        %v8307 = vpack.c.b16 %v6557, %v6507
        %v8308 = vpack.c.b16 %v6558, %v6508
        %v8309 = vpack.c.b16 %v6559, %v6509
        %v8310 = vpack.c.b16 %v6560, %v6510
        %v8311 = vpack.c.b16 %v6561, %v6511
        %v8312 = vpack.c.b16 %v6562, %v6512
        %v8313 = vpack.c.b16 %v6563, %v6513
        %v8314 = vpack.c.b16 %v6564, %v6514
        %v8315 = vpack.c.b16 %v6565, %v6515
        %v8316 = vpack.c.b16 %v6566, %v6516
        %v8317 = vpack.c.b16 %v6567, %v6517
        %v8318 = vpack.c.b16 %v6568, %v6518
        %v8319 = vpack.c.b16 %v6569, %v6519
        %v8320 = vpack.c.b16 %v6570, %v6520
        %v8321 = vpack.c.b16 %v6571, %v6521
        %v8322 = vpack.c.b16 %v6572, %v6522
        %v8323 = vpack.c.b16 %v6573, %v6523
        %v8324 = vpack.c.b16 %v6574, %v6524
        %v8325 = vpack.c.b16 %v6575, %v6525
        %v8326 = vpack.c.b16 %v6576, %v6526
        %v8327 = vpack.c.b16 %v6577, %v6527
        %v8328 = vpack.c.b16 %v6578, %v6528
        %v8329 = vpack.c.b16 %v6579, %v6529
        %v8330 = vpack.c.b16 %v6580, %v6530
        %v8331 = vpack.c.b16 %v6581, %v6531
        %v8332 = vpack.c.b16 %v6582, %v6532
        %v8333 = vpack.c.b16 %v6583, %v6533
        %v8334 = vpack.c.b16 %v6634, %v6584
        %v8335 = vpack.c.b16 %v6635, %v6585
        %v8336 = vpack.c.b16 %v6636, %v6586
        %v8337 = vpack.c.b16 %v6637, %v6587
        %v8338 = vpack.c.b16 %v6638, %v6588
        %v8339 = vpack.c.b16 %v6639, %v6589
        %v8340 = vpack.c.b16 %v6640, %v6590
        %v8341 = vpack.c.b16 %v6641, %v6591
        %v8342 = vpack.c.b16 %v6642, %v6592
        %v8343 = vpack.c.b16 %v6643, %v6593
        %v8344 = vpack.c.b16 %v6644, %v6594
        %v8345 = vpack.c.b16 %v6645, %v6595
        %v8346 = vpack.c.b16 %v6646, %v6596
        %v8347 = vpack.c.b16 %v6647, %v6597
        %v8348 = vpack.c.b16 %v6648, %v6598
        %v8349 = vpack.c.b16 %v6649, %v6599
        %v8350 = vpack.c.b16 %v6650, %v6600
        %v8351 = vpack.c.b16 %v6651, %v6601
        %v8352 = vpack.c.b16 %v6652, %v6602
        %v8353 = vpack.c.b16 %v6653, %v6603
        %v8354 = vpack.c.b16 %v6654, %v6604
        %v8355 = vpack.c.b16 %v6655, %v6605
        %v8356 = vpack.c.b16 %v6656, %v6606
        %v8357 = vpack.c.b16 %v6657, %v6607
        %v8358 = vpack.c.b16 %v6658, %v6608
        %v8359 = vpack.c.b16 %v6659, %v6609
        %v8360 = vpack.c.b16 %v6660, %v6610
        %v8361 = vpack.c.b16 %v6661, %v6611
        %v8362 = vpack.c.b16 %v6662, %v6612
        %v8363 = vpack.c.b16 %v6663, %v6613
        %v8364 = vpack.c.b16 %v6664, %v6614
        %v8365 = vpack.c.b16 %v6665, %v6615
        %v8366 = vpack.c.b16 %v6666, %v6616
        %v8367 = vpack.c.b16 %v6667, %v6617
        %v8368 = vpack.c.b16 %v6668, %v6618
        %v8369 = vpack.c.b16 %v6669, %v6619
        %v8370 = vpack.c.b16 %v6670, %v6620
        %v8371 = vpack.c.b16 %v6671, %v6621
        %v8372 = vpack.c.b16 %v6672, %v6622
        %v8373 = vpack.c.b16 %v6673, %v6623
        %v8374 = vpack.c.b16 %v6674, %v6624
        %v8375 = vpack.c.b16 %v6675, %v6625
        %v8376 = vpack.c.b16 %v6676, %v6626
        %v8377 = vpack.c.b16 %v6677, %v6627
        %v8378 = vpack.c.b16 %v6678, %v6628
        %v8379 = vpack.c.b16 %v6679, %v6629
        %v8380 = vpack.c.b16 %v6680, %v6630
        %v8381 = vpack.c.b16 %v6681, %v6631
        %v8382 = vpack.c.b16 %v6682, %v6632
        %v8383 = vpack.c.b16 %v6683, %v6633
        %v8384 = vpack.c.b16 %v6734, %v6684
        %v8385 = vpack.c.b16 %v6735, %v6685
        %v8386 = vpack.c.b16 %v6736, %v6686
        %v8387 = vpack.c.b16 %v6737, %v6687
        %v8388 = vpack.c.b16 %v6738, %v6688
        %v8389 = vpack.c.b16 %v6739, %v6689
        %v8390 = vpack.c.b16 %v6740, %v6690
        %v8391 = vpack.c.b16 %v6741, %v6691
        %v8392 = vpack.c.b16 %v6742, %v6692
        %v8393 = vpack.c.b16 %v6743, %v6693
        %v8394 = vpack.c.b16 %v6744, %v6694
        %v8395 = vpack.c.b16 %v6745, %v6695
        %v8396 = vpack.c.b16 %v6746, %v6696
        %v8397 = vpack.c.b16 %v6747, %v6697
        %v8398 = vpack.c.b16 %v6748, %v6698
        %v8399 = vpack.c.b16 %v6749, %v6699
        %v8400 = vpack.c.b16 %v6750, %v6700
        %v8401 = vpack.c.b16 %v6751, %v6701
        %v8402 = vpack.c.b16 %v6752, %v6702
        %v8403 = vpack.c.b16 %v6753, %v6703
        %v8404 = vpack.c.b16 %v6754, %v6704
        %v8405 = vpack.c.b16 %v6755, %v6705
        %v8406 = vpack.c.b16 %v6756, %v6706
        %v8407 = vpack.c.b16 %v6757, %v6707
        %v8408 = vpack.c.b16 %v6758, %v6708
        %v8409 = vpack.c.b16 %v6759, %v6709
        %v8410 = vpack.c.b16 %v6760, %v6710
        %v8411 = vpack.c.b16 %v6761, %v6711
        %v8412 = vpack.c.b16 %v6762, %v6712
        %v8413 = vpack.c.b16 %v6763, %v6713
        %v8414 = vpack.c.b16 %v6764, %v6714
        %v8415 = vpack.c.b16 %v6765, %v6715
        %v8416 = vpack.c.b16 %v6766, %v6716
        %v8417 = vpack.c.b16 %v6767, %v6717
        %v8418 = vpack.c.b16 %v6768, %v6718
        %v8419 = vpack.c.b16 %v6769, %v6719
        %v8420 = vpack.c.b16 %v6770, %v6720
        %v8421 = vpack.c.b16 %v6771, %v6721
        %v8422 = vpack.c.b16 %v6772, %v6722
        %v8423 = vpack.c.b16 %v6773, %v6723
        %v8424 = vpack.c.b16 %v6774, %v6724
        %v8425 = vpack.c.b16 %v6775, %v6725
        %v8426 = vpack.c.b16 %v6776, %v6726
        %v8427 = vpack.c.b16 %v6777, %v6727
        %v8428 = vpack.c.b16 %v6778, %v6728
        %v8429 = vpack.c.b16 %v6779, %v6729
        %v8430 = vpack.c.b16 %v6780, %v6730
        %v8431 = vpack.c.b16 %v6781, %v6731
        %v8432 = vpack.c.b16 %v6782, %v6732
        %v8433 = vpack.c.b16 %v6783, %v6733
        %v8434 = vpack.c.b16 %v6834, %v6784
        %v8435 = vpack.c.b16 %v6835, %v6785
        %v8436 = vpack.c.b16 %v6836, %v6786
        %v8437 = vpack.c.b16 %v6837, %v6787
        %v8438 = vpack.c.b16 %v6838, %v6788
        %v8439 = vpack.c.b16 %v6839, %v6789
        %v8440 = vpack.c.b16 %v6840, %v6790
        %v8441 = vpack.c.b16 %v6841, %v6791
        %v8442 = vpack.c.b16 %v6842, %v6792
        %v8443 = vpack.c.b16 %v6843, %v6793
        %v8444 = vpack.c.b16 %v6844, %v6794
        %v8445 = vpack.c.b16 %v6845, %v6795
        %v8446 = vpack.c.b16 %v6846, %v6796
        %v8447 = vpack.c.b16 %v6847, %v6797
        %v8448 = vpack.c.b16 %v6848, %v6798
        %v8449 = vpack.c.b16 %v6849, %v6799
        %v8450 = vpack.c.b16 %v6850, %v6800
        %v8451 = vpack.c.b16 %v6851, %v6801
        %v8452 = vpack.c.b16 %v6852, %v6802
        %v8453 = vpack.c.b16 %v6853, %v6803
        %v8454 = vpack.c.b16 %v6854, %v6804
        %v8455 = vpack.c.b16 %v6855, %v6805
        %v8456 = vpack.c.b16 %v6856, %v6806
        %v8457 = vpack.c.b16 %v6857, %v6807
        %v8458 = vpack.c.b16 %v6858, %v6808
        %v8459 = vpack.c.b16 %v6859, %v6809
        %v8460 = vpack.c.b16 %v6860, %v6810
        %v8461 = vpack.c.b16 %v6861, %v6811
        %v8462 = vpack.c.b16 %v6862, %v6812
        %v8463 = vpack.c.b16 %v6863, %v6813
        %v8464 = vpack.c.b16 %v6864, %v6814
        %v8465 = vpack.c.b16 %v6865, %v6815
        %v8466 = vpack.c.b16 %v6866, %v6816
        %v8467 = vpack.c.b16 %v6867, %v6817
        %v8468 = vpack.c.b16 %v6868, %v6818
        %v8469 = vpack.c.b16 %v6869, %v6819
        %v8470 = vpack.c.b16 %v6870, %v6820
        %v8471 = vpack.c.b16 %v6871, %v6821
        %v8472 = vpack.c.b16 %v6872, %v6822
        %v8473 = vpack.c.b16 %v6873, %v6823
        %v8474 = vpack.c.b16 %v6874, %v6824
        %v8475 = vpack.c.b16 %v6875, %v6825
        %v8476 = vpack.c.b16 %v6876, %v6826
        %v8477 = vpack.c.b16 %v6877, %v6827
        %v8478 = vpack.c.b16 %v6878, %v6828
        %v8479 = vpack.c.b16 %v6879, %v6829
        %v8480 = vpack.c.b16 %v6880, %v6830
        %v8481 = vpack.c.b16 %v6881, %v6831
        %v8482 = vpack.c.b16 %v6882, %v6832
        %v8483 = vpack.c.b16 %v6883, %v6833
        %10084 = vmatprep.subr.bf16.mxu0 %v7235
        %10085 = vmatpush1.bf16.msra.mxu0 %v7234
        %10086 = vmatprep.subr.bf16.mxu0 %v7185
        %10087 = vmatpush1.bf16.msra.mxu0 %v7184
        %10088 = vmatprep.subr.bf16.mxu0 %v7135
        %10089 = vmatpush1.bf16.msra.mxu0 %v7134
        %10090 = vmatprep.subr.bf16.mxu0 %v7085
        %10091 = vmatpush1.bf16.msra.mxu0 %v7084
        %10092 = vmatprep.subr.bf16.mxu0 %v7035
        %10093 = vmatpush1.bf16.msra.mxu0 %v7034
        %10094 = vmatprep.subr.bf16.mxu0 %v6985
        %10095 = vmatpush1.bf16.msra.mxu0 %v6984
        %10096 = vmatprep.subr.bf16.mxu0 %v6935
        %10097 = vmatpush1.bf16.msra.mxu0 %v6934
        %10098 = vmatprep.subr.bf16.mxu0 %v6885
        %10099 = vmatpush1.bf16.msra.mxu0 %v6884
        %10100 = vmatprep.subr.bf16.mxu0 %v7635
        %10101 = vmatpush2.bf16.msra.mxu0 %v7634
        %10102 = vmatprep.subr.bf16.mxu0 %v7585
        %10103 = vmatpush2.bf16.msra.mxu0 %v7584
        %10104 = vmatprep.subr.bf16.mxu0 %v7535
        %10105 = vmatpush2.bf16.msra.mxu0 %v7534
        %10106 = vmatprep.subr.bf16.mxu0 %v7485
        %10107 = vmatpush2.bf16.msra.mxu0 %v7484
        %10108 = vmatprep.subr.bf16.mxu0 %v7435
        %10109 = vmatpush2.bf16.msra.mxu0 %v7434
        %10110 = vmatprep.subr.bf16.mxu0 %v7385
        %10111 = vmatpush2.bf16.msra.mxu0 %v7384
        %10112 = vmatprep.subr.bf16.mxu0 %v7335
        %10113 = vmatpush2.bf16.msra.mxu0 %v7334
        %10114 = vmatprep.subr.bf16.mxu0 %v7285
        %10115 = vmatpush2.bf16.msra.mxu0 %v7284
        %10116 = vmatprep.mubr.bf16.mxu0 %v217
        %10117 = vmatmul.mubr.bf16.gmra.mxu0 %v216
        %v10118 = vpop.f32.mrf.mxu0
        %v10119 = vadd.f32 %v1837, %v10118
        %v10120 = vpop.f32.mrf.mxu0
        %v10121 = vadd.f32 %v1841, %v10120
        %v10122 = vpop.f32.mrf.mxu0
        %v10123 = vpop.f32.mrf.mxu0
        %10124 = vdwg.mxu0
        %10125 = vmatprep.subr.bf16.mxu0 %v8035
        %10126 = vmatpush1.bf16.msra.mxu0 %v8034
        %10127 = vmatprep.subr.bf16.mxu0 %v7985
        %10128 = vmatpush1.bf16.msra.mxu0 %v7984
        %10129 = vmatprep.subr.bf16.mxu0 %v7935
        %10130 = vmatpush1.bf16.msra.mxu0 %v7934
        %10131 = vmatprep.subr.bf16.mxu0 %v7885
        %10132 = vmatpush1.bf16.msra.mxu0 %v7884
        %10133 = vmatprep.subr.bf16.mxu0 %v7835
        %10134 = vmatpush1.bf16.msra.mxu0 %v7834
        %10135 = vmatprep.subr.bf16.mxu0 %v7785
        %10136 = vmatpush1.bf16.msra.mxu0 %v7784
        %10137 = vmatprep.subr.bf16.mxu0 %v7735
        %10138 = vmatpush1.bf16.msra.mxu0 %v7734
        %10139 = vmatprep.subr.bf16.mxu0 %v7685
        %10140 = vmatpush1.bf16.msra.mxu0 %v7684
        %10141 = vmatprep.subr.bf16.mxu0 %v8435
        %10142 = vmatpush2.bf16.msra.mxu0 %v8434
        %10143 = vmatprep.subr.bf16.mxu0 %v8385
        %10144 = vmatpush2.bf16.msra.mxu0 %v8384
        %10145 = vmatprep.subr.bf16.mxu0 %v8335
        %10146 = vmatpush2.bf16.msra.mxu0 %v8334
        %10147 = vmatprep.subr.bf16.mxu0 %v8285
        %10148 = vmatpush2.bf16.msra.mxu0 %v8284
        %10149 = vmatprep.subr.bf16.mxu0 %v8235
        %10150 = vmatpush2.bf16.msra.mxu0 %v8234
        %10151 = vmatprep.subr.bf16.mxu0 %v8185
        %10152 = vmatpush2.bf16.msra.mxu0 %v8184
        %10153 = vmatprep.subr.bf16.mxu0 %v8135
        %10154 = vmatpush2.bf16.msra.mxu0 %v8134
        %10155 = vmatprep.subr.bf16.mxu0 %v8085
        %10156 = vmatpush2.bf16.msra.mxu0 %v8084
        %10157 = vmatprep.mubr.bf16.mxu0 %v219
        %10158 = vmatmul.mubr.bf16.gmra.mxu0 %v218
        %v10159 = vpop.f32.mrf.mxu0
        %v10160 = vadd.f32 %v10119, %v10159
        %v10161 = vpop.f32.mrf.mxu0
        %v10162 = vadd.f32 %v10121, %v10161
        %v10163 = vpop.f32.mrf.mxu0
        %v10164 = vpop.f32.mrf.mxu0
        %10165 = vdwg.mxu0
        %10166 = vmatprep.subr.bf16.mxu0 %v7237
        %10167 = vmatpush1.bf16.msra.mxu0 %v7236
        %10168 = vmatprep.subr.bf16.mxu0 %v7187
        %10169 = vmatpush1.bf16.msra.mxu0 %v7186
        %10170 = vmatprep.subr.bf16.mxu0 %v7137
        %10171 = vmatpush1.bf16.msra.mxu0 %v7136
        %10172 = vmatprep.subr.bf16.mxu0 %v7087
        %10173 = vmatpush1.bf16.msra.mxu0 %v7086
        %10174 = vmatprep.subr.bf16.mxu0 %v7037
        %10175 = vmatpush1.bf16.msra.mxu0 %v7036
        %10176 = vmatprep.subr.bf16.mxu0 %v6987
        %10177 = vmatpush1.bf16.msra.mxu0 %v6986
        %10178 = vmatprep.subr.bf16.mxu0 %v6937
        %10179 = vmatpush1.bf16.msra.mxu0 %v6936
        %10180 = vmatprep.subr.bf16.mxu0 %v6887
        %10181 = vmatpush1.bf16.msra.mxu0 %v6886
        %10182 = vmatprep.subr.bf16.mxu0 %v7637
        %10183 = vmatpush2.bf16.msra.mxu0 %v7636
        %10184 = vmatprep.subr.bf16.mxu0 %v7587
        %10185 = vmatpush2.bf16.msra.mxu0 %v7586
        %10186 = vmatprep.subr.bf16.mxu0 %v7537
        %10187 = vmatpush2.bf16.msra.mxu0 %v7536
        %10188 = vmatprep.subr.bf16.mxu0 %v7487
        %10189 = vmatpush2.bf16.msra.mxu0 %v7486
        %10190 = vmatprep.subr.bf16.mxu0 %v7437
        %10191 = vmatpush2.bf16.msra.mxu0 %v7436
        %10192 = vmatprep.subr.bf16.mxu0 %v7387
        %10193 = vmatpush2.bf16.msra.mxu0 %v7386
        %10194 = vmatprep.subr.bf16.mxu0 %v7337
        %10195 = vmatpush2.bf16.msra.mxu0 %v7336
        %10196 = vmatprep.subr.bf16.mxu0 %v7287
        %10197 = vmatpush2.bf16.msra.mxu0 %v7286
        %10198 = vmatprep.mubr.bf16.mxu0 %v217
        %10199 = vmatmul.mubr.bf16.gmra.mxu0 %v216
        %v10200 = vpop.f32.mrf.mxu0
        %v10201 = vadd.f32 %v1845, %v10200
        %v10202 = vpop.f32.mrf.mxu0
        %v10203 = vadd.f32 %v1849, %v10202
        %v10204 = vpop.f32.mrf.mxu0
        %v10205 = vpop.f32.mrf.mxu0
        %10206 = vdwg.mxu0
        %10207 = vmatprep.subr.bf16.mxu0 %v8037
        %10208 = vmatpush1.bf16.msra.mxu0 %v8036
        %10209 = vmatprep.subr.bf16.mxu0 %v7987
        %10210 = vmatpush1.bf16.msra.mxu0 %v7986
        %10211 = vmatprep.subr.bf16.mxu0 %v7937
        %10212 = vmatpush1.bf16.msra.mxu0 %v7936
        %10213 = vmatprep.subr.bf16.mxu0 %v7887
        %10214 = vmatpush1.bf16.msra.mxu0 %v7886
        %10215 = vmatprep.subr.bf16.mxu0 %v7837
        %10216 = vmatpush1.bf16.msra.mxu0 %v7836
        %10217 = vmatprep.subr.bf16.mxu0 %v7787
        %10218 = vmatpush1.bf16.msra.mxu0 %v7786
        %10219 = vmatprep.subr.bf16.mxu0 %v7737
        %10220 = vmatpush1.bf16.msra.mxu0 %v7736
        %10221 = vmatprep.subr.bf16.mxu0 %v7687
        %10222 = vmatpush1.bf16.msra.mxu0 %v7686
        %10223 = vmatprep.subr.bf16.mxu0 %v8437
        %10224 = vmatpush2.bf16.msra.mxu0 %v8436
        %10225 = vmatprep.subr.bf16.mxu0 %v8387
        %10226 = vmatpush2.bf16.msra.mxu0 %v8386
        %10227 = vmatprep.subr.bf16.mxu0 %v8337
        %10228 = vmatpush2.bf16.msra.mxu0 %v8336
        %10229 = vmatprep.subr.bf16.mxu0 %v8287
        %10230 = vmatpush2.bf16.msra.mxu0 %v8286
        %10231 = vmatprep.subr.bf16.mxu0 %v8237
        %10232 = vmatpush2.bf16.msra.mxu0 %v8236
        %10233 = vmatprep.subr.bf16.mxu0 %v8187
        %10234 = vmatpush2.bf16.msra.mxu0 %v8186
        %10235 = vmatprep.subr.bf16.mxu0 %v8137
        %10236 = vmatpush2.bf16.msra.mxu0 %v8136
        %10237 = vmatprep.subr.bf16.mxu0 %v8087
        %10238 = vmatpush2.bf16.msra.mxu0 %v8086
        %10239 = vmatprep.mubr.bf16.mxu0 %v219
        %10240 = vmatmul.mubr.bf16.gmra.mxu0 %v218
        %v10241 = vpop.f32.mrf.mxu0
        %v10242 = vadd.f32 %v10201, %v10241
        %v10243 = vpop.f32.mrf.mxu0
        %v10244 = vadd.f32 %v10203, %v10243
        %v10245 = vpop.f32.mrf.mxu0
        %v10246 = vpop.f32.mrf.mxu0
        %10247 = vdwg.mxu0
        %10248 = vmatprep.subr.bf16.mxu0 %v7239
        %10249 = vmatpush1.bf16.msra.mxu0 %v7238
        %10250 = vmatprep.subr.bf16.mxu0 %v7189
        %10251 = vmatpush1.bf16.msra.mxu0 %v7188
        %10252 = vmatprep.subr.bf16.mxu0 %v7139
        %10253 = vmatpush1.bf16.msra.mxu0 %v7138
        %10254 = vmatprep.subr.bf16.mxu0 %v7089
        %10255 = vmatpush1.bf16.msra.mxu0 %v7088
        %10256 = vmatprep.subr.bf16.mxu0 %v7039
        %10257 = vmatpush1.bf16.msra.mxu0 %v7038
        %10258 = vmatprep.subr.bf16.mxu0 %v6989
        %10259 = vmatpush1.bf16.msra.mxu0 %v6988
        %10260 = vmatprep.subr.bf16.mxu0 %v6939
        %10261 = vmatpush1.bf16.msra.mxu0 %v6938
        %10262 = vmatprep.subr.bf16.mxu0 %v6889
        %10263 = vmatpush1.bf16.msra.mxu0 %v6888
        %10264 = vmatprep.subr.bf16.mxu0 %v7639
        %10265 = vmatpush2.bf16.msra.mxu0 %v7638
        %10266 = vmatprep.subr.bf16.mxu0 %v7589
        %10267 = vmatpush2.bf16.msra.mxu0 %v7588
        %10268 = vmatprep.subr.bf16.mxu0 %v7539
        %10269 = vmatpush2.bf16.msra.mxu0 %v7538
        %10270 = vmatprep.subr.bf16.mxu0 %v7489
        %10271 = vmatpush2.bf16.msra.mxu0 %v7488
        %10272 = vmatprep.subr.bf16.mxu0 %v7439
        %10273 = vmatpush2.bf16.msra.mxu0 %v7438
        %10274 = vmatprep.subr.bf16.mxu0 %v7389
        %10275 = vmatpush2.bf16.msra.mxu0 %v7388
        %10276 = vmatprep.subr.bf16.mxu0 %v7339
        %10277 = vmatpush2.bf16.msra.mxu0 %v7338
        %10278 = vmatprep.subr.bf16.mxu0 %v7289
        %10279 = vmatpush2.bf16.msra.mxu0 %v7288
        %10280 = vmatprep.mubr.bf16.mxu0 %v217
        %10281 = vmatmul.mubr.bf16.gmra.mxu0 %v216
        %v10282 = vpop.f32.mrf.mxu0
        %v10283 = vadd.f32 %v1853, %v10282
        %v10284 = vpop.f32.mrf.mxu0
        %v10285 = vadd.f32 %v1857, %v10284
        %v10286 = vpop.f32.mrf.mxu0
        %v10287 = vpop.f32.mrf.mxu0
        %10288 = vdwg.mxu0
        %10289 = vmatprep.subr.bf16.mxu0 %v8039
        %10290 = vmatpush1.bf16.msra.mxu0 %v8038
        %10291 = vmatprep.subr.bf16.mxu0 %v7989
        %10292 = vmatpush1.bf16.msra.mxu0 %v7988
        %10293 = vmatprep.subr.bf16.mxu0 %v7939
        %10294 = vmatpush1.bf16.msra.mxu0 %v7938
        %10295 = vmatprep.subr.bf16.mxu0 %v7889
        %10296 = vmatpush1.bf16.msra.mxu0 %v7888
        %10297 = vmatprep.subr.bf16.mxu0 %v7839
        %10298 = vmatpush1.bf16.msra.mxu0 %v7838
        %10299 = vmatprep.subr.bf16.mxu0 %v7789
        %10300 = vmatpush1.bf16.msra.mxu0 %v7788
        %10301 = vmatprep.subr.bf16.mxu0 %v7739
        %10302 = vmatpush1.bf16.msra.mxu0 %v7738
        %10303 = vmatprep.subr.bf16.mxu0 %v7689
        %10304 = vmatpush1.bf16.msra.mxu0 %v7688
        %10305 = vmatprep.subr.bf16.mxu0 %v8439
        %10306 = vmatpush2.bf16.msra.mxu0 %v8438
        %10307 = vmatprep.subr.bf16.mxu0 %v8389
        %10308 = vmatpush2.bf16.msra.mxu0 %v8388
        %10309 = vmatprep.subr.bf16.mxu0 %v8339
        %10310 = vmatpush2.bf16.msra.mxu0 %v8338
        %10311 = vmatprep.subr.bf16.mxu0 %v8289
        %10312 = vmatpush2.bf16.msra.mxu0 %v8288
        %10313 = vmatprep.subr.bf16.mxu0 %v8239
        %10314 = vmatpush2.bf16.msra.mxu0 %v8238
        %10315 = vmatprep.subr.bf16.mxu0 %v8189
        %10316 = vmatpush2.bf16.msra.mxu0 %v8188
        %10317 = vmatprep.subr.bf16.mxu0 %v8139
        %10318 = vmatpush2.bf16.msra.mxu0 %v8138
        %10319 = vmatprep.subr.bf16.mxu0 %v8089
        %10320 = vmatpush2.bf16.msra.mxu0 %v8088
        %10321 = vmatprep.mubr.bf16.mxu0 %v219
        %10322 = vmatmul.mubr.bf16.gmra.mxu0 %v218
        %v10323 = vpop.f32.mrf.mxu0
        %v10324 = vadd.f32 %v10283, %v10323
        %v10325 = vpop.f32.mrf.mxu0
        %v10326 = vadd.f32 %v10285, %v10325
        %v10327 = vpop.f32.mrf.mxu0
        %v10328 = vpop.f32.mrf.mxu0
        %10329 = vdwg.mxu0
        %10330 = vmatprep.subr.bf16.mxu0 %v7241
        %10331 = vmatpush1.bf16.msra.mxu0 %v7240
        %10332 = vmatprep.subr.bf16.mxu0 %v7191
        %10333 = vmatpush1.bf16.msra.mxu0 %v7190
        %10334 = vmatprep.subr.bf16.mxu0 %v7141
        %10335 = vmatpush1.bf16.msra.mxu0 %v7140
        %10336 = vmatprep.subr.bf16.mxu0 %v7091
        %10337 = vmatpush1.bf16.msra.mxu0 %v7090
        %10338 = vmatprep.subr.bf16.mxu0 %v7041
        %10339 = vmatpush1.bf16.msra.mxu0 %v7040
        %10340 = vmatprep.subr.bf16.mxu0 %v6991
        %10341 = vmatpush1.bf16.msra.mxu0 %v6990
        %10342 = vmatprep.subr.bf16.mxu0 %v6941
        %10343 = vmatpush1.bf16.msra.mxu0 %v6940
        %10344 = vmatprep.subr.bf16.mxu0 %v6891
        %10345 = vmatpush1.bf16.msra.mxu0 %v6890
        %10346 = vmatprep.subr.bf16.mxu0 %v7641
        %10347 = vmatpush2.bf16.msra.mxu0 %v7640
        %10348 = vmatprep.subr.bf16.mxu0 %v7591
        %10349 = vmatpush2.bf16.msra.mxu0 %v7590
        %10350 = vmatprep.subr.bf16.mxu0 %v7541
        %10351 = vmatpush2.bf16.msra.mxu0 %v7540
        %10352 = vmatprep.subr.bf16.mxu0 %v7491
        %10353 = vmatpush2.bf16.msra.mxu0 %v7490
        %10354 = vmatprep.subr.bf16.mxu0 %v7441
        %10355 = vmatpush2.bf16.msra.mxu0 %v7440
        %10356 = vmatprep.subr.bf16.mxu0 %v7391
        %10357 = vmatpush2.bf16.msra.mxu0 %v7390
        %10358 = vmatprep.subr.bf16.mxu0 %v7341
        %10359 = vmatpush2.bf16.msra.mxu0 %v7340
        %10360 = vmatprep.subr.bf16.mxu0 %v7291
        %10361 = vmatpush2.bf16.msra.mxu0 %v7290
        %10362 = vmatprep.mubr.bf16.mxu0 %v217
        %10363 = vmatmul.mubr.bf16.gmra.mxu0 %v216
        %v10364 = vpop.f32.mrf.mxu0
        %v10365 = vadd.f32 %v1861, %v10364
        %v10366 = vpop.f32.mrf.mxu0
        %v10367 = vadd.f32 %v1865, %v10366
        %v10368 = vpop.f32.mrf.mxu0
        %v10369 = vpop.f32.mrf.mxu0
        %10370 = vdwg.mxu0
        %10371 = vmatprep.subr.bf16.mxu0 %v8041
        %10372 = vmatpush1.bf16.msra.mxu0 %v8040
        %10373 = vmatprep.subr.bf16.mxu0 %v7991
        %10374 = vmatpush1.bf16.msra.mxu0 %v7990
        %10375 = vmatprep.subr.bf16.mxu0 %v7941
        %10376 = vmatpush1.bf16.msra.mxu0 %v7940
        %10377 = vmatprep.subr.bf16.mxu0 %v7891
        %10378 = vmatpush1.bf16.msra.mxu0 %v7890
        %10379 = vmatprep.subr.bf16.mxu0 %v7841
        %10380 = vmatpush1.bf16.msra.mxu0 %v7840
        %10381 = vmatprep.subr.bf16.mxu0 %v7791
        %10382 = vmatpush1.bf16.msra.mxu0 %v7790
        %10383 = vmatprep.subr.bf16.mxu0 %v7741
        %10384 = vmatpush1.bf16.msra.mxu0 %v7740
        %10385 = vmatprep.subr.bf16.mxu0 %v7691
        %10386 = vmatpush1.bf16.msra.mxu0 %v7690
        %10387 = vmatprep.subr.bf16.mxu0 %v8441
        %10388 = vmatpush2.bf16.msra.mxu0 %v8440
        %10389 = vmatprep.subr.bf16.mxu0 %v8391
        %10390 = vmatpush2.bf16.msra.mxu0 %v8390
        %10391 = vmatprep.subr.bf16.mxu0 %v8341
        %10392 = vmatpush2.bf16.msra.mxu0 %v8340
        %10393 = vmatprep.subr.bf16.mxu0 %v8291
        %10394 = vmatpush2.bf16.msra.mxu0 %v8290
        %10395 = vmatprep.subr.bf16.mxu0 %v8241
        %10396 = vmatpush2.bf16.msra.mxu0 %v8240
        %10397 = vmatprep.subr.bf16.mxu0 %v8191
        %10398 = vmatpush2.bf16.msra.mxu0 %v8190
        %10399 = vmatprep.subr.bf16.mxu0 %v8141
        %10400 = vmatpush2.bf16.msra.mxu0 %v8140
        %10401 = vmatprep.subr.bf16.mxu0 %v8091
        %10402 = vmatpush2.bf16.msra.mxu0 %v8090
        %10403 = vmatprep.mubr.bf16.mxu0 %v219
        %10404 = vmatmul.mubr.bf16.gmra.mxu0 %v218
        %v10405 = vpop.f32.mrf.mxu0
        %v10406 = vadd.f32 %v10365, %v10405
        %v10407 = vpop.f32.mrf.mxu0
        %v10408 = vadd.f32 %v10367, %v10407
        %v10409 = vpop.f32.mrf.mxu0
        %v10410 = vpop.f32.mrf.mxu0
        %10411 = vdwg.mxu0
        %10412 = vmatprep.subr.bf16.mxu0 %v7243
        %10413 = vmatpush1.bf16.msra.mxu0 %v7242
        %10414 = vmatprep.subr.bf16.mxu0 %v7193
        %10415 = vmatpush1.bf16.msra.mxu0 %v7192
        %10416 = vmatprep.subr.bf16.mxu0 %v7143
        %10417 = vmatpush1.bf16.msra.mxu0 %v7142
        %10418 = vmatprep.subr.bf16.mxu0 %v7093
        %10419 = vmatpush1.bf16.msra.mxu0 %v7092
        %10420 = vmatprep.subr.bf16.mxu0 %v7043
        %10421 = vmatpush1.bf16.msra.mxu0 %v7042
        %10422 = vmatprep.subr.bf16.mxu0 %v6993
        %10423 = vmatpush1.bf16.msra.mxu0 %v6992
        %10424 = vmatprep.subr.bf16.mxu0 %v6943
        %10425 = vmatpush1.bf16.msra.mxu0 %v6942
        %10426 = vmatprep.subr.bf16.mxu0 %v6893
        %10427 = vmatpush1.bf16.msra.mxu0 %v6892
        %10428 = vmatprep.subr.bf16.mxu0 %v7643
        %10429 = vmatpush2.bf16.msra.mxu0 %v7642
        %10430 = vmatprep.subr.bf16.mxu0 %v7593
        %10431 = vmatpush2.bf16.msra.mxu0 %v7592
        %10432 = vmatprep.subr.bf16.mxu0 %v7543
        %10433 = vmatpush2.bf16.msra.mxu0 %v7542
        %10434 = vmatprep.subr.bf16.mxu0 %v7493
        %10435 = vmatpush2.bf16.msra.mxu0 %v7492
        %10436 = vmatprep.subr.bf16.mxu0 %v7443
        %10437 = vmatpush2.bf16.msra.mxu0 %v7442
        %10438 = vmatprep.subr.bf16.mxu0 %v7393
        %10439 = vmatpush2.bf16.msra.mxu0 %v7392
        %10440 = vmatprep.subr.bf16.mxu0 %v7343
        %10441 = vmatpush2.bf16.msra.mxu0 %v7342
        %10442 = vmatprep.subr.bf16.mxu0 %v7293
        %10443 = vmatpush2.bf16.msra.mxu0 %v7292
        %10444 = vmatprep.mubr.bf16.mxu0 %v217
        %10445 = vmatmul.mubr.bf16.gmra.mxu0 %v216
        %v10446 = vpop.f32.mrf.mxu0
        %v10447 = vadd.f32 %v1869, %v10446
        %v10448 = vpop.f32.mrf.mxu0
        %v10449 = vadd.f32 %v1873, %v10448
        %v10450 = vpop.f32.mrf.mxu0
        %v10451 = vpop.f32.mrf.mxu0
        %10452 = vdwg.mxu0
        %10453 = vmatprep.subr.bf16.mxu0 %v8043
        %10454 = vmatpush1.bf16.msra.mxu0 %v8042
        %10455 = vmatprep.subr.bf16.mxu0 %v7993
        %10456 = vmatpush1.bf16.msra.mxu0 %v7992
        %10457 = vmatprep.subr.bf16.mxu0 %v7943
        %10458 = vmatpush1.bf16.msra.mxu0 %v7942
        %10459 = vmatprep.subr.bf16.mxu0 %v7893
        %10460 = vmatpush1.bf16.msra.mxu0 %v7892
        %10461 = vmatprep.subr.bf16.mxu0 %v7843
        %10462 = vmatpush1.bf16.msra.mxu0 %v7842
        %10463 = vmatprep.subr.bf16.mxu0 %v7793
        %10464 = vmatpush1.bf16.msra.mxu0 %v7792
        %10465 = vmatprep.subr.bf16.mxu0 %v7743
        %10466 = vmatpush1.bf16.msra.mxu0 %v7742
        %10467 = vmatprep.subr.bf16.mxu0 %v7693
        %10468 = vmatpush1.bf16.msra.mxu0 %v7692
        %10469 = vmatprep.subr.bf16.mxu0 %v8443
        %10470 = vmatpush2.bf16.msra.mxu0 %v8442
        %10471 = vmatprep.subr.bf16.mxu0 %v8393
        %10472 = vmatpush2.bf16.msra.mxu0 %v8392
        %10473 = vmatprep.subr.bf16.mxu0 %v8343
        %10474 = vmatpush2.bf16.msra.mxu0 %v8342
        %10475 = vmatprep.subr.bf16.mxu0 %v8293
        %10476 = vmatpush2.bf16.msra.mxu0 %v8292
        %10477 = vmatprep.subr.bf16.mxu0 %v8243
        %10478 = vmatpush2.bf16.msra.mxu0 %v8242
        %10479 = vmatprep.subr.bf16.mxu0 %v8193
        %10480 = vmatpush2.bf16.msra.mxu0 %v8192
        %10481 = vmatprep.subr.bf16.mxu0 %v8143
        %10482 = vmatpush2.bf16.msra.mxu0 %v8142
        %10483 = vmatprep.subr.bf16.mxu0 %v8093
        %10484 = vmatpush2.bf16.msra.mxu0 %v8092
        %10485 = vmatprep.mubr.bf16.mxu0 %v219
        %10486 = vmatmul.mubr.bf16.gmra.mxu0 %v218
        %v10487 = vpop.f32.mrf.mxu0
        %v10488 = vadd.f32 %v10447, %v10487
        %v10489 = vpop.f32.mrf.mxu0
        %v10490 = vadd.f32 %v10449, %v10489
        %v10491 = vpop.f32.mrf.mxu0
        %v10492 = vpop.f32.mrf.mxu0
        %10493 = vdwg.mxu0
        %10494 = vmatprep.subr.bf16.mxu0 %v7245
        %10495 = vmatpush1.bf16.msra.mxu0 %v7244
        %10496 = vmatprep.subr.bf16.mxu0 %v7195
        %10497 = vmatpush1.bf16.msra.mxu0 %v7194
        %10498 = vmatprep.subr.bf16.mxu0 %v7145
        %10499 = vmatpush1.bf16.msra.mxu0 %v7144
        %10500 = vmatprep.subr.bf16.mxu0 %v7095
        %10501 = vmatpush1.bf16.msra.mxu0 %v7094
        %10502 = vmatprep.subr.bf16.mxu0 %v7045
        %10503 = vmatpush1.bf16.msra.mxu0 %v7044
        %10504 = vmatprep.subr.bf16.mxu0 %v6995
        %10505 = vmatpush1.bf16.msra.mxu0 %v6994
        %10506 = vmatprep.subr.bf16.mxu0 %v6945
        %10507 = vmatpush1.bf16.msra.mxu0 %v6944
        %10508 = vmatprep.subr.bf16.mxu0 %v6895
        %10509 = vmatpush1.bf16.msra.mxu0 %v6894
        %10510 = vmatprep.subr.bf16.mxu0 %v7645
        %10511 = vmatpush2.bf16.msra.mxu0 %v7644
        %10512 = vmatprep.subr.bf16.mxu0 %v7595
        %10513 = vmatpush2.bf16.msra.mxu0 %v7594
        %10514 = vmatprep.subr.bf16.mxu0 %v7545
        %10515 = vmatpush2.bf16.msra.mxu0 %v7544
        %10516 = vmatprep.subr.bf16.mxu0 %v7495
        %10517 = vmatpush2.bf16.msra.mxu0 %v7494
        %10518 = vmatprep.subr.bf16.mxu0 %v7445
        %10519 = vmatpush2.bf16.msra.mxu0 %v7444
        %10520 = vmatprep.subr.bf16.mxu0 %v7395
        %10521 = vmatpush2.bf16.msra.mxu0 %v7394
        %10522 = vmatprep.subr.bf16.mxu0 %v7345
        %10523 = vmatpush2.bf16.msra.mxu0 %v7344
        %10524 = vmatprep.subr.bf16.mxu0 %v7295
        %10525 = vmatpush2.bf16.msra.mxu0 %v7294
        %10526 = vmatprep.mubr.bf16.mxu0 %v217
        %10527 = vmatmul.mubr.bf16.gmra.mxu0 %v216
        %v10528 = vpop.f32.mrf.mxu0
        %v10529 = vadd.f32 %v1877, %v10528
        %v10530 = vpop.f32.mrf.mxu0
        %v10531 = vadd.f32 %v1881, %v10530
        %v10532 = vpop.f32.mrf.mxu0
        %v10533 = vpop.f32.mrf.mxu0
        %10534 = vdwg.mxu0
        %10535 = vmatprep.subr.bf16.mxu0 %v8045
        %10536 = vmatpush1.bf16.msra.mxu0 %v8044
        %10537 = vmatprep.subr.bf16.mxu0 %v7995
        %10538 = vmatpush1.bf16.msra.mxu0 %v7994
        %10539 = vmatprep.subr.bf16.mxu0 %v7945
        %10540 = vmatpush1.bf16.msra.mxu0 %v7944
        %10541 = vmatprep.subr.bf16.mxu0 %v7895
        %10542 = vmatpush1.bf16.msra.mxu0 %v7894
        %10543 = vmatprep.subr.bf16.mxu0 %v7845
        %10544 = vmatpush1.bf16.msra.mxu0 %v7844
        %10545 = vmatprep.subr.bf16.mxu0 %v7795
        %10546 = vmatpush1.bf16.msra.mxu0 %v7794
        %10547 = vmatprep.subr.bf16.mxu0 %v7745
        %10548 = vmatpush1.bf16.msra.mxu0 %v7744
        %10549 = vmatprep.subr.bf16.mxu0 %v7695
        %10550 = vmatpush1.bf16.msra.mxu0 %v7694
        %10551 = vmatprep.subr.bf16.mxu0 %v8445
        %10552 = vmatpush2.bf16.msra.mxu0 %v8444
        %10553 = vmatprep.subr.bf16.mxu0 %v8395
        %10554 = vmatpush2.bf16.msra.mxu0 %v8394
        %10555 = vmatprep.subr.bf16.mxu0 %v8345
        %10556 = vmatpush2.bf16.msra.mxu0 %v8344
        %10557 = vmatprep.subr.bf16.mxu0 %v8295
        %10558 = vmatpush2.bf16.msra.mxu0 %v8294
        %10559 = vmatprep.subr.bf16.mxu0 %v8245
        %10560 = vmatpush2.bf16.msra.mxu0 %v8244
        %10561 = vmatprep.subr.bf16.mxu0 %v8195
        %10562 = vmatpush2.bf16.msra.mxu0 %v8194
        %10563 = vmatprep.subr.bf16.mxu0 %v8145
        %10564 = vmatpush2.bf16.msra.mxu0 %v8144
        %10565 = vmatprep.subr.bf16.mxu0 %v8095
        %10566 = vmatpush2.bf16.msra.mxu0 %v8094
        %10567 = vmatprep.mubr.bf16.mxu0 %v219
        %10568 = vmatmul.mubr.bf16.gmra.mxu0 %v218
        %v10569 = vpop.f32.mrf.mxu0
        %v10570 = vadd.f32 %v10529, %v10569
        %v10571 = vpop.f32.mrf.mxu0
        %v10572 = vadd.f32 %v10531, %v10571
        %v10573 = vpop.f32.mrf.mxu0
        %v10574 = vpop.f32.mrf.mxu0
        %10575 = vdwg.mxu0
        %10576 = vmatprep.subr.bf16.mxu0 %v7247
        %10577 = vmatpush1.bf16.msra.mxu0 %v7246
        %10578 = vmatprep.subr.bf16.mxu0 %v7197
        %10579 = vmatpush1.bf16.msra.mxu0 %v7196
        %10580 = vmatprep.subr.bf16.mxu0 %v7147
        %10581 = vmatpush1.bf16.msra.mxu0 %v7146
        %10582 = vmatprep.subr.bf16.mxu0 %v7097
        %10583 = vmatpush1.bf16.msra.mxu0 %v7096
        %10584 = vmatprep.subr.bf16.mxu0 %v7047
        %10585 = vmatpush1.bf16.msra.mxu0 %v7046
        %10586 = vmatprep.subr.bf16.mxu0 %v6997
        %10587 = vmatpush1.bf16.msra.mxu0 %v6996
        %10588 = vmatprep.subr.bf16.mxu0 %v6947
        %10589 = vmatpush1.bf16.msra.mxu0 %v6946
        %10590 = vmatprep.subr.bf16.mxu0 %v6897
        %10591 = vmatpush1.bf16.msra.mxu0 %v6896
        %10592 = vmatprep.subr.bf16.mxu0 %v7647
        %10593 = vmatpush2.bf16.msra.mxu0 %v7646
        %10594 = vmatprep.subr.bf16.mxu0 %v7597
        %10595 = vmatpush2.bf16.msra.mxu0 %v7596
        %10596 = vmatprep.subr.bf16.mxu0 %v7547
        %10597 = vmatpush2.bf16.msra.mxu0 %v7546
        %10598 = vmatprep.subr.bf16.mxu0 %v7497
        %10599 = vmatpush2.bf16.msra.mxu0 %v7496
        %10600 = vmatprep.subr.bf16.mxu0 %v7447
        %10601 = vmatpush2.bf16.msra.mxu0 %v7446
        %10602 = vmatprep.subr.bf16.mxu0 %v7397
        %10603 = vmatpush2.bf16.msra.mxu0 %v7396
        %10604 = vmatprep.subr.bf16.mxu0 %v7347
        %10605 = vmatpush2.bf16.msra.mxu0 %v7346
        %10606 = vmatprep.subr.bf16.mxu0 %v7297
        %10607 = vmatpush2.bf16.msra.mxu0 %v7296
        %10608 = vmatprep.mubr.bf16.mxu0 %v217
        %10609 = vmatmul.mubr.bf16.gmra.mxu0 %v216
        %v10610 = vpop.f32.mrf.mxu0
        %v10611 = vadd.f32 %v1885, %v10610
        %v10612 = vpop.f32.mrf.mxu0
        %v10613 = vadd.f32 %v1889, %v10612
        %v10614 = vpop.f32.mrf.mxu0
        %v10615 = vpop.f32.mrf.mxu0
        %10616 = vdwg.mxu0
        %10617 = vmatprep.subr.bf16.mxu0 %v8047
        %10618 = vmatpush1.bf16.msra.mxu0 %v8046
        %10619 = vmatprep.subr.bf16.mxu0 %v7997
        %10620 = vmatpush1.bf16.msra.mxu0 %v7996
        %10621 = vmatprep.subr.bf16.mxu0 %v7947
        %10622 = vmatpush1.bf16.msra.mxu0 %v7946
        %10623 = vmatprep.subr.bf16.mxu0 %v7897
        %10624 = vmatpush1.bf16.msra.mxu0 %v7896
        %10625 = vmatprep.subr.bf16.mxu0 %v7847
        %10626 = vmatpush1.bf16.msra.mxu0 %v7846
        %10627 = vmatprep.subr.bf16.mxu0 %v7797
        %10628 = vmatpush1.bf16.msra.mxu0 %v7796
        %10629 = vmatprep.subr.bf16.mxu0 %v7747
        %10630 = vmatpush1.bf16.msra.mxu0 %v7746
        %10631 = vmatprep.subr.bf16.mxu0 %v7697
        %10632 = vmatpush1.bf16.msra.mxu0 %v7696
        %10633 = vmatprep.subr.bf16.mxu0 %v8447
        %10634 = vmatpush2.bf16.msra.mxu0 %v8446
        %10635 = vmatprep.subr.bf16.mxu0 %v8397
        %10636 = vmatpush2.bf16.msra.mxu0 %v8396
        %10637 = vmatprep.subr.bf16.mxu0 %v8347
        %10638 = vmatpush2.bf16.msra.mxu0 %v8346
        %10639 = vmatprep.subr.bf16.mxu0 %v8297
        %10640 = vmatpush2.bf16.msra.mxu0 %v8296
        %10641 = vmatprep.subr.bf16.mxu0 %v8247
        %10642 = vmatpush2.bf16.msra.mxu0 %v8246
        %10643 = vmatprep.subr.bf16.mxu0 %v8197
        %10644 = vmatpush2.bf16.msra.mxu0 %v8196
        %10645 = vmatprep.subr.bf16.mxu0 %v8147
        %10646 = vmatpush2.bf16.msra.mxu0 %v8146
        %10647 = vmatprep.subr.bf16.mxu0 %v8097
        %10648 = vmatpush2.bf16.msra.mxu0 %v8096
        %10649 = vmatprep.mubr.bf16.mxu0 %v219
        %10650 = vmatmul.mubr.bf16.gmra.mxu0 %v218
        %v10651 = vpop.f32.mrf.mxu0
        %v10652 = vadd.f32 %v10611, %v10651
        %v10653 = vpop.f32.mrf.mxu0
        %v10654 = vadd.f32 %v10613, %v10653
        %v10655 = vpop.f32.mrf.mxu0
        %v10656 = vpop.f32.mrf.mxu0
        %10657 = vdwg.mxu0
        %10658 = vmatprep.subr.bf16.mxu0 %v7249
        %10659 = vmatpush1.bf16.msra.mxu0 %v7248
        %10660 = vmatprep.subr.bf16.mxu0 %v7199
        %10661 = vmatpush1.bf16.msra.mxu0 %v7198
        %10662 = vmatprep.subr.bf16.mxu0 %v7149
        %10663 = vmatpush1.bf16.msra.mxu0 %v7148
        %10664 = vmatprep.subr.bf16.mxu0 %v7099
        %10665 = vmatpush1.bf16.msra.mxu0 %v7098
        %10666 = vmatprep.subr.bf16.mxu0 %v7049
        %10667 = vmatpush1.bf16.msra.mxu0 %v7048
        %10668 = vmatprep.subr.bf16.mxu0 %v6999
        %10669 = vmatpush1.bf16.msra.mxu0 %v6998
        %10670 = vmatprep.subr.bf16.mxu0 %v6949
        %10671 = vmatpush1.bf16.msra.mxu0 %v6948
        %10672 = vmatprep.subr.bf16.mxu0 %v6899
        %10673 = vmatpush1.bf16.msra.mxu0 %v6898
        %10674 = vmatprep.subr.bf16.mxu0 %v7649
        %10675 = vmatpush2.bf16.msra.mxu0 %v7648
        %10676 = vmatprep.subr.bf16.mxu0 %v7599
        %10677 = vmatpush2.bf16.msra.mxu0 %v7598
        %10678 = vmatprep.subr.bf16.mxu0 %v7549
        %10679 = vmatpush2.bf16.msra.mxu0 %v7548
        %10680 = vmatprep.subr.bf16.mxu0 %v7499
        %10681 = vmatpush2.bf16.msra.mxu0 %v7498
        %10682 = vmatprep.subr.bf16.mxu0 %v7449
        %10683 = vmatpush2.bf16.msra.mxu0 %v7448
        %10684 = vmatprep.subr.bf16.mxu0 %v7399
        %10685 = vmatpush2.bf16.msra.mxu0 %v7398
        %10686 = vmatprep.subr.bf16.mxu0 %v7349
        %10687 = vmatpush2.bf16.msra.mxu0 %v7348
        %10688 = vmatprep.subr.bf16.mxu0 %v7299
        %10689 = vmatpush2.bf16.msra.mxu0 %v7298
        %10690 = vmatprep.mubr.bf16.mxu0 %v217
        %10691 = vmatmul.mubr.bf16.gmra.mxu0 %v216
        %v10692 = vpop.f32.mrf.mxu0
        %v10693 = vadd.f32 %v1893, %v10692
        %v10694 = vpop.f32.mrf.mxu0
        %v10695 = vadd.f32 %v1897, %v10694
        %v10696 = vpop.f32.mrf.mxu0
        %v10697 = vpop.f32.mrf.mxu0
        %10698 = vdwg.mxu0
        %10699 = vmatprep.subr.bf16.mxu0 %v8049
        %10700 = vmatpush1.bf16.msra.mxu0 %v8048
        %10701 = vmatprep.subr.bf16.mxu0 %v7999
        %10702 = vmatpush1.bf16.msra.mxu0 %v7998
        %10703 = vmatprep.subr.bf16.mxu0 %v7949
        %10704 = vmatpush1.bf16.msra.mxu0 %v7948
        %10705 = vmatprep.subr.bf16.mxu0 %v7899
        %10706 = vmatpush1.bf16.msra.mxu0 %v7898
        %10707 = vmatprep.subr.bf16.mxu0 %v7849
        %10708 = vmatpush1.bf16.msra.mxu0 %v7848
        %10709 = vmatprep.subr.bf16.mxu0 %v7799
        %10710 = vmatpush1.bf16.msra.mxu0 %v7798
        %10711 = vmatprep.subr.bf16.mxu0 %v7749
        %10712 = vmatpush1.bf16.msra.mxu0 %v7748
        %10713 = vmatprep.subr.bf16.mxu0 %v7699
        %10714 = vmatpush1.bf16.msra.mxu0 %v7698
        %10715 = vmatprep.subr.bf16.mxu0 %v8449
        %10716 = vmatpush2.bf16.msra.mxu0 %v8448
        %10717 = vmatprep.subr.bf16.mxu0 %v8399
        %10718 = vmatpush2.bf16.msra.mxu0 %v8398
        %10719 = vmatprep.subr.bf16.mxu0 %v8349
        %10720 = vmatpush2.bf16.msra.mxu0 %v8348
        %10721 = vmatprep.subr.bf16.mxu0 %v8299
        %10722 = vmatpush2.bf16.msra.mxu0 %v8298
        %10723 = vmatprep.subr.bf16.mxu0 %v8249
        %10724 = vmatpush2.bf16.msra.mxu0 %v8248
        %10725 = vmatprep.subr.bf16.mxu0 %v8199
        %10726 = vmatpush2.bf16.msra.mxu0 %v8198
        %10727 = vmatprep.subr.bf16.mxu0 %v8149
        %10728 = vmatpush2.bf16.msra.mxu0 %v8148
        %10729 = vmatprep.subr.bf16.mxu0 %v8099
        %10730 = vmatpush2.bf16.msra.mxu0 %v8098
        %10731 = vmatprep.mubr.bf16.mxu0 %v219
        %10732 = vmatmul.mubr.bf16.gmra.mxu0 %v218
        %v10733 = vpop.f32.mrf.mxu0
        %v10734 = vadd.f32 %v10693, %v10733
        %v10735 = vpop.f32.mrf.mxu0
        %v10736 = vadd.f32 %v10695, %v10735
        %v10737 = vpop.f32.mrf.mxu0
        %v10738 = vpop.f32.mrf.mxu0
        %10739 = vdwg.mxu0
        %10740 = vmatprep.subr.bf16.mxu0 %v7251
        %10741 = vmatpush1.bf16.msra.mxu0 %v7250
        %10742 = vmatprep.subr.bf16.mxu0 %v7201
        %10743 = vmatpush1.bf16.msra.mxu0 %v7200
        %10744 = vmatprep.subr.bf16.mxu0 %v7151
        %10745 = vmatpush1.bf16.msra.mxu0 %v7150
        %10746 = vmatprep.subr.bf16.mxu0 %v7101
        %10747 = vmatpush1.bf16.msra.mxu0 %v7100
        %10748 = vmatprep.subr.bf16.mxu0 %v7051
        %10749 = vmatpush1.bf16.msra.mxu0 %v7050
        %10750 = vmatprep.subr.bf16.mxu0 %v7001
        %10751 = vmatpush1.bf16.msra.mxu0 %v7000
        %10752 = vmatprep.subr.bf16.mxu0 %v6951
        %10753 = vmatpush1.bf16.msra.mxu0 %v6950
        %10754 = vmatprep.subr.bf16.mxu0 %v6901
        %10755 = vmatpush1.bf16.msra.mxu0 %v6900
        %10756 = vmatprep.subr.bf16.mxu0 %v7651
        %10757 = vmatpush2.bf16.msra.mxu0 %v7650
        %10758 = vmatprep.subr.bf16.mxu0 %v7601
        %10759 = vmatpush2.bf16.msra.mxu0 %v7600
        %10760 = vmatprep.subr.bf16.mxu0 %v7551
        %10761 = vmatpush2.bf16.msra.mxu0 %v7550
        %10762 = vmatprep.subr.bf16.mxu0 %v7501
        %10763 = vmatpush2.bf16.msra.mxu0 %v7500
        %10764 = vmatprep.subr.bf16.mxu0 %v7451
        %10765 = vmatpush2.bf16.msra.mxu0 %v7450
        %10766 = vmatprep.subr.bf16.mxu0 %v7401
        %10767 = vmatpush2.bf16.msra.mxu0 %v7400
        %10768 = vmatprep.subr.bf16.mxu0 %v7351
        %10769 = vmatpush2.bf16.msra.mxu0 %v7350
        %10770 = vmatprep.subr.bf16.mxu0 %v7301
        %10771 = vmatpush2.bf16.msra.mxu0 %v7300
        %10772 = vmatprep.mubr.bf16.mxu0 %v217
        %10773 = vmatmul.mubr.bf16.gmra.mxu0 %v216
        %v10774 = vpop.f32.mrf.mxu0
        %v10775 = vadd.f32 %v1901, %v10774
        %v10776 = vpop.f32.mrf.mxu0
        %v10777 = vadd.f32 %v1905, %v10776
        %v10778 = vpop.f32.mrf.mxu0
        %v10779 = vpop.f32.mrf.mxu0
        %10780 = vdwg.mxu0
        %10781 = vmatprep.subr.bf16.mxu0 %v8051
        %10782 = vmatpush1.bf16.msra.mxu0 %v8050
        %10783 = vmatprep.subr.bf16.mxu0 %v8001
        %10784 = vmatpush1.bf16.msra.mxu0 %v8000
        %10785 = vmatprep.subr.bf16.mxu0 %v7951
        %10786 = vmatpush1.bf16.msra.mxu0 %v7950
        %10787 = vmatprep.subr.bf16.mxu0 %v7901
        %10788 = vmatpush1.bf16.msra.mxu0 %v7900
        %10789 = vmatprep.subr.bf16.mxu0 %v7851
        %10790 = vmatpush1.bf16.msra.mxu0 %v7850
        %10791 = vmatprep.subr.bf16.mxu0 %v7801
        %10792 = vmatpush1.bf16.msra.mxu0 %v7800
        %10793 = vmatprep.subr.bf16.mxu0 %v7751
        %10794 = vmatpush1.bf16.msra.mxu0 %v7750
        %10795 = vmatprep.subr.bf16.mxu0 %v7701
        %10796 = vmatpush1.bf16.msra.mxu0 %v7700
        %10797 = vmatprep.subr.bf16.mxu0 %v8451
        %10798 = vmatpush2.bf16.msra.mxu0 %v8450
        %10799 = vmatprep.subr.bf16.mxu0 %v8401
        %10800 = vmatpush2.bf16.msra.mxu0 %v8400
        %10801 = vmatprep.subr.bf16.mxu0 %v8351
        %10802 = vmatpush2.bf16.msra.mxu0 %v8350
        %10803 = vmatprep.subr.bf16.mxu0 %v8301
        %10804 = vmatpush2.bf16.msra.mxu0 %v8300
        %10805 = vmatprep.subr.bf16.mxu0 %v8251
        %10806 = vmatpush2.bf16.msra.mxu0 %v8250
        %10807 = vmatprep.subr.bf16.mxu0 %v8201
        %10808 = vmatpush2.bf16.msra.mxu0 %v8200
        %10809 = vmatprep.subr.bf16.mxu0 %v8151
        %10810 = vmatpush2.bf16.msra.mxu0 %v8150
        %10811 = vmatprep.subr.bf16.mxu0 %v8101
        %10812 = vmatpush2.bf16.msra.mxu0 %v8100
        %10813 = vmatprep.mubr.bf16.mxu0 %v219
        %10814 = vmatmul.mubr.bf16.gmra.mxu0 %v218
        %v10815 = vpop.f32.mrf.mxu0
        %v10816 = vadd.f32 %v10775, %v10815
        %v10817 = vpop.f32.mrf.mxu0
        %v10818 = vadd.f32 %v10777, %v10817
        %v10819 = vpop.f32.mrf.mxu0
        %v10820 = vpop.f32.mrf.mxu0
        %10821 = vdwg.mxu0
        %10822 = vmatprep.subr.bf16.mxu0 %v7253
        %10823 = vmatpush1.bf16.msra.mxu0 %v7252
        %10824 = vmatprep.subr.bf16.mxu0 %v7203
        %10825 = vmatpush1.bf16.msra.mxu0 %v7202
        %10826 = vmatprep.subr.bf16.mxu0 %v7153
        %10827 = vmatpush1.bf16.msra.mxu0 %v7152
        %10828 = vmatprep.subr.bf16.mxu0 %v7103
        %10829 = vmatpush1.bf16.msra.mxu0 %v7102
        %10830 = vmatprep.subr.bf16.mxu0 %v7053
        %10831 = vmatpush1.bf16.msra.mxu0 %v7052
        %10832 = vmatprep.subr.bf16.mxu0 %v7003
        %10833 = vmatpush1.bf16.msra.mxu0 %v7002
        %10834 = vmatprep.subr.bf16.mxu0 %v6953
        %10835 = vmatpush1.bf16.msra.mxu0 %v6952
        %10836 = vmatprep.subr.bf16.mxu0 %v6903
        %10837 = vmatpush1.bf16.msra.mxu0 %v6902
        %10838 = vmatprep.subr.bf16.mxu0 %v7653
        %10839 = vmatpush2.bf16.msra.mxu0 %v7652
        %10840 = vmatprep.subr.bf16.mxu0 %v7603
        %10841 = vmatpush2.bf16.msra.mxu0 %v7602
        %10842 = vmatprep.subr.bf16.mxu0 %v7553
        %10843 = vmatpush2.bf16.msra.mxu0 %v7552
        %10844 = vmatprep.subr.bf16.mxu0 %v7503
        %10845 = vmatpush2.bf16.msra.mxu0 %v7502
        %10846 = vmatprep.subr.bf16.mxu0 %v7453
        %10847 = vmatpush2.bf16.msra.mxu0 %v7452
        %10848 = vmatprep.subr.bf16.mxu0 %v7403
        %10849 = vmatpush2.bf16.msra.mxu0 %v7402
        %10850 = vmatprep.subr.bf16.mxu0 %v7353
        %10851 = vmatpush2.bf16.msra.mxu0 %v7352
        %10852 = vmatprep.subr.bf16.mxu0 %v7303
        %10853 = vmatpush2.bf16.msra.mxu0 %v7302
        %10854 = vmatprep.mubr.bf16.mxu0 %v217
        %10855 = vmatmul.mubr.bf16.gmra.mxu0 %v216
        %v10856 = vpop.f32.mrf.mxu0
        %v10857 = vadd.f32 %v1909, %v10856
        %v10858 = vpop.f32.mrf.mxu0
        %v10859 = vadd.f32 %v1913, %v10858
        %v10860 = vpop.f32.mrf.mxu0
        %v10861 = vpop.f32.mrf.mxu0
        %10862 = vdwg.mxu0
        %10863 = vmatprep.subr.bf16.mxu0 %v8053
        %10864 = vmatpush1.bf16.msra.mxu0 %v8052
        %10865 = vmatprep.subr.bf16.mxu0 %v8003
        %10866 = vmatpush1.bf16.msra.mxu0 %v8002
        %10867 = vmatprep.subr.bf16.mxu0 %v7953
        %10868 = vmatpush1.bf16.msra.mxu0 %v7952
        %10869 = vmatprep.subr.bf16.mxu0 %v7903
        %10870 = vmatpush1.bf16.msra.mxu0 %v7902
        %10871 = vmatprep.subr.bf16.mxu0 %v7853
        %10872 = vmatpush1.bf16.msra.mxu0 %v7852
        %10873 = vmatprep.subr.bf16.mxu0 %v7803
        %10874 = vmatpush1.bf16.msra.mxu0 %v7802
        %10875 = vmatprep.subr.bf16.mxu0 %v7753
        %10876 = vmatpush1.bf16.msra.mxu0 %v7752
        %10877 = vmatprep.subr.bf16.mxu0 %v7703
        %10878 = vmatpush1.bf16.msra.mxu0 %v7702
        %10879 = vmatprep.subr.bf16.mxu0 %v8453
        %10880 = vmatpush2.bf16.msra.mxu0 %v8452
        %10881 = vmatprep.subr.bf16.mxu0 %v8403
        %10882 = vmatpush2.bf16.msra.mxu0 %v8402
        %10883 = vmatprep.subr.bf16.mxu0 %v8353
        %10884 = vmatpush2.bf16.msra.mxu0 %v8352
        %10885 = vmatprep.subr.bf16.mxu0 %v8303
        %10886 = vmatpush2.bf16.msra.mxu0 %v8302
        %10887 = vmatprep.subr.bf16.mxu0 %v8253
        %10888 = vmatpush2.bf16.msra.mxu0 %v8252
        %10889 = vmatprep.subr.bf16.mxu0 %v8203
        %10890 = vmatpush2.bf16.msra.mxu0 %v8202
        %10891 = vmatprep.subr.bf16.mxu0 %v8153
        %10892 = vmatpush2.bf16.msra.mxu0 %v8152
        %10893 = vmatprep.subr.bf16.mxu0 %v8103
        %10894 = vmatpush2.bf16.msra.mxu0 %v8102
        %10895 = vmatprep.mubr.bf16.mxu0 %v219
        %10896 = vmatmul.mubr.bf16.gmra.mxu0 %v218
        %v10897 = vpop.f32.mrf.mxu0
        %v10898 = vadd.f32 %v10857, %v10897
        %v10899 = vpop.f32.mrf.mxu0
        %v10900 = vadd.f32 %v10859, %v10899
        %v10901 = vpop.f32.mrf.mxu0
        %v10902 = vpop.f32.mrf.mxu0
        %10903 = vdwg.mxu0
        %10904 = vmatprep.subr.bf16.mxu0 %v7255
        %10905 = vmatpush1.bf16.msra.mxu0 %v7254
        %10906 = vmatprep.subr.bf16.mxu0 %v7205
        %10907 = vmatpush1.bf16.msra.mxu0 %v7204
        %10908 = vmatprep.subr.bf16.mxu0 %v7155
        %10909 = vmatpush1.bf16.msra.mxu0 %v7154
        %10910 = vmatprep.subr.bf16.mxu0 %v7105
        %10911 = vmatpush1.bf16.msra.mxu0 %v7104
        %10912 = vmatprep.subr.bf16.mxu0 %v7055
        %10913 = vmatpush1.bf16.msra.mxu0 %v7054
        %10914 = vmatprep.subr.bf16.mxu0 %v7005
        %10915 = vmatpush1.bf16.msra.mxu0 %v7004
        %10916 = vmatprep.subr.bf16.mxu0 %v6955
        %10917 = vmatpush1.bf16.msra.mxu0 %v6954
        %10918 = vmatprep.subr.bf16.mxu0 %v6905
        %10919 = vmatpush1.bf16.msra.mxu0 %v6904
        %10920 = vmatprep.subr.bf16.mxu0 %v7655
        %10921 = vmatpush2.bf16.msra.mxu0 %v7654
        %10922 = vmatprep.subr.bf16.mxu0 %v7605
        %10923 = vmatpush2.bf16.msra.mxu0 %v7604
        %10924 = vmatprep.subr.bf16.mxu0 %v7555
        %10925 = vmatpush2.bf16.msra.mxu0 %v7554
        %10926 = vmatprep.subr.bf16.mxu0 %v7505
        %10927 = vmatpush2.bf16.msra.mxu0 %v7504
        %10928 = vmatprep.subr.bf16.mxu0 %v7455
        %10929 = vmatpush2.bf16.msra.mxu0 %v7454
        %10930 = vmatprep.subr.bf16.mxu0 %v7405
        %10931 = vmatpush2.bf16.msra.mxu0 %v7404
        %10932 = vmatprep.subr.bf16.mxu0 %v7355
        %10933 = vmatpush2.bf16.msra.mxu0 %v7354
        %10934 = vmatprep.subr.bf16.mxu0 %v7305
        %10935 = vmatpush2.bf16.msra.mxu0 %v7304
        %10936 = vmatprep.mubr.bf16.mxu0 %v217
        %10937 = vmatmul.mubr.bf16.gmra.mxu0 %v216
        %v10938 = vpop.f32.mrf.mxu0
        %v10939 = vadd.f32 %v1917, %v10938
        %v10940 = vpop.f32.mrf.mxu0
        %v10941 = vadd.f32 %v1921, %v10940
        %v10942 = vpop.f32.mrf.mxu0
        %v10943 = vpop.f32.mrf.mxu0
        %10944 = vdwg.mxu0
        %10945 = vmatprep.subr.bf16.mxu0 %v8055
        %10946 = vmatpush1.bf16.msra.mxu0 %v8054
        %10947 = vmatprep.subr.bf16.mxu0 %v8005
        %10948 = vmatpush1.bf16.msra.mxu0 %v8004
        %10949 = vmatprep.subr.bf16.mxu0 %v7955
        %10950 = vmatpush1.bf16.msra.mxu0 %v7954
        %10951 = vmatprep.subr.bf16.mxu0 %v7905
        %10952 = vmatpush1.bf16.msra.mxu0 %v7904
        %10953 = vmatprep.subr.bf16.mxu0 %v7855
        %10954 = vmatpush1.bf16.msra.mxu0 %v7854
        %10955 = vmatprep.subr.bf16.mxu0 %v7805
        %10956 = vmatpush1.bf16.msra.mxu0 %v7804
        %10957 = vmatprep.subr.bf16.mxu0 %v7755
        %10958 = vmatpush1.bf16.msra.mxu0 %v7754
        %10959 = vmatprep.subr.bf16.mxu0 %v7705
        %10960 = vmatpush1.bf16.msra.mxu0 %v7704
        %10961 = vmatprep.subr.bf16.mxu0 %v8455
        %10962 = vmatpush2.bf16.msra.mxu0 %v8454
        %10963 = vmatprep.subr.bf16.mxu0 %v8405
        %10964 = vmatpush2.bf16.msra.mxu0 %v8404
        %10965 = vmatprep.subr.bf16.mxu0 %v8355
        %10966 = vmatpush2.bf16.msra.mxu0 %v8354
        %10967 = vmatprep.subr.bf16.mxu0 %v8305
        %10968 = vmatpush2.bf16.msra.mxu0 %v8304
        %10969 = vmatprep.subr.bf16.mxu0 %v8255
        %10970 = vmatpush2.bf16.msra.mxu0 %v8254
        %10971 = vmatprep.subr.bf16.mxu0 %v8205
        %10972 = vmatpush2.bf16.msra.mxu0 %v8204
        %10973 = vmatprep.subr.bf16.mxu0 %v8155
        %10974 = vmatpush2.bf16.msra.mxu0 %v8154
        %10975 = vmatprep.subr.bf16.mxu0 %v8105
        %10976 = vmatpush2.bf16.msra.mxu0 %v8104
        %10977 = vmatprep.mubr.bf16.mxu0 %v219
        %10978 = vmatmul.mubr.bf16.gmra.mxu0 %v218
        %v10979 = vpop.f32.mrf.mxu0
        %v10980 = vadd.f32 %v10939, %v10979
        %v10981 = vpop.f32.mrf.mxu0
        %v10982 = vadd.f32 %v10941, %v10981
        %v10983 = vpop.f32.mrf.mxu0
        %v10984 = vpop.f32.mrf.mxu0
        %10985 = vdwg.mxu0
        %10986 = vmatprep.subr.bf16.mxu0 %v7257
        %10987 = vmatpush1.bf16.msra.mxu0 %v7256
        %10988 = vmatprep.subr.bf16.mxu0 %v7207
        %10989 = vmatpush1.bf16.msra.mxu0 %v7206
        %10990 = vmatprep.subr.bf16.mxu0 %v7157
        %10991 = vmatpush1.bf16.msra.mxu0 %v7156
        %10992 = vmatprep.subr.bf16.mxu0 %v7107
        %10993 = vmatpush1.bf16.msra.mxu0 %v7106
        %10994 = vmatprep.subr.bf16.mxu0 %v7057
        %10995 = vmatpush1.bf16.msra.mxu0 %v7056
        %10996 = vmatprep.subr.bf16.mxu0 %v7007
        %10997 = vmatpush1.bf16.msra.mxu0 %v7006
        %10998 = vmatprep.subr.bf16.mxu0 %v6957
        %10999 = vmatpush1.bf16.msra.mxu0 %v6956
        %11000 = vmatprep.subr.bf16.mxu0 %v6907
        %11001 = vmatpush1.bf16.msra.mxu0 %v6906
        %11002 = vmatprep.subr.bf16.mxu0 %v7657
        %11003 = vmatpush2.bf16.msra.mxu0 %v7656
        %11004 = vmatprep.subr.bf16.mxu0 %v7607
        %11005 = vmatpush2.bf16.msra.mxu0 %v7606
        %11006 = vmatprep.subr.bf16.mxu0 %v7557
        %11007 = vmatpush2.bf16.msra.mxu0 %v7556
        %11008 = vmatprep.subr.bf16.mxu0 %v7507
        %11009 = vmatpush2.bf16.msra.mxu0 %v7506
        %11010 = vmatprep.subr.bf16.mxu0 %v7457
        %11011 = vmatpush2.bf16.msra.mxu0 %v7456
        %11012 = vmatprep.subr.bf16.mxu0 %v7407
        %11013 = vmatpush2.bf16.msra.mxu0 %v7406
        %11014 = vmatprep.subr.bf16.mxu0 %v7357
        %11015 = vmatpush2.bf16.msra.mxu0 %v7356
        %11016 = vmatprep.subr.bf16.mxu0 %v7307
        %11017 = vmatpush2.bf16.msra.mxu0 %v7306
        %11018 = vmatprep.mubr.bf16.mxu0 %v217
        %11019 = vmatmul.mubr.bf16.gmra.mxu0 %v216
        %v11020 = vpop.f32.mrf.mxu0
        %v11021 = vadd.f32 %v1925, %v11020
        %v11022 = vpop.f32.mrf.mxu0
        %v11023 = vadd.f32 %v1929, %v11022
        %v11024 = vpop.f32.mrf.mxu0
        %v11025 = vpop.f32.mrf.mxu0
        %11026 = vdwg.mxu0
        %11027 = vmatprep.subr.bf16.mxu0 %v8057
        %11028 = vmatpush1.bf16.msra.mxu0 %v8056
        %11029 = vmatprep.subr.bf16.mxu0 %v8007
        %11030 = vmatpush1.bf16.msra.mxu0 %v8006
        %11031 = vmatprep.subr.bf16.mxu0 %v7957
        %11032 = vmatpush1.bf16.msra.mxu0 %v7956
        %11033 = vmatprep.subr.bf16.mxu0 %v7907
        %11034 = vmatpush1.bf16.msra.mxu0 %v7906
        %11035 = vmatprep.subr.bf16.mxu0 %v7857
        %11036 = vmatpush1.bf16.msra.mxu0 %v7856
        %11037 = vmatprep.subr.bf16.mxu0 %v7807
        %11038 = vmatpush1.bf16.msra.mxu0 %v7806
        %11039 = vmatprep.subr.bf16.mxu0 %v7757
        %11040 = vmatpush1.bf16.msra.mxu0 %v7756
        %11041 = vmatprep.subr.bf16.mxu0 %v7707
        %11042 = vmatpush1.bf16.msra.mxu0 %v7706
        %11043 = vmatprep.subr.bf16.mxu0 %v8457
        %11044 = vmatpush2.bf16.msra.mxu0 %v8456
        %11045 = vmatprep.subr.bf16.mxu0 %v8407
        %11046 = vmatpush2.bf16.msra.mxu0 %v8406
        %11047 = vmatprep.subr.bf16.mxu0 %v8357
        %11048 = vmatpush2.bf16.msra.mxu0 %v8356
        %11049 = vmatprep.subr.bf16.mxu0 %v8307
        %11050 = vmatpush2.bf16.msra.mxu0 %v8306
        %11051 = vmatprep.subr.bf16.mxu0 %v8257
        %11052 = vmatpush2.bf16.msra.mxu0 %v8256
        %11053 = vmatprep.subr.bf16.mxu0 %v8207
        %11054 = vmatpush2.bf16.msra.mxu0 %v8206
        %11055 = vmatprep.subr.bf16.mxu0 %v8157
        %11056 = vmatpush2.bf16.msra.mxu0 %v8156
        %11057 = vmatprep.subr.bf16.mxu0 %v8107
        %11058 = vmatpush2.bf16.msra.mxu0 %v8106
        %11059 = vmatprep.mubr.bf16.mxu0 %v219
        %11060 = vmatmul.mubr.bf16.gmra.mxu0 %v218
        %v11061 = vpop.f32.mrf.mxu0
        %v11062 = vadd.f32 %v11021, %v11061
        %v11063 = vpop.f32.mrf.mxu0
        %v11064 = vadd.f32 %v11023, %v11063
        %v11065 = vpop.f32.mrf.mxu0
        %v11066 = vpop.f32.mrf.mxu0
        %11067 = vdwg.mxu0
        %11068 = vmatprep.subr.bf16.mxu0 %v7259
        %11069 = vmatpush1.bf16.msra.mxu0 %v7258
        %11070 = vmatprep.subr.bf16.mxu0 %v7209
        %11071 = vmatpush1.bf16.msra.mxu0 %v7208
        %11072 = vmatprep.subr.bf16.mxu0 %v7159
        %11073 = vmatpush1.bf16.msra.mxu0 %v7158
        %11074 = vmatprep.subr.bf16.mxu0 %v7109
        %11075 = vmatpush1.bf16.msra.mxu0 %v7108
        %11076 = vmatprep.subr.bf16.mxu0 %v7059
        %11077 = vmatpush1.bf16.msra.mxu0 %v7058
        %11078 = vmatprep.subr.bf16.mxu0 %v7009
        %11079 = vmatpush1.bf16.msra.mxu0 %v7008
        %11080 = vmatprep.subr.bf16.mxu0 %v6959
        %11081 = vmatpush1.bf16.msra.mxu0 %v6958
        %11082 = vmatprep.subr.bf16.mxu0 %v6909
        %11083 = vmatpush1.bf16.msra.mxu0 %v6908
        %11084 = vmatprep.subr.bf16.mxu0 %v7659
        %11085 = vmatpush2.bf16.msra.mxu0 %v7658
        %11086 = vmatprep.subr.bf16.mxu0 %v7609
        %11087 = vmatpush2.bf16.msra.mxu0 %v7608
        %11088 = vmatprep.subr.bf16.mxu0 %v7559
        %11089 = vmatpush2.bf16.msra.mxu0 %v7558
        %11090 = vmatprep.subr.bf16.mxu0 %v7509
        %11091 = vmatpush2.bf16.msra.mxu0 %v7508
        %11092 = vmatprep.subr.bf16.mxu0 %v7459
        %11093 = vmatpush2.bf16.msra.mxu0 %v7458
        %11094 = vmatprep.subr.bf16.mxu0 %v7409
        %11095 = vmatpush2.bf16.msra.mxu0 %v7408
        %11096 = vmatprep.subr.bf16.mxu0 %v7359
        %11097 = vmatpush2.bf16.msra.mxu0 %v7358
        %11098 = vmatprep.subr.bf16.mxu0 %v7309
        %11099 = vmatpush2.bf16.msra.mxu0 %v7308
        %11100 = vmatprep.mubr.bf16.mxu0 %v217
        %11101 = vmatmul.mubr.bf16.gmra.mxu0 %v216
        %v11102 = vpop.f32.mrf.mxu0
        %v11103 = vadd.f32 %v1933, %v11102
        %v11104 = vpop.f32.mrf.mxu0
        %v11105 = vadd.f32 %v1937, %v11104
        %v11106 = vpop.f32.mrf.mxu0
        %v11107 = vpop.f32.mrf.mxu0
        %11108 = vdwg.mxu0
        %11109 = vmatprep.subr.bf16.mxu0 %v8059
        %11110 = vmatpush1.bf16.msra.mxu0 %v8058
        %11111 = vmatprep.subr.bf16.mxu0 %v8009
        %11112 = vmatpush1.bf16.msra.mxu0 %v8008
        %11113 = vmatprep.subr.bf16.mxu0 %v7959
        %11114 = vmatpush1.bf16.msra.mxu0 %v7958
        %11115 = vmatprep.subr.bf16.mxu0 %v7909
        %11116 = vmatpush1.bf16.msra.mxu0 %v7908
        %11117 = vmatprep.subr.bf16.mxu0 %v7859
        %11118 = vmatpush1.bf16.msra.mxu0 %v7858
        %11119 = vmatprep.subr.bf16.mxu0 %v7809
        %11120 = vmatpush1.bf16.msra.mxu0 %v7808
        %11121 = vmatprep.subr.bf16.mxu0 %v7759
        %11122 = vmatpush1.bf16.msra.mxu0 %v7758
        %11123 = vmatprep.subr.bf16.mxu0 %v7709
        %11124 = vmatpush1.bf16.msra.mxu0 %v7708
        %11125 = vmatprep.subr.bf16.mxu0 %v8459
        %11126 = vmatpush2.bf16.msra.mxu0 %v8458
        %11127 = vmatprep.subr.bf16.mxu0 %v8409
        %11128 = vmatpush2.bf16.msra.mxu0 %v8408
        %11129 = vmatprep.subr.bf16.mxu0 %v8359
        %11130 = vmatpush2.bf16.msra.mxu0 %v8358
        %11131 = vmatprep.subr.bf16.mxu0 %v8309
        %11132 = vmatpush2.bf16.msra.mxu0 %v8308
        %11133 = vmatprep.subr.bf16.mxu0 %v8259
        %11134 = vmatpush2.bf16.msra.mxu0 %v8258
        %11135 = vmatprep.subr.bf16.mxu0 %v8209
        %11136 = vmatpush2.bf16.msra.mxu0 %v8208
        %11137 = vmatprep.subr.bf16.mxu0 %v8159
        %11138 = vmatpush2.bf16.msra.mxu0 %v8158
        %11139 = vmatprep.subr.bf16.mxu0 %v8109
        %11140 = vmatpush2.bf16.msra.mxu0 %v8108
        %11141 = vmatprep.mubr.bf16.mxu0 %v219
        %11142 = vmatmul.mubr.bf16.gmra.mxu0 %v218
        %v11143 = vpop.f32.mrf.mxu0
        %v11144 = vadd.f32 %v11103, %v11143
        %v11145 = vpop.f32.mrf.mxu0
        %v11146 = vadd.f32 %v11105, %v11145
        %v11147 = vpop.f32.mrf.mxu0
        %v11148 = vpop.f32.mrf.mxu0
        %11149 = vdwg.mxu0
        %11150 = vmatprep.subr.bf16.mxu0 %v7261
        %11151 = vmatpush1.bf16.msra.mxu0 %v7260
        %11152 = vmatprep.subr.bf16.mxu0 %v7211
        %11153 = vmatpush1.bf16.msra.mxu0 %v7210
        %11154 = vmatprep.subr.bf16.mxu0 %v7161
        %11155 = vmatpush1.bf16.msra.mxu0 %v7160
        %11156 = vmatprep.subr.bf16.mxu0 %v7111
        %11157 = vmatpush1.bf16.msra.mxu0 %v7110
        %11158 = vmatprep.subr.bf16.mxu0 %v7061
        %11159 = vmatpush1.bf16.msra.mxu0 %v7060
        %11160 = vmatprep.subr.bf16.mxu0 %v7011
        %11161 = vmatpush1.bf16.msra.mxu0 %v7010
        %11162 = vmatprep.subr.bf16.mxu0 %v6961
        %11163 = vmatpush1.bf16.msra.mxu0 %v6960
        %11164 = vmatprep.subr.bf16.mxu0 %v6911
        %11165 = vmatpush1.bf16.msra.mxu0 %v6910
        %11166 = vmatprep.subr.bf16.mxu0 %v7661
        %11167 = vmatpush2.bf16.msra.mxu0 %v7660
        %11168 = vmatprep.subr.bf16.mxu0 %v7611
        %11169 = vmatpush2.bf16.msra.mxu0 %v7610
        %11170 = vmatprep.subr.bf16.mxu0 %v7561
        %11171 = vmatpush2.bf16.msra.mxu0 %v7560
        %11172 = vmatprep.subr.bf16.mxu0 %v7511
        %11173 = vmatpush2.bf16.msra.mxu0 %v7510
        %11174 = vmatprep.subr.bf16.mxu0 %v7461
        %11175 = vmatpush2.bf16.msra.mxu0 %v7460
        %11176 = vmatprep.subr.bf16.mxu0 %v7411
        %11177 = vmatpush2.bf16.msra.mxu0 %v7410
        %11178 = vmatprep.subr.bf16.mxu0 %v7361
        %11179 = vmatpush2.bf16.msra.mxu0 %v7360
        %11180 = vmatprep.subr.bf16.mxu0 %v7311
        %11181 = vmatpush2.bf16.msra.mxu0 %v7310
        %11182 = vmatprep.mubr.bf16.mxu0 %v217
        %11183 = vmatmul.mubr.bf16.gmra.mxu0 %v216
        %v11184 = vpop.f32.mrf.mxu0
        %v11185 = vadd.f32 %v1941, %v11184
        %v11186 = vpop.f32.mrf.mxu0
        %v11187 = vadd.f32 %v1945, %v11186
        %v11188 = vpop.f32.mrf.mxu0
        %v11189 = vpop.f32.mrf.mxu0
        %11190 = vdwg.mxu0
        %11191 = vmatprep.subr.bf16.mxu0 %v8061
        %11192 = vmatpush1.bf16.msra.mxu0 %v8060
        %11193 = vmatprep.subr.bf16.mxu0 %v8011
        %11194 = vmatpush1.bf16.msra.mxu0 %v8010
        %11195 = vmatprep.subr.bf16.mxu0 %v7961
        %11196 = vmatpush1.bf16.msra.mxu0 %v7960
        %11197 = vmatprep.subr.bf16.mxu0 %v7911
        %11198 = vmatpush1.bf16.msra.mxu0 %v7910
        %11199 = vmatprep.subr.bf16.mxu0 %v7861
        %11200 = vmatpush1.bf16.msra.mxu0 %v7860
        %11201 = vmatprep.subr.bf16.mxu0 %v7811
        %11202 = vmatpush1.bf16.msra.mxu0 %v7810
        %11203 = vmatprep.subr.bf16.mxu0 %v7761
        %11204 = vmatpush1.bf16.msra.mxu0 %v7760
        %11205 = vmatprep.subr.bf16.mxu0 %v7711
        %11206 = vmatpush1.bf16.msra.mxu0 %v7710
        %11207 = vmatprep.subr.bf16.mxu0 %v8461
        %11208 = vmatpush2.bf16.msra.mxu0 %v8460
        %11209 = vmatprep.subr.bf16.mxu0 %v8411
        %11210 = vmatpush2.bf16.msra.mxu0 %v8410
        %11211 = vmatprep.subr.bf16.mxu0 %v8361
        %11212 = vmatpush2.bf16.msra.mxu0 %v8360
        %11213 = vmatprep.subr.bf16.mxu0 %v8311
        %11214 = vmatpush2.bf16.msra.mxu0 %v8310
        %11215 = vmatprep.subr.bf16.mxu0 %v8261
        %11216 = vmatpush2.bf16.msra.mxu0 %v8260
        %11217 = vmatprep.subr.bf16.mxu0 %v8211
        %11218 = vmatpush2.bf16.msra.mxu0 %v8210
        %11219 = vmatprep.subr.bf16.mxu0 %v8161
        %11220 = vmatpush2.bf16.msra.mxu0 %v8160
        %11221 = vmatprep.subr.bf16.mxu0 %v8111
        %11222 = vmatpush2.bf16.msra.mxu0 %v8110
        %11223 = vmatprep.mubr.bf16.mxu0 %v219
        %11224 = vmatmul.mubr.bf16.gmra.mxu0 %v218
        %v11225 = vpop.f32.mrf.mxu0
        %v11226 = vadd.f32 %v11185, %v11225
        %v11227 = vpop.f32.mrf.mxu0
        %v11228 = vadd.f32 %v11187, %v11227
        %v11229 = vpop.f32.mrf.mxu0
        %v11230 = vpop.f32.mrf.mxu0
        %11231 = vdwg.mxu0
        %11232 = vmatprep.subr.bf16.mxu0 %v7263
        %11233 = vmatpush1.bf16.msra.mxu0 %v7262
        %11234 = vmatprep.subr.bf16.mxu0 %v7213
        %11235 = vmatpush1.bf16.msra.mxu0 %v7212
        %11236 = vmatprep.subr.bf16.mxu0 %v7163
        %11237 = vmatpush1.bf16.msra.mxu0 %v7162
        %11238 = vmatprep.subr.bf16.mxu0 %v7113
        %11239 = vmatpush1.bf16.msra.mxu0 %v7112
        %11240 = vmatprep.subr.bf16.mxu0 %v7063
        %11241 = vmatpush1.bf16.msra.mxu0 %v7062
        %11242 = vmatprep.subr.bf16.mxu0 %v7013
        %11243 = vmatpush1.bf16.msra.mxu0 %v7012
        %11244 = vmatprep.subr.bf16.mxu0 %v6963
        %11245 = vmatpush1.bf16.msra.mxu0 %v6962
        %11246 = vmatprep.subr.bf16.mxu0 %v6913
        %11247 = vmatpush1.bf16.msra.mxu0 %v6912
        %11248 = vmatprep.subr.bf16.mxu0 %v7663
        %11249 = vmatpush2.bf16.msra.mxu0 %v7662
        %11250 = vmatprep.subr.bf16.mxu0 %v7613
        %11251 = vmatpush2.bf16.msra.mxu0 %v7612
        %11252 = vmatprep.subr.bf16.mxu0 %v7563
        %11253 = vmatpush2.bf16.msra.mxu0 %v7562
        %11254 = vmatprep.subr.bf16.mxu0 %v7513
        %11255 = vmatpush2.bf16.msra.mxu0 %v7512
        %11256 = vmatprep.subr.bf16.mxu0 %v7463
        %11257 = vmatpush2.bf16.msra.mxu0 %v7462
        %11258 = vmatprep.subr.bf16.mxu0 %v7413
        %11259 = vmatpush2.bf16.msra.mxu0 %v7412
        %11260 = vmatprep.subr.bf16.mxu0 %v7363
        %11261 = vmatpush2.bf16.msra.mxu0 %v7362
        %11262 = vmatprep.subr.bf16.mxu0 %v7313
        %11263 = vmatpush2.bf16.msra.mxu0 %v7312
        %11264 = vmatprep.mubr.bf16.mxu0 %v217
        %11265 = vmatmul.mubr.bf16.gmra.mxu0 %v216
        %v11266 = vpop.f32.mrf.mxu0
        %v11267 = vadd.f32 %v1949, %v11266
        %v11268 = vpop.f32.mrf.mxu0
        %v11269 = vadd.f32 %v1953, %v11268
        %v11270 = vpop.f32.mrf.mxu0
        %v11271 = vpop.f32.mrf.mxu0
        %11272 = vdwg.mxu0
        %11273 = vmatprep.subr.bf16.mxu0 %v8063
        %11274 = vmatpush1.bf16.msra.mxu0 %v8062
        %11275 = vmatprep.subr.bf16.mxu0 %v8013
        %11276 = vmatpush1.bf16.msra.mxu0 %v8012
        %11277 = vmatprep.subr.bf16.mxu0 %v7963
        %11278 = vmatpush1.bf16.msra.mxu0 %v7962
        %11279 = vmatprep.subr.bf16.mxu0 %v7913
        %11280 = vmatpush1.bf16.msra.mxu0 %v7912
        %11281 = vmatprep.subr.bf16.mxu0 %v7863
        %11282 = vmatpush1.bf16.msra.mxu0 %v7862
        %11283 = vmatprep.subr.bf16.mxu0 %v7813
        %11284 = vmatpush1.bf16.msra.mxu0 %v7812
        %11285 = vmatprep.subr.bf16.mxu0 %v7763
        %11286 = vmatpush1.bf16.msra.mxu0 %v7762
        %11287 = vmatprep.subr.bf16.mxu0 %v7713
        %11288 = vmatpush1.bf16.msra.mxu0 %v7712
        %11289 = vmatprep.subr.bf16.mxu0 %v8463
        %11290 = vmatpush2.bf16.msra.mxu0 %v8462
        %11291 = vmatprep.subr.bf16.mxu0 %v8413
        %11292 = vmatpush2.bf16.msra.mxu0 %v8412
        %11293 = vmatprep.subr.bf16.mxu0 %v8363
        %11294 = vmatpush2.bf16.msra.mxu0 %v8362
        %11295 = vmatprep.subr.bf16.mxu0 %v8313
        %11296 = vmatpush2.bf16.msra.mxu0 %v8312
        %11297 = vmatprep.subr.bf16.mxu0 %v8263
        %11298 = vmatpush2.bf16.msra.mxu0 %v8262
        %11299 = vmatprep.subr.bf16.mxu0 %v8213
        %11300 = vmatpush2.bf16.msra.mxu0 %v8212
        %11301 = vmatprep.subr.bf16.mxu0 %v8163
        %11302 = vmatpush2.bf16.msra.mxu0 %v8162
        %11303 = vmatprep.subr.bf16.mxu0 %v8113
        %11304 = vmatpush2.bf16.msra.mxu0 %v8112
        %11305 = vmatprep.mubr.bf16.mxu0 %v219
        %11306 = vmatmul.mubr.bf16.gmra.mxu0 %v218
        %v11307 = vpop.f32.mrf.mxu0
        %v11308 = vadd.f32 %v11267, %v11307
        %v11309 = vpop.f32.mrf.mxu0
        %v11310 = vadd.f32 %v11269, %v11309
        %v11311 = vpop.f32.mrf.mxu0
        %v11312 = vpop.f32.mrf.mxu0
        %11313 = vdwg.mxu0
        %11314 = vmatprep.subr.bf16.mxu0 %v7265
        %11315 = vmatpush1.bf16.msra.mxu0 %v7264
        %11316 = vmatprep.subr.bf16.mxu0 %v7215
        %11317 = vmatpush1.bf16.msra.mxu0 %v7214
        %11318 = vmatprep.subr.bf16.mxu0 %v7165
        %11319 = vmatpush1.bf16.msra.mxu0 %v7164
        %11320 = vmatprep.subr.bf16.mxu0 %v7115
        %11321 = vmatpush1.bf16.msra.mxu0 %v7114
        %11322 = vmatprep.subr.bf16.mxu0 %v7065
        %11323 = vmatpush1.bf16.msra.mxu0 %v7064
        %11324 = vmatprep.subr.bf16.mxu0 %v7015
        %11325 = vmatpush1.bf16.msra.mxu0 %v7014
        %11326 = vmatprep.subr.bf16.mxu0 %v6965
        %11327 = vmatpush1.bf16.msra.mxu0 %v6964
        %11328 = vmatprep.subr.bf16.mxu0 %v6915
        %11329 = vmatpush1.bf16.msra.mxu0 %v6914
        %11330 = vmatprep.subr.bf16.mxu0 %v7665
        %11331 = vmatpush2.bf16.msra.mxu0 %v7664
        %11332 = vmatprep.subr.bf16.mxu0 %v7615
        %11333 = vmatpush2.bf16.msra.mxu0 %v7614
        %11334 = vmatprep.subr.bf16.mxu0 %v7565
        %11335 = vmatpush2.bf16.msra.mxu0 %v7564
        %11336 = vmatprep.subr.bf16.mxu0 %v7515
        %11337 = vmatpush2.bf16.msra.mxu0 %v7514
        %11338 = vmatprep.subr.bf16.mxu0 %v7465
        %11339 = vmatpush2.bf16.msra.mxu0 %v7464
        %11340 = vmatprep.subr.bf16.mxu0 %v7415
        %11341 = vmatpush2.bf16.msra.mxu0 %v7414
        %11342 = vmatprep.subr.bf16.mxu0 %v7365
        %11343 = vmatpush2.bf16.msra.mxu0 %v7364
        %11344 = vmatprep.subr.bf16.mxu0 %v7315
        %11345 = vmatpush2.bf16.msra.mxu0 %v7314
        %11346 = vmatprep.mubr.bf16.mxu0 %v217
        %11347 = vmatmul.mubr.bf16.gmra.mxu0 %v216
        %v11348 = vpop.f32.mrf.mxu0
        %v11349 = vadd.f32 %v1957, %v11348
        %v11350 = vpop.f32.mrf.mxu0
        %v11351 = vadd.f32 %v1961, %v11350
        %v11352 = vpop.f32.mrf.mxu0
        %v11353 = vpop.f32.mrf.mxu0
        %11354 = vdwg.mxu0
        %11355 = vmatprep.subr.bf16.mxu0 %v8065
        %11356 = vmatpush1.bf16.msra.mxu0 %v8064
        %11357 = vmatprep.subr.bf16.mxu0 %v8015
        %11358 = vmatpush1.bf16.msra.mxu0 %v8014
        %11359 = vmatprep.subr.bf16.mxu0 %v7965
        %11360 = vmatpush1.bf16.msra.mxu0 %v7964
        %11361 = vmatprep.subr.bf16.mxu0 %v7915
        %11362 = vmatpush1.bf16.msra.mxu0 %v7914
        %11363 = vmatprep.subr.bf16.mxu0 %v7865
        %11364 = vmatpush1.bf16.msra.mxu0 %v7864
        %11365 = vmatprep.subr.bf16.mxu0 %v7815
        %11366 = vmatpush1.bf16.msra.mxu0 %v7814
        %11367 = vmatprep.subr.bf16.mxu0 %v7765
        %11368 = vmatpush1.bf16.msra.mxu0 %v7764
        %11369 = vmatprep.subr.bf16.mxu0 %v7715
        %11370 = vmatpush1.bf16.msra.mxu0 %v7714
        %11371 = vmatprep.subr.bf16.mxu0 %v8465
        %11372 = vmatpush2.bf16.msra.mxu0 %v8464
        %11373 = vmatprep.subr.bf16.mxu0 %v8415
        %11374 = vmatpush2.bf16.msra.mxu0 %v8414
        %11375 = vmatprep.subr.bf16.mxu0 %v8365
        %11376 = vmatpush2.bf16.msra.mxu0 %v8364
        %11377 = vmatprep.subr.bf16.mxu0 %v8315
        %11378 = vmatpush2.bf16.msra.mxu0 %v8314
        %11379 = vmatprep.subr.bf16.mxu0 %v8265
        %11380 = vmatpush2.bf16.msra.mxu0 %v8264
        %11381 = vmatprep.subr.bf16.mxu0 %v8215
        %11382 = vmatpush2.bf16.msra.mxu0 %v8214
        %11383 = vmatprep.subr.bf16.mxu0 %v8165
        %11384 = vmatpush2.bf16.msra.mxu0 %v8164
        %11385 = vmatprep.subr.bf16.mxu0 %v8115
        %11386 = vmatpush2.bf16.msra.mxu0 %v8114
        %11387 = vmatprep.mubr.bf16.mxu0 %v219
        %11388 = vmatmul.mubr.bf16.gmra.mxu0 %v218
        %v11389 = vpop.f32.mrf.mxu0
        %v11390 = vadd.f32 %v11349, %v11389
        %v11391 = vpop.f32.mrf.mxu0
        %v11392 = vadd.f32 %v11351, %v11391
        %v11393 = vpop.f32.mrf.mxu0
        %v11394 = vpop.f32.mrf.mxu0
        %11395 = vdwg.mxu0
        %11396 = vmatprep.subr.bf16.mxu0 %v7267
        %11397 = vmatpush1.bf16.msra.mxu0 %v7266
        %11398 = vmatprep.subr.bf16.mxu0 %v7217
        %11399 = vmatpush1.bf16.msra.mxu0 %v7216
        %11400 = vmatprep.subr.bf16.mxu0 %v7167
        %11401 = vmatpush1.bf16.msra.mxu0 %v7166
        %11402 = vmatprep.subr.bf16.mxu0 %v7117
        %11403 = vmatpush1.bf16.msra.mxu0 %v7116
        %11404 = vmatprep.subr.bf16.mxu0 %v7067
        %11405 = vmatpush1.bf16.msra.mxu0 %v7066
        %11406 = vmatprep.subr.bf16.mxu0 %v7017
        %11407 = vmatpush1.bf16.msra.mxu0 %v7016
        %11408 = vmatprep.subr.bf16.mxu0 %v6967
        %11409 = vmatpush1.bf16.msra.mxu0 %v6966
        %11410 = vmatprep.subr.bf16.mxu0 %v6917
        %11411 = vmatpush1.bf16.msra.mxu0 %v6916
        %11412 = vmatprep.subr.bf16.mxu0 %v7667
        %11413 = vmatpush2.bf16.msra.mxu0 %v7666
        %11414 = vmatprep.subr.bf16.mxu0 %v7617
        %11415 = vmatpush2.bf16.msra.mxu0 %v7616
        %11416 = vmatprep.subr.bf16.mxu0 %v7567
        %11417 = vmatpush2.bf16.msra.mxu0 %v7566
        %11418 = vmatprep.subr.bf16.mxu0 %v7517
        %11419 = vmatpush2.bf16.msra.mxu0 %v7516
        %11420 = vmatprep.subr.bf16.mxu0 %v7467
        %11421 = vmatpush2.bf16.msra.mxu0 %v7466
        %11422 = vmatprep.subr.bf16.mxu0 %v7417
        %11423 = vmatpush2.bf16.msra.mxu0 %v7416
        %11424 = vmatprep.subr.bf16.mxu0 %v7367
        %11425 = vmatpush2.bf16.msra.mxu0 %v7366
        %11426 = vmatprep.subr.bf16.mxu0 %v7317
        %11427 = vmatpush2.bf16.msra.mxu0 %v7316
        %11428 = vmatprep.mubr.bf16.mxu0 %v217
        %11429 = vmatmul.mubr.bf16.gmra.mxu0 %v216
        %v11430 = vpop.f32.mrf.mxu0
        %v11431 = vadd.f32 %v1965, %v11430
        %v11432 = vpop.f32.mrf.mxu0
        %v11433 = vadd.f32 %v1969, %v11432
        %v11434 = vpop.f32.mrf.mxu0
        %v11435 = vpop.f32.mrf.mxu0
        %11436 = vdwg.mxu0
        %11437 = vmatprep.subr.bf16.mxu0 %v8067
        %11438 = vmatpush1.bf16.msra.mxu0 %v8066
        %11439 = vmatprep.subr.bf16.mxu0 %v8017
        %11440 = vmatpush1.bf16.msra.mxu0 %v8016
        %11441 = vmatprep.subr.bf16.mxu0 %v7967
        %11442 = vmatpush1.bf16.msra.mxu0 %v7966
        %11443 = vmatprep.subr.bf16.mxu0 %v7917
        %11444 = vmatpush1.bf16.msra.mxu0 %v7916
        %11445 = vmatprep.subr.bf16.mxu0 %v7867
        %11446 = vmatpush1.bf16.msra.mxu0 %v7866
        %11447 = vmatprep.subr.bf16.mxu0 %v7817
        %11448 = vmatpush1.bf16.msra.mxu0 %v7816
        %11449 = vmatprep.subr.bf16.mxu0 %v7767
        %11450 = vmatpush1.bf16.msra.mxu0 %v7766
        %11451 = vmatprep.subr.bf16.mxu0 %v7717
        %11452 = vmatpush1.bf16.msra.mxu0 %v7716
        %11453 = vmatprep.subr.bf16.mxu0 %v8467
        %11454 = vmatpush2.bf16.msra.mxu0 %v8466
        %11455 = vmatprep.subr.bf16.mxu0 %v8417
        %11456 = vmatpush2.bf16.msra.mxu0 %v8416
        %11457 = vmatprep.subr.bf16.mxu0 %v8367
        %11458 = vmatpush2.bf16.msra.mxu0 %v8366
        %11459 = vmatprep.subr.bf16.mxu0 %v8317
        %11460 = vmatpush2.bf16.msra.mxu0 %v8316
        %11461 = vmatprep.subr.bf16.mxu0 %v8267
        %11462 = vmatpush2.bf16.msra.mxu0 %v8266
        %11463 = vmatprep.subr.bf16.mxu0 %v8217
        %11464 = vmatpush2.bf16.msra.mxu0 %v8216
        %11465 = vmatprep.subr.bf16.mxu0 %v8167
        %11466 = vmatpush2.bf16.msra.mxu0 %v8166
        %11467 = vmatprep.subr.bf16.mxu0 %v8117
        %11468 = vmatpush2.bf16.msra.mxu0 %v8116
        %11469 = vmatprep.mubr.bf16.mxu0 %v219
        %11470 = vmatmul.mubr.bf16.gmra.mxu0 %v218
        %v11471 = vpop.f32.mrf.mxu0
        %v11472 = vadd.f32 %v11431, %v11471
        %v11473 = vpop.f32.mrf.mxu0
        %v11474 = vadd.f32 %v11433, %v11473
        %v11475 = vpop.f32.mrf.mxu0
        %v11476 = vpop.f32.mrf.mxu0
        %11477 = vdwg.mxu0
        %11478 = vmatprep.subr.bf16.mxu0 %v7269
        %11479 = vmatpush1.bf16.msra.mxu0 %v7268
        %11480 = vmatprep.subr.bf16.mxu0 %v7219
        %11481 = vmatpush1.bf16.msra.mxu0 %v7218
        %11482 = vmatprep.subr.bf16.mxu0 %v7169
        %11483 = vmatpush1.bf16.msra.mxu0 %v7168
        %11484 = vmatprep.subr.bf16.mxu0 %v7119
        %11485 = vmatpush1.bf16.msra.mxu0 %v7118
        %11486 = vmatprep.subr.bf16.mxu0 %v7069
        %11487 = vmatpush1.bf16.msra.mxu0 %v7068
        %11488 = vmatprep.subr.bf16.mxu0 %v7019
        %11489 = vmatpush1.bf16.msra.mxu0 %v7018
        %11490 = vmatprep.subr.bf16.mxu0 %v6969
        %11491 = vmatpush1.bf16.msra.mxu0 %v6968
        %11492 = vmatprep.subr.bf16.mxu0 %v6919
        %11493 = vmatpush1.bf16.msra.mxu0 %v6918
        %11494 = vmatprep.subr.bf16.mxu0 %v7669
        %11495 = vmatpush2.bf16.msra.mxu0 %v7668
        %11496 = vmatprep.subr.bf16.mxu0 %v7619
        %11497 = vmatpush2.bf16.msra.mxu0 %v7618
        %11498 = vmatprep.subr.bf16.mxu0 %v7569
        %11499 = vmatpush2.bf16.msra.mxu0 %v7568
        %11500 = vmatprep.subr.bf16.mxu0 %v7519
        %11501 = vmatpush2.bf16.msra.mxu0 %v7518
        %11502 = vmatprep.subr.bf16.mxu0 %v7469
        %11503 = vmatpush2.bf16.msra.mxu0 %v7468
        %11504 = vmatprep.subr.bf16.mxu0 %v7419
        %11505 = vmatpush2.bf16.msra.mxu0 %v7418
        %11506 = vmatprep.subr.bf16.mxu0 %v7369
        %11507 = vmatpush2.bf16.msra.mxu0 %v7368
        %11508 = vmatprep.subr.bf16.mxu0 %v7319
        %11509 = vmatpush2.bf16.msra.mxu0 %v7318
        %11510 = vmatprep.mubr.bf16.mxu0 %v217
        %11511 = vmatmul.mubr.bf16.gmra.mxu0 %v216
        %v11512 = vpop.f32.mrf.mxu0
        %v11513 = vadd.f32 %v1973, %v11512
        %v11514 = vpop.f32.mrf.mxu0
        %v11515 = vadd.f32 %v1977, %v11514
        %v11516 = vpop.f32.mrf.mxu0
        %v11517 = vpop.f32.mrf.mxu0
        %11518 = vdwg.mxu0
        %11519 = vmatprep.subr.bf16.mxu0 %v8069
        %11520 = vmatpush1.bf16.msra.mxu0 %v8068
        %11521 = vmatprep.subr.bf16.mxu0 %v8019
        %11522 = vmatpush1.bf16.msra.mxu0 %v8018
        %11523 = vmatprep.subr.bf16.mxu0 %v7969
        %11524 = vmatpush1.bf16.msra.mxu0 %v7968
        %11525 = vmatprep.subr.bf16.mxu0 %v7919
        %11526 = vmatpush1.bf16.msra.mxu0 %v7918
        %11527 = vmatprep.subr.bf16.mxu0 %v7869
        %11528 = vmatpush1.bf16.msra.mxu0 %v7868
        %11529 = vmatprep.subr.bf16.mxu0 %v7819
        %11530 = vmatpush1.bf16.msra.mxu0 %v7818
        %11531 = vmatprep.subr.bf16.mxu0 %v7769
        %11532 = vmatpush1.bf16.msra.mxu0 %v7768
        %11533 = vmatprep.subr.bf16.mxu0 %v7719
        %11534 = vmatpush1.bf16.msra.mxu0 %v7718
        %11535 = vmatprep.subr.bf16.mxu0 %v8469
        %11536 = vmatpush2.bf16.msra.mxu0 %v8468
        %11537 = vmatprep.subr.bf16.mxu0 %v8419
        %11538 = vmatpush2.bf16.msra.mxu0 %v8418
        %11539 = vmatprep.subr.bf16.mxu0 %v8369
        %11540 = vmatpush2.bf16.msra.mxu0 %v8368
        %11541 = vmatprep.subr.bf16.mxu0 %v8319
        %11542 = vmatpush2.bf16.msra.mxu0 %v8318
        %11543 = vmatprep.subr.bf16.mxu0 %v8269
        %11544 = vmatpush2.bf16.msra.mxu0 %v8268
        %11545 = vmatprep.subr.bf16.mxu0 %v8219
        %11546 = vmatpush2.bf16.msra.mxu0 %v8218
        %11547 = vmatprep.subr.bf16.mxu0 %v8169
        %11548 = vmatpush2.bf16.msra.mxu0 %v8168
        %11549 = vmatprep.subr.bf16.mxu0 %v8119
        %11550 = vmatpush2.bf16.msra.mxu0 %v8118
        %11551 = vmatprep.mubr.bf16.mxu0 %v219
        %11552 = vmatmul.mubr.bf16.gmra.mxu0 %v218
        %v11553 = vpop.f32.mrf.mxu0
        %v11554 = vadd.f32 %v11513, %v11553
        %v11555 = vpop.f32.mrf.mxu0
        %v11556 = vadd.f32 %v11515, %v11555
        %v11557 = vpop.f32.mrf.mxu0
        %v11558 = vpop.f32.mrf.mxu0
        %11559 = vdwg.mxu0
        %11560 = vmatprep.subr.bf16.mxu0 %v7271
        %11561 = vmatpush1.bf16.msra.mxu0 %v7270
        %11562 = vmatprep.subr.bf16.mxu0 %v7221
        %11563 = vmatpush1.bf16.msra.mxu0 %v7220
        %11564 = vmatprep.subr.bf16.mxu0 %v7171
        %11565 = vmatpush1.bf16.msra.mxu0 %v7170
        %11566 = vmatprep.subr.bf16.mxu0 %v7121
        %11567 = vmatpush1.bf16.msra.mxu0 %v7120
        %11568 = vmatprep.subr.bf16.mxu0 %v7071
        %11569 = vmatpush1.bf16.msra.mxu0 %v7070
        %11570 = vmatprep.subr.bf16.mxu0 %v7021
        %11571 = vmatpush1.bf16.msra.mxu0 %v7020
        %11572 = vmatprep.subr.bf16.mxu0 %v6971
        %11573 = vmatpush1.bf16.msra.mxu0 %v6970
        %11574 = vmatprep.subr.bf16.mxu0 %v6921
        %11575 = vmatpush1.bf16.msra.mxu0 %v6920
        %11576 = vmatprep.subr.bf16.mxu0 %v7671
        %11577 = vmatpush2.bf16.msra.mxu0 %v7670
        %11578 = vmatprep.subr.bf16.mxu0 %v7621
        %11579 = vmatpush2.bf16.msra.mxu0 %v7620
        %11580 = vmatprep.subr.bf16.mxu0 %v7571
        %11581 = vmatpush2.bf16.msra.mxu0 %v7570
        %11582 = vmatprep.subr.bf16.mxu0 %v7521
        %11583 = vmatpush2.bf16.msra.mxu0 %v7520
        %11584 = vmatprep.subr.bf16.mxu0 %v7471
        %11585 = vmatpush2.bf16.msra.mxu0 %v7470
        %11586 = vmatprep.subr.bf16.mxu0 %v7421
        %11587 = vmatpush2.bf16.msra.mxu0 %v7420
        %11588 = vmatprep.subr.bf16.mxu0 %v7371
        %11589 = vmatpush2.bf16.msra.mxu0 %v7370
        %11590 = vmatprep.subr.bf16.mxu0 %v7321
        %11591 = vmatpush2.bf16.msra.mxu0 %v7320
        %11592 = vmatprep.mubr.bf16.mxu0 %v217
        %11593 = vmatmul.mubr.bf16.gmra.mxu0 %v216
        %v11594 = vpop.f32.mrf.mxu0
        %v11595 = vadd.f32 %v1981, %v11594
        %v11596 = vpop.f32.mrf.mxu0
        %v11597 = vadd.f32 %v1985, %v11596
        %v11598 = vpop.f32.mrf.mxu0
        %v11599 = vpop.f32.mrf.mxu0
        %11600 = vdwg.mxu0
        %11601 = vmatprep.subr.bf16.mxu0 %v8071
        %11602 = vmatpush1.bf16.msra.mxu0 %v8070
        %11603 = vmatprep.subr.bf16.mxu0 %v8021
        %11604 = vmatpush1.bf16.msra.mxu0 %v8020
        %11605 = vmatprep.subr.bf16.mxu0 %v7971
        %11606 = vmatpush1.bf16.msra.mxu0 %v7970
        %11607 = vmatprep.subr.bf16.mxu0 %v7921
        %11608 = vmatpush1.bf16.msra.mxu0 %v7920
        %11609 = vmatprep.subr.bf16.mxu0 %v7871
        %11610 = vmatpush1.bf16.msra.mxu0 %v7870
        %11611 = vmatprep.subr.bf16.mxu0 %v7821
        %11612 = vmatpush1.bf16.msra.mxu0 %v7820
        %11613 = vmatprep.subr.bf16.mxu0 %v7771
        %11614 = vmatpush1.bf16.msra.mxu0 %v7770
        %11615 = vmatprep.subr.bf16.mxu0 %v7721
        %11616 = vmatpush1.bf16.msra.mxu0 %v7720
        %11617 = vmatprep.subr.bf16.mxu0 %v8471
        %11618 = vmatpush2.bf16.msra.mxu0 %v8470
        %11619 = vmatprep.subr.bf16.mxu0 %v8421
        %11620 = vmatpush2.bf16.msra.mxu0 %v8420
        %11621 = vmatprep.subr.bf16.mxu0 %v8371
        %11622 = vmatpush2.bf16.msra.mxu0 %v8370
        %11623 = vmatprep.subr.bf16.mxu0 %v8321
        %11624 = vmatpush2.bf16.msra.mxu0 %v8320
        %11625 = vmatprep.subr.bf16.mxu0 %v8271
        %11626 = vmatpush2.bf16.msra.mxu0 %v8270
        %11627 = vmatprep.subr.bf16.mxu0 %v8221
        %11628 = vmatpush2.bf16.msra.mxu0 %v8220
        %11629 = vmatprep.subr.bf16.mxu0 %v8171
        %11630 = vmatpush2.bf16.msra.mxu0 %v8170
        %11631 = vmatprep.subr.bf16.mxu0 %v8121
        %11632 = vmatpush2.bf16.msra.mxu0 %v8120
        %11633 = vmatprep.mubr.bf16.mxu0 %v219
        %11634 = vmatmul.mubr.bf16.gmra.mxu0 %v218
        %v11635 = vpop.f32.mrf.mxu0
        %v11636 = vadd.f32 %v11595, %v11635
        %v11637 = vpop.f32.mrf.mxu0
        %v11638 = vadd.f32 %v11597, %v11637
        %v11639 = vpop.f32.mrf.mxu0
        %v11640 = vpop.f32.mrf.mxu0
        %11641 = vdwg.mxu0
        %11642 = vmatprep.subr.bf16.mxu0 %v7273
        %11643 = vmatpush1.bf16.msra.mxu0 %v7272
        %11644 = vmatprep.subr.bf16.mxu0 %v7223
        %11645 = vmatpush1.bf16.msra.mxu0 %v7222
        %11646 = vmatprep.subr.bf16.mxu0 %v7173
        %11647 = vmatpush1.bf16.msra.mxu0 %v7172
        %11648 = vmatprep.subr.bf16.mxu0 %v7123
        %11649 = vmatpush1.bf16.msra.mxu0 %v7122
        %11650 = vmatprep.subr.bf16.mxu0 %v7073
        %11651 = vmatpush1.bf16.msra.mxu0 %v7072
        %11652 = vmatprep.subr.bf16.mxu0 %v7023
        %11653 = vmatpush1.bf16.msra.mxu0 %v7022
        %11654 = vmatprep.subr.bf16.mxu0 %v6973
        %11655 = vmatpush1.bf16.msra.mxu0 %v6972
        %11656 = vmatprep.subr.bf16.mxu0 %v6923
        %11657 = vmatpush1.bf16.msra.mxu0 %v6922
        %11658 = vmatprep.subr.bf16.mxu0 %v7673
        %11659 = vmatpush2.bf16.msra.mxu0 %v7672
        %11660 = vmatprep.subr.bf16.mxu0 %v7623
        %11661 = vmatpush2.bf16.msra.mxu0 %v7622
        %11662 = vmatprep.subr.bf16.mxu0 %v7573
        %11663 = vmatpush2.bf16.msra.mxu0 %v7572
        %11664 = vmatprep.subr.bf16.mxu0 %v7523
        %11665 = vmatpush2.bf16.msra.mxu0 %v7522
        %11666 = vmatprep.subr.bf16.mxu0 %v7473
        %11667 = vmatpush2.bf16.msra.mxu0 %v7472
        %11668 = vmatprep.subr.bf16.mxu0 %v7423
        %11669 = vmatpush2.bf16.msra.mxu0 %v7422
        %11670 = vmatprep.subr.bf16.mxu0 %v7373
        %11671 = vmatpush2.bf16.msra.mxu0 %v7372
        %11672 = vmatprep.subr.bf16.mxu0 %v7323
        %11673 = vmatpush2.bf16.msra.mxu0 %v7322
        %11674 = vmatprep.mubr.bf16.mxu0 %v217
        %11675 = vmatmul.mubr.bf16.gmra.mxu0 %v216
        %v11676 = vpop.f32.mrf.mxu0
        %v11677 = vadd.f32 %v1989, %v11676
        %v11678 = vpop.f32.mrf.mxu0
        %v11679 = vadd.f32 %v1993, %v11678
        %v11680 = vpop.f32.mrf.mxu0
        %v11681 = vpop.f32.mrf.mxu0
        %11682 = vdwg.mxu0
        %11683 = vmatprep.subr.bf16.mxu0 %v8073
        %11684 = vmatpush1.bf16.msra.mxu0 %v8072
        %11685 = vmatprep.subr.bf16.mxu0 %v8023
        %11686 = vmatpush1.bf16.msra.mxu0 %v8022
        %11687 = vmatprep.subr.bf16.mxu0 %v7973
        %11688 = vmatpush1.bf16.msra.mxu0 %v7972
        %11689 = vmatprep.subr.bf16.mxu0 %v7923
        %11690 = vmatpush1.bf16.msra.mxu0 %v7922
        %11691 = vmatprep.subr.bf16.mxu0 %v7873
        %11692 = vmatpush1.bf16.msra.mxu0 %v7872
        %11693 = vmatprep.subr.bf16.mxu0 %v7823
        %11694 = vmatpush1.bf16.msra.mxu0 %v7822
        %11695 = vmatprep.subr.bf16.mxu0 %v7773
        %11696 = vmatpush1.bf16.msra.mxu0 %v7772
        %11697 = vmatprep.subr.bf16.mxu0 %v7723
        %11698 = vmatpush1.bf16.msra.mxu0 %v7722
        %11699 = vmatprep.subr.bf16.mxu0 %v8473
        %11700 = vmatpush2.bf16.msra.mxu0 %v8472
        %11701 = vmatprep.subr.bf16.mxu0 %v8423
        %11702 = vmatpush2.bf16.msra.mxu0 %v8422
        %11703 = vmatprep.subr.bf16.mxu0 %v8373
        %11704 = vmatpush2.bf16.msra.mxu0 %v8372
        %11705 = vmatprep.subr.bf16.mxu0 %v8323
        %11706 = vmatpush2.bf16.msra.mxu0 %v8322
        %11707 = vmatprep.subr.bf16.mxu0 %v8273
        %11708 = vmatpush2.bf16.msra.mxu0 %v8272
        %11709 = vmatprep.subr.bf16.mxu0 %v8223
        %11710 = vmatpush2.bf16.msra.mxu0 %v8222
        %11711 = vmatprep.subr.bf16.mxu0 %v8173
        %11712 = vmatpush2.bf16.msra.mxu0 %v8172
        %11713 = vmatprep.subr.bf16.mxu0 %v8123
        %11714 = vmatpush2.bf16.msra.mxu0 %v8122
        %11715 = vmatprep.mubr.bf16.mxu0 %v219
        %11716 = vmatmul.mubr.bf16.gmra.mxu0 %v218
        %v11717 = vpop.f32.mrf.mxu0
        %v11718 = vadd.f32 %v11677, %v11717
        %v11719 = vpop.f32.mrf.mxu0
        %v11720 = vadd.f32 %v11679, %v11719
        %v11721 = vpop.f32.mrf.mxu0
        %v11722 = vpop.f32.mrf.mxu0
        %11723 = vdwg.mxu0
        %11724 = vmatprep.subr.bf16.mxu0 %v7275
        %11725 = vmatpush1.bf16.msra.mxu0 %v7274
        %11726 = vmatprep.subr.bf16.mxu0 %v7225
        %11727 = vmatpush1.bf16.msra.mxu0 %v7224
        %11728 = vmatprep.subr.bf16.mxu0 %v7175
        %11729 = vmatpush1.bf16.msra.mxu0 %v7174
        %11730 = vmatprep.subr.bf16.mxu0 %v7125
        %11731 = vmatpush1.bf16.msra.mxu0 %v7124
        %11732 = vmatprep.subr.bf16.mxu0 %v7075
        %11733 = vmatpush1.bf16.msra.mxu0 %v7074
        %11734 = vmatprep.subr.bf16.mxu0 %v7025
        %11735 = vmatpush1.bf16.msra.mxu0 %v7024
        %11736 = vmatprep.subr.bf16.mxu0 %v6975
        %11737 = vmatpush1.bf16.msra.mxu0 %v6974
        %11738 = vmatprep.subr.bf16.mxu0 %v6925
        %11739 = vmatpush1.bf16.msra.mxu0 %v6924
        %11740 = vmatprep.subr.bf16.mxu0 %v7675
        %11741 = vmatpush2.bf16.msra.mxu0 %v7674
        %11742 = vmatprep.subr.bf16.mxu0 %v7625
        %11743 = vmatpush2.bf16.msra.mxu0 %v7624
        %11744 = vmatprep.subr.bf16.mxu0 %v7575
        %11745 = vmatpush2.bf16.msra.mxu0 %v7574
        %11746 = vmatprep.subr.bf16.mxu0 %v7525
        %11747 = vmatpush2.bf16.msra.mxu0 %v7524
        %11748 = vmatprep.subr.bf16.mxu0 %v7475
        %11749 = vmatpush2.bf16.msra.mxu0 %v7474
        %11750 = vmatprep.subr.bf16.mxu0 %v7425
        %11751 = vmatpush2.bf16.msra.mxu0 %v7424
        %11752 = vmatprep.subr.bf16.mxu0 %v7375
        %11753 = vmatpush2.bf16.msra.mxu0 %v7374
        %11754 = vmatprep.subr.bf16.mxu0 %v7325
        %11755 = vmatpush2.bf16.msra.mxu0 %v7324
        %11756 = vmatprep.mubr.bf16.mxu0 %v217
        %11757 = vmatmul.mubr.bf16.gmra.mxu0 %v216
        %v11758 = vpop.f32.mrf.mxu0
        %v11759 = vadd.f32 %v1997, %v11758
        %v11760 = vpop.f32.mrf.mxu0
        %v11761 = vadd.f32 %v2001, %v11760
        %v11762 = vpop.f32.mrf.mxu0
        %v11763 = vpop.f32.mrf.mxu0
        %11764 = vdwg.mxu0
        %11765 = vmatprep.subr.bf16.mxu0 %v8075
        %11766 = vmatpush1.bf16.msra.mxu0 %v8074
        %11767 = vmatprep.subr.bf16.mxu0 %v8025
        %11768 = vmatpush1.bf16.msra.mxu0 %v8024
        %11769 = vmatprep.subr.bf16.mxu0 %v7975
        %11770 = vmatpush1.bf16.msra.mxu0 %v7974
        %11771 = vmatprep.subr.bf16.mxu0 %v7925
        %11772 = vmatpush1.bf16.msra.mxu0 %v7924
        %11773 = vmatprep.subr.bf16.mxu0 %v7875
        %11774 = vmatpush1.bf16.msra.mxu0 %v7874
        %11775 = vmatprep.subr.bf16.mxu0 %v7825
        %11776 = vmatpush1.bf16.msra.mxu0 %v7824
        %11777 = vmatprep.subr.bf16.mxu0 %v7775
        %11778 = vmatpush1.bf16.msra.mxu0 %v7774
        %11779 = vmatprep.subr.bf16.mxu0 %v7725
        %11780 = vmatpush1.bf16.msra.mxu0 %v7724
        %11781 = vmatprep.subr.bf16.mxu0 %v8475
        %11782 = vmatpush2.bf16.msra.mxu0 %v8474
        %11783 = vmatprep.subr.bf16.mxu0 %v8425
        %11784 = vmatpush2.bf16.msra.mxu0 %v8424
        %11785 = vmatprep.subr.bf16.mxu0 %v8375
        %11786 = vmatpush2.bf16.msra.mxu0 %v8374
        %11787 = vmatprep.subr.bf16.mxu0 %v8325
        %11788 = vmatpush2.bf16.msra.mxu0 %v8324
        %11789 = vmatprep.subr.bf16.mxu0 %v8275
        %11790 = vmatpush2.bf16.msra.mxu0 %v8274
        %11791 = vmatprep.subr.bf16.mxu0 %v8225
        %11792 = vmatpush2.bf16.msra.mxu0 %v8224
        %11793 = vmatprep.subr.bf16.mxu0 %v8175
        %11794 = vmatpush2.bf16.msra.mxu0 %v8174
        %11795 = vmatprep.subr.bf16.mxu0 %v8125
        %11796 = vmatpush2.bf16.msra.mxu0 %v8124
        %11797 = vmatprep.mubr.bf16.mxu0 %v219
        %11798 = vmatmul.mubr.bf16.gmra.mxu0 %v218
        %v11799 = vpop.f32.mrf.mxu0
        %v11800 = vadd.f32 %v11759, %v11799
        %v11801 = vpop.f32.mrf.mxu0
        %v11802 = vadd.f32 %v11761, %v11801
        %v11803 = vpop.f32.mrf.mxu0
        %v11804 = vpop.f32.mrf.mxu0
        %11805 = vdwg.mxu0
        %11806 = vmatprep.subr.bf16.mxu0 %v7277
        %11807 = vmatpush1.bf16.msra.mxu0 %v7276
        %11808 = vmatprep.subr.bf16.mxu0 %v7227
        %11809 = vmatpush1.bf16.msra.mxu0 %v7226
        %11810 = vmatprep.subr.bf16.mxu0 %v7177
        %11811 = vmatpush1.bf16.msra.mxu0 %v7176
        %11812 = vmatprep.subr.bf16.mxu0 %v7127
        %11813 = vmatpush1.bf16.msra.mxu0 %v7126
        %11814 = vmatprep.subr.bf16.mxu0 %v7077
        %11815 = vmatpush1.bf16.msra.mxu0 %v7076
        %11816 = vmatprep.subr.bf16.mxu0 %v7027
        %11817 = vmatpush1.bf16.msra.mxu0 %v7026
        %11818 = vmatprep.subr.bf16.mxu0 %v6977
        %11819 = vmatpush1.bf16.msra.mxu0 %v6976
        %11820 = vmatprep.subr.bf16.mxu0 %v6927
        %11821 = vmatpush1.bf16.msra.mxu0 %v6926
        %11822 = vmatprep.subr.bf16.mxu0 %v7677
        %11823 = vmatpush2.bf16.msra.mxu0 %v7676
        %11824 = vmatprep.subr.bf16.mxu0 %v7627
        %11825 = vmatpush2.bf16.msra.mxu0 %v7626
        %11826 = vmatprep.subr.bf16.mxu0 %v7577
        %11827 = vmatpush2.bf16.msra.mxu0 %v7576
        %11828 = vmatprep.subr.bf16.mxu0 %v7527
        %11829 = vmatpush2.bf16.msra.mxu0 %v7526
        %11830 = vmatprep.subr.bf16.mxu0 %v7477
        %11831 = vmatpush2.bf16.msra.mxu0 %v7476
        %11832 = vmatprep.subr.bf16.mxu0 %v7427
        %11833 = vmatpush2.bf16.msra.mxu0 %v7426
        %11834 = vmatprep.subr.bf16.mxu0 %v7377
        %11835 = vmatpush2.bf16.msra.mxu0 %v7376
        %11836 = vmatprep.subr.bf16.mxu0 %v7327
        %11837 = vmatpush2.bf16.msra.mxu0 %v7326
        %11838 = vmatprep.mubr.bf16.mxu0 %v217
        %11839 = vmatmul.mubr.bf16.gmra.mxu0 %v216
        %v11840 = vpop.f32.mrf.mxu0
        %v11841 = vadd.f32 %v2005, %v11840
        %v11842 = vpop.f32.mrf.mxu0
        %v11843 = vadd.f32 %v2009, %v11842
        %v11844 = vpop.f32.mrf.mxu0
        %v11845 = vpop.f32.mrf.mxu0
        %11846 = vdwg.mxu0
        %11847 = vmatprep.subr.bf16.mxu0 %v8077
        %11848 = vmatpush1.bf16.msra.mxu0 %v8076
        %11849 = vmatprep.subr.bf16.mxu0 %v8027
        %11850 = vmatpush1.bf16.msra.mxu0 %v8026
        %11851 = vmatprep.subr.bf16.mxu0 %v7977
        %11852 = vmatpush1.bf16.msra.mxu0 %v7976
        %11853 = vmatprep.subr.bf16.mxu0 %v7927
        %11854 = vmatpush1.bf16.msra.mxu0 %v7926
        %11855 = vmatprep.subr.bf16.mxu0 %v7877
        %11856 = vmatpush1.bf16.msra.mxu0 %v7876
        %11857 = vmatprep.subr.bf16.mxu0 %v7827
        %11858 = vmatpush1.bf16.msra.mxu0 %v7826
        %11859 = vmatprep.subr.bf16.mxu0 %v7777
        %11860 = vmatpush1.bf16.msra.mxu0 %v7776
        %11861 = vmatprep.subr.bf16.mxu0 %v7727
        %11862 = vmatpush1.bf16.msra.mxu0 %v7726
        %11863 = vmatprep.subr.bf16.mxu0 %v8477
        %11864 = vmatpush2.bf16.msra.mxu0 %v8476
        %11865 = vmatprep.subr.bf16.mxu0 %v8427
        %11866 = vmatpush2.bf16.msra.mxu0 %v8426
        %11867 = vmatprep.subr.bf16.mxu0 %v8377
        %11868 = vmatpush2.bf16.msra.mxu0 %v8376
        %11869 = vmatprep.subr.bf16.mxu0 %v8327
        %11870 = vmatpush2.bf16.msra.mxu0 %v8326
        %11871 = vmatprep.subr.bf16.mxu0 %v8277
        %11872 = vmatpush2.bf16.msra.mxu0 %v8276
        %11873 = vmatprep.subr.bf16.mxu0 %v8227
        %11874 = vmatpush2.bf16.msra.mxu0 %v8226
        %11875 = vmatprep.subr.bf16.mxu0 %v8177
        %11876 = vmatpush2.bf16.msra.mxu0 %v8176
        %11877 = vmatprep.subr.bf16.mxu0 %v8127
        %11878 = vmatpush2.bf16.msra.mxu0 %v8126
        %11879 = vmatprep.mubr.bf16.mxu0 %v219
        %11880 = vmatmul.mubr.bf16.gmra.mxu0 %v218
        %v11881 = vpop.f32.mrf.mxu0
        %v11882 = vadd.f32 %v11841, %v11881
        %v11883 = vpop.f32.mrf.mxu0
        %v11884 = vadd.f32 %v11843, %v11883
        %v11885 = vpop.f32.mrf.mxu0
        %v11886 = vpop.f32.mrf.mxu0
        %11887 = vdwg.mxu0
        %11888 = vmatprep.subr.bf16.mxu0 %v7279
        %11889 = vmatpush1.bf16.msra.mxu0 %v7278
        %11890 = vmatprep.subr.bf16.mxu0 %v7229
        %11891 = vmatpush1.bf16.msra.mxu0 %v7228
        %11892 = vmatprep.subr.bf16.mxu0 %v7179
        %11893 = vmatpush1.bf16.msra.mxu0 %v7178
        %11894 = vmatprep.subr.bf16.mxu0 %v7129
        %11895 = vmatpush1.bf16.msra.mxu0 %v7128
        %11896 = vmatprep.subr.bf16.mxu0 %v7079
        %11897 = vmatpush1.bf16.msra.mxu0 %v7078
        %11898 = vmatprep.subr.bf16.mxu0 %v7029
        %11899 = vmatpush1.bf16.msra.mxu0 %v7028
        %11900 = vmatprep.subr.bf16.mxu0 %v6979
        %11901 = vmatpush1.bf16.msra.mxu0 %v6978
        %11902 = vmatprep.subr.bf16.mxu0 %v6929
        %11903 = vmatpush1.bf16.msra.mxu0 %v6928
        %11904 = vmatprep.subr.bf16.mxu0 %v7679
        %11905 = vmatpush2.bf16.msra.mxu0 %v7678
        %11906 = vmatprep.subr.bf16.mxu0 %v7629
        %11907 = vmatpush2.bf16.msra.mxu0 %v7628
        %11908 = vmatprep.subr.bf16.mxu0 %v7579
        %11909 = vmatpush2.bf16.msra.mxu0 %v7578
        %11910 = vmatprep.subr.bf16.mxu0 %v7529
        %11911 = vmatpush2.bf16.msra.mxu0 %v7528
        %11912 = vmatprep.subr.bf16.mxu0 %v7479
        %11913 = vmatpush2.bf16.msra.mxu0 %v7478
        %11914 = vmatprep.subr.bf16.mxu0 %v7429
        %11915 = vmatpush2.bf16.msra.mxu0 %v7428
        %11916 = vmatprep.subr.bf16.mxu0 %v7379
        %11917 = vmatpush2.bf16.msra.mxu0 %v7378
        %11918 = vmatprep.subr.bf16.mxu0 %v7329
        %11919 = vmatpush2.bf16.msra.mxu0 %v7328
        %11920 = vmatprep.mubr.bf16.mxu0 %v217
        %11921 = vmatmul.mubr.bf16.gmra.mxu0 %v216
        %v11922 = vpop.f32.mrf.mxu0
        %v11923 = vadd.f32 %v2013, %v11922
        %v11924 = vpop.f32.mrf.mxu0
        %v11925 = vadd.f32 %v2017, %v11924
        %v11926 = vpop.f32.mrf.mxu0
        %v11927 = vpop.f32.mrf.mxu0
        %11928 = vdwg.mxu0
        %11929 = vmatprep.subr.bf16.mxu0 %v8079
        %11930 = vmatpush1.bf16.msra.mxu0 %v8078
        %11931 = vmatprep.subr.bf16.mxu0 %v8029
        %11932 = vmatpush1.bf16.msra.mxu0 %v8028
        %11933 = vmatprep.subr.bf16.mxu0 %v7979
        %11934 = vmatpush1.bf16.msra.mxu0 %v7978
        %11935 = vmatprep.subr.bf16.mxu0 %v7929
        %11936 = vmatpush1.bf16.msra.mxu0 %v7928
        %11937 = vmatprep.subr.bf16.mxu0 %v7879
        %11938 = vmatpush1.bf16.msra.mxu0 %v7878
        %11939 = vmatprep.subr.bf16.mxu0 %v7829
        %11940 = vmatpush1.bf16.msra.mxu0 %v7828
        %11941 = vmatprep.subr.bf16.mxu0 %v7779
        %11942 = vmatpush1.bf16.msra.mxu0 %v7778
        %11943 = vmatprep.subr.bf16.mxu0 %v7729
        %11944 = vmatpush1.bf16.msra.mxu0 %v7728
        %11945 = vmatprep.subr.bf16.mxu0 %v8479
        %11946 = vmatpush2.bf16.msra.mxu0 %v8478
        %11947 = vmatprep.subr.bf16.mxu0 %v8429
        %11948 = vmatpush2.bf16.msra.mxu0 %v8428
        %11949 = vmatprep.subr.bf16.mxu0 %v8379
        %11950 = vmatpush2.bf16.msra.mxu0 %v8378
        %11951 = vmatprep.subr.bf16.mxu0 %v8329
        %11952 = vmatpush2.bf16.msra.mxu0 %v8328
        %11953 = vmatprep.subr.bf16.mxu0 %v8279
        %11954 = vmatpush2.bf16.msra.mxu0 %v8278
        %11955 = vmatprep.subr.bf16.mxu0 %v8229
        %11956 = vmatpush2.bf16.msra.mxu0 %v8228
        %11957 = vmatprep.subr.bf16.mxu0 %v8179
        %11958 = vmatpush2.bf16.msra.mxu0 %v8178
        %11959 = vmatprep.subr.bf16.mxu0 %v8129
        %11960 = vmatpush2.bf16.msra.mxu0 %v8128
        %11961 = vmatprep.mubr.bf16.mxu0 %v219
        %11962 = vmatmul.mubr.bf16.gmra.mxu0 %v218
        %v11963 = vpop.f32.mrf.mxu0
        %v11964 = vadd.f32 %v11923, %v11963
        %v11965 = vpop.f32.mrf.mxu0
        %v11966 = vadd.f32 %v11925, %v11965
        %v11967 = vpop.f32.mrf.mxu0
        %v11968 = vpop.f32.mrf.mxu0
        %11969 = vdwg.mxu0
        %11970 = vmatprep.subr.bf16.mxu0 %v7281
        %11971 = vmatpush1.bf16.msra.mxu0 %v7280
        %11972 = vmatprep.subr.bf16.mxu0 %v7231
        %11973 = vmatpush1.bf16.msra.mxu0 %v7230
        %11974 = vmatprep.subr.bf16.mxu0 %v7181
        %11975 = vmatpush1.bf16.msra.mxu0 %v7180
        %11976 = vmatprep.subr.bf16.mxu0 %v7131
        %11977 = vmatpush1.bf16.msra.mxu0 %v7130
        %11978 = vmatprep.subr.bf16.mxu0 %v7081
        %11979 = vmatpush1.bf16.msra.mxu0 %v7080
        %11980 = vmatprep.subr.bf16.mxu0 %v7031
        %11981 = vmatpush1.bf16.msra.mxu0 %v7030
        %11982 = vmatprep.subr.bf16.mxu0 %v6981
        %11983 = vmatpush1.bf16.msra.mxu0 %v6980
        %11984 = vmatprep.subr.bf16.mxu0 %v6931
        %11985 = vmatpush1.bf16.msra.mxu0 %v6930
        %11986 = vmatprep.subr.bf16.mxu0 %v7681
        %11987 = vmatpush2.bf16.msra.mxu0 %v7680
        %11988 = vmatprep.subr.bf16.mxu0 %v7631
        %11989 = vmatpush2.bf16.msra.mxu0 %v7630
        %11990 = vmatprep.subr.bf16.mxu0 %v7581
        %11991 = vmatpush2.bf16.msra.mxu0 %v7580
        %11992 = vmatprep.subr.bf16.mxu0 %v7531
        %11993 = vmatpush2.bf16.msra.mxu0 %v7530
        %11994 = vmatprep.subr.bf16.mxu0 %v7481
        %11995 = vmatpush2.bf16.msra.mxu0 %v7480
        %11996 = vmatprep.subr.bf16.mxu0 %v7431
        %11997 = vmatpush2.bf16.msra.mxu0 %v7430
        %11998 = vmatprep.subr.bf16.mxu0 %v7381
        %11999 = vmatpush2.bf16.msra.mxu0 %v7380
        %12000 = vmatprep.subr.bf16.mxu0 %v7331
        %12001 = vmatpush2.bf16.msra.mxu0 %v7330
        %12002 = vmatprep.mubr.bf16.mxu0 %v217
        %12003 = vmatmul.mubr.bf16.gmra.mxu0 %v216
        %v12004 = vpop.f32.mrf.mxu0
        %v12005 = vadd.f32 %v2021, %v12004
        %v12006 = vpop.f32.mrf.mxu0
        %v12007 = vadd.f32 %v2025, %v12006
        %v12008 = vpop.f32.mrf.mxu0
        %v12009 = vpop.f32.mrf.mxu0
        %12010 = vdwg.mxu0
        %12011 = vmatprep.subr.bf16.mxu0 %v8081
        %12012 = vmatpush1.bf16.msra.mxu0 %v8080
        %12013 = vmatprep.subr.bf16.mxu0 %v8031
        %12014 = vmatpush1.bf16.msra.mxu0 %v8030
        %12015 = vmatprep.subr.bf16.mxu0 %v7981
        %12016 = vmatpush1.bf16.msra.mxu0 %v7980
        %12017 = vmatprep.subr.bf16.mxu0 %v7931
        %12018 = vmatpush1.bf16.msra.mxu0 %v7930
        %12019 = vmatprep.subr.bf16.mxu0 %v7881
        %12020 = vmatpush1.bf16.msra.mxu0 %v7880
        %12021 = vmatprep.subr.bf16.mxu0 %v7831
        %12022 = vmatpush1.bf16.msra.mxu0 %v7830
        %12023 = vmatprep.subr.bf16.mxu0 %v7781
        %12024 = vmatpush1.bf16.msra.mxu0 %v7780
        %12025 = vmatprep.subr.bf16.mxu0 %v7731
        %12026 = vmatpush1.bf16.msra.mxu0 %v7730
        %12027 = vmatprep.subr.bf16.mxu0 %v8481
        %12028 = vmatpush2.bf16.msra.mxu0 %v8480
        %12029 = vmatprep.subr.bf16.mxu0 %v8431
        %12030 = vmatpush2.bf16.msra.mxu0 %v8430
        %12031 = vmatprep.subr.bf16.mxu0 %v8381
        %12032 = vmatpush2.bf16.msra.mxu0 %v8380
        %12033 = vmatprep.subr.bf16.mxu0 %v8331
        %12034 = vmatpush2.bf16.msra.mxu0 %v8330
        %12035 = vmatprep.subr.bf16.mxu0 %v8281
        %12036 = vmatpush2.bf16.msra.mxu0 %v8280
        %12037 = vmatprep.subr.bf16.mxu0 %v8231
        %12038 = vmatpush2.bf16.msra.mxu0 %v8230
        %12039 = vmatprep.subr.bf16.mxu0 %v8181
        %12040 = vmatpush2.bf16.msra.mxu0 %v8180
        %12041 = vmatprep.subr.bf16.mxu0 %v8131
        %12042 = vmatpush2.bf16.msra.mxu0 %v8130
        %12043 = vmatprep.mubr.bf16.mxu0 %v219
        %12044 = vmatmul.mubr.bf16.gmra.mxu0 %v218
        %v12045 = vpop.f32.mrf.mxu0
        %v12046 = vadd.f32 %v12005, %v12045
        %v12047 = vpop.f32.mrf.mxu0
        %v12048 = vadd.f32 %v12007, %v12047
        %v12049 = vpop.f32.mrf.mxu0
        %v12050 = vpop.f32.mrf.mxu0
        %12051 = vdwg.mxu0
        %12052 = vmatprep.subr.bf16.mxu0 %v7283
        %12053 = vmatpush1.bf16.msra.mxu0 %v7282
        %12054 = vmatprep.subr.bf16.mxu0 %v7233
        %12055 = vmatpush1.bf16.msra.mxu0 %v7232
        %12056 = vmatprep.subr.bf16.mxu0 %v7183
        %12057 = vmatpush1.bf16.msra.mxu0 %v7182
        %12058 = vmatprep.subr.bf16.mxu0 %v7133
        %12059 = vmatpush1.bf16.msra.mxu0 %v7132
        %12060 = vmatprep.subr.bf16.mxu0 %v7083
        %12061 = vmatpush1.bf16.msra.mxu0 %v7082
        %12062 = vmatprep.subr.bf16.mxu0 %v7033
        %12063 = vmatpush1.bf16.msra.mxu0 %v7032
        %12064 = vmatprep.subr.bf16.mxu0 %v6983
        %12065 = vmatpush1.bf16.msra.mxu0 %v6982
        %12066 = vmatprep.subr.bf16.mxu0 %v6933
        %12067 = vmatpush1.bf16.msra.mxu0 %v6932
        %12068 = vmatprep.subr.bf16.mxu0 %v7683
        %12069 = vmatpush2.bf16.msra.mxu0 %v7682
        %12070 = vmatprep.subr.bf16.mxu0 %v7633
        %12071 = vmatpush2.bf16.msra.mxu0 %v7632
        %12072 = vmatprep.subr.bf16.mxu0 %v7583
        %12073 = vmatpush2.bf16.msra.mxu0 %v7582
        %12074 = vmatprep.subr.bf16.mxu0 %v7533
        %12075 = vmatpush2.bf16.msra.mxu0 %v7532
        %12076 = vmatprep.subr.bf16.mxu0 %v7483
        %12077 = vmatpush2.bf16.msra.mxu0 %v7482
        %12078 = vmatprep.subr.bf16.mxu0 %v7433
        %12079 = vmatpush2.bf16.msra.mxu0 %v7432
        %12080 = vmatprep.subr.bf16.mxu0 %v7383
        %12081 = vmatpush2.bf16.msra.mxu0 %v7382
        %12082 = vmatprep.subr.bf16.mxu0 %v7333
        %12083 = vmatpush2.bf16.msra.mxu0 %v7332
        %12084 = vmatprep.mubr.bf16.mxu0 %v217
        %12085 = vmatmul.mubr.bf16.gmra.mxu0 %v216
        %v12086 = vpop.f32.mrf.mxu0
        %v12087 = vadd.f32 %v2029, %v12086
        %v12088 = vpop.f32.mrf.mxu0
        %v12089 = vadd.f32 %v2033, %v12088
        %v12090 = vpop.f32.mrf.mxu0
        %v12091 = vpop.f32.mrf.mxu0
        %12092 = vdwg.mxu0
        %12093 = vmatprep.subr.bf16.mxu0 %v8083
        %12094 = vmatpush1.bf16.msra.mxu0 %v8082
        %12095 = vmatprep.subr.bf16.mxu0 %v8033
        %12096 = vmatpush1.bf16.msra.mxu0 %v8032
        %12097 = vmatprep.subr.bf16.mxu0 %v7983
        %12098 = vmatpush1.bf16.msra.mxu0 %v7982
        %12099 = vmatprep.subr.bf16.mxu0 %v7933
        %12100 = vmatpush1.bf16.msra.mxu0 %v7932
        %12101 = vmatprep.subr.bf16.mxu0 %v7883
        %12102 = vmatpush1.bf16.msra.mxu0 %v7882
        %12103 = vmatprep.subr.bf16.mxu0 %v7833
        %12104 = vmatpush1.bf16.msra.mxu0 %v7832
        %12105 = vmatprep.subr.bf16.mxu0 %v7783
        %12106 = vmatpush1.bf16.msra.mxu0 %v7782
        %12107 = vmatprep.subr.bf16.mxu0 %v7733
        %12108 = vmatpush1.bf16.msra.mxu0 %v7732
        %12109 = vmatprep.subr.bf16.mxu0 %v8483
        %12110 = vmatpush2.bf16.msra.mxu0 %v8482
        %12111 = vmatprep.subr.bf16.mxu0 %v8433
        %12112 = vmatpush2.bf16.msra.mxu0 %v8432
        %12113 = vmatprep.subr.bf16.mxu0 %v8383
        %12114 = vmatpush2.bf16.msra.mxu0 %v8382
        %12115 = vmatprep.subr.bf16.mxu0 %v8333
        %12116 = vmatpush2.bf16.msra.mxu0 %v8332
        %12117 = vmatprep.subr.bf16.mxu0 %v8283
        %12118 = vmatpush2.bf16.msra.mxu0 %v8282
        %12119 = vmatprep.subr.bf16.mxu0 %v8233
        %12120 = vmatpush2.bf16.msra.mxu0 %v8232
        %12121 = vmatprep.subr.bf16.mxu0 %v8183
        %12122 = vmatpush2.bf16.msra.mxu0 %v8182
        %12123 = vmatprep.subr.bf16.mxu0 %v8133
        %12124 = vmatpush2.bf16.msra.mxu0 %v8132
        %12125 = vmatprep.mubr.bf16.mxu0 %v219
        %12126 = vmatmul.mubr.bf16.gmra.mxu0 %v218
        %v12127 = vpop.f32.mrf.mxu0
        %v12128 = vadd.f32 %v12087, %v12127
        %v12129 = vpop.f32.mrf.mxu0
        %v12130 = vadd.f32 %v12089, %v12129
        %v12131 = vpop.f32.mrf.mxu0
        %v12132 = vpop.f32.mrf.mxu0
        %12133 = vdwg.mxu0
        %12134 = vst [vmem:[%s210] sm:$0xff] %v10160
        %12135 = vst [vmem:[%s210 + $0x8] sm:$0xff] %v10162
        %12136 = vst [vmem:[%s210 + $0x10] sm:$0xff] %v10242
        %12137 = vst [vmem:[%s210 + $0x18] sm:$0xff] %v10244
        %12138 = vst [vmem:[%s210 + $0x20] sm:$0xff] %v10324
        %12139 = vst [vmem:[%s210 + $0x28] sm:$0xff] %v10326
        %12140 = vst [vmem:[%s210 + $0x30] sm:$0xff] %v10406
        %12141 = vst [vmem:[%s210 + $0x38] sm:$0xff] %v10408
        %12142 = vst [vmem:[%s210 + $0x40] sm:$0xff] %v10488
        %12143 = vst [vmem:[%s210 + $0x48] sm:$0xff] %v10490
        %12144 = vst [vmem:[%s210 + $0x50] sm:$0xff] %v10570
        %12145 = vst [vmem:[%s210 + $0x58] sm:$0xff] %v10572
        %12146 = vst [vmem:[%s210 + $0x60] sm:$0xff] %v10652
        %12147 = vst [vmem:[%s210 + $0x68] sm:$0xff] %v10654
        %12148 = vst [vmem:[%s210 + $0x70] sm:$0xff] %v10734
        %12149 = vst [vmem:[%s210 + $0x78] sm:$0xff] %v10736
        %12150 = vst [vmem:[%s210 + $0x80] sm:$0xff] %v10816
        %12151 = vst [vmem:[%s210 + $0x88] sm:$0xff] %v10818
        %12152 = vst [vmem:[%s210 + $0x90] sm:$0xff] %v10898
        %12153 = vst [vmem:[%s210 + $0x98] sm:$0xff] %v10900
        %12154 = vst [vmem:[%s210 + $0xa0] sm:$0xff] %v10980
        %12155 = vst [vmem:[%s210 + $0xa8] sm:$0xff] %v10982
        %12156 = vst [vmem:[%s210 + $0xb0] sm:$0xff] %v11062
        %12157 = vst [vmem:[%s210 + $0xb8] sm:$0xff] %v11064
        %12158 = vst [vmem:[%s210 + $0xc0] sm:$0xff] %v11144
        %12159 = vst [vmem:[%s210 + $0xc8] sm:$0xff] %v11146
        %12160 = vst [vmem:[%s210 + $0xd0] sm:$0xff] %v11226
        %12161 = vst [vmem:[%s210 + $0xd8] sm:$0xff] %v11228
        %12162 = vst [vmem:[%s210 + $0xe0] sm:$0xff] %v11308
        %12163 = vst [vmem:[%s210 + $0xe8] sm:$0xff] %v11310
        %12164 = vst [vmem:[%s210 + $0xf0] sm:$0xff] %v11390
        %12165 = vst [vmem:[%s210 + $0xf8] sm:$0xff] %v11392
        %12166 = vst [vmem:[%s210 + $0x100] sm:$0xff] %v11472
        %12167 = vst [vmem:[%s210 + $0x108] sm:$0xff] %v11474
        %12168 = vst [vmem:[%s210 + $0x110] sm:$0xff] %v11554
        %12169 = vst [vmem:[%s210 + $0x118] sm:$0xff] %v11556
        %12170 = vst [vmem:[%s210 + $0x120] sm:$0xff] %v11636
        %12171 = vst [vmem:[%s210 + $0x128] sm:$0xff] %v11638
        %12172 = vst [vmem:[%s210 + $0x130] sm:$0xff] %v11718
        %12173 = vst [vmem:[%s210 + $0x138] sm:$0xff] %v11720
        %12174 = vst [vmem:[%s210 + $0x140] sm:$0xff] %v11800
        %12175 = vst [vmem:[%s210 + $0x148] sm:$0xff] %v11802
        %12176 = vst [vmem:[%s210 + $0x150] sm:$0xff] %v11882
        %12177 = vst [vmem:[%s210 + $0x158] sm:$0xff] %v11884
        %12178 = vst [vmem:[%s210 + $0x160] sm:$0xff] %v11964
        %12179 = vst [vmem:[%s210 + $0x168] sm:$0xff] %v11966
        %12180 = vst [vmem:[%s210 + $0x170] sm:$0xff] %v12046
        %12181 = vst [vmem:[%s210 + $0x178] sm:$0xff] %v12048
        %12182 = vst [vmem:[%s210 + $0x180] sm:$0xff] %v12128
        %12183 = vst [vmem:[%s210 + $0x188] sm:$0xff] %v12130
        %s12184 = smul.u32 50, %s17
        %p12185 = scmp.lt.s32.totalorder %s12184, 299
        %s12186 = scalar_select %p12185, %s12184, 299
        %s12187 = smul.addr %s12186, 8
        %s12188 = scalar_lea.vmem %s3, %s12187
        // Predicated region
        $region37: #{gnn_forward.3} parent=31 // pred_check
          %p12189 = pneg %p108
        $region38: #{gnn_forward.3} parent=31 // pred_check_branch
          %12191 = sbr.rel (%p12189) target = $region40
        $region39: #{gnn_forward.3} parent=31 // pred_region
          %s12192 = smul.u32 50, %s17
        $region40: #{gnn_forward.3} parent=31 // pred_fallthru
          _
      $region32: #{gnn_forward.3} parent=5 // pred_fallthru
        _
      %p12193 = scmp.le.s32.totalorder 2, %s12
      // Predicated region
      $region41: #{gnn_forward.3} parent=5 // pred_check
        %p12194 = pneg %p12193
      $region42: #{gnn_forward.3} parent=5 // pred_check_branch
        %12196 = sbr.rel (%p12194) target = $region44
      $region43: #{gnn_forward.3} parent=5 // pred_region
        %s12197 = ssub.s32 %s12, 2
        // Predicated region
        $region45: #{gnn_forward.3} parent=43 // pred_check
          %p12198 = pneg %p114
        $region46: #{gnn_forward.3} parent=43 // pred_check_branch
          %12200 = sbr.rel (%p12198) target = $region48
        $region47: #{gnn_forward.3} parent=43 // pred_region
          %s12201 = smul.u32 50, %s18
          %p12202 = scmp.lt.s32.totalorder %s12201, 299
          %s12203 = scalar_select %p12202, %s12201, 299
          %s12204 = smul.addr %s12203, 8
          %s12205 = scalar_lea.vmem %s3, %s12204
        $region48: #{gnn_forward.3} parent=43 // pred_fallthru
          _
      $region44: #{gnn_forward.3} parent=5 // pred_fallthru
        _
    $region6: #{gnn_forward.3} parent=1 // loop_footer
      %s16 = sadd.s32 1, %s12
    $region7: #{gnn_forward.3} parent=1 // loop_footer_branch
      %11 = sbr.rel target = $region3
    $region8: #{gnn_forward.3} parent=1 // loop_exit
      _
    %12206 = vsyncpa [#allocation3], 1
    %s12207 = scalar_lea.sflag [#allocation3], 1
    %12208 = vsyncpa %s12207, 1

</llo_original>
